<compile_context>
chip_gen: v6e
topology: v6e:2x2x1
jax: 0.10.0
libtpu: 0.0.40
codegen_flags: <defaults>
</compile_context>

<pallas_src>
import jax
import jax.numpy as jnp
from jax import lax
from jax.experimental import pallas as pl
from jax.experimental.pallas import tpu as pltpu

# ----------------------------- model dimensions ------------------------------
C_IN, HW = 3, 32            # input: (B, 3, 32, 32)
K = 5                       # conv kernel size
C1, C1P = 6, 8              # conv1 out channels (padded to 8 sublanes)
K1 = C_IN * K * K           # 75
M1, M1P = 14 * 14, 256      # pooled conv1 spatial (padded to 2 lane tiles)
C2 = 16                     # conv2 out channels
K2 = C1 * K * K             # 150
M2, M2P = 5 * 5, 32         # pooled conv2 spatial (padded to 4 sublane tiles)
H1, H2 = 120, 84            # fc hidden sizes
NC, NCP = 10, 128           # classes (padded to one lane tile -> unmasked stores)


# ----------------------------- Pallas kernels --------------------------------

def _conv1_relu_pool_kernel(p_ref, w_ref, b_ref, o_ref):
    """conv1 (as matmul on pool-grouped im2col patches) + bias + ReLU + 2x2 maxpool.

    p_ref: (1, K1, 4*Bt*M1P) bf16, column = q*(Bt*M1P) + b*M1P + m   (q = pool pos)
    w_ref: (C1P, K1)         bf16  (rows >= C1 are zero padding)
    b_ref: (C1P, 1)          f32
    o_ref: (1, C1P, Bt*M1P)  bf16  pooled activation, lane-dense, column = b*M1P + m
    """
    n = o_ref.shape[2]                                     # Bt * M1P (multiple of 128)
    y = jnp.dot(w_ref[...], p_ref[0], preferred_element_type=jnp.float32)
    y = jnp.maximum(y + b_ref[...], 0.0)                   # (C1P, 4n) f32
    # 2x2 maxpool == max over 4 contiguous, 128-lane-aligned column blocks.
    pooled = jnp.maximum(jnp.maximum(y[:, :n], y[:, n:2 * n]),
                         jnp.maximum(y[:, 2 * n:3 * n], y[:, 3 * n:]))
    o_ref[0] = pooled.astype(o_ref.dtype)


def _conv2_pool_fc_kernel(p2_ref, w2_ref, b2_ref, wfc1_ref, bfc1_ref,
                          wfc2_ref, bfc2_ref, wfc3_ref, bfc3_ref, o_ref):
    """conv2 + bias + ReLU + 2x2 maxpool + fc1 + fc2 + fc3 for Bt samples.

    p2_ref : (1, 4*M2P*Bt, K2) bf16, row = q*(M2P*Bt) + p*Bt + b
    w2_ref : (K2, C2) bf16          b2_ref : (1, C2) f32
    wfc1_ref: (M2P, C2, H1) bf16    (flatten folded in; rows p >= 25 are zero)
    bfc1_ref: (1, H1) f32
    wfc2_ref: (H1, H2) bf16         bfc2_ref: (1, H2) f32
    wfc3_ref: (H2, NCP) bf16        bfc3_ref: (1, NCP) f32   (cols >= NC are zero)
    o_ref  : (1, Bt, NCP) f32 logits
    """
    m2p, _, _ = wfc1_ref.shape
    bt = o_ref.shape[1]
    n = m2p * bt                                            # multiple of 8 sublanes

    y2 = jnp.dot(p2_ref[0], w2_ref[...], preferred_element_type=jnp.float32)
    y2 = jnp.maximum(y2 + b2_ref[...], 0.0)                 # (4n, C2)
    # 2x2 maxpool == max over 4 contiguous, sublane-aligned row blocks.
    a2 = jnp.maximum(jnp.maximum(y2[:n], y2[n:2 * n]),
                     jnp.maximum(y2[2 * n:3 * n], y2[3 * n:]))   # (n, C2), row = p*Bt+b
    a2 = a2.reshape(m2p, bt, -1).astype(jnp.bfloat16)       # (M2P, Bt, C2), free reshape

    # fc1: M2P independent (Bt, C2) x (C2, H1) products (batched dot) + VPU reduce.
    parts = lax.dot_general(a2, wfc1_ref[...],
                            dimension_numbers=(((2,), (1,)), ((0,), (0,))),
                            preferred_element_type=jnp.float32)  # (M2P, Bt, H1)
    h = jnp.maximum(jnp.sum(parts, axis=0) + bfc1_ref[...], 0.0)  # (Bt, H1)

    h = jnp.dot(h.astype(jnp.bfloat16), wfc2_ref[...],
                preferred_element_type=jnp.float32) + bfc2_ref[...]
    h = jnp.maximum(h, 0.0)                                 # (Bt, H2)

    out = jnp.dot(h.astype(jnp.bfloat16), wfc3_ref[...],
                  preferred_element_type=jnp.float32) + bfc3_ref[...]   # (Bt, NCP)
    o_ref[0] = out.astype(o_ref.dtype)


# ----------------------------- wrappers ---------------------------------------

def _pick_bt(batch, bt_cap=64):
    """Samples per grid step: multiple of 8 (aligned reshapes / unmasked stores),
    capped at 64 so double-buffered blocks fit v7x's 64 MiB VMEM (raiseable to 128
    on v5e/v6e), and sized so realistic batches yield >= 2 grid steps (both v7x TCs
    get work)."""
    return 8 * max(1, min(bt_cap // 8, (batch + 15) // 16))


def _mosaic_params(num_inputs, in_block_bytes):
    # 2 pipeline buffers for the big patch block + outputs/weights + slack; the Bt
    # cap in _pick_bt keeps this comfortably under v7x's 64 MiB VMEM.
    vmem = int(max(32 * 1024 * 1024, 4 * in_block_bytes))
    return pltpu.CompilerParams(
        dimension_semantics=("parallel",),
        vmem_limit_bytes=vmem,
        allow_input_fusion=[True] + [False] * (num_inputs - 1),
    )


def _patches_pool_grouped(x, k, m_pad):
    """im2col for a valid kxk stride-1 conv, grouped for 2x2 pooling.

    x: (B, C, H, W) -> (B, C*k*k, 4, m_pad); entry [b, r, q, m] with r = c*k*k index
    (torch Conv2d weight order), q = dh*2 + dw the position inside the 2x2 pool
    window, m = ph*Pw + pw the pooled output position (zero-padded to m_pad).
    """
    b, c, h, w = x.shape
    ho, wo = h - k + 1, w - k + 1
    ph, pw = ho // 2, wo // 2
    m = ph * pw
    pats = jnp.stack([x[:, :, kh:kh + ho, kw:kw + wo]
                      for kh in range(k) for kw in range(k)], axis=2)   # (B,C,k*k,Ho,Wo)
    pats = pats.reshape(b, c * k * k, ph, 2, pw, 2)                     # h=2ph+dh, w=2pw+dw
    pats = pats.transpose(0, 1, 3, 5, 2, 4)                             # (B,Ckk,dh,dw,Ph,Pw)
    pats = pats.reshape(b, c * k * k, 4, m)
    if m_pad > m:
        pats = jnp.pad(pats, ((0, 0), (0, 0), (0, 0), (0, m_pad - m)))
    return pats


def conv1_relu_pool(p1, w1, b1):
    """p1: (G, K1, 4*Bt*M1P) bf16 -> (G, C1P, Bt*M1P) bf16 pooled ReLU(conv1)."""
    g, k1, cols = p1.shape
    c1p = w1.shape[0]
    n = cols // 4
    blk_bytes = k1 * cols * 2
    cost = pl.CostEstimate(
        flops=int(2 * g * c1p * k1 * cols),
        transcendentals=0,
        bytes_accessed=int(g * blk_bytes + w1.size * 2 + b1.size * 4 + g * c1p * n * 2),
    )
    return pl.pallas_call(
        _conv1_relu_pool_kernel,
        out_shape=jax.ShapeDtypeStruct((g, c1p, n), jnp.bfloat16),
        grid=(g,),
        in_specs=[
            pl.BlockSpec((1, k1, cols), lambda i: (i, 0, 0)),
            pl.BlockSpec((c1p, k1), lambda i: (0, 0)),
            pl.BlockSpec((c1p, 1), lambda i: (0, 0)),
        ],
        out_specs=pl.BlockSpec((1, c1p, n), lambda i: (i, 0, 0)),
        compiler_params=_mosaic_params(3, blk_bytes),
        cost_estimate=cost,
    )(p1, w1, b1)


def conv2_pool_fc(p2, prep):
    """p2: (G, 4*M2P*Bt, K2) bf16 -> (G, Bt, NCP) f32 logits (cols >= NC are zero)."""
    g, rows, k2 = p2.shape
    bt = rows // (4 * M2P)
    blk_bytes = rows * k2 * 2
    w_bytes = sum(int(prep[k].size) * 2 for k in ("w2", "wfc1", "wfc2", "wfc3"))
    b_bytes = sum(int(prep[k].size) * 4 for k in ("b2", "bfc1", "bfc2", "bfc3"))
    cost = pl.CostEstimate(
        flops=int(g * (2 * rows * k2 * C2 + 2 * M2P * bt * C2 * H1
                       + 2 * bt * H1 * H2 + 2 * bt * H2 * NCP)),
        transcendentals=0,
        bytes_accessed=int(g * blk_bytes + w_bytes + b_bytes + g * bt * NCP * 4),
    )
    return pl.pallas_call(
        _conv2_pool_fc_kernel,
        out_shape=jax.ShapeDtypeStruct((g, bt, NCP), jnp.float32),
        grid=(g,),
        in_specs=[
            pl.BlockSpec((1, rows, k2), lambda i: (i, 0, 0)),
            pl.BlockSpec((k2, C2), lambda i: (0, 0)),
            pl.BlockSpec((1, C2), lambda i: (0, 0)),
            pl.BlockSpec((M2P, C2, H1), lambda i: (0, 0, 0)),
            pl.BlockSpec((1, H1), lambda i: (0, 0)),
            pl.BlockSpec((H1, H2), lambda i: (0, 0)),
            pl.BlockSpec((1, H2), lambda i: (0, 0)),
            pl.BlockSpec((H2, NCP), lambda i: (0, 0)),
            pl.BlockSpec((1, NCP), lambda i: (0, 0)),
        ],
        out_specs=pl.BlockSpec((1, bt, NCP), lambda i: (i, 0, 0)),
        compiler_params=_mosaic_params(9, blk_bytes),
        cost_estimate=cost,
    )(p2, prep["w2"], prep["b2"], prep["wfc1"], prep["bfc1"],
      prep["wfc2"], prep["bfc2"], prep["wfc3"], prep["bfc3"])


# ----------------------------- parameters -------------------------------------

def init_params(key):
    """Parameters in the exact torch layouts of the reference Net."""
    ks = jax.random.split(key, 10)

    def w(k, shape, fan_in):
        return (jax.random.normal(k, shape, jnp.float32) / jnp.sqrt(fan_in)).astype(jnp.float32)

    return {
        "conv1_w": w(ks[0], (C1, C_IN, K, K), C_IN * K * K),
        "conv1_b": w(ks[1], (C1,), C_IN * K * K),
        "conv2_w": w(ks[2], (C2, C1, K, K), C1 * K * K),
        "conv2_b": w(ks[3], (C2,), C1 * K * K),
        "fc1_w": w(ks[4], (H1, C2 * M2), C2 * M2),   # torch Linear: (out, in)
        "fc1_b": w(ks[5], (H1,), C2 * M2),
        "fc2_w": w(ks[6], (H2, H1), H1),
        "fc2_b": w(ks[7], (H2,), H1),
        "fc3_w": w(ks[8], (NC, H2), H2),
        "fc3_b": w(ks[9], (NC,), H2),
    }


def prepare_params(params):
    """One-time re-layout of torch-format weights into what the kernels consume."""
    # conv1: (6,3,5,5) -> (8, 75) bf16, rows 6..7 zero (8-sublane unmasked store).
    w1 = jnp.pad(params["conv1_w"].reshape(C1, K1), ((0, C1P - C1), (0, 0)))
    b1 = jnp.pad(params["conv1_b"], (0, C1P - C1)).reshape(C1P, 1)
    # conv2: (16,6,5,5) -> (150, 16).
    w2 = params["conv2_w"].reshape(C2, K2).T
    # fc1: fold the NCHW flatten (feature = c*25 + p) into a (pool-pos, cin, out)
    # slab; pad pool positions 25..31 with zeros so padded patches never contribute.
    wfc1 = params["fc1_w"].reshape(H1, C2, M2).transpose(2, 1, 0)        # (25, 16, 120)
    wfc1 = jnp.pad(wfc1, ((0, M2P - M2), (0, 0), (0, 0)))
    # fc3: pad the 10 classes to 128 lanes so kernel B's output store is unmasked.
    wfc3 = jnp.pad(params["fc3_w"].T, ((0, 0), (0, NCP - NC)))
    bfc3 = jnp.pad(params["fc3_b"], (0, NCP - NC))
    return {
        "w1": w1.astype(jnp.bfloat16), "b1": b1.astype(jnp.float32),
        "w2": w2.astype(jnp.bfloat16),
        "b2": params["conv2_b"].reshape(1, C2).astype(jnp.float32),
        "wfc1": wfc1.astype(jnp.bfloat16),
        "bfc1": params["fc1_b"].reshape(1, H1).astype(jnp.float32),
        "wfc2": params["fc2_w"].T.astype(jnp.bfloat16),
        "bfc2": params["fc2_b"].reshape(1, H2).astype(jnp.float32),
        "wfc3": wfc3.astype(jnp.bfloat16),
        "bfc3": bfc3.reshape(1, NCP).astype(jnp.float32),
    }


# ----------------------------- forward pass -----------------------------------

@jax.jit
def net_forward(prep, x):
    """x: (B, 3, 32, 32) NCHW float32 -> logits (B, 10) float32."""
    b = x.shape[0]
    assert x.shape[1:] == (C_IN, HW, HW), "Net is hard-wired to 3x32x32 inputs"
    bt = _pick_bt(b)
    bp = -(-b // bt) * bt                               # pad batch to multiple of bt
    g = bp // bt
    xb = jnp.pad(x, ((0, bp - b), (0, 0), (0, 0), (0, 0))).astype(jnp.bfloat16)

    # ---- kernel A: conv1 + ReLU + 2x2 pool (lane-dense, batched) -------------
    p1 = _patches_pool_grouped(xb, K, M1P)                              # (bp, 75, 4, 256)
    p1 = p1.reshape(g, bt, K1, 4, M1P).transpose(0, 2, 3, 1, 4)
    p1 = p1.reshape(g, K1, 4 * bt * M1P)                                # col = (q, b, m)
    a1 = conv1_relu_pool(p1, prep["w1"], prep["b1"])                    # (g, 8, bt*256) bf16

    # per-sample pooled conv1 map (tiny bf16 XLA glue between the two kernels)
    a1 = a1.reshape(g, C1P, bt, M1P).transpose(0, 2, 1, 3).reshape(bp, C1P, M1P)
    a1 = a1[:, :C1, :M1].reshape(bp, C1, 14, 14)

    # ---- kernel B: conv2 + ReLU + pool + fc1 + fc2 + fc3 ---------------------
    p2 = _patches_pool_grouped(a1, K, M2P)                              # (bp, 150, 4, 32)
    p2 = p2.reshape(g, bt, K2, 4, M2P).transpose(0, 3, 4, 1, 2)
    p2 = p2.reshape(g, 4 * M2P * bt, K2)                                # row = (q, p, b)
    logits = conv2_pool_fc(p2, prep)                                    # (g, bt, 128) f32
    return logits.reshape(bp, NCP)[:b, :NC]


@jax.jit
def net_reference(params, x):
    """Pure-JAX f32 reference of the torch Net, for a tolerance check."""
    y = lax.conv_general_dilated(x, params["conv1_w"], (1, 1), "VALID",
                                 dimension_numbers=("NCHW", "OIHW", "NCHW"))
    y = jax.nn.relu(y + params["conv1_b"][None, :, None, None])
    y = lax.reduce_window(y, -jnp.inf, lax.max, (1, 1, 2, 2), (1, 1, 2, 2), "VALID")
    y = lax.conv_general_dilated(y, params["conv2_w"], (1, 1), "VALID",
                                 dimension_numbers=("NCHW", "OIHW", "NCHW"))
    y = jax.nn.relu(y + params["conv2_b"][None, :, None, None])
    y = lax.reduce_window(y, -jnp.inf, lax.max, (1, 1, 2, 2), (1, 1, 2, 2), "VALID")
    y = y.reshape(y.shape[0], -1)
    y = jax.nn.relu(y @ params["fc1_w"].T + params["fc1_b"])
    y = jax.nn.relu(y @ params["fc2_w"].T + params["fc2_b"])
    return y @ params["fc3_w"].T + params["fc3_b"]


if __name__ == "__main__":
    key = jax.random.PRNGKey(0)
    k_in, k_par = jax.random.split(key)
    x = jax.random.normal(k_in, (2, C_IN, HW, HW), jnp.float32)   # module implies 3x32x32
    params = init_params(k_par)
    prep = prepare_params(params)

    out = jax.block_until_ready(net_forward(prep, x))
    assert out.shape == (2, NC) and out.dtype == jnp.float32

    # bf16-matmul kernel path vs f32 reference: loose tolerance, catches layout bugs.
    ref = jax.block_until_ready(net_reference(params, x))
    err = float(jnp.max(jnp.abs(out - ref)))
    tol = 5e-2 * (1.0 + float(jnp.max(jnp.abs(ref))))
    assert err <= tol, f"kernel/reference mismatch: max|err|={err:.4f} tol={tol:.4f}"

    print("KERNEL_OK")
</pallas_src>

<mosaic_0001>
module attributes {stable_mosaic.version = 11 : i64} {
  func.func @_conv1_relu_pool_kernel(%arg0: i32, %arg1: memref<1x75x8192xbf16, #tpu.memory_space<vmem>>, %arg2: memref<8x75xbf16, #tpu.memory_space<vmem>>, %arg3: memref<8x1xf32, #tpu.memory_space<vmem>>, %arg4: memref<1x8x2048xbf16, #tpu.memory_space<vmem>>) attributes {dimension_semantics = [#tpu.dimension_semantics<parallel>], iteration_bounds = array<i64: 1>, scalar_prefetch = 0 : i64, scratch_operands = 0 : i64, tpu.core_type = #tpu.core_type<tc>, window_params = [{transform_indices = @transform_0, window_bounds = array<i64: 1, 75, 8192>}, {pipeline_mode = #tpu.pipeline_mode<synchronous>, transform_indices = @transform_1, window_bounds = array<i64: 8, 75>}, {pipeline_mode = #tpu.pipeline_mode<synchronous>, transform_indices = @transform_2, window_bounds = array<i64: 8, 1>}, {transform_indices = @transform_3, window_bounds = array<i64: 1, 8, 2048>}]} {
    %c0 = arith.constant 0 : index
    %c0_0 = arith.constant 0 : index
    %0 = vector.load %arg2[%c0, %c0_0] : memref<8x75xbf16, #tpu.memory_space<vmem>>, vector<8x75xbf16>
    %c0_1 = arith.constant 0 : index
    %c0_2 = arith.constant 0 : index
    %c0_3 = arith.constant 0 : index
    %1 = vector.load %arg1[%c0_1, %c0_2, %c0_3] : memref<1x75x8192xbf16, #tpu.memory_space<vmem>>, vector<1x75x8192xbf16>
    %2 = vector.shape_cast %1 : vector<1x75x8192xbf16> to vector<75x8192xbf16>
    %cst = arith.constant dense<0.000000e+00> : vector<8x8192xf32>
    %3 = tpu.matmul %0, %2, %cst {dimension_numbers = #tpu.dot_dimension_numbers<[1], [0], [0], [1], [0, 0, 1, 1], [], []>} : vector<8x75xbf16>, vector<75x8192xbf16>, vector<8x8192xf32> -> vector<8x8192xf32>
    %c0_4 = arith.constant 0 : index
    %c0_5 = arith.constant 0 : index
    %4 = vector.load %arg3[%c0_4, %c0_5] : memref<8x1xf32, #tpu.memory_space<vmem>>, vector<8x1xf32>
    %5 = vector.broadcast %4 : vector<8x1xf32> to vector<8x8192xf32>
    %6 = arith.addf %3, %5 : vector<8x8192xf32>
    %cst_6 = arith.constant 0.000000e+00 : f32
    %7 = vector.broadcast %cst_6 : f32 to vector<8x8192xf32>
    %8 = arith.maximumf %6, %7 : vector<8x8192xf32>
    %9 = vector.extract_strided_slice %8 {offsets = [0, 0], sizes = [8, 2048], strides = [1, 1]} : vector<8x8192xf32> to vector<8x2048xf32>
    %10 = vector.extract_strided_slice %8 {offsets = [0, 2048], sizes = [8, 2048], strides = [1, 1]} : vector<8x8192xf32> to vector<8x2048xf32>
    %11 = arith.maximumf %9, %10 : vector<8x2048xf32>
    %12 = vector.extract_strided_slice %8 {offsets = [0, 4096], sizes = [8, 2048], strides = [1, 1]} : vector<8x8192xf32> to vector<8x2048xf32>
    %13 = vector.extract_strided_slice %8 {offsets = [0, 6144], sizes = [8, 2048], strides = [1, 1]} : vector<8x8192xf32> to vector<8x2048xf32>
    %14 = arith.maximumf %12, %13 : vector<8x2048xf32>
    %15 = arith.maximumf %11, %14 : vector<8x2048xf32>
    %16 = arith.truncf %15 : vector<8x2048xf32> to vector<8x2048xbf16>
    %c0_7 = arith.constant 0 : index
    %c0_8 = arith.constant 0 : index
    %c0_9 = arith.constant 0 : index
    %17 = vector.load %arg4[%c0_7, %c0_8, %c0_9] : memref<1x8x2048xbf16, #tpu.memory_space<vmem>>, vector<1x8x2048xbf16>
    %18 = vector.shape_cast %17 : vector<1x8x2048xbf16> to vector<8x2048xbf16>
    %19 = vector.shape_cast %16 : vector<8x2048xbf16> to vector<1x8x2048xbf16>
    tpu.vector_store %arg4[%c0_7, %c0_8, %c0_9], %19 {strides = array<i32>} : memref<1x8x2048xbf16, #tpu.memory_space<vmem>>, vector<1x8x2048xbf16>,
    return
  }
  func.func @transform_0(%arg0: i32) -> (i32, i32, i32) {
    %c0_i32 = arith.constant 0 : i32
    %c0_i32_0 = arith.constant 0 : i32
    %c0_i32_1 = arith.constant 0 : i32
    return %arg0, %c0_i32, %c0_i32_0 : i32, i32, i32
  }
  func.func @transform_1(%arg0: i32) -> (i32, i32) {
    %c0_i32 = arith.constant 0 : i32
    %c0_i32_0 = arith.constant 0 : i32
    %c0_i32_1 = arith.constant 0 : i32
    return %c0_i32, %c0_i32_0 : i32, i32
  }
  func.func @transform_2(%arg0: i32) -> (i32, i32) {
    %c0_i32 = arith.constant 0 : i32
    %c0_i32_0 = arith.constant 0 : i32
    %c0_i32_1 = arith.constant 0 : i32
    return %c0_i32, %c0_i32_0 : i32, i32
  }
  func.func @transform_3(%arg0: i32) -> (i32, i32, i32) {
    %c0_i32 = arith.constant 0 : i32
    %c0_i32_0 = arith.constant 0 : i32
    %c0_i32_1 = arith.constant 0 : i32
    return %arg0, %c0_i32, %c0_i32_0 : i32, i32, i32
  }
}

module attributes {stable_mosaic.version = 11 : i64} {
  func.func @_conv2_pool_fc_kernel(%arg0: i32, %arg1: memref<1x1024x150xbf16, #tpu.memory_space<vmem>>, %arg2: memref<150x16xbf16, #tpu.memory_space<vmem>>, %arg3: memref<1x16xf32, #tpu.memory_space<vmem>>, %arg4: memref<32x16x120xbf16, #tpu.memory_space<vmem>>, %arg5: memref<1x120xf32, #tpu.memory_space<vmem>>, %arg6: memref<120x84xbf16, #tpu.memory_space<vmem>>, %arg7: memref<1x84xf32, #tpu.memory_space<vmem>>, %arg8: memref<84x128xbf16, #tpu.memory_space<vmem>>, %arg9: memref<1x128xf32, #tpu.memory_space<vmem>>, %arg10: memref<1x8x128xf32, #tpu.memory_space<vmem>>) attributes {dimension_semantics = [#tpu.dimension_semantics<parallel>], iteration_bounds = array<i64: 1>, scalar_prefetch = 0 : i64, scratch_operands = 0 : i64, tpu.core_type = #tpu.core_type<tc>, window_params = [{transform_indices = @transform_0, window_bounds = array<i64: 1, 1024, 150>}, {pipeline_mode = #tpu.pipeline_mode<synchronous>, transform_indices = @transform_1, window_bounds = array<i64: 150, 16>}, {pipeline_mode = #tpu.pipeline_mode<synchronous>, transform_indices = @transform_2, window_bounds = array<i64: 1, 16>}, {pipeline_mode = #tpu.pipeline_mode<synchronous>, transform_indices = @transform_3, window_bounds = array<i64: 32, 16, 120>}, {pipeline_mode = #tpu.pipeline_mode<synchronous>, transform_indices = @transform_4, window_bounds = array<i64: 1, 120>}, {pipeline_mode = #tpu.pipeline_mode<synchronous>, transform_indices = @transform_5, window_bounds = array<i64: 120, 84>}, {pipeline_mode = #tpu.pipeline_mode<synchronous>, transform_indices = @transform_6, window_bounds = array<i64: 1, 84>}, {pipeline_mode = #tpu.pipeline_mode<synchronous>, transform_indices = @transform_7, window_bounds = array<i64: 84, 128>}, {pipeline_mode = #tpu.pipeline_mode<synchronous>, transform_indices = @transform_8, window_bounds = array<i64: 1, 128>}, {transform_indices = @transform_9, window_bounds = array<i64: 1, 8, 128>}]} {
    %c0 = arith.constant 0 : index
    %c0_0 = arith.constant 0 : index
    %c0_1 = arith.constant 0 : index
    %0 = vector.load %arg1[%c0, %c0_0, %c0_1] : memref<1x1024x150xbf16, #tpu.memory_space<vmem>>, vector<1x1024x150xbf16>
    %1 = vector.shape_cast %0 : vector<1x1024x150xbf16> to vector<1024x150xbf16>
    %c0_2 = arith.constant 0 : index
    %c0_3 = arith.constant 0 : index
    %2 = vector.load %arg2[%c0_2, %c0_3] : memref<150x16xbf16, #tpu.memory_space<vmem>>, vector<150x16xbf16>
    %cst = arith.constant dense<0.000000e+00> : vector<1024x16xf32>
    %3 = tpu.matmul %1, %2, %cst {dimension_numbers = #tpu.dot_dimension_numbers<[1], [0], [0], [1], [0, 0, 1, 1], [], []>} : vector<1024x150xbf16>, vector<150x16xbf16>, vector<1024x16xf32> -> vector<1024x16xf32>
    %c0_4 = arith.constant 0 : index
    %c0_5 = arith.constant 0 : index
    %4 = vector.load %arg3[%c0_4, %c0_5] : memref<1x16xf32, #tpu.memory_space<vmem>>, vector<1x16xf32>
    %5 = vector.broadcast %4 : vector<1x16xf32> to vector<1024x16xf32>
    %6 = arith.addf %3, %5 : vector<1024x16xf32>
    %cst_6 = arith.constant 0.000000e+00 : f32
    %7 = vector.broadcast %cst_6 : f32 to vector<1024x16xf32>
    %8 = arith.maximumf %6, %7 : vector<1024x16xf32>
    %9 = vector.extract_strided_slice %8 {offsets = [0, 0], sizes = [256, 16], strides = [1, 1]} : vector<1024x16xf32> to vector<256x16xf32>
    %10 = vector.extract_strided_slice %8 {offsets = [256, 0], sizes = [256, 16], strides = [1, 1]} : vector<1024x16xf32> to vector<256x16xf32>
    %11 = arith.maximumf %9, %10 : vector<256x16xf32>
    %12 = vector.extract_strided_slice %8 {offsets = [512, 0], sizes = [256, 16], strides = [1, 1]} : vector<1024x16xf32> to vector<256x16xf32>
    %13 = vector.extract_strided_slice %8 {offsets = [768, 0], sizes = [256, 16], strides = [1, 1]} : vector<1024x16xf32> to vector<256x16xf32>
    %14 = arith.maximumf %12, %13 : vector<256x16xf32>
    %15 = arith.maximumf %11, %14 : vector<256x16xf32>
    %16 = vector.shape_cast %15 : vector<256x16xf32> to vector<32x8x16xf32>
    %17 = arith.truncf %16 : vector<32x8x16xf32> to vector<32x8x16xbf16>
    %c0_7 = arith.constant 0 : index
    %c0_8 = arith.constant 0 : index
    %c0_9 = arith.constant 0 : index
    %18 = vector.load %arg4[%c0_7, %c0_8, %c0_9] : memref<32x16x120xbf16, #tpu.memory_space<vmem>>, vector<32x16x120xbf16>
    %cst_10 = arith.constant dense<0.000000e+00> : vector<32x8x120xf32>
    %19 = tpu.matmul %17, %18, %cst_10 {dimension_numbers = #tpu.dot_dimension_numbers<[2], [1], [1], [2], [0, 0, 0, 1, 1, 2], [0], [0]>} : vector<32x8x16xbf16>, vector<32x16x120xbf16>, vector<32x8x120xf32> -> vector<32x8x120xf32>
    %cst_11 = arith.constant dense<0.000000e+00> : vector<8x120xf32>
    %20 = vector.multi_reduction <add>, %19, %cst_11 [0] : vector<32x8x120xf32> to vector<8x120xf32>
    %c0_12 = arith.constant 0 : index
    %c0_13 = arith.constant 0 : index
    %21 = vector.load %arg5[%c0_12, %c0_13] : memref<1x120xf32, #tpu.memory_space<vmem>>, vector<1x120xf32>
    %22 = vector.broadcast %21 : vector<1x120xf32> to vector<8x120xf32>
    %23 = arith.addf %20, %22 : vector<8x120xf32>
    %cst_14 = arith.constant 0.000000e+00 : f32
    %24 = vector.broadcast %cst_14 : f32 to vector<8x120xf32>
    %25 = arith.maximumf %23, %24 : vector<8x120xf32>
    %26 = arith.truncf %25 : vector<8x120xf32> to vector<8x120xbf16>
    %c0_15 = arith.constant 0 : index
    %c0_16 = arith.constant 0 : index
    %27 = vector.load %arg6[%c0_15, %c0_16] : memref<120x84xbf16, #tpu.memory_space<vmem>>, vector<120x84xbf16>
    %cst_17 = arith.constant dense<0.000000e+00> : vector<8x84xf32>
    %28 = tpu.matmul %26, %27, %cst_17 {dimension_numbers = #tpu.dot_dimension_numbers<[1], [0], [0], [1], [0, 0, 1, 1], [], []>} : vector<8x120xbf16>, vector<120x84xbf16>, vector<8x84xf32> -> vector<8x84xf32>
    %c0_18 = arith.constant 0 : index
    %c0_19 = arith.constant 0 : index
    %29 = vector.load %arg7[%c0_18, %c0_19] : memref<1x84xf32, #tpu.memory_space<vmem>>, vector<1x84xf32>
    %30 = vector.broadcast %29 : vector<1x84xf32> to vector<8x84xf32>
    %31 = arith.addf %28, %30 : vector<8x84xf32>
    %cst_20 = arith.constant 0.000000e+00 : f32
    %32 = vector.broadcast %cst_20 : f32 to vector<8x84xf32>
    %33 = arith.maximumf %31, %32 : vector<8x84xf32>
    %34 = arith.truncf %33 : vector<8x84xf32> to vector<8x84xbf16>
    %c0_21 = arith.constant 0 : index
    %c0_22 = arith.constant 0 : index
    %35 = vector.load %arg8[%c0_21, %c0_22] : memref<84x128xbf16, #tpu.memory_space<vmem>>, vector<84x128xbf16>
    %cst_23 = arith.constant dense<0.000000e+00> : vector<8x128xf32>
    %36 = tpu.matmul %34, %35, %cst_23 {dimension_numbers = #tpu.dot_dimension_numbers<[1], [0], [0], [1], [0, 0, 1, 1], [], []>} : vector<8x84xbf16>, vector<84x128xbf16>, vector<8x128xf32> -> vector<8x128xf32>
    %c0_24 = arith.constant 0 : index
    %c0_25 = arith.constant 0 : index
    %37 = vector.load %arg9[%c0_24, %c0_25] : memref<1x128xf32, #tpu.memory_space<vmem>>, vector<1x128xf32>
    %38 = vector.broadcast %37 : vector<1x128xf32> to vector<8x128xf32>
    %39 = arith.addf %36, %38 : vector<8x128xf32>
    %c0_26 = arith.constant 0 : index
    %c0_27 = arith.constant 0 : index
    %c0_28 = arith.constant 0 : index
    %40 = vector.load %arg10[%c0_26, %c0_27, %c0_28] : memref<1x8x128xf32, #tpu.memory_space<vmem>>, vector<1x8x128xf32>
    %41 = vector.shape_cast %40 : vector<1x8x128xf32> to vector<8x128xf32>
    %42 = vector.shape_cast %39 : vector<8x128xf32> to vector<1x8x128xf32>
    tpu.vector_store %arg10[%c0_26, %c0_27, %c0_28], %42 {strides = array<i32>} : memref<1x8x128xf32, #tpu.memory_space<vmem>>, vector<1x8x128xf32>,
    return
  }
  func.func @transform_0(%arg0: i32) -> (i32, i32, i32) {
    %c0_i32 = arith.constant 0 : i32
    %c0_i32_0 = arith.constant 0 : i32
    %c0_i32_1 = arith.constant 0 : i32
    return %arg0, %c0_i32, %c0_i32_0 : i32, i32, i32
  }
  func.func @transform_1(%arg0: i32) -> (i32, i32) {
    %c0_i32 = arith.constant 0 : i32
    %c0_i32_0 = arith.constant 0 : i32
    %c0_i32_1 = arith.constant 0 : i32
    return %c0_i32, %c0_i32_0 : i32, i32
  }
  func.func @transform_2(%arg0: i32) -> (i32, i32) {
    %c0_i32 = arith.constant 0 : i32
    %c0_i32_0 = arith.constant 0 : i32
    %c0_i32_1 = arith.constant 0 : i32
    return %c0_i32, %c0_i32_0 : i32, i32
  }
  func.func @transform_3(%arg0: i32) -> (i32, i32, i32) {
    %c0_i32 = arith.constant 0 : i32
    %c0_i32_0 = arith.constant 0 : i32
    %c0_i32_1 = arith.constant 0 : i32
    %c0_i32_2 = arith.constant 0 : i32
    return %c0_i32, %c0_i32_0, %c0_i32_1 : i32, i32, i32
  }
  func.func @transform_4(%arg0: i32) -> (i32, i32) {
    %c0_i32 = arith.constant 0 : i32
    %c0_i32_0 = arith.constant 0 : i32
    %c0_i32_1 = arith.constant 0 : i32
    return %c0_i32, %c0_i32_0 : i32, i32
  }
  func.func @transform_5(%arg0: i32) -> (i32, i32) {
    %c0_i32 = arith.constant 0 : i32
    %c0_i32_0 = arith.constant 0 : i32
    %c0_i32_1 = arith.constant 0 : i32
    return %c0_i32, %c0_i32_0 : i32, i32
  }
  func.func @transform_6(%arg0: i32) -> (i32, i32) {
    %c0_i32 = arith.constant 0 : i32
    %c0_i32_0 = arith.constant 0 : i32
    %c0_i32_1 = arith.constant 0 : i32
    return %c0_i32, %c0_i32_0 : i32, i32
  }
  func.func @transform_7(%arg0: i32) -> (i32, i32) {
    %c0_i32 = arith.constant 0 : i32
    %c0_i32_0 = arith.constant 0 : i32
    %c0_i32_1 = arith.constant 0 : i32
    return %c0_i32, %c0_i32_0 : i32, i32
  }
  func.func @transform_8(%arg0: i32) -> (i32, i32) {
    %c0_i32 = arith.constant 0 : i32
    %c0_i32_0 = arith.constant 0 : i32
    %c0_i32_1 = arith.constant 0 : i32
    return %c0_i32, %c0_i32_0 : i32, i32
  }
  func.func @transform_9(%arg0: i32) -> (i32, i32, i32) {
    %c0_i32 = arith.constant 0 : i32
    %c0_i32_0 = arith.constant 0 : i32
    %c0_i32_1 = arith.constant 0 : i32
    return %arg0, %c0_i32, %c0_i32_0 : i32, i32, i32
  }
}

</mosaic_0001>

<llo_original>
// kernel: net_forward.2
$region0: #{net_forward.2}
  #allocation0 [shape = 'u32[]', space=smem, size = 0x4, offset = 0x4, fixed_abs, tag = 'smem constant byte address 0x4 - core index']
  #allocation1 [shape = 'u32[144,128]{1,0:T(1,128)}', space=vmem, size = 0x12000, scoped, tag = 'internal scratch']
  %s0 = inlined_call_operand.vmem [shape: bf16[1,75,8192], index: 0, kind: input, shape index: {}]
  %s1 = inlined_call_operand.vmem [shape: bf16[8,75], index: 1, kind: input, shape index: {}]
  %s2 = inlined_call_operand.vmem [shape: f32[8,1], index: 2, kind: input, shape index: {}]
  %s3 = inlined_call_operand.vmem [shape: bf16[1,8,2048], index: 3, kind: output, shape index: {}]
  %s4 = sld [smem:[#allocation0]]
  $region22: #{net_forward.2} parent=0
    _
  %s6 = ssub.s32 1, %s4
  %s7 = scalar_select 0, %s6, %s4
  // Predicated region
  $region2: #{net_forward.2} parent=0 // pred_check
    _
  $region3: #{net_forward.2} parent=0 // pred_check_branch
    %9 = sbr.rel (0) target = $region5
  $region4: #{net_forward.2} parent=0 // pred_region
    _
  $region5: #{net_forward.2} parent=0 // pred_fallthru
    _
  // Predicated region
  $region6: #{net_forward.2} parent=0 // pred_check
    _
  $region7: #{net_forward.2} parent=0 // pred_check_branch
    %11 = sbr.rel (0) target = $region9
  $region8: #{net_forward.2} parent=0 // pred_region
    _
  $region9: #{net_forward.2} parent=0 // pred_fallthru
    _
  // Predicated region
  $region10: #{net_forward.2} parent=0 // pred_check
    _
  $region11: #{net_forward.2} parent=0 // pred_check_branch
    %13 = sbr.rel (0) target = $region13
  $region12: #{net_forward.2} parent=0 // pred_region
    _
  $region13: #{net_forward.2} parent=0 // pred_fallthru
    _
  %v15 = vld [vmem:[%s1] sm:$0xf]
  %v16 = vld [vmem:[%s0] sm:$0xff]
  %v17 = vld [vmem:[%s0 + $0x8] sm:$0xff]
  %v18 = vld [vmem:[%s0 + $0x10] sm:$0xff]
  %v19 = vld [vmem:[%s0 + $0x18] sm:$0xff]
  %v20 = vld [vmem:[%s0 + $0x20] sm:$0xff]
  %v21 = vld [vmem:[%s0 + $0x28] sm:$0xff]
  %v22 = vld [vmem:[%s0 + $0x30] sm:$0xff]
  %v23 = vld [vmem:[%s0 + $0x38] sm:$0xff]
  %v24 = vld [vmem:[%s0 + $0x40] sm:$0xff]
  %v25 = vld [vmem:[%s0 + $0x48] sm:$0xff]
  %v26 = vld [vmem:[%s0 + $0x50] sm:$0xff]
  %v27 = vld [vmem:[%s0 + $0x58] sm:$0xff]
  %v28 = vld [vmem:[%s0 + $0x60] sm:$0xff]
  %v29 = vld [vmem:[%s0 + $0x68] sm:$0xff]
  %v30 = vld [vmem:[%s0 + $0x70] sm:$0xff]
  %v31 = vld [vmem:[%s0 + $0x78] sm:$0xff]
  %v32 = vld [vmem:[%s0 + $0x80] sm:$0xff]
  %v33 = vld [vmem:[%s0 + $0x88] sm:$0xff]
  %v34 = vld [vmem:[%s0 + $0x90] sm:$0xff]
  %v35 = vld [vmem:[%s0 + $0x98] sm:$0xff]
  %v36 = vld [vmem:[%s0 + $0xa0] sm:$0xff]
  %v37 = vld [vmem:[%s0 + $0xa8] sm:$0xff]
  %v38 = vld [vmem:[%s0 + $0xb0] sm:$0xff]
  %v39 = vld [vmem:[%s0 + $0xb8] sm:$0xff]
  %v40 = vld [vmem:[%s0 + $0xc0] sm:$0xff]
  %v41 = vld [vmem:[%s0 + $0xc8] sm:$0xff]
  %v42 = vld [vmem:[%s0 + $0xd0] sm:$0xff]
  %v43 = vld [vmem:[%s0 + $0xd8] sm:$0xff]
  %v44 = vld [vmem:[%s0 + $0xe0] sm:$0xff]
  %v45 = vld [vmem:[%s0 + $0xe8] sm:$0xff]
  %v46 = vld [vmem:[%s0 + $0xf0] sm:$0xff]
  %v47 = vld [vmem:[%s0 + $0xf8] sm:$0xff]
  %v48 = vld [vmem:[%s0 + $0x100] sm:$0xff]
  %v49 = vld [vmem:[%s0 + $0x108] sm:$0xff]
  %v50 = vld [vmem:[%s0 + $0x110] sm:$0xff]
  %v51 = vld [vmem:[%s0 + $0x118] sm:$0xff]
  %v52 = vld [vmem:[%s0 + $0x120] sm:$0xff]
  %v53 = vld [vmem:[%s0 + $0x128] sm:$0xff]
  %v54 = vld [vmem:[%s0 + $0x130] sm:$0xff]
  %v55 = vld [vmem:[%s0 + $0x138] sm:$0xff]
  %v56 = vld [vmem:[%s0 + $0x140] sm:$0xff]
  %v57 = vld [vmem:[%s0 + $0x148] sm:$0xff]
  %v58 = vld [vmem:[%s0 + $0x150] sm:$0xff]
  %v59 = vld [vmem:[%s0 + $0x158] sm:$0xff]
  %v60 = vld [vmem:[%s0 + $0x160] sm:$0xff]
  %v61 = vld [vmem:[%s0 + $0x168] sm:$0xff]
  %v62 = vld [vmem:[%s0 + $0x170] sm:$0xff]
  %v63 = vld [vmem:[%s0 + $0x178] sm:$0xff]
  %v64 = vld [vmem:[%s0 + $0x180] sm:$0xff]
  %v65 = vld [vmem:[%s0 + $0x188] sm:$0xff]
  %v66 = vld [vmem:[%s0 + $0x190] sm:$0xff]
  %v67 = vld [vmem:[%s0 + $0x198] sm:$0xff]
  %v68 = vld [vmem:[%s0 + $0x1a0] sm:$0xff]
  %v69 = vld [vmem:[%s0 + $0x1a8] sm:$0xff]
  %v70 = vld [vmem:[%s0 + $0x1b0] sm:$0xff]
  %v71 = vld [vmem:[%s0 + $0x1b8] sm:$0xff]
  %v72 = vld [vmem:[%s0 + $0x1c0] sm:$0xff]
  %v73 = vld [vmem:[%s0 + $0x1c8] sm:$0xff]
  %v74 = vld [vmem:[%s0 + $0x1d0] sm:$0xff]
  %v75 = vld [vmem:[%s0 + $0x1d8] sm:$0xff]
  %v76 = vld [vmem:[%s0 + $0x1e0] sm:$0xff]
  %v77 = vld [vmem:[%s0 + $0x1e8] sm:$0xff]
  %v78 = vld [vmem:[%s0 + $0x1f0] sm:$0xff]
  %v79 = vld [vmem:[%s0 + $0x1f8] sm:$0xff]
  %v80 = vld [vmem:[%s0 + $0x200] sm:$0xff]
  %v81 = vld [vmem:[%s0 + $0x208] sm:$0xff]
  %v82 = vld [vmem:[%s0 + $0x210] sm:$0xff]
  %v83 = vld [vmem:[%s0 + $0x218] sm:$0xff]
  %v84 = vld [vmem:[%s0 + $0x220] sm:$0xff]
  %v85 = vld [vmem:[%s0 + $0x228] sm:$0xff]
  %v86 = vld [vmem:[%s0 + $0x230] sm:$0xff]
  %v87 = vld [vmem:[%s0 + $0x238] sm:$0xff]
  %v88 = vld [vmem:[%s0 + $0x240] sm:$0xff]
  %v89 = vld [vmem:[%s0 + $0x248] sm:$0xff]
  %v90 = vld [vmem:[%s0 + $0x250] sm:$0xff]
  %v91 = vld [vmem:[%s0 + $0x258] sm:$0xff]
  %v92 = vld [vmem:[%s0 + $0x260] sm:$0xff]
  %v93 = vld [vmem:[%s0 + $0x268] sm:$0xff]
  %v94 = vld [vmem:[%s0 + $0x270] sm:$0xff]
  %v95 = vld [vmem:[%s0 + $0x278] sm:$0xff]
  %v96 = vld [vmem:[%s0 + $0x280] sm:$0xff]
  %v97 = vld [vmem:[%s0 + $0x288] sm:$0xff]
  %v98 = vld [vmem:[%s0 + $0x290] sm:$0xff]
  %v99 = vld [vmem:[%s0 + $0x298] sm:$0xff]
  %v100 = vld [vmem:[%s0 + $0x2a0] sm:$0xff]
  %v101 = vld [vmem:[%s0 + $0x2a8] sm:$0xff]
  %v102 = vld [vmem:[%s0 + $0x2b0] sm:$0xff]
  %v103 = vld [vmem:[%s0 + $0x2b8] sm:$0xff]
  %v104 = vld [vmem:[%s0 + $0x2c0] sm:$0xff]
  %v105 = vld [vmem:[%s0 + $0x2c8] sm:$0xff]
  %v106 = vld [vmem:[%s0 + $0x2d0] sm:$0xff]
  %v107 = vld [vmem:[%s0 + $0x2d8] sm:$0xff]
  %v108 = vld [vmem:[%s0 + $0x2e0] sm:$0xff]
  %v109 = vld [vmem:[%s0 + $0x2e8] sm:$0xff]
  %v110 = vld [vmem:[%s0 + $0x2f0] sm:$0xff]
  %v111 = vld [vmem:[%s0 + $0x2f8] sm:$0xff]
  %v112 = vld [vmem:[%s0 + $0x300] sm:$0xff]
  %v113 = vld [vmem:[%s0 + $0x308] sm:$0xff]
  %v114 = vld [vmem:[%s0 + $0x310] sm:$0xff]
  %v115 = vld [vmem:[%s0 + $0x318] sm:$0xff]
  %v116 = vld [vmem:[%s0 + $0x320] sm:$0xff]
  %v117 = vld [vmem:[%s0 + $0x328] sm:$0xff]
  %v118 = vld [vmem:[%s0 + $0x330] sm:$0xff]
  %v119 = vld [vmem:[%s0 + $0x338] sm:$0xff]
  %v120 = vld [vmem:[%s0 + $0x340] sm:$0xff]
  %v121 = vld [vmem:[%s0 + $0x348] sm:$0xff]
  %v122 = vld [vmem:[%s0 + $0x350] sm:$0xff]
  %v123 = vld [vmem:[%s0 + $0x358] sm:$0xff]
  %v124 = vld [vmem:[%s0 + $0x360] sm:$0xff]
  %v125 = vld [vmem:[%s0 + $0x368] sm:$0xff]
  %v126 = vld [vmem:[%s0 + $0x370] sm:$0xff]
  %v127 = vld [vmem:[%s0 + $0x378] sm:$0xff]
  %v128 = vld [vmem:[%s0 + $0x380] sm:$0xff]
  %v129 = vld [vmem:[%s0 + $0x388] sm:$0xff]
  %v130 = vld [vmem:[%s0 + $0x390] sm:$0xff]
  %v131 = vld [vmem:[%s0 + $0x398] sm:$0xff]
  %v132 = vld [vmem:[%s0 + $0x3a0] sm:$0xff]
  %v133 = vld [vmem:[%s0 + $0x3a8] sm:$0xff]
  %v134 = vld [vmem:[%s0 + $0x3b0] sm:$0xff]
  %v135 = vld [vmem:[%s0 + $0x3b8] sm:$0xff]
  %v136 = vld [vmem:[%s0 + $0x3c0] sm:$0xff]
  %v137 = vld [vmem:[%s0 + $0x3c8] sm:$0xff]
  %v138 = vld [vmem:[%s0 + $0x3d0] sm:$0xff]
  %v139 = vld [vmem:[%s0 + $0x3d8] sm:$0xff]
  %v140 = vld [vmem:[%s0 + $0x3e0] sm:$0xff]
  %v141 = vld [vmem:[%s0 + $0x3e8] sm:$0xff]
  %v142 = vld [vmem:[%s0 + $0x3f0] sm:$0xff]
  %v143 = vld [vmem:[%s0 + $0x3f8] sm:$0xff]
  %v144 = vld [vmem:[%s0 + $0x400] sm:$0xff]
  %v145 = vld [vmem:[%s0 + $0x408] sm:$0xff]
  %v146 = vld [vmem:[%s0 + $0x410] sm:$0xff]
  %v147 = vld [vmem:[%s0 + $0x418] sm:$0xff]
  %v148 = vld [vmem:[%s0 + $0x420] sm:$0xff]
  %v149 = vld [vmem:[%s0 + $0x428] sm:$0xff]
  %v150 = vld [vmem:[%s0 + $0x430] sm:$0xff]
  %v151 = vld [vmem:[%s0 + $0x438] sm:$0xff]
  %v152 = vld [vmem:[%s0 + $0x440] sm:$0xff]
  %v153 = vld [vmem:[%s0 + $0x448] sm:$0xff]
  %v154 = vld [vmem:[%s0 + $0x450] sm:$0xff]
  %v155 = vld [vmem:[%s0 + $0x458] sm:$0xff]
  %v156 = vld [vmem:[%s0 + $0x460] sm:$0xff]
  %v157 = vld [vmem:[%s0 + $0x468] sm:$0xff]
  %v158 = vld [vmem:[%s0 + $0x470] sm:$0xff]
  %v159 = vld [vmem:[%s0 + $0x478] sm:$0xff]
  %v160 = vld [vmem:[%s0 + $0x480] sm:$0xff]
  %v161 = vld [vmem:[%s0 + $0x488] sm:$0xff]
  %v162 = vld [vmem:[%s0 + $0x490] sm:$0xff]
  %v163 = vld [vmem:[%s0 + $0x498] sm:$0xff]
  %v164 = vld [vmem:[%s0 + $0x4a0] sm:$0xff]
  %v165 = vld [vmem:[%s0 + $0x4a8] sm:$0xff]
  %v166 = vld [vmem:[%s0 + $0x4b0] sm:$0xff]
  %v167 = vld [vmem:[%s0 + $0x4b8] sm:$0xff]
  %v168 = vld [vmem:[%s0 + $0x4c0] sm:$0xff]
  %v169 = vld [vmem:[%s0 + $0x4c8] sm:$0xff]
  %v170 = vld [vmem:[%s0 + $0x4d0] sm:$0xff]
  %v171 = vld [vmem:[%s0 + $0x4d8] sm:$0xff]
  %v172 = vld [vmem:[%s0 + $0x4e0] sm:$0xff]
  %v173 = vld [vmem:[%s0 + $0x4e8] sm:$0xff]
  %v174 = vld [vmem:[%s0 + $0x4f0] sm:$0xff]
  %v175 = vld [vmem:[%s0 + $0x4f8] sm:$0xff]
  %v176 = vld [vmem:[%s0 + $0x500] sm:$0xff]
  %v177 = vld [vmem:[%s0 + $0x508] sm:$0xff]
  %v178 = vld [vmem:[%s0 + $0x510] sm:$0xff]
  %v179 = vld [vmem:[%s0 + $0x518] sm:$0xff]
  %v180 = vld [vmem:[%s0 + $0x520] sm:$0xff]
  %v181 = vld [vmem:[%s0 + $0x528] sm:$0xff]
  %v182 = vld [vmem:[%s0 + $0x530] sm:$0xff]
  %v183 = vld [vmem:[%s0 + $0x538] sm:$0xff]
  %v184 = vld [vmem:[%s0 + $0x540] sm:$0xff]
  %v185 = vld [vmem:[%s0 + $0x548] sm:$0xff]
  %v186 = vld [vmem:[%s0 + $0x550] sm:$0xff]
  %v187 = vld [vmem:[%s0 + $0x558] sm:$0xff]
  %v188 = vld [vmem:[%s0 + $0x560] sm:$0xff]
  %v189 = vld [vmem:[%s0 + $0x568] sm:$0xff]
  %v190 = vld [vmem:[%s0 + $0x570] sm:$0xff]
  %v191 = vld [vmem:[%s0 + $0x578] sm:$0xff]
  %v192 = vld [vmem:[%s0 + $0x580] sm:$0xff]
  %v193 = vld [vmem:[%s0 + $0x588] sm:$0xff]
  %v194 = vld [vmem:[%s0 + $0x590] sm:$0xff]
  %v195 = vld [vmem:[%s0 + $0x598] sm:$0xff]
  %v196 = vld [vmem:[%s0 + $0x5a0] sm:$0xff]
  %v197 = vld [vmem:[%s0 + $0x5a8] sm:$0xff]
  %v198 = vld [vmem:[%s0 + $0x5b0] sm:$0xff]
  %v199 = vld [vmem:[%s0 + $0x5b8] sm:$0xff]
  %v200 = vld [vmem:[%s0 + $0x5c0] sm:$0xff]
  %v201 = vld [vmem:[%s0 + $0x5c8] sm:$0xff]
  %v202 = vld [vmem:[%s0 + $0x5d0] sm:$0xff]
  %v203 = vld [vmem:[%s0 + $0x5d8] sm:$0xff]
  %v204 = vld [vmem:[%s0 + $0x5e0] sm:$0xff]
  %v205 = vld [vmem:[%s0 + $0x5e8] sm:$0xff]
  %v206 = vld [vmem:[%s0 + $0x5f0] sm:$0xff]
  %v207 = vld [vmem:[%s0 + $0x5f8] sm:$0xff]
  %v208 = vld [vmem:[%s0 + $0x600] sm:$0xff]
  %v209 = vld [vmem:[%s0 + $0x608] sm:$0xff]
  %v210 = vld [vmem:[%s0 + $0x610] sm:$0xff]
  %v211 = vld [vmem:[%s0 + $0x618] sm:$0xff]
  %v212 = vld [vmem:[%s0 + $0x620] sm:$0xff]
  %v213 = vld [vmem:[%s0 + $0x628] sm:$0xff]
  %v214 = vld [vmem:[%s0 + $0x630] sm:$0xff]
  %v215 = vld [vmem:[%s0 + $0x638] sm:$0xff]
  %v216 = vld [vmem:[%s0 + $0x640] sm:$0xff]
  %v217 = vld [vmem:[%s0 + $0x648] sm:$0xff]
  %v218 = vld [vmem:[%s0 + $0x650] sm:$0xff]
  %v219 = vld [vmem:[%s0 + $0x658] sm:$0xff]
  %v220 = vld [vmem:[%s0 + $0x660] sm:$0xff]
  %v221 = vld [vmem:[%s0 + $0x668] sm:$0xff]
  %v222 = vld [vmem:[%s0 + $0x670] sm:$0xff]
  %v223 = vld [vmem:[%s0 + $0x678] sm:$0xff]
  %v224 = vld [vmem:[%s0 + $0x680] sm:$0xff]
  %v225 = vld [vmem:[%s0 + $0x688] sm:$0xff]
  %v226 = vld [vmem:[%s0 + $0x690] sm:$0xff]
  %v227 = vld [vmem:[%s0 + $0x698] sm:$0xff]
  %v228 = vld [vmem:[%s0 + $0x6a0] sm:$0xff]
  %v229 = vld [vmem:[%s0 + $0x6a8] sm:$0xff]
  %v230 = vld [vmem:[%s0 + $0x6b0] sm:$0xff]
  %v231 = vld [vmem:[%s0 + $0x6b8] sm:$0xff]
  %v232 = vld [vmem:[%s0 + $0x6c0] sm:$0xff]
  %v233 = vld [vmem:[%s0 + $0x6c8] sm:$0xff]
  %v234 = vld [vmem:[%s0 + $0x6d0] sm:$0xff]
  %v235 = vld [vmem:[%s0 + $0x6d8] sm:$0xff]
  %v236 = vld [vmem:[%s0 + $0x6e0] sm:$0xff]
  %v237 = vld [vmem:[%s0 + $0x6e8] sm:$0xff]
  %v238 = vld [vmem:[%s0 + $0x6f0] sm:$0xff]
  %v239 = vld [vmem:[%s0 + $0x6f8] sm:$0xff]
  %v240 = vld [vmem:[%s0 + $0x700] sm:$0xff]
  %v241 = vld [vmem:[%s0 + $0x708] sm:$0xff]
  %v242 = vld [vmem:[%s0 + $0x710] sm:$0xff]
  %v243 = vld [vmem:[%s0 + $0x718] sm:$0xff]
  %v244 = vld [vmem:[%s0 + $0x720] sm:$0xff]
  %v245 = vld [vmem:[%s0 + $0x728] sm:$0xff]
  %v246 = vld [vmem:[%s0 + $0x730] sm:$0xff]
  %v247 = vld [vmem:[%s0 + $0x738] sm:$0xff]
  %v248 = vld [vmem:[%s0 + $0x740] sm:$0xff]
  %v249 = vld [vmem:[%s0 + $0x748] sm:$0xff]
  %v250 = vld [vmem:[%s0 + $0x750] sm:$0xff]
  %v251 = vld [vmem:[%s0 + $0x758] sm:$0xff]
  %v252 = vld [vmem:[%s0 + $0x760] sm:$0xff]
  %v253 = vld [vmem:[%s0 + $0x768] sm:$0xff]
  %v254 = vld [vmem:[%s0 + $0x770] sm:$0xff]
  %v255 = vld [vmem:[%s0 + $0x778] sm:$0xff]
  %v256 = vld [vmem:[%s0 + $0x780] sm:$0xff]
  %v257 = vld [vmem:[%s0 + $0x788] sm:$0xff]
  %v258 = vld [vmem:[%s0 + $0x790] sm:$0xff]
  %v259 = vld [vmem:[%s0 + $0x798] sm:$0xff]
  %v260 = vld [vmem:[%s0 + $0x7a0] sm:$0xff]
  %v261 = vld [vmem:[%s0 + $0x7a8] sm:$0xff]
  %v262 = vld [vmem:[%s0 + $0x7b0] sm:$0xff]
  %v263 = vld [vmem:[%s0 + $0x7b8] sm:$0xff]
  %v264 = vld [vmem:[%s0 + $0x7c0] sm:$0xff]
  %v265 = vld [vmem:[%s0 + $0x7c8] sm:$0xff]
  %v266 = vld [vmem:[%s0 + $0x7d0] sm:$0xff]
  %v267 = vld [vmem:[%s0 + $0x7d8] sm:$0xff]
  %v268 = vld [vmem:[%s0 + $0x7e0] sm:$0xff]
  %v269 = vld [vmem:[%s0 + $0x7e8] sm:$0xff]
  %v270 = vld [vmem:[%s0 + $0x7f0] sm:$0xff]
  %v271 = vld [vmem:[%s0 + $0x7f8] sm:$0xff]
  %v272 = vld [vmem:[%s0 + $0x800] sm:$0xff]
  %v273 = vld [vmem:[%s0 + $0x808] sm:$0xff]
  %v274 = vld [vmem:[%s0 + $0x810] sm:$0xff]
  %v275 = vld [vmem:[%s0 + $0x818] sm:$0xff]
  %v276 = vld [vmem:[%s0 + $0x820] sm:$0xff]
  %v277 = vld [vmem:[%s0 + $0x828] sm:$0xff]
  %v278 = vld [vmem:[%s0 + $0x830] sm:$0xff]
  %v279 = vld [vmem:[%s0 + $0x838] sm:$0xff]
  %v280 = vld [vmem:[%s0 + $0x840] sm:$0xff]
  %v281 = vld [vmem:[%s0 + $0x848] sm:$0xff]
  %v282 = vld [vmem:[%s0 + $0x850] sm:$0xff]
  %v283 = vld [vmem:[%s0 + $0x858] sm:$0xff]
  %v284 = vld [vmem:[%s0 + $0x860] sm:$0xff]
  %v285 = vld [vmem:[%s0 + $0x868] sm:$0xff]
  %v286 = vld [vmem:[%s0 + $0x870] sm:$0xff]
  %v287 = vld [vmem:[%s0 + $0x878] sm:$0xff]
  %v288 = vld [vmem:[%s0 + $0x880] sm:$0xff]
  %v289 = vld [vmem:[%s0 + $0x888] sm:$0xff]
  %v290 = vld [vmem:[%s0 + $0x890] sm:$0xff]
  %v291 = vld [vmem:[%s0 + $0x898] sm:$0xff]
  %v292 = vld [vmem:[%s0 + $0x8a0] sm:$0xff]
  %v293 = vld [vmem:[%s0 + $0x8a8] sm:$0xff]
  %v294 = vld [vmem:[%s0 + $0x8b0] sm:$0xff]
  %v295 = vld [vmem:[%s0 + $0x8b8] sm:$0xff]
  %v296 = vld [vmem:[%s0 + $0x8c0] sm:$0xff]
  %v297 = vld [vmem:[%s0 + $0x8c8] sm:$0xff]
  %v298 = vld [vmem:[%s0 + $0x8d0] sm:$0xff]
  %v299 = vld [vmem:[%s0 + $0x8d8] sm:$0xff]
  %v300 = vld [vmem:[%s0 + $0x8e0] sm:$0xff]
  %v301 = vld [vmem:[%s0 + $0x8e8] sm:$0xff]
  %v302 = vld [vmem:[%s0 + $0x8f0] sm:$0xff]
  %v303 = vld [vmem:[%s0 + $0x8f8] sm:$0xff]
  %v304 = vld [vmem:[%s0 + $0x900] sm:$0x33]
  %v305 = vld [vmem:[%s0 + $0x908] sm:$0x33]
  %v306 = vld [vmem:[%s0 + $0x910] sm:$0x33]
  %v307 = vld [vmem:[%s0 + $0x918] sm:$0x33]
  %v308 = vld [vmem:[%s0 + $0x920] sm:$0x33]
  %v309 = vld [vmem:[%s0 + $0x928] sm:$0x33]
  %v310 = vld [vmem:[%s0 + $0x930] sm:$0x33]
  %v311 = vld [vmem:[%s0 + $0x938] sm:$0x33]
  %v312 = vld [vmem:[%s0 + $0x940] sm:$0x33]
  %v313 = vld [vmem:[%s0 + $0x948] sm:$0x33]
  %v314 = vld [vmem:[%s0 + $0x950] sm:$0x33]
  %v315 = vld [vmem:[%s0 + $0x958] sm:$0x33]
  %v316 = vld [vmem:[%s0 + $0x960] sm:$0x33]
  %v317 = vld [vmem:[%s0 + $0x968] sm:$0x33]
  %v318 = vld [vmem:[%s0 + $0x970] sm:$0x33]
  %v319 = vld [vmem:[%s0 + $0x978] sm:$0x33]
  %v320 = vld [vmem:[%s0 + $0x980] sm:$0x33]
  %v321 = vld [vmem:[%s0 + $0x988] sm:$0x33]
  %v322 = vld [vmem:[%s0 + $0x990] sm:$0x33]
  %v323 = vld [vmem:[%s0 + $0x998] sm:$0x33]
  %v324 = vld [vmem:[%s0 + $0x9a0] sm:$0x33]
  %v325 = vld [vmem:[%s0 + $0x9a8] sm:$0x33]
  %v326 = vld [vmem:[%s0 + $0x9b0] sm:$0x33]
  %v327 = vld [vmem:[%s0 + $0x9b8] sm:$0x33]
  %v328 = vld [vmem:[%s0 + $0x9c0] sm:$0x33]
  %v329 = vld [vmem:[%s0 + $0x9c8] sm:$0x33]
  %v330 = vld [vmem:[%s0 + $0x9d0] sm:$0x33]
  %v331 = vld [vmem:[%s0 + $0x9d8] sm:$0x33]
  %v332 = vld [vmem:[%s0 + $0x9e0] sm:$0x33]
  %v333 = vld [vmem:[%s0 + $0x9e8] sm:$0x33]
  %v334 = vld [vmem:[%s0 + $0x9f0] sm:$0x33]
  %v335 = vld [vmem:[%s0 + $0x9f8] sm:$0x33]
  %v336 = vld [vmem:[%s2] sm:$0xff]
  %338 = vset.pattern.permute.xlu0 0
  %339 = vperm.xlu0 %338, %v336
  %v340 = vpop.permute.xlu0 %339
  %v662 = vunpack.c.l.b16 %v16
  %v663 = vunpack.c.h.b16 %v16
  %v664 = vunpack.c.l.b16 %v17
  %v665 = vunpack.c.h.b16 %v17
  %v666 = vunpack.c.l.b16 %v18
  %v667 = vunpack.c.h.b16 %v18
  %v668 = vunpack.c.l.b16 %v19
  %v669 = vunpack.c.h.b16 %v19
  %v670 = vunpack.c.l.b16 %v20
  %v671 = vunpack.c.h.b16 %v20
  %v672 = vunpack.c.l.b16 %v21
  %v673 = vunpack.c.h.b16 %v21
  %v674 = vunpack.c.l.b16 %v22
  %v675 = vunpack.c.h.b16 %v22
  %v676 = vunpack.c.l.b16 %v23
  %v677 = vunpack.c.h.b16 %v23
  %v678 = vunpack.c.l.b16 %v24
  %v679 = vunpack.c.h.b16 %v24
  %v680 = vunpack.c.l.b16 %v25
  %v681 = vunpack.c.h.b16 %v25
  %v682 = vunpack.c.l.b16 %v26
  %v683 = vunpack.c.h.b16 %v26
  %v684 = vunpack.c.l.b16 %v27
  %v685 = vunpack.c.h.b16 %v27
  %v686 = vunpack.c.l.b16 %v28
  %v687 = vunpack.c.h.b16 %v28
  %v688 = vunpack.c.l.b16 %v29
  %v689 = vunpack.c.h.b16 %v29
  %v690 = vunpack.c.l.b16 %v30
  %v691 = vunpack.c.h.b16 %v30
  %v692 = vunpack.c.l.b16 %v31
  %v693 = vunpack.c.h.b16 %v31
  %v694 = vunpack.c.l.b16 %v32
  %v695 = vunpack.c.h.b16 %v32
  %v696 = vunpack.c.l.b16 %v33
  %v697 = vunpack.c.h.b16 %v33
  %v698 = vunpack.c.l.b16 %v34
  %v699 = vunpack.c.h.b16 %v34
  %v700 = vunpack.c.l.b16 %v35
  %v701 = vunpack.c.h.b16 %v35
  %v702 = vunpack.c.l.b16 %v36
  %v703 = vunpack.c.h.b16 %v36
  %v704 = vunpack.c.l.b16 %v37
  %v705 = vunpack.c.h.b16 %v37
  %v706 = vunpack.c.l.b16 %v38
  %v707 = vunpack.c.h.b16 %v38
  %v708 = vunpack.c.l.b16 %v39
  %v709 = vunpack.c.h.b16 %v39
  %v710 = vunpack.c.l.b16 %v40
  %v711 = vunpack.c.h.b16 %v40
  %v712 = vunpack.c.l.b16 %v41
  %v713 = vunpack.c.h.b16 %v41
  %v714 = vunpack.c.l.b16 %v42
  %v715 = vunpack.c.h.b16 %v42
  %v716 = vunpack.c.l.b16 %v43
  %v717 = vunpack.c.h.b16 %v43
  %v718 = vunpack.c.l.b16 %v44
  %v719 = vunpack.c.h.b16 %v44
  %v720 = vunpack.c.l.b16 %v45
  %v721 = vunpack.c.h.b16 %v45
  %v722 = vunpack.c.l.b16 %v46
  %v723 = vunpack.c.h.b16 %v46
  %v724 = vunpack.c.l.b16 %v47
  %v725 = vunpack.c.h.b16 %v47
  %v726 = vunpack.c.l.b16 %v48
  %v727 = vunpack.c.h.b16 %v48
  %v728 = vunpack.c.l.b16 %v49
  %v729 = vunpack.c.h.b16 %v49
  %v730 = vunpack.c.l.b16 %v50
  %v731 = vunpack.c.h.b16 %v50
  %v732 = vunpack.c.l.b16 %v51
  %v733 = vunpack.c.h.b16 %v51
  %v734 = vunpack.c.l.b16 %v52
  %v735 = vunpack.c.h.b16 %v52
  %v736 = vunpack.c.l.b16 %v53
  %v737 = vunpack.c.h.b16 %v53
  %v738 = vunpack.c.l.b16 %v54
  %v739 = vunpack.c.h.b16 %v54
  %v740 = vunpack.c.l.b16 %v55
  %v741 = vunpack.c.h.b16 %v55
  %v742 = vunpack.c.l.b16 %v56
  %v743 = vunpack.c.h.b16 %v56
  %v744 = vunpack.c.l.b16 %v57
  %v745 = vunpack.c.h.b16 %v57
  %v746 = vunpack.c.l.b16 %v58
  %v747 = vunpack.c.h.b16 %v58
  %v748 = vunpack.c.l.b16 %v59
  %v749 = vunpack.c.h.b16 %v59
  %v750 = vunpack.c.l.b16 %v60
  %v751 = vunpack.c.h.b16 %v60
  %v752 = vunpack.c.l.b16 %v61
  %v753 = vunpack.c.h.b16 %v61
  %v754 = vunpack.c.l.b16 %v62
  %v755 = vunpack.c.h.b16 %v62
  %v756 = vunpack.c.l.b16 %v63
  %v757 = vunpack.c.h.b16 %v63
  %v758 = vunpack.c.l.b16 %v64
  %v759 = vunpack.c.h.b16 %v64
  %v760 = vunpack.c.l.b16 %v65
  %v761 = vunpack.c.h.b16 %v65
  %v762 = vunpack.c.l.b16 %v66
  %v763 = vunpack.c.h.b16 %v66
  %v764 = vunpack.c.l.b16 %v67
  %v765 = vunpack.c.h.b16 %v67
  %v766 = vunpack.c.l.b16 %v68
  %v767 = vunpack.c.h.b16 %v68
  %v768 = vunpack.c.l.b16 %v69
  %v769 = vunpack.c.h.b16 %v69
  %v770 = vunpack.c.l.b16 %v70
  %v771 = vunpack.c.h.b16 %v70
  %v772 = vunpack.c.l.b16 %v71
  %v773 = vunpack.c.h.b16 %v71
  %v774 = vunpack.c.l.b16 %v72
  %v775 = vunpack.c.h.b16 %v72
  %v776 = vunpack.c.l.b16 %v73
  %v777 = vunpack.c.h.b16 %v73
  %v778 = vunpack.c.l.b16 %v74
  %v779 = vunpack.c.h.b16 %v74
  %v780 = vunpack.c.l.b16 %v75
  %v781 = vunpack.c.h.b16 %v75
  %v782 = vunpack.c.l.b16 %v76
  %v783 = vunpack.c.h.b16 %v76
  %v784 = vunpack.c.l.b16 %v77
  %v785 = vunpack.c.h.b16 %v77
  %v786 = vunpack.c.l.b16 %v78
  %v787 = vunpack.c.h.b16 %v78
  %v788 = vunpack.c.l.b16 %v79
  %v789 = vunpack.c.h.b16 %v79
  %v790 = vunpack.c.l.b16 %v80
  %v791 = vunpack.c.h.b16 %v80
  %v792 = vunpack.c.l.b16 %v81
  %v793 = vunpack.c.h.b16 %v81
  %v794 = vunpack.c.l.b16 %v82
  %v795 = vunpack.c.h.b16 %v82
  %v796 = vunpack.c.l.b16 %v83
  %v797 = vunpack.c.h.b16 %v83
  %v798 = vunpack.c.l.b16 %v84
  %v799 = vunpack.c.h.b16 %v84
  %v800 = vunpack.c.l.b16 %v85
  %v801 = vunpack.c.h.b16 %v85
  %v802 = vunpack.c.l.b16 %v86
  %v803 = vunpack.c.h.b16 %v86
  %v804 = vunpack.c.l.b16 %v87
  %v805 = vunpack.c.h.b16 %v87
  %v806 = vunpack.c.l.b16 %v88
  %v807 = vunpack.c.h.b16 %v88
  %v808 = vunpack.c.l.b16 %v89
  %v809 = vunpack.c.h.b16 %v89
  %v810 = vunpack.c.l.b16 %v90
  %v811 = vunpack.c.h.b16 %v90
  %v812 = vunpack.c.l.b16 %v91
  %v813 = vunpack.c.h.b16 %v91
  %v814 = vunpack.c.l.b16 %v92
  %v815 = vunpack.c.h.b16 %v92
  %v816 = vunpack.c.l.b16 %v93
  %v817 = vunpack.c.h.b16 %v93
  %v818 = vunpack.c.l.b16 %v94
  %v819 = vunpack.c.h.b16 %v94
  %v820 = vunpack.c.l.b16 %v95
  %v821 = vunpack.c.h.b16 %v95
  %v822 = vunpack.c.l.b16 %v96
  %v823 = vunpack.c.h.b16 %v96
  %v824 = vunpack.c.l.b16 %v97
  %v825 = vunpack.c.h.b16 %v97
  %v826 = vunpack.c.l.b16 %v98
  %v827 = vunpack.c.h.b16 %v98
  %v828 = vunpack.c.l.b16 %v99
  %v829 = vunpack.c.h.b16 %v99
  %v830 = vunpack.c.l.b16 %v100
  %v831 = vunpack.c.h.b16 %v100
  %v832 = vunpack.c.l.b16 %v101
  %v833 = vunpack.c.h.b16 %v101
  %v834 = vunpack.c.l.b16 %v102
  %v835 = vunpack.c.h.b16 %v102
  %v836 = vunpack.c.l.b16 %v103
  %v837 = vunpack.c.h.b16 %v103
  %v838 = vunpack.c.l.b16 %v104
  %v839 = vunpack.c.h.b16 %v104
  %v840 = vunpack.c.l.b16 %v105
  %v841 = vunpack.c.h.b16 %v105
  %v842 = vunpack.c.l.b16 %v106
  %v843 = vunpack.c.h.b16 %v106
  %v844 = vunpack.c.l.b16 %v107
  %v845 = vunpack.c.h.b16 %v107
  %v846 = vunpack.c.l.b16 %v108
  %v847 = vunpack.c.h.b16 %v108
  %v848 = vunpack.c.l.b16 %v109
  %v849 = vunpack.c.h.b16 %v109
  %v850 = vunpack.c.l.b16 %v110
  %v851 = vunpack.c.h.b16 %v110
  %v852 = vunpack.c.l.b16 %v111
  %v853 = vunpack.c.h.b16 %v111
  %v854 = vunpack.c.l.b16 %v112
  %v855 = vunpack.c.h.b16 %v112
  %v856 = vunpack.c.l.b16 %v113
  %v857 = vunpack.c.h.b16 %v113
  %v858 = vunpack.c.l.b16 %v114
  %v859 = vunpack.c.h.b16 %v114
  %v860 = vunpack.c.l.b16 %v115
  %v861 = vunpack.c.h.b16 %v115
  %v862 = vunpack.c.l.b16 %v116
  %v863 = vunpack.c.h.b16 %v116
  %v864 = vunpack.c.l.b16 %v117
  %v865 = vunpack.c.h.b16 %v117
  %v866 = vunpack.c.l.b16 %v118
  %v867 = vunpack.c.h.b16 %v118
  %v868 = vunpack.c.l.b16 %v119
  %v869 = vunpack.c.h.b16 %v119
  %v870 = vunpack.c.l.b16 %v120
  %v871 = vunpack.c.h.b16 %v120
  %v872 = vunpack.c.l.b16 %v121
  %v873 = vunpack.c.h.b16 %v121
  %v874 = vunpack.c.l.b16 %v122
  %v875 = vunpack.c.h.b16 %v122
  %v876 = vunpack.c.l.b16 %v123
  %v877 = vunpack.c.h.b16 %v123
  %v878 = vunpack.c.l.b16 %v124
  %v879 = vunpack.c.h.b16 %v124
  %v880 = vunpack.c.l.b16 %v125
  %v881 = vunpack.c.h.b16 %v125
  %v882 = vunpack.c.l.b16 %v126
  %v883 = vunpack.c.h.b16 %v126
  %v884 = vunpack.c.l.b16 %v127
  %v885 = vunpack.c.h.b16 %v127
  %v886 = vunpack.c.l.b16 %v128
  %v887 = vunpack.c.h.b16 %v128
  %v888 = vunpack.c.l.b16 %v129
  %v889 = vunpack.c.h.b16 %v129
  %v890 = vunpack.c.l.b16 %v130
  %v891 = vunpack.c.h.b16 %v130
  %v892 = vunpack.c.l.b16 %v131
  %v893 = vunpack.c.h.b16 %v131
  %v894 = vunpack.c.l.b16 %v132
  %v895 = vunpack.c.h.b16 %v132
  %v896 = vunpack.c.l.b16 %v133
  %v897 = vunpack.c.h.b16 %v133
  %v898 = vunpack.c.l.b16 %v134
  %v899 = vunpack.c.h.b16 %v134
  %v900 = vunpack.c.l.b16 %v135
  %v901 = vunpack.c.h.b16 %v135
  %v902 = vunpack.c.l.b16 %v136
  %v903 = vunpack.c.h.b16 %v136
  %v904 = vunpack.c.l.b16 %v137
  %v905 = vunpack.c.h.b16 %v137
  %v906 = vunpack.c.l.b16 %v138
  %v907 = vunpack.c.h.b16 %v138
  %v908 = vunpack.c.l.b16 %v139
  %v909 = vunpack.c.h.b16 %v139
  %v910 = vunpack.c.l.b16 %v140
  %v911 = vunpack.c.h.b16 %v140
  %v912 = vunpack.c.l.b16 %v141
  %v913 = vunpack.c.h.b16 %v141
  %v914 = vunpack.c.l.b16 %v142
  %v915 = vunpack.c.h.b16 %v142
  %v916 = vunpack.c.l.b16 %v143
  %v917 = vunpack.c.h.b16 %v143
  %v918 = vunpack.c.l.b16 %v144
  %v919 = vunpack.c.h.b16 %v144
  %v920 = vunpack.c.l.b16 %v145
  %v921 = vunpack.c.h.b16 %v145
  %v922 = vunpack.c.l.b16 %v146
  %v923 = vunpack.c.h.b16 %v146
  %v924 = vunpack.c.l.b16 %v147
  %v925 = vunpack.c.h.b16 %v147
  %v926 = vunpack.c.l.b16 %v148
  %v927 = vunpack.c.h.b16 %v148
  %v928 = vunpack.c.l.b16 %v149
  %v929 = vunpack.c.h.b16 %v149
  %v930 = vunpack.c.l.b16 %v150
  %v931 = vunpack.c.h.b16 %v150
  %v932 = vunpack.c.l.b16 %v151
  %v933 = vunpack.c.h.b16 %v151
  %v934 = vunpack.c.l.b16 %v152
  %v935 = vunpack.c.h.b16 %v152
  %v936 = vunpack.c.l.b16 %v153
  %v937 = vunpack.c.h.b16 %v153
  %v938 = vunpack.c.l.b16 %v154
  %v939 = vunpack.c.h.b16 %v154
  %v940 = vunpack.c.l.b16 %v155
  %v941 = vunpack.c.h.b16 %v155
  %v942 = vunpack.c.l.b16 %v156
  %v943 = vunpack.c.h.b16 %v156
  %v944 = vunpack.c.l.b16 %v157
  %v945 = vunpack.c.h.b16 %v157
  %v946 = vunpack.c.l.b16 %v158
  %v947 = vunpack.c.h.b16 %v158
  %v948 = vunpack.c.l.b16 %v159
  %v949 = vunpack.c.h.b16 %v159
  %v950 = vunpack.c.l.b16 %v160
  %v951 = vunpack.c.h.b16 %v160
  %v952 = vunpack.c.l.b16 %v161
  %v953 = vunpack.c.h.b16 %v161
  %v954 = vunpack.c.l.b16 %v162
  %v955 = vunpack.c.h.b16 %v162
  %v956 = vunpack.c.l.b16 %v163
  %v957 = vunpack.c.h.b16 %v163
  %v958 = vunpack.c.l.b16 %v164
  %v959 = vunpack.c.h.b16 %v164
  %v960 = vunpack.c.l.b16 %v165
  %v961 = vunpack.c.h.b16 %v165
  %v962 = vunpack.c.l.b16 %v166
  %v963 = vunpack.c.h.b16 %v166
  %v964 = vunpack.c.l.b16 %v167
  %v965 = vunpack.c.h.b16 %v167
  %v966 = vunpack.c.l.b16 %v168
  %v967 = vunpack.c.h.b16 %v168
  %v968 = vunpack.c.l.b16 %v169
  %v969 = vunpack.c.h.b16 %v169
  %v970 = vunpack.c.l.b16 %v170
  %v971 = vunpack.c.h.b16 %v170
  %v972 = vunpack.c.l.b16 %v171
  %v973 = vunpack.c.h.b16 %v171
  %v974 = vunpack.c.l.b16 %v172
  %v975 = vunpack.c.h.b16 %v172
  %v976 = vunpack.c.l.b16 %v173
  %v977 = vunpack.c.h.b16 %v173
  %v978 = vunpack.c.l.b16 %v174
  %v979 = vunpack.c.h.b16 %v174
  %v980 = vunpack.c.l.b16 %v175
  %v981 = vunpack.c.h.b16 %v175
  %v982 = vunpack.c.l.b16 %v176
  %v983 = vunpack.c.h.b16 %v176
  %v984 = vunpack.c.l.b16 %v177
  %v985 = vunpack.c.h.b16 %v177
  %v986 = vunpack.c.l.b16 %v178
  %v987 = vunpack.c.h.b16 %v178
  %v988 = vunpack.c.l.b16 %v179
  %v989 = vunpack.c.h.b16 %v179
  %v990 = vunpack.c.l.b16 %v180
  %v991 = vunpack.c.h.b16 %v180
  %v992 = vunpack.c.l.b16 %v181
  %v993 = vunpack.c.h.b16 %v181
  %v994 = vunpack.c.l.b16 %v182
  %v995 = vunpack.c.h.b16 %v182
  %v996 = vunpack.c.l.b16 %v183
  %v997 = vunpack.c.h.b16 %v183
  %v998 = vunpack.c.l.b16 %v184
  %v999 = vunpack.c.h.b16 %v184
  %v1000 = vunpack.c.l.b16 %v185
  %v1001 = vunpack.c.h.b16 %v185
  %v1002 = vunpack.c.l.b16 %v186
  %v1003 = vunpack.c.h.b16 %v186
  %v1004 = vunpack.c.l.b16 %v187
  %v1005 = vunpack.c.h.b16 %v187
  %v1006 = vunpack.c.l.b16 %v188
  %v1007 = vunpack.c.h.b16 %v188
  %v1008 = vunpack.c.l.b16 %v189
  %v1009 = vunpack.c.h.b16 %v189
  %v1010 = vunpack.c.l.b16 %v190
  %v1011 = vunpack.c.h.b16 %v190
  %v1012 = vunpack.c.l.b16 %v191
  %v1013 = vunpack.c.h.b16 %v191
  %v1014 = vunpack.c.l.b16 %v192
  %v1015 = vunpack.c.h.b16 %v192
  %v1016 = vunpack.c.l.b16 %v193
  %v1017 = vunpack.c.h.b16 %v193
  %v1018 = vunpack.c.l.b16 %v194
  %v1019 = vunpack.c.h.b16 %v194
  %v1020 = vunpack.c.l.b16 %v195
  %v1021 = vunpack.c.h.b16 %v195
  %v1022 = vunpack.c.l.b16 %v196
  %v1023 = vunpack.c.h.b16 %v196
  %v1024 = vunpack.c.l.b16 %v197
  %v1025 = vunpack.c.h.b16 %v197
  %v1026 = vunpack.c.l.b16 %v198
  %v1027 = vunpack.c.h.b16 %v198
  %v1028 = vunpack.c.l.b16 %v199
  %v1029 = vunpack.c.h.b16 %v199
  %v1030 = vunpack.c.l.b16 %v200
  %v1031 = vunpack.c.h.b16 %v200
  %v1032 = vunpack.c.l.b16 %v201
  %v1033 = vunpack.c.h.b16 %v201
  %v1034 = vunpack.c.l.b16 %v202
  %v1035 = vunpack.c.h.b16 %v202
  %v1036 = vunpack.c.l.b16 %v203
  %v1037 = vunpack.c.h.b16 %v203
  %v1038 = vunpack.c.l.b16 %v204
  %v1039 = vunpack.c.h.b16 %v204
  %v1040 = vunpack.c.l.b16 %v205
  %v1041 = vunpack.c.h.b16 %v205
  %v1042 = vunpack.c.l.b16 %v206
  %v1043 = vunpack.c.h.b16 %v206
  %v1044 = vunpack.c.l.b16 %v207
  %v1045 = vunpack.c.h.b16 %v207
  %v1046 = vunpack.c.l.b16 %v208
  %v1047 = vunpack.c.h.b16 %v208
  %v1048 = vunpack.c.l.b16 %v209
  %v1049 = vunpack.c.h.b16 %v209
  %v1050 = vunpack.c.l.b16 %v210
  %v1051 = vunpack.c.h.b16 %v210
  %v1052 = vunpack.c.l.b16 %v211
  %v1053 = vunpack.c.h.b16 %v211
  %v1054 = vunpack.c.l.b16 %v212
  %v1055 = vunpack.c.h.b16 %v212
  %v1056 = vunpack.c.l.b16 %v213
  %v1057 = vunpack.c.h.b16 %v213
  %v1058 = vunpack.c.l.b16 %v214
  %v1059 = vunpack.c.h.b16 %v214
  %v1060 = vunpack.c.l.b16 %v215
  %v1061 = vunpack.c.h.b16 %v215
  %v1062 = vunpack.c.l.b16 %v216
  %v1063 = vunpack.c.h.b16 %v216
  %v1064 = vunpack.c.l.b16 %v217
  %v1065 = vunpack.c.h.b16 %v217
  %v1066 = vunpack.c.l.b16 %v218
  %v1067 = vunpack.c.h.b16 %v218
  %v1068 = vunpack.c.l.b16 %v219
  %v1069 = vunpack.c.h.b16 %v219
  %v1070 = vunpack.c.l.b16 %v220
  %v1071 = vunpack.c.h.b16 %v220
  %v1072 = vunpack.c.l.b16 %v221
  %v1073 = vunpack.c.h.b16 %v221
  %v1074 = vunpack.c.l.b16 %v222
  %v1075 = vunpack.c.h.b16 %v222
  %v1076 = vunpack.c.l.b16 %v223
  %v1077 = vunpack.c.h.b16 %v223
  %v1078 = vunpack.c.l.b16 %v224
  %v1079 = vunpack.c.h.b16 %v224
  %v1080 = vunpack.c.l.b16 %v225
  %v1081 = vunpack.c.h.b16 %v225
  %v1082 = vunpack.c.l.b16 %v226
  %v1083 = vunpack.c.h.b16 %v226
  %v1084 = vunpack.c.l.b16 %v227
  %v1085 = vunpack.c.h.b16 %v227
  %v1086 = vunpack.c.l.b16 %v228
  %v1087 = vunpack.c.h.b16 %v228
  %v1088 = vunpack.c.l.b16 %v229
  %v1089 = vunpack.c.h.b16 %v229
  %v1090 = vunpack.c.l.b16 %v230
  %v1091 = vunpack.c.h.b16 %v230
  %v1092 = vunpack.c.l.b16 %v231
  %v1093 = vunpack.c.h.b16 %v231
  %v1094 = vunpack.c.l.b16 %v232
  %v1095 = vunpack.c.h.b16 %v232
  %v1096 = vunpack.c.l.b16 %v233
  %v1097 = vunpack.c.h.b16 %v233
  %v1098 = vunpack.c.l.b16 %v234
  %v1099 = vunpack.c.h.b16 %v234
  %v1100 = vunpack.c.l.b16 %v235
  %v1101 = vunpack.c.h.b16 %v235
  %v1102 = vunpack.c.l.b16 %v236
  %v1103 = vunpack.c.h.b16 %v236
  %v1104 = vunpack.c.l.b16 %v237
  %v1105 = vunpack.c.h.b16 %v237
  %v1106 = vunpack.c.l.b16 %v238
  %v1107 = vunpack.c.h.b16 %v238
  %v1108 = vunpack.c.l.b16 %v239
  %v1109 = vunpack.c.h.b16 %v239
  %v1110 = vunpack.c.l.b16 %v240
  %v1111 = vunpack.c.h.b16 %v240
  %v1112 = vunpack.c.l.b16 %v241
  %v1113 = vunpack.c.h.b16 %v241
  %v1114 = vunpack.c.l.b16 %v242
  %v1115 = vunpack.c.h.b16 %v242
  %v1116 = vunpack.c.l.b16 %v243
  %v1117 = vunpack.c.h.b16 %v243
  %v1118 = vunpack.c.l.b16 %v244
  %v1119 = vunpack.c.h.b16 %v244
  %v1120 = vunpack.c.l.b16 %v245
  %v1121 = vunpack.c.h.b16 %v245
  %v1122 = vunpack.c.l.b16 %v246
  %v1123 = vunpack.c.h.b16 %v246
  %v1124 = vunpack.c.l.b16 %v247
  %v1125 = vunpack.c.h.b16 %v247
  %v1126 = vunpack.c.l.b16 %v248
  %v1127 = vunpack.c.h.b16 %v248
  %v1128 = vunpack.c.l.b16 %v249
  %v1129 = vunpack.c.h.b16 %v249
  %v1130 = vunpack.c.l.b16 %v250
  %v1131 = vunpack.c.h.b16 %v250
  %v1132 = vunpack.c.l.b16 %v251
  %v1133 = vunpack.c.h.b16 %v251
  %v1134 = vunpack.c.l.b16 %v252
  %v1135 = vunpack.c.h.b16 %v252
  %v1136 = vunpack.c.l.b16 %v253
  %v1137 = vunpack.c.h.b16 %v253
  %v1138 = vunpack.c.l.b16 %v254
  %v1139 = vunpack.c.h.b16 %v254
  %v1140 = vunpack.c.l.b16 %v255
  %v1141 = vunpack.c.h.b16 %v255
  %v1142 = vunpack.c.l.b16 %v256
  %v1143 = vunpack.c.h.b16 %v256
  %v1144 = vunpack.c.l.b16 %v257
  %v1145 = vunpack.c.h.b16 %v257
  %v1146 = vunpack.c.l.b16 %v258
  %v1147 = vunpack.c.h.b16 %v258
  %v1148 = vunpack.c.l.b16 %v259
  %v1149 = vunpack.c.h.b16 %v259
  %v1150 = vunpack.c.l.b16 %v260
  %v1151 = vunpack.c.h.b16 %v260
  %v1152 = vunpack.c.l.b16 %v261
  %v1153 = vunpack.c.h.b16 %v261
  %v1154 = vunpack.c.l.b16 %v262
  %v1155 = vunpack.c.h.b16 %v262
  %v1156 = vunpack.c.l.b16 %v263
  %v1157 = vunpack.c.h.b16 %v263
  %v1158 = vunpack.c.l.b16 %v264
  %v1159 = vunpack.c.h.b16 %v264
  %v1160 = vunpack.c.l.b16 %v265
  %v1161 = vunpack.c.h.b16 %v265
  %v1162 = vunpack.c.l.b16 %v266
  %v1163 = vunpack.c.h.b16 %v266
  %v1164 = vunpack.c.l.b16 %v267
  %v1165 = vunpack.c.h.b16 %v267
  %v1166 = vunpack.c.l.b16 %v268
  %v1167 = vunpack.c.h.b16 %v268
  %v1168 = vunpack.c.l.b16 %v269
  %v1169 = vunpack.c.h.b16 %v269
  %v1170 = vunpack.c.l.b16 %v270
  %v1171 = vunpack.c.h.b16 %v270
  %v1172 = vunpack.c.l.b16 %v271
  %v1173 = vunpack.c.h.b16 %v271
  %v1174 = vunpack.c.l.b16 %v272
  %v1175 = vunpack.c.h.b16 %v272
  %v1176 = vunpack.c.l.b16 %v273
  %v1177 = vunpack.c.h.b16 %v273
  %v1178 = vunpack.c.l.b16 %v274
  %v1179 = vunpack.c.h.b16 %v274
  %v1180 = vunpack.c.l.b16 %v275
  %v1181 = vunpack.c.h.b16 %v275
  %v1182 = vunpack.c.l.b16 %v276
  %v1183 = vunpack.c.h.b16 %v276
  %v1184 = vunpack.c.l.b16 %v277
  %v1185 = vunpack.c.h.b16 %v277
  %v1186 = vunpack.c.l.b16 %v278
  %v1187 = vunpack.c.h.b16 %v278
  %v1188 = vunpack.c.l.b16 %v279
  %v1189 = vunpack.c.h.b16 %v279
  %v1190 = vunpack.c.l.b16 %v280
  %v1191 = vunpack.c.h.b16 %v280
  %v1192 = vunpack.c.l.b16 %v281
  %v1193 = vunpack.c.h.b16 %v281
  %v1194 = vunpack.c.l.b16 %v282
  %v1195 = vunpack.c.h.b16 %v282
  %v1196 = vunpack.c.l.b16 %v283
  %v1197 = vunpack.c.h.b16 %v283
  %v1198 = vunpack.c.l.b16 %v284
  %v1199 = vunpack.c.h.b16 %v284
  %v1200 = vunpack.c.l.b16 %v285
  %v1201 = vunpack.c.h.b16 %v285
  %v1202 = vunpack.c.l.b16 %v286
  %v1203 = vunpack.c.h.b16 %v286
  %v1204 = vunpack.c.l.b16 %v287
  %v1205 = vunpack.c.h.b16 %v287
  %v1206 = vunpack.c.l.b16 %v288
  %v1207 = vunpack.c.h.b16 %v288
  %v1208 = vunpack.c.l.b16 %v289
  %v1209 = vunpack.c.h.b16 %v289
  %v1210 = vunpack.c.l.b16 %v290
  %v1211 = vunpack.c.h.b16 %v290
  %v1212 = vunpack.c.l.b16 %v291
  %v1213 = vunpack.c.h.b16 %v291
  %v1214 = vunpack.c.l.b16 %v292
  %v1215 = vunpack.c.h.b16 %v292
  %v1216 = vunpack.c.l.b16 %v293
  %v1217 = vunpack.c.h.b16 %v293
  %v1218 = vunpack.c.l.b16 %v294
  %v1219 = vunpack.c.h.b16 %v294
  %v1220 = vunpack.c.l.b16 %v295
  %v1221 = vunpack.c.h.b16 %v295
  %v1222 = vunpack.c.l.b16 %v296
  %v1223 = vunpack.c.h.b16 %v296
  %v1224 = vunpack.c.l.b16 %v297
  %v1225 = vunpack.c.h.b16 %v297
  %v1226 = vunpack.c.l.b16 %v298
  %v1227 = vunpack.c.h.b16 %v298
  %v1228 = vunpack.c.l.b16 %v299
  %v1229 = vunpack.c.h.b16 %v299
  %v1230 = vunpack.c.l.b16 %v300
  %v1231 = vunpack.c.h.b16 %v300
  %v1232 = vunpack.c.l.b16 %v301
  %v1233 = vunpack.c.h.b16 %v301
  %v1234 = vunpack.c.l.b16 %v302
  %v1235 = vunpack.c.h.b16 %v302
  %v1236 = vunpack.c.l.b16 %v303
  %v1237 = vunpack.c.h.b16 %v303
  %v1238 = vunpack.c.l.b16 %v304
  %v1239 = vunpack.c.h.b16 %v304
  %v1240 = vunpack.c.l.b16 %v305
  %v1241 = vunpack.c.h.b16 %v305
  %v1242 = vunpack.c.l.b16 %v306
  %v1243 = vunpack.c.h.b16 %v306
  %v1244 = vunpack.c.l.b16 %v307
  %v1245 = vunpack.c.h.b16 %v307
  %v1246 = vunpack.c.l.b16 %v308
  %v1247 = vunpack.c.h.b16 %v308
  %v1248 = vunpack.c.l.b16 %v309
  %v1249 = vunpack.c.h.b16 %v309
  %v1250 = vunpack.c.l.b16 %v310
  %v1251 = vunpack.c.h.b16 %v310
  %v1252 = vunpack.c.l.b16 %v311
  %v1253 = vunpack.c.h.b16 %v311
  %v1254 = vunpack.c.l.b16 %v312
  %v1255 = vunpack.c.h.b16 %v312
  %v1256 = vunpack.c.l.b16 %v313
  %v1257 = vunpack.c.h.b16 %v313
  %v1258 = vunpack.c.l.b16 %v314
  %v1259 = vunpack.c.h.b16 %v314
  %v1260 = vunpack.c.l.b16 %v315
  %v1261 = vunpack.c.h.b16 %v315
  %v1262 = vunpack.c.l.b16 %v316
  %v1263 = vunpack.c.h.b16 %v316
  %v1264 = vunpack.c.l.b16 %v317
  %v1265 = vunpack.c.h.b16 %v317
  %v1266 = vunpack.c.l.b16 %v318
  %v1267 = vunpack.c.h.b16 %v318
  %v1268 = vunpack.c.l.b16 %v319
  %v1269 = vunpack.c.h.b16 %v319
  %v1270 = vunpack.c.l.b16 %v320
  %v1271 = vunpack.c.h.b16 %v320
  %v1272 = vunpack.c.l.b16 %v321
  %v1273 = vunpack.c.h.b16 %v321
  %v1274 = vunpack.c.l.b16 %v322
  %v1275 = vunpack.c.h.b16 %v322
  %v1276 = vunpack.c.l.b16 %v323
  %v1277 = vunpack.c.h.b16 %v323
  %v1278 = vunpack.c.l.b16 %v324
  %v1279 = vunpack.c.h.b16 %v324
  %v1280 = vunpack.c.l.b16 %v325
  %v1281 = vunpack.c.h.b16 %v325
  %v1282 = vunpack.c.l.b16 %v326
  %v1283 = vunpack.c.h.b16 %v326
  %v1284 = vunpack.c.l.b16 %v327
  %v1285 = vunpack.c.h.b16 %v327
  %v1286 = vunpack.c.l.b16 %v328
  %v1287 = vunpack.c.h.b16 %v328
  %v1288 = vunpack.c.l.b16 %v329
  %v1289 = vunpack.c.h.b16 %v329
  %v1290 = vunpack.c.l.b16 %v330
  %v1291 = vunpack.c.h.b16 %v330
  %v1292 = vunpack.c.l.b16 %v331
  %v1293 = vunpack.c.h.b16 %v331
  %v1294 = vunpack.c.l.b16 %v332
  %v1295 = vunpack.c.h.b16 %v332
  %v1296 = vunpack.c.l.b16 %v333
  %v1297 = vunpack.c.h.b16 %v333
  %v1298 = vunpack.c.l.b16 %v334
  %v1299 = vunpack.c.h.b16 %v334
  %v1300 = vunpack.c.l.b16 %v335
  %v1301 = vunpack.c.h.b16 %v335
  %v1302 = vpack.c.b16 %v726, %v662
  %v1303 = vpack.c.b16 %v727, %v663
  %v1304 = vpack.c.b16 %v728, %v664
  %v1305 = vpack.c.b16 %v729, %v665
  %v1306 = vpack.c.b16 %v730, %v666
  %v1307 = vpack.c.b16 %v731, %v667
  %v1308 = vpack.c.b16 %v732, %v668
  %v1309 = vpack.c.b16 %v733, %v669
  %v1310 = vpack.c.b16 %v734, %v670
  %v1311 = vpack.c.b16 %v735, %v671
  %v1312 = vpack.c.b16 %v736, %v672
  %v1313 = vpack.c.b16 %v737, %v673
  %v1314 = vpack.c.b16 %v738, %v674
  %v1315 = vpack.c.b16 %v739, %v675
  %v1316 = vpack.c.b16 %v740, %v676
  %v1317 = vpack.c.b16 %v741, %v677
  %v1318 = vpack.c.b16 %v742, %v678
  %v1319 = vpack.c.b16 %v743, %v679
  %v1320 = vpack.c.b16 %v744, %v680
  %v1321 = vpack.c.b16 %v745, %v681
  %v1322 = vpack.c.b16 %v746, %v682
  %v1323 = vpack.c.b16 %v747, %v683
  %v1324 = vpack.c.b16 %v748, %v684
  %v1325 = vpack.c.b16 %v749, %v685
  %v1326 = vpack.c.b16 %v750, %v686
  %v1327 = vpack.c.b16 %v751, %v687
  %v1328 = vpack.c.b16 %v752, %v688
  %v1329 = vpack.c.b16 %v753, %v689
  %v1330 = vpack.c.b16 %v754, %v690
  %v1331 = vpack.c.b16 %v755, %v691
  %v1332 = vpack.c.b16 %v756, %v692
  %v1333 = vpack.c.b16 %v757, %v693
  %v1334 = vpack.c.b16 %v758, %v694
  %v1335 = vpack.c.b16 %v759, %v695
  %v1336 = vpack.c.b16 %v760, %v696
  %v1337 = vpack.c.b16 %v761, %v697
  %v1338 = vpack.c.b16 %v762, %v698
  %v1339 = vpack.c.b16 %v763, %v699
  %v1340 = vpack.c.b16 %v764, %v700
  %v1341 = vpack.c.b16 %v765, %v701
  %v1342 = vpack.c.b16 %v766, %v702
  %v1343 = vpack.c.b16 %v767, %v703
  %v1344 = vpack.c.b16 %v768, %v704
  %v1345 = vpack.c.b16 %v769, %v705
  %v1346 = vpack.c.b16 %v770, %v706
  %v1347 = vpack.c.b16 %v771, %v707
  %v1348 = vpack.c.b16 %v772, %v708
  %v1349 = vpack.c.b16 %v773, %v709
  %v1350 = vpack.c.b16 %v774, %v710
  %v1351 = vpack.c.b16 %v775, %v711
  %v1352 = vpack.c.b16 %v776, %v712
  %v1353 = vpack.c.b16 %v777, %v713
  %v1354 = vpack.c.b16 %v778, %v714
  %v1355 = vpack.c.b16 %v779, %v715
  %v1356 = vpack.c.b16 %v780, %v716
  %v1357 = vpack.c.b16 %v781, %v717
  %v1358 = vpack.c.b16 %v782, %v718
  %v1359 = vpack.c.b16 %v783, %v719
  %v1360 = vpack.c.b16 %v784, %v720
  %v1361 = vpack.c.b16 %v785, %v721
  %v1362 = vpack.c.b16 %v786, %v722
  %v1363 = vpack.c.b16 %v787, %v723
  %v1364 = vpack.c.b16 %v788, %v724
  %v1365 = vpack.c.b16 %v789, %v725
  %v1366 = vpack.c.b16 %v854, %v790
  %v1367 = vpack.c.b16 %v855, %v791
  %v1368 = vpack.c.b16 %v856, %v792
  %v1369 = vpack.c.b16 %v857, %v793
  %v1370 = vpack.c.b16 %v858, %v794
  %v1371 = vpack.c.b16 %v859, %v795
  %v1372 = vpack.c.b16 %v860, %v796
  %v1373 = vpack.c.b16 %v861, %v797
  %v1374 = vpack.c.b16 %v862, %v798
  %v1375 = vpack.c.b16 %v863, %v799
  %v1376 = vpack.c.b16 %v864, %v800
  %v1377 = vpack.c.b16 %v865, %v801
  %v1378 = vpack.c.b16 %v866, %v802
  %v1379 = vpack.c.b16 %v867, %v803
  %v1380 = vpack.c.b16 %v868, %v804
  %v1381 = vpack.c.b16 %v869, %v805
  %v1382 = vpack.c.b16 %v870, %v806
  %v1383 = vpack.c.b16 %v871, %v807
  %v1384 = vpack.c.b16 %v872, %v808
  %v1385 = vpack.c.b16 %v873, %v809
  %v1386 = vpack.c.b16 %v874, %v810
  %v1387 = vpack.c.b16 %v875, %v811
  %v1388 = vpack.c.b16 %v876, %v812
  %v1389 = vpack.c.b16 %v877, %v813
  %v1390 = vpack.c.b16 %v878, %v814
  %v1391 = vpack.c.b16 %v879, %v815
  %v1392 = vpack.c.b16 %v880, %v816
  %v1393 = vpack.c.b16 %v881, %v817
  %v1394 = vpack.c.b16 %v882, %v818
  %v1395 = vpack.c.b16 %v883, %v819
  %v1396 = vpack.c.b16 %v884, %v820
  %v1397 = vpack.c.b16 %v885, %v821
  %v1398 = vpack.c.b16 %v886, %v822
  %v1399 = vpack.c.b16 %v887, %v823
  %v1400 = vpack.c.b16 %v888, %v824
  %v1401 = vpack.c.b16 %v889, %v825
  %v1402 = vpack.c.b16 %v890, %v826
  %v1403 = vpack.c.b16 %v891, %v827
  %v1404 = vpack.c.b16 %v892, %v828
  %v1405 = vpack.c.b16 %v893, %v829
  %v1406 = vpack.c.b16 %v894, %v830
  %v1407 = vpack.c.b16 %v895, %v831
  %v1408 = vpack.c.b16 %v896, %v832
  %v1409 = vpack.c.b16 %v897, %v833
  %v1410 = vpack.c.b16 %v898, %v834
  %v1411 = vpack.c.b16 %v899, %v835
  %v1412 = vpack.c.b16 %v900, %v836
  %v1413 = vpack.c.b16 %v901, %v837
  %v1414 = vpack.c.b16 %v902, %v838
  %v1415 = vpack.c.b16 %v903, %v839
  %v1416 = vpack.c.b16 %v904, %v840
  %v1417 = vpack.c.b16 %v905, %v841
  %v1418 = vpack.c.b16 %v906, %v842
  %v1419 = vpack.c.b16 %v907, %v843
  %v1420 = vpack.c.b16 %v908, %v844
  %v1421 = vpack.c.b16 %v909, %v845
  %v1422 = vpack.c.b16 %v910, %v846
  %v1423 = vpack.c.b16 %v911, %v847
  %v1424 = vpack.c.b16 %v912, %v848
  %v1425 = vpack.c.b16 %v913, %v849
  %v1426 = vpack.c.b16 %v914, %v850
  %v1427 = vpack.c.b16 %v915, %v851
  %v1428 = vpack.c.b16 %v916, %v852
  %v1429 = vpack.c.b16 %v917, %v853
  %v1430 = vpack.c.b16 %v982, %v918
  %v1431 = vpack.c.b16 %v983, %v919
  %v1432 = vpack.c.b16 %v984, %v920
  %v1433 = vpack.c.b16 %v985, %v921
  %v1434 = vpack.c.b16 %v986, %v922
  %v1435 = vpack.c.b16 %v987, %v923
  %v1436 = vpack.c.b16 %v988, %v924
  %v1437 = vpack.c.b16 %v989, %v925
  %v1438 = vpack.c.b16 %v990, %v926
  %v1439 = vpack.c.b16 %v991, %v927
  %v1440 = vpack.c.b16 %v992, %v928
  %v1441 = vpack.c.b16 %v993, %v929
  %v1442 = vpack.c.b16 %v994, %v930
  %v1443 = vpack.c.b16 %v995, %v931
  %v1444 = vpack.c.b16 %v996, %v932
  %v1445 = vpack.c.b16 %v997, %v933
  %v1446 = vpack.c.b16 %v998, %v934
  %v1447 = vpack.c.b16 %v999, %v935
  %v1448 = vpack.c.b16 %v1000, %v936
  %v1449 = vpack.c.b16 %v1001, %v937
  %v1450 = vpack.c.b16 %v1002, %v938
  %v1451 = vpack.c.b16 %v1003, %v939
  %v1452 = vpack.c.b16 %v1004, %v940
  %v1453 = vpack.c.b16 %v1005, %v941
  %v1454 = vpack.c.b16 %v1006, %v942
  %v1455 = vpack.c.b16 %v1007, %v943
  %v1456 = vpack.c.b16 %v1008, %v944
  %v1457 = vpack.c.b16 %v1009, %v945
  %v1458 = vpack.c.b16 %v1010, %v946
  %v1459 = vpack.c.b16 %v1011, %v947
  %v1460 = vpack.c.b16 %v1012, %v948
  %v1461 = vpack.c.b16 %v1013, %v949
  %v1462 = vpack.c.b16 %v1014, %v950
  %v1463 = vpack.c.b16 %v1015, %v951
  %v1464 = vpack.c.b16 %v1016, %v952
  %v1465 = vpack.c.b16 %v1017, %v953
  %v1466 = vpack.c.b16 %v1018, %v954
  %v1467 = vpack.c.b16 %v1019, %v955
  %v1468 = vpack.c.b16 %v1020, %v956
  %v1469 = vpack.c.b16 %v1021, %v957
  %v1470 = vpack.c.b16 %v1022, %v958
  %v1471 = vpack.c.b16 %v1023, %v959
  %v1472 = vpack.c.b16 %v1024, %v960
  %v1473 = vpack.c.b16 %v1025, %v961
  %v1474 = vpack.c.b16 %v1026, %v962
  %v1475 = vpack.c.b16 %v1027, %v963
  %v1476 = vpack.c.b16 %v1028, %v964
  %v1477 = vpack.c.b16 %v1029, %v965
  %v1478 = vpack.c.b16 %v1030, %v966
  %v1479 = vpack.c.b16 %v1031, %v967
  %v1480 = vpack.c.b16 %v1032, %v968
  %v1481 = vpack.c.b16 %v1033, %v969
  %v1482 = vpack.c.b16 %v1034, %v970
  %v1483 = vpack.c.b16 %v1035, %v971
  %v1484 = vpack.c.b16 %v1036, %v972
  %v1485 = vpack.c.b16 %v1037, %v973
  %v1486 = vpack.c.b16 %v1038, %v974
  %v1487 = vpack.c.b16 %v1039, %v975
  %v1488 = vpack.c.b16 %v1040, %v976
  %v1489 = vpack.c.b16 %v1041, %v977
  %v1490 = vpack.c.b16 %v1042, %v978
  %v1491 = vpack.c.b16 %v1043, %v979
  %v1492 = vpack.c.b16 %v1044, %v980
  %v1493 = vpack.c.b16 %v1045, %v981
  %v1494 = vpack.c.b16 %v1110, %v1046
  %v1495 = vpack.c.b16 %v1111, %v1047
  %v1496 = vpack.c.b16 %v1112, %v1048
  %v1497 = vpack.c.b16 %v1113, %v1049
  %v1498 = vpack.c.b16 %v1114, %v1050
  %v1499 = vpack.c.b16 %v1115, %v1051
  %v1500 = vpack.c.b16 %v1116, %v1052
  %v1501 = vpack.c.b16 %v1117, %v1053
  %v1502 = vpack.c.b16 %v1118, %v1054
  %v1503 = vpack.c.b16 %v1119, %v1055
  %v1504 = vpack.c.b16 %v1120, %v1056
  %v1505 = vpack.c.b16 %v1121, %v1057
  %v1506 = vpack.c.b16 %v1122, %v1058
  %v1507 = vpack.c.b16 %v1123, %v1059
  %v1508 = vpack.c.b16 %v1124, %v1060
  %v1509 = vpack.c.b16 %v1125, %v1061
  %v1510 = vpack.c.b16 %v1126, %v1062
  %v1511 = vpack.c.b16 %v1127, %v1063
  %v1512 = vpack.c.b16 %v1128, %v1064
  %v1513 = vpack.c.b16 %v1129, %v1065
  %v1514 = vpack.c.b16 %v1130, %v1066
  %v1515 = vpack.c.b16 %v1131, %v1067
  %v1516 = vpack.c.b16 %v1132, %v1068
  %v1517 = vpack.c.b16 %v1133, %v1069
  %v1518 = vpack.c.b16 %v1134, %v1070
  %v1519 = vpack.c.b16 %v1135, %v1071
  %v1520 = vpack.c.b16 %v1136, %v1072
  %v1521 = vpack.c.b16 %v1137, %v1073
  %v1522 = vpack.c.b16 %v1138, %v1074
  %v1523 = vpack.c.b16 %v1139, %v1075
  %v1524 = vpack.c.b16 %v1140, %v1076
  %v1525 = vpack.c.b16 %v1141, %v1077
  %v1526 = vpack.c.b16 %v1142, %v1078
  %v1527 = vpack.c.b16 %v1143, %v1079
  %v1528 = vpack.c.b16 %v1144, %v1080
  %v1529 = vpack.c.b16 %v1145, %v1081
  %v1530 = vpack.c.b16 %v1146, %v1082
  %v1531 = vpack.c.b16 %v1147, %v1083
  %v1532 = vpack.c.b16 %v1148, %v1084
  %v1533 = vpack.c.b16 %v1149, %v1085
  %v1534 = vpack.c.b16 %v1150, %v1086
  %v1535 = vpack.c.b16 %v1151, %v1087
  %v1536 = vpack.c.b16 %v1152, %v1088
  %v1537 = vpack.c.b16 %v1153, %v1089
  %v1538 = vpack.c.b16 %v1154, %v1090
  %v1539 = vpack.c.b16 %v1155, %v1091
  %v1540 = vpack.c.b16 %v1156, %v1092
  %v1541 = vpack.c.b16 %v1157, %v1093
  %v1542 = vpack.c.b16 %v1158, %v1094
  %v1543 = vpack.c.b16 %v1159, %v1095
  %v1544 = vpack.c.b16 %v1160, %v1096
  %v1545 = vpack.c.b16 %v1161, %v1097
  %v1546 = vpack.c.b16 %v1162, %v1098
  %v1547 = vpack.c.b16 %v1163, %v1099
  %v1548 = vpack.c.b16 %v1164, %v1100
  %v1549 = vpack.c.b16 %v1165, %v1101
  %v1550 = vpack.c.b16 %v1166, %v1102
  %v1551 = vpack.c.b16 %v1167, %v1103
  %v1552 = vpack.c.b16 %v1168, %v1104
  %v1553 = vpack.c.b16 %v1169, %v1105
  %v1554 = vpack.c.b16 %v1170, %v1106
  %v1555 = vpack.c.b16 %v1171, %v1107
  %v1556 = vpack.c.b16 %v1172, %v1108
  %v1557 = vpack.c.b16 %v1173, %v1109
  %v1558 = vpack.c.b16 %v1238, %v1174
  %v1559 = vpack.c.b16 %v1239, %v1175
  %v1560 = vpack.c.b16 %v1240, %v1176
  %v1561 = vpack.c.b16 %v1241, %v1177
  %v1562 = vpack.c.b16 %v1242, %v1178
  %v1563 = vpack.c.b16 %v1243, %v1179
  %v1564 = vpack.c.b16 %v1244, %v1180
  %v1565 = vpack.c.b16 %v1245, %v1181
  %v1566 = vpack.c.b16 %v1246, %v1182
  %v1567 = vpack.c.b16 %v1247, %v1183
  %v1568 = vpack.c.b16 %v1248, %v1184
  %v1569 = vpack.c.b16 %v1249, %v1185
  %v1570 = vpack.c.b16 %v1250, %v1186
  %v1571 = vpack.c.b16 %v1251, %v1187
  %v1572 = vpack.c.b16 %v1252, %v1188
  %v1573 = vpack.c.b16 %v1253, %v1189
  %v1574 = vpack.c.b16 %v1254, %v1190
  %v1575 = vpack.c.b16 %v1255, %v1191
  %v1576 = vpack.c.b16 %v1256, %v1192
  %v1577 = vpack.c.b16 %v1257, %v1193
  %v1578 = vpack.c.b16 %v1258, %v1194
  %v1579 = vpack.c.b16 %v1259, %v1195
  %v1580 = vpack.c.b16 %v1260, %v1196
  %v1581 = vpack.c.b16 %v1261, %v1197
  %v1582 = vpack.c.b16 %v1262, %v1198
  %v1583 = vpack.c.b16 %v1263, %v1199
  %v1584 = vpack.c.b16 %v1264, %v1200
  %v1585 = vpack.c.b16 %v1265, %v1201
  %v1586 = vpack.c.b16 %v1266, %v1202
  %v1587 = vpack.c.b16 %v1267, %v1203
  %v1588 = vpack.c.b16 %v1268, %v1204
  %v1589 = vpack.c.b16 %v1269, %v1205
  %v1590 = vpack.c.b16 %v1270, %v1206
  %v1591 = vpack.c.b16 %v1271, %v1207
  %v1592 = vpack.c.b16 %v1272, %v1208
  %v1593 = vpack.c.b16 %v1273, %v1209
  %v1594 = vpack.c.b16 %v1274, %v1210
  %v1595 = vpack.c.b16 %v1275, %v1211
  %v1596 = vpack.c.b16 %v1276, %v1212
  %v1597 = vpack.c.b16 %v1277, %v1213
  %v1598 = vpack.c.b16 %v1278, %v1214
  %v1599 = vpack.c.b16 %v1279, %v1215
  %v1600 = vpack.c.b16 %v1280, %v1216
  %v1601 = vpack.c.b16 %v1281, %v1217
  %v1602 = vpack.c.b16 %v1282, %v1218
  %v1603 = vpack.c.b16 %v1283, %v1219
  %v1604 = vpack.c.b16 %v1284, %v1220
  %v1605 = vpack.c.b16 %v1285, %v1221
  %v1606 = vpack.c.b16 %v1286, %v1222
  %v1607 = vpack.c.b16 %v1287, %v1223
  %v1608 = vpack.c.b16 %v1288, %v1224
  %v1609 = vpack.c.b16 %v1289, %v1225
  %v1610 = vpack.c.b16 %v1290, %v1226
  %v1611 = vpack.c.b16 %v1291, %v1227
  %v1612 = vpack.c.b16 %v1292, %v1228
  %v1613 = vpack.c.b16 %v1293, %v1229
  %v1614 = vpack.c.b16 %v1294, %v1230
  %v1615 = vpack.c.b16 %v1295, %v1231
  %v1616 = vpack.c.b16 %v1296, %v1232
  %v1617 = vpack.c.b16 %v1297, %v1233
  %v1618 = vpack.c.b16 %v1298, %v1234
  %v1619 = vpack.c.b16 %v1299, %v1235
  %v1620 = vpack.c.b16 %v1300, %v1236
  %v1621 = vpack.c.b16 %v1301, %v1237
  %vm1878 = vcmask 613376
  %v1880 = vsel %vm1878, %v15, 0
  %vm1882 = vcmask 1044480
  %vm1883 = vcmask 1045504
  %v1884 = vsel %vm1882, 4294967295, 65535
  %v1885 = vsel %vm1883, %v1884, 0
  %v1887 = vand.u32 %v1558, %v1885
  %v1890 = vand.u32 %v1559, %v1885
  %v1893 = vand.u32 %v1560, %v1885
  %v1896 = vand.u32 %v1561, %v1885
  %v1899 = vand.u32 %v1562, %v1885
  %v1902 = vand.u32 %v1563, %v1885
  %v1905 = vand.u32 %v1564, %v1885
  %v1908 = vand.u32 %v1565, %v1885
  %v1911 = vand.u32 %v1566, %v1885
  %v1914 = vand.u32 %v1567, %v1885
  %v1917 = vand.u32 %v1568, %v1885
  %v1920 = vand.u32 %v1569, %v1885
  %v1923 = vand.u32 %v1570, %v1885
  %v1926 = vand.u32 %v1571, %v1885
  %v1929 = vand.u32 %v1572, %v1885
  %v1932 = vand.u32 %v1573, %v1885
  %v1935 = vand.u32 %v1574, %v1885
  %v1938 = vand.u32 %v1575, %v1885
  %v1941 = vand.u32 %v1576, %v1885
  %v1944 = vand.u32 %v1577, %v1885
  %v1947 = vand.u32 %v1578, %v1885
  %v1950 = vand.u32 %v1579, %v1885
  %v1953 = vand.u32 %v1580, %v1885
  %v1956 = vand.u32 %v1581, %v1885
  %v1959 = vand.u32 %v1582, %v1885
  %v1962 = vand.u32 %v1583, %v1885
  %v1965 = vand.u32 %v1584, %v1885
  %v1968 = vand.u32 %v1585, %v1885
  %v1971 = vand.u32 %v1586, %v1885
  %v1974 = vand.u32 %v1587, %v1885
  %v1977 = vand.u32 %v1588, %v1885
  %v1980 = vand.u32 %v1589, %v1885
  %v1983 = vand.u32 %v1590, %v1885
  %v1986 = vand.u32 %v1591, %v1885
  %v1989 = vand.u32 %v1592, %v1885
  %v1992 = vand.u32 %v1593, %v1885
  %v1995 = vand.u32 %v1594, %v1885
  %v1998 = vand.u32 %v1595, %v1885
  %v2001 = vand.u32 %v1596, %v1885
  %v2004 = vand.u32 %v1597, %v1885
  %v2007 = vand.u32 %v1598, %v1885
  %v2010 = vand.u32 %v1599, %v1885
  %v2013 = vand.u32 %v1600, %v1885
  %v2016 = vand.u32 %v1601, %v1885
  %v2019 = vand.u32 %v1602, %v1885
  %v2022 = vand.u32 %v1603, %v1885
  %v2025 = vand.u32 %v1604, %v1885
  %v2028 = vand.u32 %v1605, %v1885
  %v2031 = vand.u32 %v1606, %v1885
  %v2034 = vand.u32 %v1607, %v1885
  %v2037 = vand.u32 %v1608, %v1885
  %v2040 = vand.u32 %v1609, %v1885
  %v2043 = vand.u32 %v1610, %v1885
  %v2046 = vand.u32 %v1611, %v1885
  %v2049 = vand.u32 %v1612, %v1885
  %v2052 = vand.u32 %v1613, %v1885
  %v2055 = vand.u32 %v1614, %v1885
  %v2058 = vand.u32 %v1615, %v1885
  %v2061 = vand.u32 %v1616, %v1885
  %v2064 = vand.u32 %v1617, %v1885
  %v2067 = vand.u32 %v1618, %v1885
  %v2070 = vand.u32 %v1619, %v1885
  %v2073 = vand.u32 %v1620, %v1885
  %v2076 = vand.u32 %v1621, %v1885
  %2078 = vmatprep.subr.bf16.mxu0 0
  %2079 = vmatpush1.bf16.msra.mxu0 0
  %2080 = vmatprep.subr.bf16.mxu0 0
  %2081 = vmatpush1.bf16.msra.mxu0 0
  %2082 = vmatprep.subr.bf16.mxu0 0
  %2083 = vmatpush1.bf16.msra.mxu0 0
  %2084 = vmatprep.subr.bf16.mxu0 %v1890
  %2085 = vmatpush1.bf16.msra.mxu0 %v1887
  %2086 = vmatprep.subr.bf16.mxu0 %v1495
  %2087 = vmatpush1.bf16.msra.mxu0 %v1494
  %2088 = vmatprep.subr.bf16.mxu0 %v1431
  %2089 = vmatpush1.bf16.msra.mxu0 %v1430
  %2090 = vmatprep.subr.bf16.mxu0 %v1367
  %2091 = vmatpush1.bf16.msra.mxu0 %v1366
  %2092 = vmatprep.subr.bf16.mxu0 %v1303
  %2093 = vmatpush1.bf16.msra.mxu0 %v1302
  %2094 = vmatprep.subr.bf16.mxu0 0
  %2095 = vmatpush2.bf16.msra.mxu0 0
  %2096 = vmatprep.subr.bf16.mxu0 0
  %2097 = vmatpush2.bf16.msra.mxu0 0
  %2098 = vmatprep.subr.bf16.mxu0 0
  %2099 = vmatpush2.bf16.msra.mxu0 0
  %2100 = vmatprep.subr.bf16.mxu0 0
  %2101 = vmatpush2.bf16.msra.mxu0 0
  %2102 = vmatprep.subr.bf16.mxu0 0
  %2103 = vmatpush2.bf16.msra.mxu0 0
  %2104 = vmatprep.subr.bf16.mxu0 0
  %2105 = vmatpush2.bf16.msra.mxu0 0
  %2106 = vmatprep.subr.bf16.mxu0 0
  %2107 = vmatpush2.bf16.msra.mxu0 0
  %2108 = vmatprep.subr.bf16.mxu0 0
  %2109 = vmatpush2.bf16.msra.mxu0 0
  %2110 = vmatprep.mubr.bf16.mxu0 0
  %2111 = vmatmul.mubr.bf16.gmra.mxu0 %v1880
  %v2112 = vpop.f32.mrf.mxu0
  %v2113 = vadd.f32 %v340, %v2112
  %v2114 = vpop.f32.mrf.mxu0
  %v2115 = vadd.f32 %v340, %v2114
  %v2116 = vpop.f32.mrf.mxu0
  %v2117 = vpop.f32.mrf.mxu0
  %2118 = vdwg.mxu0
  %2119 = vmatprep.subr.bf16.mxu0 0
  %2120 = vmatpush1.bf16.msra.mxu0 0
  %2121 = vmatprep.subr.bf16.mxu0 0
  %2122 = vmatpush1.bf16.msra.mxu0 0
  %2123 = vmatprep.subr.bf16.mxu0 0
  %2124 = vmatpush1.bf16.msra.mxu0 0
  %2125 = vmatprep.subr.bf16.mxu0 %v1896
  %2126 = vmatpush1.bf16.msra.mxu0 %v1893
  %2127 = vmatprep.subr.bf16.mxu0 %v1497
  %2128 = vmatpush1.bf16.msra.mxu0 %v1496
  %2129 = vmatprep.subr.bf16.mxu0 %v1433
  %2130 = vmatpush1.bf16.msra.mxu0 %v1432
  %2131 = vmatprep.subr.bf16.mxu0 %v1369
  %2132 = vmatpush1.bf16.msra.mxu0 %v1368
  %2133 = vmatprep.subr.bf16.mxu0 %v1305
  %2134 = vmatpush1.bf16.msra.mxu0 %v1304
  %2135 = vmatprep.subr.bf16.mxu0 0
  %2136 = vmatpush2.bf16.msra.mxu0 0
  %2137 = vmatprep.subr.bf16.mxu0 0
  %2138 = vmatpush2.bf16.msra.mxu0 0
  %2139 = vmatprep.subr.bf16.mxu0 0
  %2140 = vmatpush2.bf16.msra.mxu0 0
  %2141 = vmatprep.subr.bf16.mxu0 0
  %2142 = vmatpush2.bf16.msra.mxu0 0
  %2143 = vmatprep.subr.bf16.mxu0 0
  %2144 = vmatpush2.bf16.msra.mxu0 0
  %2145 = vmatprep.subr.bf16.mxu0 0
  %2146 = vmatpush2.bf16.msra.mxu0 0
  %2147 = vmatprep.subr.bf16.mxu0 0
  %2148 = vmatpush2.bf16.msra.mxu0 0
  %2149 = vmatprep.subr.bf16.mxu0 0
  %2150 = vmatpush2.bf16.msra.mxu0 0
  %2151 = vmatprep.mubr.bf16.mxu0 0
  %2152 = vmatmul.mubr.bf16.gmra.mxu0 %v1880
  %v2153 = vpop.f32.mrf.mxu0
  %v2154 = vadd.f32 %v340, %v2153
  %v2155 = vpop.f32.mrf.mxu0
  %v2156 = vadd.f32 %v340, %v2155
  %v2157 = vpop.f32.mrf.mxu0
  %v2158 = vpop.f32.mrf.mxu0
  %2159 = vdwg.mxu0
  %2160 = vmatprep.subr.bf16.mxu0 0
  %2161 = vmatpush1.bf16.msra.mxu0 0
  %2162 = vmatprep.subr.bf16.mxu0 0
  %2163 = vmatpush1.bf16.msra.mxu0 0
  %2164 = vmatprep.subr.bf16.mxu0 0
  %2165 = vmatpush1.bf16.msra.mxu0 0
  %2166 = vmatprep.subr.bf16.mxu0 %v1902
  %2167 = vmatpush1.bf16.msra.mxu0 %v1899
  %2168 = vmatprep.subr.bf16.mxu0 %v1499
  %2169 = vmatpush1.bf16.msra.mxu0 %v1498
  %2170 = vmatprep.subr.bf16.mxu0 %v1435
  %2171 = vmatpush1.bf16.msra.mxu0 %v1434
  %2172 = vmatprep.subr.bf16.mxu0 %v1371
  %2173 = vmatpush1.bf16.msra.mxu0 %v1370
  %2174 = vmatprep.subr.bf16.mxu0 %v1307
  %2175 = vmatpush1.bf16.msra.mxu0 %v1306
  %2176 = vmatprep.subr.bf16.mxu0 0
  %2177 = vmatpush2.bf16.msra.mxu0 0
  %2178 = vmatprep.subr.bf16.mxu0 0
  %2179 = vmatpush2.bf16.msra.mxu0 0
  %2180 = vmatprep.subr.bf16.mxu0 0
  %2181 = vmatpush2.bf16.msra.mxu0 0
  %2182 = vmatprep.subr.bf16.mxu0 0
  %2183 = vmatpush2.bf16.msra.mxu0 0
  %2184 = vmatprep.subr.bf16.mxu0 0
  %2185 = vmatpush2.bf16.msra.mxu0 0
  %2186 = vmatprep.subr.bf16.mxu0 0
  %2187 = vmatpush2.bf16.msra.mxu0 0
  %2188 = vmatprep.subr.bf16.mxu0 0
  %2189 = vmatpush2.bf16.msra.mxu0 0
  %2190 = vmatprep.subr.bf16.mxu0 0
  %2191 = vmatpush2.bf16.msra.mxu0 0
  %2192 = vmatprep.mubr.bf16.mxu0 0
  %2193 = vmatmul.mubr.bf16.gmra.mxu0 %v1880
  %v2194 = vpop.f32.mrf.mxu0
  %v2195 = vadd.f32 %v340, %v2194
  %v2196 = vpop.f32.mrf.mxu0
  %v2197 = vadd.f32 %v340, %v2196
  %v2198 = vpop.f32.mrf.mxu0
  %v2199 = vpop.f32.mrf.mxu0
  %2200 = vdwg.mxu0
  %2201 = vmatprep.subr.bf16.mxu0 0
  %2202 = vmatpush1.bf16.msra.mxu0 0
  %2203 = vmatprep.subr.bf16.mxu0 0
  %2204 = vmatpush1.bf16.msra.mxu0 0
  %2205 = vmatprep.subr.bf16.mxu0 0
  %2206 = vmatpush1.bf16.msra.mxu0 0
  %2207 = vmatprep.subr.bf16.mxu0 %v1908
  %2208 = vmatpush1.bf16.msra.mxu0 %v1905
  %2209 = vmatprep.subr.bf16.mxu0 %v1501
  %2210 = vmatpush1.bf16.msra.mxu0 %v1500
  %2211 = vmatprep.subr.bf16.mxu0 %v1437
  %2212 = vmatpush1.bf16.msra.mxu0 %v1436
  %2213 = vmatprep.subr.bf16.mxu0 %v1373
  %2214 = vmatpush1.bf16.msra.mxu0 %v1372
  %2215 = vmatprep.subr.bf16.mxu0 %v1309
  %2216 = vmatpush1.bf16.msra.mxu0 %v1308
  %2217 = vmatprep.subr.bf16.mxu0 0
  %2218 = vmatpush2.bf16.msra.mxu0 0
  %2219 = vmatprep.subr.bf16.mxu0 0
  %2220 = vmatpush2.bf16.msra.mxu0 0
  %2221 = vmatprep.subr.bf16.mxu0 0
  %2222 = vmatpush2.bf16.msra.mxu0 0
  %2223 = vmatprep.subr.bf16.mxu0 0
  %2224 = vmatpush2.bf16.msra.mxu0 0
  %2225 = vmatprep.subr.bf16.mxu0 0
  %2226 = vmatpush2.bf16.msra.mxu0 0
  %2227 = vmatprep.subr.bf16.mxu0 0
  %2228 = vmatpush2.bf16.msra.mxu0 0
  %2229 = vmatprep.subr.bf16.mxu0 0
  %2230 = vmatpush2.bf16.msra.mxu0 0
  %2231 = vmatprep.subr.bf16.mxu0 0
  %2232 = vmatpush2.bf16.msra.mxu0 0
  %2233 = vmatprep.mubr.bf16.mxu0 0
  %2234 = vmatmul.mubr.bf16.gmra.mxu0 %v1880
  %v2235 = vpop.f32.mrf.mxu0
  %v2236 = vadd.f32 %v340, %v2235
  %v2237 = vpop.f32.mrf.mxu0
  %v2238 = vadd.f32 %v340, %v2237
  %v2239 = vpop.f32.mrf.mxu0
  %v2240 = vpop.f32.mrf.mxu0
  %2241 = vdwg.mxu0
  %2242 = vmatprep.subr.bf16.mxu0 0
  %2243 = vmatpush1.bf16.msra.mxu0 0
  %2244 = vmatprep.subr.bf16.mxu0 0
  %2245 = vmatpush1.bf16.msra.mxu0 0
  %2246 = vmatprep.subr.bf16.mxu0 0
  %2247 = vmatpush1.bf16.msra.mxu0 0
  %2248 = vmatprep.subr.bf16.mxu0 %v1914
  %2249 = vmatpush1.bf16.msra.mxu0 %v1911
  %2250 = vmatprep.subr.bf16.mxu0 %v1503
  %2251 = vmatpush1.bf16.msra.mxu0 %v1502
  %2252 = vmatprep.subr.bf16.mxu0 %v1439
  %2253 = vmatpush1.bf16.msra.mxu0 %v1438
  %2254 = vmatprep.subr.bf16.mxu0 %v1375
  %2255 = vmatpush1.bf16.msra.mxu0 %v1374
  %2256 = vmatprep.subr.bf16.mxu0 %v1311
  %2257 = vmatpush1.bf16.msra.mxu0 %v1310
  %2258 = vmatprep.subr.bf16.mxu0 0
  %2259 = vmatpush2.bf16.msra.mxu0 0
  %2260 = vmatprep.subr.bf16.mxu0 0
  %2261 = vmatpush2.bf16.msra.mxu0 0
  %2262 = vmatprep.subr.bf16.mxu0 0
  %2263 = vmatpush2.bf16.msra.mxu0 0
  %2264 = vmatprep.subr.bf16.mxu0 0
  %2265 = vmatpush2.bf16.msra.mxu0 0
  %2266 = vmatprep.subr.bf16.mxu0 0
  %2267 = vmatpush2.bf16.msra.mxu0 0
  %2268 = vmatprep.subr.bf16.mxu0 0
  %2269 = vmatpush2.bf16.msra.mxu0 0
  %2270 = vmatprep.subr.bf16.mxu0 0
  %2271 = vmatpush2.bf16.msra.mxu0 0
  %2272 = vmatprep.subr.bf16.mxu0 0
  %2273 = vmatpush2.bf16.msra.mxu0 0
  %2274 = vmatprep.mubr.bf16.mxu0 0
  %2275 = vmatmul.mubr.bf16.gmra.mxu0 %v1880
  %v2276 = vpop.f32.mrf.mxu0
  %v2277 = vadd.f32 %v340, %v2276
  %v2278 = vpop.f32.mrf.mxu0
  %v2279 = vadd.f32 %v340, %v2278
  %v2280 = vpop.f32.mrf.mxu0
  %v2281 = vpop.f32.mrf.mxu0
  %2282 = vdwg.mxu0
  %2283 = vmatprep.subr.bf16.mxu0 0
  %2284 = vmatpush1.bf16.msra.mxu0 0
  %2285 = vmatprep.subr.bf16.mxu0 0
  %2286 = vmatpush1.bf16.msra.mxu0 0
  %2287 = vmatprep.subr.bf16.mxu0 0
  %2288 = vmatpush1.bf16.msra.mxu0 0
  %2289 = vmatprep.subr.bf16.mxu0 %v1920
  %2290 = vmatpush1.bf16.msra.mxu0 %v1917
  %2291 = vmatprep.subr.bf16.mxu0 %v1505
  %2292 = vmatpush1.bf16.msra.mxu0 %v1504
  %2293 = vmatprep.subr.bf16.mxu0 %v1441
  %2294 = vmatpush1.bf16.msra.mxu0 %v1440
  %2295 = vmatprep.subr.bf16.mxu0 %v1377
  %2296 = vmatpush1.bf16.msra.mxu0 %v1376
  %2297 = vmatprep.subr.bf16.mxu0 %v1313
  %2298 = vmatpush1.bf16.msra.mxu0 %v1312
  %2299 = vmatprep.subr.bf16.mxu0 0
  %2300 = vmatpush2.bf16.msra.mxu0 0
  %2301 = vmatprep.subr.bf16.mxu0 0
  %2302 = vmatpush2.bf16.msra.mxu0 0
  %2303 = vmatprep.subr.bf16.mxu0 0
  %2304 = vmatpush2.bf16.msra.mxu0 0
  %2305 = vmatprep.subr.bf16.mxu0 0
  %2306 = vmatpush2.bf16.msra.mxu0 0
  %2307 = vmatprep.subr.bf16.mxu0 0
  %2308 = vmatpush2.bf16.msra.mxu0 0
  %2309 = vmatprep.subr.bf16.mxu0 0
  %2310 = vmatpush2.bf16.msra.mxu0 0
  %2311 = vmatprep.subr.bf16.mxu0 0
  %2312 = vmatpush2.bf16.msra.mxu0 0
  %2313 = vmatprep.subr.bf16.mxu0 0
  %2314 = vmatpush2.bf16.msra.mxu0 0
  %2315 = vmatprep.mubr.bf16.mxu0 0
  %2316 = vmatmul.mubr.bf16.gmra.mxu0 %v1880
  %v2317 = vpop.f32.mrf.mxu0
  %v2318 = vadd.f32 %v340, %v2317
  %v2319 = vpop.f32.mrf.mxu0
  %v2320 = vadd.f32 %v340, %v2319
  %v2321 = vpop.f32.mrf.mxu0
  %v2322 = vpop.f32.mrf.mxu0
  %2323 = vdwg.mxu0
  %2324 = vmatprep.subr.bf16.mxu0 0
  %2325 = vmatpush1.bf16.msra.mxu0 0
  %2326 = vmatprep.subr.bf16.mxu0 0
  %2327 = vmatpush1.bf16.msra.mxu0 0
  %2328 = vmatprep.subr.bf16.mxu0 0
  %2329 = vmatpush1.bf16.msra.mxu0 0
  %2330 = vmatprep.subr.bf16.mxu0 %v1926
  %2331 = vmatpush1.bf16.msra.mxu0 %v1923
  %2332 = vmatprep.subr.bf16.mxu0 %v1507
  %2333 = vmatpush1.bf16.msra.mxu0 %v1506
  %2334 = vmatprep.subr.bf16.mxu0 %v1443
  %2335 = vmatpush1.bf16.msra.mxu0 %v1442
  %2336 = vmatprep.subr.bf16.mxu0 %v1379
  %2337 = vmatpush1.bf16.msra.mxu0 %v1378
  %2338 = vmatprep.subr.bf16.mxu0 %v1315
  %2339 = vmatpush1.bf16.msra.mxu0 %v1314
  %2340 = vmatprep.subr.bf16.mxu0 0
  %2341 = vmatpush2.bf16.msra.mxu0 0
  %2342 = vmatprep.subr.bf16.mxu0 0
  %2343 = vmatpush2.bf16.msra.mxu0 0
  %2344 = vmatprep.subr.bf16.mxu0 0
  %2345 = vmatpush2.bf16.msra.mxu0 0
  %2346 = vmatprep.subr.bf16.mxu0 0
  %2347 = vmatpush2.bf16.msra.mxu0 0
  %2348 = vmatprep.subr.bf16.mxu0 0
  %2349 = vmatpush2.bf16.msra.mxu0 0
  %2350 = vmatprep.subr.bf16.mxu0 0
  %2351 = vmatpush2.bf16.msra.mxu0 0
  %2352 = vmatprep.subr.bf16.mxu0 0
  %2353 = vmatpush2.bf16.msra.mxu0 0
  %2354 = vmatprep.subr.bf16.mxu0 0
  %2355 = vmatpush2.bf16.msra.mxu0 0
  %2356 = vmatprep.mubr.bf16.mxu0 0
  %2357 = vmatmul.mubr.bf16.gmra.mxu0 %v1880
  %v2358 = vpop.f32.mrf.mxu0
  %v2359 = vadd.f32 %v340, %v2358
  %v2360 = vpop.f32.mrf.mxu0
  %v2361 = vadd.f32 %v340, %v2360
  %v2362 = vpop.f32.mrf.mxu0
  %v2363 = vpop.f32.mrf.mxu0
  %2364 = vdwg.mxu0
  %2365 = vmatprep.subr.bf16.mxu0 0
  %2366 = vmatpush1.bf16.msra.mxu0 0
  %2367 = vmatprep.subr.bf16.mxu0 0
  %2368 = vmatpush1.bf16.msra.mxu0 0
  %2369 = vmatprep.subr.bf16.mxu0 0
  %2370 = vmatpush1.bf16.msra.mxu0 0
  %2371 = vmatprep.subr.bf16.mxu0 %v1932
  %2372 = vmatpush1.bf16.msra.mxu0 %v1929
  %2373 = vmatprep.subr.bf16.mxu0 %v1509
  %2374 = vmatpush1.bf16.msra.mxu0 %v1508
  %2375 = vmatprep.subr.bf16.mxu0 %v1445
  %2376 = vmatpush1.bf16.msra.mxu0 %v1444
  %2377 = vmatprep.subr.bf16.mxu0 %v1381
  %2378 = vmatpush1.bf16.msra.mxu0 %v1380
  %2379 = vmatprep.subr.bf16.mxu0 %v1317
  %2380 = vmatpush1.bf16.msra.mxu0 %v1316
  %2381 = vmatprep.subr.bf16.mxu0 0
  %2382 = vmatpush2.bf16.msra.mxu0 0
  %2383 = vmatprep.subr.bf16.mxu0 0
  %2384 = vmatpush2.bf16.msra.mxu0 0
  %2385 = vmatprep.subr.bf16.mxu0 0
  %2386 = vmatpush2.bf16.msra.mxu0 0
  %2387 = vmatprep.subr.bf16.mxu0 0
  %2388 = vmatpush2.bf16.msra.mxu0 0
  %2389 = vmatprep.subr.bf16.mxu0 0
  %2390 = vmatpush2.bf16.msra.mxu0 0
  %2391 = vmatprep.subr.bf16.mxu0 0
  %2392 = vmatpush2.bf16.msra.mxu0 0
  %2393 = vmatprep.subr.bf16.mxu0 0
  %2394 = vmatpush2.bf16.msra.mxu0 0
  %2395 = vmatprep.subr.bf16.mxu0 0
  %2396 = vmatpush2.bf16.msra.mxu0 0
  %2397 = vmatprep.mubr.bf16.mxu0 0
  %2398 = vmatmul.mubr.bf16.gmra.mxu0 %v1880
  %v2399 = vpop.f32.mrf.mxu0
  %v2400 = vadd.f32 %v340, %v2399
  %v2401 = vpop.f32.mrf.mxu0
  %v2402 = vadd.f32 %v340, %v2401
  %v2403 = vpop.f32.mrf.mxu0
  %v2404 = vpop.f32.mrf.mxu0
  %2405 = vdwg.mxu0
  %2406 = vmatprep.subr.bf16.mxu0 0
  %2407 = vmatpush1.bf16.msra.mxu0 0
  %2408 = vmatprep.subr.bf16.mxu0 0
  %2409 = vmatpush1.bf16.msra.mxu0 0
  %2410 = vmatprep.subr.bf16.mxu0 0
  %2411 = vmatpush1.bf16.msra.mxu0 0
  %2412 = vmatprep.subr.bf16.mxu0 %v1938
  %2413 = vmatpush1.bf16.msra.mxu0 %v1935
  %2414 = vmatprep.subr.bf16.mxu0 %v1511
  %2415 = vmatpush1.bf16.msra.mxu0 %v1510
  %2416 = vmatprep.subr.bf16.mxu0 %v1447
  %2417 = vmatpush1.bf16.msra.mxu0 %v1446
  %2418 = vmatprep.subr.bf16.mxu0 %v1383
  %2419 = vmatpush1.bf16.msra.mxu0 %v1382
  %2420 = vmatprep.subr.bf16.mxu0 %v1319
  %2421 = vmatpush1.bf16.msra.mxu0 %v1318
  %2422 = vmatprep.subr.bf16.mxu0 0
  %2423 = vmatpush2.bf16.msra.mxu0 0
  %2424 = vmatprep.subr.bf16.mxu0 0
  %2425 = vmatpush2.bf16.msra.mxu0 0
  %2426 = vmatprep.subr.bf16.mxu0 0
  %2427 = vmatpush2.bf16.msra.mxu0 0
  %2428 = vmatprep.subr.bf16.mxu0 0
  %2429 = vmatpush2.bf16.msra.mxu0 0
  %2430 = vmatprep.subr.bf16.mxu0 0
  %2431 = vmatpush2.bf16.msra.mxu0 0
  %2432 = vmatprep.subr.bf16.mxu0 0
  %2433 = vmatpush2.bf16.msra.mxu0 0
  %2434 = vmatprep.subr.bf16.mxu0 0
  %2435 = vmatpush2.bf16.msra.mxu0 0
  %2436 = vmatprep.subr.bf16.mxu0 0
  %2437 = vmatpush2.bf16.msra.mxu0 0
  %2438 = vmatprep.mubr.bf16.mxu0 0
  %2439 = vmatmul.mubr.bf16.gmra.mxu0 %v1880
  %v2440 = vpop.f32.mrf.mxu0
  %v2441 = vadd.f32 %v340, %v2440
  %v2442 = vpop.f32.mrf.mxu0
  %v2443 = vadd.f32 %v340, %v2442
  %v2444 = vpop.f32.mrf.mxu0
  %v2445 = vpop.f32.mrf.mxu0
  %2446 = vdwg.mxu0
  %2447 = vmatprep.subr.bf16.mxu0 0
  %2448 = vmatpush1.bf16.msra.mxu0 0
  %2449 = vmatprep.subr.bf16.mxu0 0
  %2450 = vmatpush1.bf16.msra.mxu0 0
  %2451 = vmatprep.subr.bf16.mxu0 0
  %2452 = vmatpush1.bf16.msra.mxu0 0
  %2453 = vmatprep.subr.bf16.mxu0 %v1944
  %2454 = vmatpush1.bf16.msra.mxu0 %v1941
  %2455 = vmatprep.subr.bf16.mxu0 %v1513
  %2456 = vmatpush1.bf16.msra.mxu0 %v1512
  %2457 = vmatprep.subr.bf16.mxu0 %v1449
  %2458 = vmatpush1.bf16.msra.mxu0 %v1448
  %2459 = vmatprep.subr.bf16.mxu0 %v1385
  %2460 = vmatpush1.bf16.msra.mxu0 %v1384
  %2461 = vmatprep.subr.bf16.mxu0 %v1321
  %2462 = vmatpush1.bf16.msra.mxu0 %v1320
  %2463 = vmatprep.subr.bf16.mxu0 0
  %2464 = vmatpush2.bf16.msra.mxu0 0
  %2465 = vmatprep.subr.bf16.mxu0 0
  %2466 = vmatpush2.bf16.msra.mxu0 0
  %2467 = vmatprep.subr.bf16.mxu0 0
  %2468 = vmatpush2.bf16.msra.mxu0 0
  %2469 = vmatprep.subr.bf16.mxu0 0
  %2470 = vmatpush2.bf16.msra.mxu0 0
  %2471 = vmatprep.subr.bf16.mxu0 0
  %2472 = vmatpush2.bf16.msra.mxu0 0
  %2473 = vmatprep.subr.bf16.mxu0 0
  %2474 = vmatpush2.bf16.msra.mxu0 0
  %2475 = vmatprep.subr.bf16.mxu0 0
  %2476 = vmatpush2.bf16.msra.mxu0 0
  %2477 = vmatprep.subr.bf16.mxu0 0
  %2478 = vmatpush2.bf16.msra.mxu0 0
  %2479 = vmatprep.mubr.bf16.mxu0 0
  %2480 = vmatmul.mubr.bf16.gmra.mxu0 %v1880
  %v2481 = vpop.f32.mrf.mxu0
  %v2482 = vadd.f32 %v340, %v2481
  %v2483 = vpop.f32.mrf.mxu0
  %v2484 = vadd.f32 %v340, %v2483
  %v2485 = vpop.f32.mrf.mxu0
  %v2486 = vpop.f32.mrf.mxu0
  %2487 = vdwg.mxu0
  %2488 = vmatprep.subr.bf16.mxu0 0
  %2489 = vmatpush1.bf16.msra.mxu0 0
  %2490 = vmatprep.subr.bf16.mxu0 0
  %2491 = vmatpush1.bf16.msra.mxu0 0
  %2492 = vmatprep.subr.bf16.mxu0 0
  %2493 = vmatpush1.bf16.msra.mxu0 0
  %2494 = vmatprep.subr.bf16.mxu0 %v1950
  %2495 = vmatpush1.bf16.msra.mxu0 %v1947
  %2496 = vmatprep.subr.bf16.mxu0 %v1515
  %2497 = vmatpush1.bf16.msra.mxu0 %v1514
  %2498 = vmatprep.subr.bf16.mxu0 %v1451
  %2499 = vmatpush1.bf16.msra.mxu0 %v1450
  %2500 = vmatprep.subr.bf16.mxu0 %v1387
  %2501 = vmatpush1.bf16.msra.mxu0 %v1386
  %2502 = vmatprep.subr.bf16.mxu0 %v1323
  %2503 = vmatpush1.bf16.msra.mxu0 %v1322
  %2504 = vmatprep.subr.bf16.mxu0 0
  %2505 = vmatpush2.bf16.msra.mxu0 0
  %2506 = vmatprep.subr.bf16.mxu0 0
  %2507 = vmatpush2.bf16.msra.mxu0 0
  %2508 = vmatprep.subr.bf16.mxu0 0
  %2509 = vmatpush2.bf16.msra.mxu0 0
  %2510 = vmatprep.subr.bf16.mxu0 0
  %2511 = vmatpush2.bf16.msra.mxu0 0
  %2512 = vmatprep.subr.bf16.mxu0 0
  %2513 = vmatpush2.bf16.msra.mxu0 0
  %2514 = vmatprep.subr.bf16.mxu0 0
  %2515 = vmatpush2.bf16.msra.mxu0 0
  %2516 = vmatprep.subr.bf16.mxu0 0
  %2517 = vmatpush2.bf16.msra.mxu0 0
  %2518 = vmatprep.subr.bf16.mxu0 0
  %2519 = vmatpush2.bf16.msra.mxu0 0
  %2520 = vmatprep.mubr.bf16.mxu0 0
  %2521 = vmatmul.mubr.bf16.gmra.mxu0 %v1880
  %v2522 = vpop.f32.mrf.mxu0
  %v2523 = vadd.f32 %v340, %v2522
  %v2524 = vpop.f32.mrf.mxu0
  %v2525 = vadd.f32 %v340, %v2524
  %v2526 = vpop.f32.mrf.mxu0
  %v2527 = vpop.f32.mrf.mxu0
  %2528 = vdwg.mxu0
  %2529 = vmatprep.subr.bf16.mxu0 0
  %2530 = vmatpush1.bf16.msra.mxu0 0
  %2531 = vmatprep.subr.bf16.mxu0 0
  %2532 = vmatpush1.bf16.msra.mxu0 0
  %2533 = vmatprep.subr.bf16.mxu0 0
  %2534 = vmatpush1.bf16.msra.mxu0 0
  %2535 = vmatprep.subr.bf16.mxu0 %v1956
  %2536 = vmatpush1.bf16.msra.mxu0 %v1953
  %2537 = vmatprep.subr.bf16.mxu0 %v1517
  %2538 = vmatpush1.bf16.msra.mxu0 %v1516
  %2539 = vmatprep.subr.bf16.mxu0 %v1453
  %2540 = vmatpush1.bf16.msra.mxu0 %v1452
  %2541 = vmatprep.subr.bf16.mxu0 %v1389
  %2542 = vmatpush1.bf16.msra.mxu0 %v1388
  %2543 = vmatprep.subr.bf16.mxu0 %v1325
  %2544 = vmatpush1.bf16.msra.mxu0 %v1324
  %2545 = vmatprep.subr.bf16.mxu0 0
  %2546 = vmatpush2.bf16.msra.mxu0 0
  %2547 = vmatprep.subr.bf16.mxu0 0
  %2548 = vmatpush2.bf16.msra.mxu0 0
  %2549 = vmatprep.subr.bf16.mxu0 0
  %2550 = vmatpush2.bf16.msra.mxu0 0
  %2551 = vmatprep.subr.bf16.mxu0 0
  %2552 = vmatpush2.bf16.msra.mxu0 0
  %2553 = vmatprep.subr.bf16.mxu0 0
  %2554 = vmatpush2.bf16.msra.mxu0 0
  %2555 = vmatprep.subr.bf16.mxu0 0
  %2556 = vmatpush2.bf16.msra.mxu0 0
  %2557 = vmatprep.subr.bf16.mxu0 0
  %2558 = vmatpush2.bf16.msra.mxu0 0
  %2559 = vmatprep.subr.bf16.mxu0 0
  %2560 = vmatpush2.bf16.msra.mxu0 0
  %2561 = vmatprep.mubr.bf16.mxu0 0
  %2562 = vmatmul.mubr.bf16.gmra.mxu0 %v1880
  %v2563 = vpop.f32.mrf.mxu0
  %v2564 = vadd.f32 %v340, %v2563
  %v2565 = vpop.f32.mrf.mxu0
  %v2566 = vadd.f32 %v340, %v2565
  %v2567 = vpop.f32.mrf.mxu0
  %v2568 = vpop.f32.mrf.mxu0
  %2569 = vdwg.mxu0
  %2570 = vmatprep.subr.bf16.mxu0 0
  %2571 = vmatpush1.bf16.msra.mxu0 0
  %2572 = vmatprep.subr.bf16.mxu0 0
  %2573 = vmatpush1.bf16.msra.mxu0 0
  %2574 = vmatprep.subr.bf16.mxu0 0
  %2575 = vmatpush1.bf16.msra.mxu0 0
  %2576 = vmatprep.subr.bf16.mxu0 %v1962
  %2577 = vmatpush1.bf16.msra.mxu0 %v1959
  %2578 = vmatprep.subr.bf16.mxu0 %v1519
  %2579 = vmatpush1.bf16.msra.mxu0 %v1518
  %2580 = vmatprep.subr.bf16.mxu0 %v1455
  %2581 = vmatpush1.bf16.msra.mxu0 %v1454
  %2582 = vmatprep.subr.bf16.mxu0 %v1391
  %2583 = vmatpush1.bf16.msra.mxu0 %v1390
  %2584 = vmatprep.subr.bf16.mxu0 %v1327
  %2585 = vmatpush1.bf16.msra.mxu0 %v1326
  %2586 = vmatprep.subr.bf16.mxu0 0
  %2587 = vmatpush2.bf16.msra.mxu0 0
  %2588 = vmatprep.subr.bf16.mxu0 0
  %2589 = vmatpush2.bf16.msra.mxu0 0
  %2590 = vmatprep.subr.bf16.mxu0 0
  %2591 = vmatpush2.bf16.msra.mxu0 0
  %2592 = vmatprep.subr.bf16.mxu0 0
  %2593 = vmatpush2.bf16.msra.mxu0 0
  %2594 = vmatprep.subr.bf16.mxu0 0
  %2595 = vmatpush2.bf16.msra.mxu0 0
  %2596 = vmatprep.subr.bf16.mxu0 0
  %2597 = vmatpush2.bf16.msra.mxu0 0
  %2598 = vmatprep.subr.bf16.mxu0 0
  %2599 = vmatpush2.bf16.msra.mxu0 0
  %2600 = vmatprep.subr.bf16.mxu0 0
  %2601 = vmatpush2.bf16.msra.mxu0 0
  %2602 = vmatprep.mubr.bf16.mxu0 0
  %2603 = vmatmul.mubr.bf16.gmra.mxu0 %v1880
  %v2604 = vpop.f32.mrf.mxu0
  %v2605 = vadd.f32 %v340, %v2604
  %v2606 = vpop.f32.mrf.mxu0
  %v2607 = vadd.f32 %v340, %v2606
  %v2608 = vpop.f32.mrf.mxu0
  %v2609 = vpop.f32.mrf.mxu0
  %2610 = vdwg.mxu0
  %2611 = vmatprep.subr.bf16.mxu0 0
  %2612 = vmatpush1.bf16.msra.mxu0 0
  %2613 = vmatprep.subr.bf16.mxu0 0
  %2614 = vmatpush1.bf16.msra.mxu0 0
  %2615 = vmatprep.subr.bf16.mxu0 0
  %2616 = vmatpush1.bf16.msra.mxu0 0
  %2617 = vmatprep.subr.bf16.mxu0 %v1968
  %2618 = vmatpush1.bf16.msra.mxu0 %v1965
  %2619 = vmatprep.subr.bf16.mxu0 %v1521
  %2620 = vmatpush1.bf16.msra.mxu0 %v1520
  %2621 = vmatprep.subr.bf16.mxu0 %v1457
  %2622 = vmatpush1.bf16.msra.mxu0 %v1456
  %2623 = vmatprep.subr.bf16.mxu0 %v1393
  %2624 = vmatpush1.bf16.msra.mxu0 %v1392
  %2625 = vmatprep.subr.bf16.mxu0 %v1329
  %2626 = vmatpush1.bf16.msra.mxu0 %v1328
  %2627 = vmatprep.subr.bf16.mxu0 0
  %2628 = vmatpush2.bf16.msra.mxu0 0
  %2629 = vmatprep.subr.bf16.mxu0 0
  %2630 = vmatpush2.bf16.msra.mxu0 0
  %2631 = vmatprep.subr.bf16.mxu0 0
  %2632 = vmatpush2.bf16.msra.mxu0 0
  %2633 = vmatprep.subr.bf16.mxu0 0
  %2634 = vmatpush2.bf16.msra.mxu0 0
  %2635 = vmatprep.subr.bf16.mxu0 0
  %2636 = vmatpush2.bf16.msra.mxu0 0
  %2637 = vmatprep.subr.bf16.mxu0 0
  %2638 = vmatpush2.bf16.msra.mxu0 0
  %2639 = vmatprep.subr.bf16.mxu0 0
  %2640 = vmatpush2.bf16.msra.mxu0 0
  %2641 = vmatprep.subr.bf16.mxu0 0
  %2642 = vmatpush2.bf16.msra.mxu0 0
  %2643 = vmatprep.mubr.bf16.mxu0 0
  %2644 = vmatmul.mubr.bf16.gmra.mxu0 %v1880
  %v2645 = vpop.f32.mrf.mxu0
  %v2646 = vadd.f32 %v340, %v2645
  %v2647 = vpop.f32.mrf.mxu0
  %v2648 = vadd.f32 %v340, %v2647
  %v2649 = vpop.f32.mrf.mxu0
  %v2650 = vpop.f32.mrf.mxu0
  %2651 = vdwg.mxu0
  %2652 = vmatprep.subr.bf16.mxu0 0
  %2653 = vmatpush1.bf16.msra.mxu0 0
  %2654 = vmatprep.subr.bf16.mxu0 0
  %2655 = vmatpush1.bf16.msra.mxu0 0
  %2656 = vmatprep.subr.bf16.mxu0 0
  %2657 = vmatpush1.bf16.msra.mxu0 0
  %2658 = vmatprep.subr.bf16.mxu0 %v1974
  %2659 = vmatpush1.bf16.msra.mxu0 %v1971
  %2660 = vmatprep.subr.bf16.mxu0 %v1523
  %2661 = vmatpush1.bf16.msra.mxu0 %v1522
  %2662 = vmatprep.subr.bf16.mxu0 %v1459
  %2663 = vmatpush1.bf16.msra.mxu0 %v1458
  %2664 = vmatprep.subr.bf16.mxu0 %v1395
  %2665 = vmatpush1.bf16.msra.mxu0 %v1394
  %2666 = vmatprep.subr.bf16.mxu0 %v1331
  %2667 = vmatpush1.bf16.msra.mxu0 %v1330
  %2668 = vmatprep.subr.bf16.mxu0 0
  %2669 = vmatpush2.bf16.msra.mxu0 0
  %2670 = vmatprep.subr.bf16.mxu0 0
  %2671 = vmatpush2.bf16.msra.mxu0 0
  %2672 = vmatprep.subr.bf16.mxu0 0
  %2673 = vmatpush2.bf16.msra.mxu0 0
  %2674 = vmatprep.subr.bf16.mxu0 0
  %2675 = vmatpush2.bf16.msra.mxu0 0
  %2676 = vmatprep.subr.bf16.mxu0 0
  %2677 = vmatpush2.bf16.msra.mxu0 0
  %2678 = vmatprep.subr.bf16.mxu0 0
  %2679 = vmatpush2.bf16.msra.mxu0 0
  %2680 = vmatprep.subr.bf16.mxu0 0
  %2681 = vmatpush2.bf16.msra.mxu0 0
  %2682 = vmatprep.subr.bf16.mxu0 0
  %2683 = vmatpush2.bf16.msra.mxu0 0
  %2684 = vmatprep.mubr.bf16.mxu0 0
  %2685 = vmatmul.mubr.bf16.gmra.mxu0 %v1880
  %v2686 = vpop.f32.mrf.mxu0
  %v2687 = vadd.f32 %v340, %v2686
  %v2688 = vpop.f32.mrf.mxu0
  %v2689 = vadd.f32 %v340, %v2688
  %v2690 = vpop.f32.mrf.mxu0
  %v2691 = vpop.f32.mrf.mxu0
  %2692 = vdwg.mxu0
  %2693 = vmatprep.subr.bf16.mxu0 0
  %2694 = vmatpush1.bf16.msra.mxu0 0
  %2695 = vmatprep.subr.bf16.mxu0 0
  %2696 = vmatpush1.bf16.msra.mxu0 0
  %2697 = vmatprep.subr.bf16.mxu0 0
  %2698 = vmatpush1.bf16.msra.mxu0 0
  %2699 = vmatprep.subr.bf16.mxu0 %v1980
  %2700 = vmatpush1.bf16.msra.mxu0 %v1977
  %2701 = vmatprep.subr.bf16.mxu0 %v1525
  %2702 = vmatpush1.bf16.msra.mxu0 %v1524
  %2703 = vmatprep.subr.bf16.mxu0 %v1461
  %2704 = vmatpush1.bf16.msra.mxu0 %v1460
  %2705 = vmatprep.subr.bf16.mxu0 %v1397
  %2706 = vmatpush1.bf16.msra.mxu0 %v1396
  %2707 = vmatprep.subr.bf16.mxu0 %v1333
  %2708 = vmatpush1.bf16.msra.mxu0 %v1332
  %2709 = vmatprep.subr.bf16.mxu0 0
  %2710 = vmatpush2.bf16.msra.mxu0 0
  %2711 = vmatprep.subr.bf16.mxu0 0
  %2712 = vmatpush2.bf16.msra.mxu0 0
  %2713 = vmatprep.subr.bf16.mxu0 0
  %2714 = vmatpush2.bf16.msra.mxu0 0
  %2715 = vmatprep.subr.bf16.mxu0 0
  %2716 = vmatpush2.bf16.msra.mxu0 0
  %2717 = vmatprep.subr.bf16.mxu0 0
  %2718 = vmatpush2.bf16.msra.mxu0 0
  %2719 = vmatprep.subr.bf16.mxu0 0
  %2720 = vmatpush2.bf16.msra.mxu0 0
  %2721 = vmatprep.subr.bf16.mxu0 0
  %2722 = vmatpush2.bf16.msra.mxu0 0
  %2723 = vmatprep.subr.bf16.mxu0 0
  %2724 = vmatpush2.bf16.msra.mxu0 0
  %2725 = vmatprep.mubr.bf16.mxu0 0
  %2726 = vmatmul.mubr.bf16.gmra.mxu0 %v1880
  %v2727 = vpop.f32.mrf.mxu0
  %v2728 = vadd.f32 %v340, %v2727
  %v2729 = vpop.f32.mrf.mxu0
  %v2730 = vadd.f32 %v340, %v2729
  %v2731 = vpop.f32.mrf.mxu0
  %v2732 = vpop.f32.mrf.mxu0
  %2733 = vdwg.mxu0
  %2734 = vmatprep.subr.bf16.mxu0 0
  %2735 = vmatpush1.bf16.msra.mxu0 0
  %2736 = vmatprep.subr.bf16.mxu0 0
  %2737 = vmatpush1.bf16.msra.mxu0 0
  %2738 = vmatprep.subr.bf16.mxu0 0
  %2739 = vmatpush1.bf16.msra.mxu0 0
  %2740 = vmatprep.subr.bf16.mxu0 %v1986
  %2741 = vmatpush1.bf16.msra.mxu0 %v1983
  %2742 = vmatprep.subr.bf16.mxu0 %v1527
  %2743 = vmatpush1.bf16.msra.mxu0 %v1526
  %2744 = vmatprep.subr.bf16.mxu0 %v1463
  %2745 = vmatpush1.bf16.msra.mxu0 %v1462
  %2746 = vmatprep.subr.bf16.mxu0 %v1399
  %2747 = vmatpush1.bf16.msra.mxu0 %v1398
  %2748 = vmatprep.subr.bf16.mxu0 %v1335
  %2749 = vmatpush1.bf16.msra.mxu0 %v1334
  %2750 = vmatprep.subr.bf16.mxu0 0
  %2751 = vmatpush2.bf16.msra.mxu0 0
  %2752 = vmatprep.subr.bf16.mxu0 0
  %2753 = vmatpush2.bf16.msra.mxu0 0
  %2754 = vmatprep.subr.bf16.mxu0 0
  %2755 = vmatpush2.bf16.msra.mxu0 0
  %2756 = vmatprep.subr.bf16.mxu0 0
  %2757 = vmatpush2.bf16.msra.mxu0 0
  %2758 = vmatprep.subr.bf16.mxu0 0
  %2759 = vmatpush2.bf16.msra.mxu0 0
  %2760 = vmatprep.subr.bf16.mxu0 0
  %2761 = vmatpush2.bf16.msra.mxu0 0
  %2762 = vmatprep.subr.bf16.mxu0 0
  %2763 = vmatpush2.bf16.msra.mxu0 0
  %2764 = vmatprep.subr.bf16.mxu0 0
  %2765 = vmatpush2.bf16.msra.mxu0 0
  %2766 = vmatprep.mubr.bf16.mxu0 0
  %2767 = vmatmul.mubr.bf16.gmra.mxu0 %v1880
  %v2768 = vpop.f32.mrf.mxu0
  %v2769 = vadd.f32 %v340, %v2768
  %v2770 = vpop.f32.mrf.mxu0
  %v2771 = vadd.f32 %v340, %v2770
  %v2772 = vpop.f32.mrf.mxu0
  %v2773 = vpop.f32.mrf.mxu0
  %2774 = vdwg.mxu0
  %2775 = vmatprep.subr.bf16.mxu0 0
  %2776 = vmatpush1.bf16.msra.mxu0 0
  %2777 = vmatprep.subr.bf16.mxu0 0
  %2778 = vmatpush1.bf16.msra.mxu0 0
  %2779 = vmatprep.subr.bf16.mxu0 0
  %2780 = vmatpush1.bf16.msra.mxu0 0
  %2781 = vmatprep.subr.bf16.mxu0 %v1992
  %2782 = vmatpush1.bf16.msra.mxu0 %v1989
  %2783 = vmatprep.subr.bf16.mxu0 %v1529
  %2784 = vmatpush1.bf16.msra.mxu0 %v1528
  %2785 = vmatprep.subr.bf16.mxu0 %v1465
  %2786 = vmatpush1.bf16.msra.mxu0 %v1464
  %2787 = vmatprep.subr.bf16.mxu0 %v1401
  %2788 = vmatpush1.bf16.msra.mxu0 %v1400
  %2789 = vmatprep.subr.bf16.mxu0 %v1337
  %2790 = vmatpush1.bf16.msra.mxu0 %v1336
  %2791 = vmatprep.subr.bf16.mxu0 0
  %2792 = vmatpush2.bf16.msra.mxu0 0
  %2793 = vmatprep.subr.bf16.mxu0 0
  %2794 = vmatpush2.bf16.msra.mxu0 0
  %2795 = vmatprep.subr.bf16.mxu0 0
  %2796 = vmatpush2.bf16.msra.mxu0 0
  %2797 = vmatprep.subr.bf16.mxu0 0
  %2798 = vmatpush2.bf16.msra.mxu0 0
  %2799 = vmatprep.subr.bf16.mxu0 0
  %2800 = vmatpush2.bf16.msra.mxu0 0
  %2801 = vmatprep.subr.bf16.mxu0 0
  %2802 = vmatpush2.bf16.msra.mxu0 0
  %2803 = vmatprep.subr.bf16.mxu0 0
  %2804 = vmatpush2.bf16.msra.mxu0 0
  %2805 = vmatprep.subr.bf16.mxu0 0
  %2806 = vmatpush2.bf16.msra.mxu0 0
  %2807 = vmatprep.mubr.bf16.mxu0 0
  %2808 = vmatmul.mubr.bf16.gmra.mxu0 %v1880
  %v2809 = vpop.f32.mrf.mxu0
  %v2810 = vadd.f32 %v340, %v2809
  %v2811 = vpop.f32.mrf.mxu0
  %v2812 = vadd.f32 %v340, %v2811
  %v2813 = vpop.f32.mrf.mxu0
  %v2814 = vpop.f32.mrf.mxu0
  %2815 = vdwg.mxu0
  %2816 = vmatprep.subr.bf16.mxu0 0
  %2817 = vmatpush1.bf16.msra.mxu0 0
  %2818 = vmatprep.subr.bf16.mxu0 0
  %2819 = vmatpush1.bf16.msra.mxu0 0
  %2820 = vmatprep.subr.bf16.mxu0 0
  %2821 = vmatpush1.bf16.msra.mxu0 0
  %2822 = vmatprep.subr.bf16.mxu0 %v1998
  %2823 = vmatpush1.bf16.msra.mxu0 %v1995
  %2824 = vmatprep.subr.bf16.mxu0 %v1531
  %2825 = vmatpush1.bf16.msra.mxu0 %v1530
  %2826 = vmatprep.subr.bf16.mxu0 %v1467
  %2827 = vmatpush1.bf16.msra.mxu0 %v1466
  %2828 = vmatprep.subr.bf16.mxu0 %v1403
  %2829 = vmatpush1.bf16.msra.mxu0 %v1402
  %2830 = vmatprep.subr.bf16.mxu0 %v1339
  %2831 = vmatpush1.bf16.msra.mxu0 %v1338
  %2832 = vmatprep.subr.bf16.mxu0 0
  %2833 = vmatpush2.bf16.msra.mxu0 0
  %2834 = vmatprep.subr.bf16.mxu0 0
  %2835 = vmatpush2.bf16.msra.mxu0 0
  %2836 = vmatprep.subr.bf16.mxu0 0
  %2837 = vmatpush2.bf16.msra.mxu0 0
  %2838 = vmatprep.subr.bf16.mxu0 0
  %2839 = vmatpush2.bf16.msra.mxu0 0
  %2840 = vmatprep.subr.bf16.mxu0 0
  %2841 = vmatpush2.bf16.msra.mxu0 0
  %2842 = vmatprep.subr.bf16.mxu0 0
  %2843 = vmatpush2.bf16.msra.mxu0 0
  %2844 = vmatprep.subr.bf16.mxu0 0
  %2845 = vmatpush2.bf16.msra.mxu0 0
  %2846 = vmatprep.subr.bf16.mxu0 0
  %2847 = vmatpush2.bf16.msra.mxu0 0
  %2848 = vmatprep.mubr.bf16.mxu0 0
  %2849 = vmatmul.mubr.bf16.gmra.mxu0 %v1880
  %v2850 = vpop.f32.mrf.mxu0
  %v2851 = vadd.f32 %v340, %v2850
  %v2852 = vpop.f32.mrf.mxu0
  %v2853 = vadd.f32 %v340, %v2852
  %v2854 = vpop.f32.mrf.mxu0
  %v2855 = vpop.f32.mrf.mxu0
  %2856 = vdwg.mxu0
  %2857 = vmatprep.subr.bf16.mxu0 0
  %2858 = vmatpush1.bf16.msra.mxu0 0
  %2859 = vmatprep.subr.bf16.mxu0 0
  %2860 = vmatpush1.bf16.msra.mxu0 0
  %2861 = vmatprep.subr.bf16.mxu0 0
  %2862 = vmatpush1.bf16.msra.mxu0 0
  %2863 = vmatprep.subr.bf16.mxu0 %v2004
  %2864 = vmatpush1.bf16.msra.mxu0 %v2001
  %2865 = vmatprep.subr.bf16.mxu0 %v1533
  %2866 = vmatpush1.bf16.msra.mxu0 %v1532
  %2867 = vmatprep.subr.bf16.mxu0 %v1469
  %2868 = vmatpush1.bf16.msra.mxu0 %v1468
  %2869 = vmatprep.subr.bf16.mxu0 %v1405
  %2870 = vmatpush1.bf16.msra.mxu0 %v1404
  %2871 = vmatprep.subr.bf16.mxu0 %v1341
  %2872 = vmatpush1.bf16.msra.mxu0 %v1340
  %2873 = vmatprep.subr.bf16.mxu0 0
  %2874 = vmatpush2.bf16.msra.mxu0 0
  %2875 = vmatprep.subr.bf16.mxu0 0
  %2876 = vmatpush2.bf16.msra.mxu0 0
  %2877 = vmatprep.subr.bf16.mxu0 0
  %2878 = vmatpush2.bf16.msra.mxu0 0
  %2879 = vmatprep.subr.bf16.mxu0 0
  %2880 = vmatpush2.bf16.msra.mxu0 0
  %2881 = vmatprep.subr.bf16.mxu0 0
  %2882 = vmatpush2.bf16.msra.mxu0 0
  %2883 = vmatprep.subr.bf16.mxu0 0
  %2884 = vmatpush2.bf16.msra.mxu0 0
  %2885 = vmatprep.subr.bf16.mxu0 0
  %2886 = vmatpush2.bf16.msra.mxu0 0
  %2887 = vmatprep.subr.bf16.mxu0 0
  %2888 = vmatpush2.bf16.msra.mxu0 0
  %2889 = vmatprep.mubr.bf16.mxu0 0
  %2890 = vmatmul.mubr.bf16.gmra.mxu0 %v1880
  %v2891 = vpop.f32.mrf.mxu0
  %v2892 = vadd.f32 %v340, %v2891
  %v2893 = vpop.f32.mrf.mxu0
  %v2894 = vadd.f32 %v340, %v2893
  %v2895 = vpop.f32.mrf.mxu0
  %v2896 = vpop.f32.mrf.mxu0
  %2897 = vdwg.mxu0
  %2898 = vmatprep.subr.bf16.mxu0 0
  %2899 = vmatpush1.bf16.msra.mxu0 0
  %2900 = vmatprep.subr.bf16.mxu0 0
  %2901 = vmatpush1.bf16.msra.mxu0 0
  %2902 = vmatprep.subr.bf16.mxu0 0
  %2903 = vmatpush1.bf16.msra.mxu0 0
  %2904 = vmatprep.subr.bf16.mxu0 %v2010
  %2905 = vmatpush1.bf16.msra.mxu0 %v2007
  %2906 = vmatprep.subr.bf16.mxu0 %v1535
  %2907 = vmatpush1.bf16.msra.mxu0 %v1534
  %2908 = vmatprep.subr.bf16.mxu0 %v1471
  %2909 = vmatpush1.bf16.msra.mxu0 %v1470
  %2910 = vmatprep.subr.bf16.mxu0 %v1407
  %2911 = vmatpush1.bf16.msra.mxu0 %v1406
  %2912 = vmatprep.subr.bf16.mxu0 %v1343
  %2913 = vmatpush1.bf16.msra.mxu0 %v1342
  %2914 = vmatprep.subr.bf16.mxu0 0
  %2915 = vmatpush2.bf16.msra.mxu0 0
  %2916 = vmatprep.subr.bf16.mxu0 0
  %2917 = vmatpush2.bf16.msra.mxu0 0
  %2918 = vmatprep.subr.bf16.mxu0 0
  %2919 = vmatpush2.bf16.msra.mxu0 0
  %2920 = vmatprep.subr.bf16.mxu0 0
  %2921 = vmatpush2.bf16.msra.mxu0 0
  %2922 = vmatprep.subr.bf16.mxu0 0
  %2923 = vmatpush2.bf16.msra.mxu0 0
  %2924 = vmatprep.subr.bf16.mxu0 0
  %2925 = vmatpush2.bf16.msra.mxu0 0
  %2926 = vmatprep.subr.bf16.mxu0 0
  %2927 = vmatpush2.bf16.msra.mxu0 0
  %2928 = vmatprep.subr.bf16.mxu0 0
  %2929 = vmatpush2.bf16.msra.mxu0 0
  %2930 = vmatprep.mubr.bf16.mxu0 0
  %2931 = vmatmul.mubr.bf16.gmra.mxu0 %v1880
  %v2932 = vpop.f32.mrf.mxu0
  %v2933 = vadd.f32 %v340, %v2932
  %v2934 = vpop.f32.mrf.mxu0
  %v2935 = vadd.f32 %v340, %v2934
  %v2936 = vpop.f32.mrf.mxu0
  %v2937 = vpop.f32.mrf.mxu0
  %2938 = vdwg.mxu0
  %2939 = vmatprep.subr.bf16.mxu0 0
  %2940 = vmatpush1.bf16.msra.mxu0 0
  %2941 = vmatprep.subr.bf16.mxu0 0
  %2942 = vmatpush1.bf16.msra.mxu0 0
  %2943 = vmatprep.subr.bf16.mxu0 0
  %2944 = vmatpush1.bf16.msra.mxu0 0
  %2945 = vmatprep.subr.bf16.mxu0 %v2016
  %2946 = vmatpush1.bf16.msra.mxu0 %v2013
  %2947 = vmatprep.subr.bf16.mxu0 %v1537
  %2948 = vmatpush1.bf16.msra.mxu0 %v1536
  %2949 = vmatprep.subr.bf16.mxu0 %v1473
  %2950 = vmatpush1.bf16.msra.mxu0 %v1472
  %2951 = vmatprep.subr.bf16.mxu0 %v1409
  %2952 = vmatpush1.bf16.msra.mxu0 %v1408
  %2953 = vmatprep.subr.bf16.mxu0 %v1345
  %2954 = vmatpush1.bf16.msra.mxu0 %v1344
  %2955 = vmatprep.subr.bf16.mxu0 0
  %2956 = vmatpush2.bf16.msra.mxu0 0
  %2957 = vmatprep.subr.bf16.mxu0 0
  %2958 = vmatpush2.bf16.msra.mxu0 0
  %2959 = vmatprep.subr.bf16.mxu0 0
  %2960 = vmatpush2.bf16.msra.mxu0 0
  %2961 = vmatprep.subr.bf16.mxu0 0
  %2962 = vmatpush2.bf16.msra.mxu0 0
  %2963 = vmatprep.subr.bf16.mxu0 0
  %2964 = vmatpush2.bf16.msra.mxu0 0
  %2965 = vmatprep.subr.bf16.mxu0 0
  %2966 = vmatpush2.bf16.msra.mxu0 0
  %2967 = vmatprep.subr.bf16.mxu0 0
  %2968 = vmatpush2.bf16.msra.mxu0 0
  %2969 = vmatprep.subr.bf16.mxu0 0
  %2970 = vmatpush2.bf16.msra.mxu0 0
  %2971 = vmatprep.mubr.bf16.mxu0 0
  %2972 = vmatmul.mubr.bf16.gmra.mxu0 %v1880
  %v2973 = vpop.f32.mrf.mxu0
  %v2974 = vadd.f32 %v340, %v2973
  %v2975 = vpop.f32.mrf.mxu0
  %v2976 = vadd.f32 %v340, %v2975
  %v2977 = vpop.f32.mrf.mxu0
  %v2978 = vpop.f32.mrf.mxu0
  %2979 = vdwg.mxu0
  %2980 = vmatprep.subr.bf16.mxu0 0
  %2981 = vmatpush1.bf16.msra.mxu0 0
  %2982 = vmatprep.subr.bf16.mxu0 0
  %2983 = vmatpush1.bf16.msra.mxu0 0
  %2984 = vmatprep.subr.bf16.mxu0 0
  %2985 = vmatpush1.bf16.msra.mxu0 0
  %2986 = vmatprep.subr.bf16.mxu0 %v2022
  %2987 = vmatpush1.bf16.msra.mxu0 %v2019
  %2988 = vmatprep.subr.bf16.mxu0 %v1539
  %2989 = vmatpush1.bf16.msra.mxu0 %v1538
  %2990 = vmatprep.subr.bf16.mxu0 %v1475
  %2991 = vmatpush1.bf16.msra.mxu0 %v1474
  %2992 = vmatprep.subr.bf16.mxu0 %v1411
  %2993 = vmatpush1.bf16.msra.mxu0 %v1410
  %2994 = vmatprep.subr.bf16.mxu0 %v1347
  %2995 = vmatpush1.bf16.msra.mxu0 %v1346
  %2996 = vmatprep.subr.bf16.mxu0 0
  %2997 = vmatpush2.bf16.msra.mxu0 0
  %2998 = vmatprep.subr.bf16.mxu0 0
  %2999 = vmatpush2.bf16.msra.mxu0 0
  %3000 = vmatprep.subr.bf16.mxu0 0
  %3001 = vmatpush2.bf16.msra.mxu0 0
  %3002 = vmatprep.subr.bf16.mxu0 0
  %3003 = vmatpush2.bf16.msra.mxu0 0
  %3004 = vmatprep.subr.bf16.mxu0 0
  %3005 = vmatpush2.bf16.msra.mxu0 0
  %3006 = vmatprep.subr.bf16.mxu0 0
  %3007 = vmatpush2.bf16.msra.mxu0 0
  %3008 = vmatprep.subr.bf16.mxu0 0
  %3009 = vmatpush2.bf16.msra.mxu0 0
  %3010 = vmatprep.subr.bf16.mxu0 0
  %3011 = vmatpush2.bf16.msra.mxu0 0
  %3012 = vmatprep.mubr.bf16.mxu0 0
  %3013 = vmatmul.mubr.bf16.gmra.mxu0 %v1880
  %v3014 = vpop.f32.mrf.mxu0
  %v3015 = vadd.f32 %v340, %v3014
  %v3016 = vpop.f32.mrf.mxu0
  %v3017 = vadd.f32 %v340, %v3016
  %v3018 = vpop.f32.mrf.mxu0
  %v3019 = vpop.f32.mrf.mxu0
  %3020 = vdwg.mxu0
  %3021 = vmatprep.subr.bf16.mxu0 0
  %3022 = vmatpush1.bf16.msra.mxu0 0
  %3023 = vmatprep.subr.bf16.mxu0 0
  %3024 = vmatpush1.bf16.msra.mxu0 0
  %3025 = vmatprep.subr.bf16.mxu0 0
  %3026 = vmatpush1.bf16.msra.mxu0 0
  %3027 = vmatprep.subr.bf16.mxu0 %v2028
  %3028 = vmatpush1.bf16.msra.mxu0 %v2025
  %3029 = vmatprep.subr.bf16.mxu0 %v1541
  %3030 = vmatpush1.bf16.msra.mxu0 %v1540
  %3031 = vmatprep.subr.bf16.mxu0 %v1477
  %3032 = vmatpush1.bf16.msra.mxu0 %v1476
  %3033 = vmatprep.subr.bf16.mxu0 %v1413
  %3034 = vmatpush1.bf16.msra.mxu0 %v1412
  %3035 = vmatprep.subr.bf16.mxu0 %v1349
  %3036 = vmatpush1.bf16.msra.mxu0 %v1348
  %3037 = vmatprep.subr.bf16.mxu0 0
  %3038 = vmatpush2.bf16.msra.mxu0 0
  %3039 = vmatprep.subr.bf16.mxu0 0
  %3040 = vmatpush2.bf16.msra.mxu0 0
  %3041 = vmatprep.subr.bf16.mxu0 0
  %3042 = vmatpush2.bf16.msra.mxu0 0
  %3043 = vmatprep.subr.bf16.mxu0 0
  %3044 = vmatpush2.bf16.msra.mxu0 0
  %3045 = vmatprep.subr.bf16.mxu0 0
  %3046 = vmatpush2.bf16.msra.mxu0 0
  %3047 = vmatprep.subr.bf16.mxu0 0
  %3048 = vmatpush2.bf16.msra.mxu0 0
  %3049 = vmatprep.subr.bf16.mxu0 0
  %3050 = vmatpush2.bf16.msra.mxu0 0
  %3051 = vmatprep.subr.bf16.mxu0 0
  %3052 = vmatpush2.bf16.msra.mxu0 0
  %3053 = vmatprep.mubr.bf16.mxu0 0
  %3054 = vmatmul.mubr.bf16.gmra.mxu0 %v1880
  %v3055 = vpop.f32.mrf.mxu0
  %v3056 = vadd.f32 %v340, %v3055
  %v3057 = vpop.f32.mrf.mxu0
  %v3058 = vadd.f32 %v340, %v3057
  %v3059 = vpop.f32.mrf.mxu0
  %v3060 = vpop.f32.mrf.mxu0
  %3061 = vdwg.mxu0
  %3062 = vmatprep.subr.bf16.mxu0 0
  %3063 = vmatpush1.bf16.msra.mxu0 0
  %3064 = vmatprep.subr.bf16.mxu0 0
  %3065 = vmatpush1.bf16.msra.mxu0 0
  %3066 = vmatprep.subr.bf16.mxu0 0
  %3067 = vmatpush1.bf16.msra.mxu0 0
  %3068 = vmatprep.subr.bf16.mxu0 %v2034
  %3069 = vmatpush1.bf16.msra.mxu0 %v2031
  %3070 = vmatprep.subr.bf16.mxu0 %v1543
  %3071 = vmatpush1.bf16.msra.mxu0 %v1542
  %3072 = vmatprep.subr.bf16.mxu0 %v1479
  %3073 = vmatpush1.bf16.msra.mxu0 %v1478
  %3074 = vmatprep.subr.bf16.mxu0 %v1415
  %3075 = vmatpush1.bf16.msra.mxu0 %v1414
  %3076 = vmatprep.subr.bf16.mxu0 %v1351
  %3077 = vmatpush1.bf16.msra.mxu0 %v1350
  %3078 = vmatprep.subr.bf16.mxu0 0
  %3079 = vmatpush2.bf16.msra.mxu0 0
  %3080 = vmatprep.subr.bf16.mxu0 0
  %3081 = vmatpush2.bf16.msra.mxu0 0
  %3082 = vmatprep.subr.bf16.mxu0 0
  %3083 = vmatpush2.bf16.msra.mxu0 0
  %3084 = vmatprep.subr.bf16.mxu0 0
  %3085 = vmatpush2.bf16.msra.mxu0 0
  %3086 = vmatprep.subr.bf16.mxu0 0
  %3087 = vmatpush2.bf16.msra.mxu0 0
  %3088 = vmatprep.subr.bf16.mxu0 0
  %3089 = vmatpush2.bf16.msra.mxu0 0
  %3090 = vmatprep.subr.bf16.mxu0 0
  %3091 = vmatpush2.bf16.msra.mxu0 0
  %3092 = vmatprep.subr.bf16.mxu0 0
  %3093 = vmatpush2.bf16.msra.mxu0 0
  %3094 = vmatprep.mubr.bf16.mxu0 0
  %3095 = vmatmul.mubr.bf16.gmra.mxu0 %v1880
  %v3096 = vpop.f32.mrf.mxu0
  %v3097 = vadd.f32 %v340, %v3096
  %v3098 = vpop.f32.mrf.mxu0
  %v3099 = vadd.f32 %v340, %v3098
  %v3100 = vpop.f32.mrf.mxu0
  %v3101 = vpop.f32.mrf.mxu0
  %3102 = vdwg.mxu0
  %3103 = vmatprep.subr.bf16.mxu0 0
  %3104 = vmatpush1.bf16.msra.mxu0 0
  %3105 = vmatprep.subr.bf16.mxu0 0
  %3106 = vmatpush1.bf16.msra.mxu0 0
  %3107 = vmatprep.subr.bf16.mxu0 0
  %3108 = vmatpush1.bf16.msra.mxu0 0
  %3109 = vmatprep.subr.bf16.mxu0 %v2040
  %3110 = vmatpush1.bf16.msra.mxu0 %v2037
  %3111 = vmatprep.subr.bf16.mxu0 %v1545
  %3112 = vmatpush1.bf16.msra.mxu0 %v1544
  %3113 = vmatprep.subr.bf16.mxu0 %v1481
  %3114 = vmatpush1.bf16.msra.mxu0 %v1480
  %3115 = vmatprep.subr.bf16.mxu0 %v1417
  %3116 = vmatpush1.bf16.msra.mxu0 %v1416
  %3117 = vmatprep.subr.bf16.mxu0 %v1353
  %3118 = vmatpush1.bf16.msra.mxu0 %v1352
  %3119 = vmatprep.subr.bf16.mxu0 0
  %3120 = vmatpush2.bf16.msra.mxu0 0
  %3121 = vmatprep.subr.bf16.mxu0 0
  %3122 = vmatpush2.bf16.msra.mxu0 0
  %3123 = vmatprep.subr.bf16.mxu0 0
  %3124 = vmatpush2.bf16.msra.mxu0 0
  %3125 = vmatprep.subr.bf16.mxu0 0
  %3126 = vmatpush2.bf16.msra.mxu0 0
  %3127 = vmatprep.subr.bf16.mxu0 0
  %3128 = vmatpush2.bf16.msra.mxu0 0
  %3129 = vmatprep.subr.bf16.mxu0 0
  %3130 = vmatpush2.bf16.msra.mxu0 0
  %3131 = vmatprep.subr.bf16.mxu0 0
  %3132 = vmatpush2.bf16.msra.mxu0 0
  %3133 = vmatprep.subr.bf16.mxu0 0
  %3134 = vmatpush2.bf16.msra.mxu0 0
  %3135 = vmatprep.mubr.bf16.mxu0 0
  %3136 = vmatmul.mubr.bf16.gmra.mxu0 %v1880
  %v3137 = vpop.f32.mrf.mxu0
  %v3138 = vadd.f32 %v340, %v3137
  %v3139 = vpop.f32.mrf.mxu0
  %v3140 = vadd.f32 %v340, %v3139
  %v3141 = vpop.f32.mrf.mxu0
  %v3142 = vpop.f32.mrf.mxu0
  %3143 = vdwg.mxu0
  %3144 = vmatprep.subr.bf16.mxu0 0
  %3145 = vmatpush1.bf16.msra.mxu0 0
  %3146 = vmatprep.subr.bf16.mxu0 0
  %3147 = vmatpush1.bf16.msra.mxu0 0
  %3148 = vmatprep.subr.bf16.mxu0 0
  %3149 = vmatpush1.bf16.msra.mxu0 0
  %3150 = vmatprep.subr.bf16.mxu0 %v2046
  %3151 = vmatpush1.bf16.msra.mxu0 %v2043
  %3152 = vmatprep.subr.bf16.mxu0 %v1547
  %3153 = vmatpush1.bf16.msra.mxu0 %v1546
  %3154 = vmatprep.subr.bf16.mxu0 %v1483
  %3155 = vmatpush1.bf16.msra.mxu0 %v1482
  %3156 = vmatprep.subr.bf16.mxu0 %v1419
  %3157 = vmatpush1.bf16.msra.mxu0 %v1418
  %3158 = vmatprep.subr.bf16.mxu0 %v1355
  %3159 = vmatpush1.bf16.msra.mxu0 %v1354
  %3160 = vmatprep.subr.bf16.mxu0 0
  %3161 = vmatpush2.bf16.msra.mxu0 0
  %3162 = vmatprep.subr.bf16.mxu0 0
  %3163 = vmatpush2.bf16.msra.mxu0 0
  %3164 = vmatprep.subr.bf16.mxu0 0
  %3165 = vmatpush2.bf16.msra.mxu0 0
  %3166 = vmatprep.subr.bf16.mxu0 0
  %3167 = vmatpush2.bf16.msra.mxu0 0
  %3168 = vmatprep.subr.bf16.mxu0 0
  %3169 = vmatpush2.bf16.msra.mxu0 0
  %3170 = vmatprep.subr.bf16.mxu0 0
  %3171 = vmatpush2.bf16.msra.mxu0 0
  %3172 = vmatprep.subr.bf16.mxu0 0
  %3173 = vmatpush2.bf16.msra.mxu0 0
  %3174 = vmatprep.subr.bf16.mxu0 0
  %3175 = vmatpush2.bf16.msra.mxu0 0
  %3176 = vmatprep.mubr.bf16.mxu0 0
  %3177 = vmatmul.mubr.bf16.gmra.mxu0 %v1880
  %v3178 = vpop.f32.mrf.mxu0
  %v3179 = vadd.f32 %v340, %v3178
  %v3180 = vpop.f32.mrf.mxu0
  %v3181 = vadd.f32 %v340, %v3180
  %v3182 = vpop.f32.mrf.mxu0
  %v3183 = vpop.f32.mrf.mxu0
  %3184 = vdwg.mxu0
  %3185 = vmatprep.subr.bf16.mxu0 0
  %3186 = vmatpush1.bf16.msra.mxu0 0
  %3187 = vmatprep.subr.bf16.mxu0 0
  %3188 = vmatpush1.bf16.msra.mxu0 0
  %3189 = vmatprep.subr.bf16.mxu0 0
  %3190 = vmatpush1.bf16.msra.mxu0 0
  %3191 = vmatprep.subr.bf16.mxu0 %v2052
  %3192 = vmatpush1.bf16.msra.mxu0 %v2049
  %3193 = vmatprep.subr.bf16.mxu0 %v1549
  %3194 = vmatpush1.bf16.msra.mxu0 %v1548
  %3195 = vmatprep.subr.bf16.mxu0 %v1485
  %3196 = vmatpush1.bf16.msra.mxu0 %v1484
  %3197 = vmatprep.subr.bf16.mxu0 %v1421
  %3198 = vmatpush1.bf16.msra.mxu0 %v1420
  %3199 = vmatprep.subr.bf16.mxu0 %v1357
  %3200 = vmatpush1.bf16.msra.mxu0 %v1356
  %3201 = vmatprep.subr.bf16.mxu0 0
  %3202 = vmatpush2.bf16.msra.mxu0 0
  %3203 = vmatprep.subr.bf16.mxu0 0
  %3204 = vmatpush2.bf16.msra.mxu0 0
  %3205 = vmatprep.subr.bf16.mxu0 0
  %3206 = vmatpush2.bf16.msra.mxu0 0
  %3207 = vmatprep.subr.bf16.mxu0 0
  %3208 = vmatpush2.bf16.msra.mxu0 0
  %3209 = vmatprep.subr.bf16.mxu0 0
  %3210 = vmatpush2.bf16.msra.mxu0 0
  %3211 = vmatprep.subr.bf16.mxu0 0
  %3212 = vmatpush2.bf16.msra.mxu0 0
  %3213 = vmatprep.subr.bf16.mxu0 0
  %3214 = vmatpush2.bf16.msra.mxu0 0
  %3215 = vmatprep.subr.bf16.mxu0 0
  %3216 = vmatpush2.bf16.msra.mxu0 0
  %3217 = vmatprep.mubr.bf16.mxu0 0
  %3218 = vmatmul.mubr.bf16.gmra.mxu0 %v1880
  %v3219 = vpop.f32.mrf.mxu0
  %v3220 = vadd.f32 %v340, %v3219
  %v3221 = vpop.f32.mrf.mxu0
  %v3222 = vadd.f32 %v340, %v3221
  %v3223 = vpop.f32.mrf.mxu0
  %v3224 = vpop.f32.mrf.mxu0
  %3225 = vdwg.mxu0
  %3226 = vmatprep.subr.bf16.mxu0 0
  %3227 = vmatpush1.bf16.msra.mxu0 0
  %3228 = vmatprep.subr.bf16.mxu0 0
  %3229 = vmatpush1.bf16.msra.mxu0 0
  %3230 = vmatprep.subr.bf16.mxu0 0
  %3231 = vmatpush1.bf16.msra.mxu0 0
  %3232 = vmatprep.subr.bf16.mxu0 %v2058
  %3233 = vmatpush1.bf16.msra.mxu0 %v2055
  %3234 = vmatprep.subr.bf16.mxu0 %v1551
  %3235 = vmatpush1.bf16.msra.mxu0 %v1550
  %3236 = vmatprep.subr.bf16.mxu0 %v1487
  %3237 = vmatpush1.bf16.msra.mxu0 %v1486
  %3238 = vmatprep.subr.bf16.mxu0 %v1423
  %3239 = vmatpush1.bf16.msra.mxu0 %v1422
  %3240 = vmatprep.subr.bf16.mxu0 %v1359
  %3241 = vmatpush1.bf16.msra.mxu0 %v1358
  %3242 = vmatprep.subr.bf16.mxu0 0
  %3243 = vmatpush2.bf16.msra.mxu0 0
  %3244 = vmatprep.subr.bf16.mxu0 0
  %3245 = vmatpush2.bf16.msra.mxu0 0
  %3246 = vmatprep.subr.bf16.mxu0 0
  %3247 = vmatpush2.bf16.msra.mxu0 0
  %3248 = vmatprep.subr.bf16.mxu0 0
  %3249 = vmatpush2.bf16.msra.mxu0 0
  %3250 = vmatprep.subr.bf16.mxu0 0
  %3251 = vmatpush2.bf16.msra.mxu0 0
  %3252 = vmatprep.subr.bf16.mxu0 0
  %3253 = vmatpush2.bf16.msra.mxu0 0
  %3254 = vmatprep.subr.bf16.mxu0 0
  %3255 = vmatpush2.bf16.msra.mxu0 0
  %3256 = vmatprep.subr.bf16.mxu0 0
  %3257 = vmatpush2.bf16.msra.mxu0 0
  %3258 = vmatprep.mubr.bf16.mxu0 0
  %3259 = vmatmul.mubr.bf16.gmra.mxu0 %v1880
  %v3260 = vpop.f32.mrf.mxu0
  %v3261 = vadd.f32 %v340, %v3260
  %v3262 = vpop.f32.mrf.mxu0
  %v3263 = vadd.f32 %v340, %v3262
  %v3264 = vpop.f32.mrf.mxu0
  %v3265 = vpop.f32.mrf.mxu0
  %3266 = vdwg.mxu0
  %3267 = vmatprep.subr.bf16.mxu0 0
  %3268 = vmatpush1.bf16.msra.mxu0 0
  %3269 = vmatprep.subr.bf16.mxu0 0
  %3270 = vmatpush1.bf16.msra.mxu0 0
  %3271 = vmatprep.subr.bf16.mxu0 0
  %3272 = vmatpush1.bf16.msra.mxu0 0
  %3273 = vmatprep.subr.bf16.mxu0 %v2064
  %3274 = vmatpush1.bf16.msra.mxu0 %v2061
  %3275 = vmatprep.subr.bf16.mxu0 %v1553
  %3276 = vmatpush1.bf16.msra.mxu0 %v1552
  %3277 = vmatprep.subr.bf16.mxu0 %v1489
  %3278 = vmatpush1.bf16.msra.mxu0 %v1488
  %3279 = vmatprep.subr.bf16.mxu0 %v1425
  %3280 = vmatpush1.bf16.msra.mxu0 %v1424
  %3281 = vmatprep.subr.bf16.mxu0 %v1361
  %3282 = vmatpush1.bf16.msra.mxu0 %v1360
  %3283 = vmatprep.subr.bf16.mxu0 0
  %3284 = vmatpush2.bf16.msra.mxu0 0
  %3285 = vmatprep.subr.bf16.mxu0 0
  %3286 = vmatpush2.bf16.msra.mxu0 0
  %3287 = vmatprep.subr.bf16.mxu0 0
  %3288 = vmatpush2.bf16.msra.mxu0 0
  %3289 = vmatprep.subr.bf16.mxu0 0
  %3290 = vmatpush2.bf16.msra.mxu0 0
  %3291 = vmatprep.subr.bf16.mxu0 0
  %3292 = vmatpush2.bf16.msra.mxu0 0
  %3293 = vmatprep.subr.bf16.mxu0 0
  %3294 = vmatpush2.bf16.msra.mxu0 0
  %3295 = vmatprep.subr.bf16.mxu0 0
  %3296 = vmatpush2.bf16.msra.mxu0 0
  %3297 = vmatprep.subr.bf16.mxu0 0
  %3298 = vmatpush2.bf16.msra.mxu0 0
  %3299 = vmatprep.mubr.bf16.mxu0 0
  %3300 = vmatmul.mubr.bf16.gmra.mxu0 %v1880
  %v3301 = vpop.f32.mrf.mxu0
  %v3302 = vadd.f32 %v340, %v3301
  %v3303 = vpop.f32.mrf.mxu0
  %v3304 = vadd.f32 %v340, %v3303
  %v3305 = vpop.f32.mrf.mxu0
  %v3306 = vpop.f32.mrf.mxu0
  %3307 = vdwg.mxu0
  %3308 = vmatprep.subr.bf16.mxu0 0
  %3309 = vmatpush1.bf16.msra.mxu0 0
  %3310 = vmatprep.subr.bf16.mxu0 0
  %3311 = vmatpush1.bf16.msra.mxu0 0
  %3312 = vmatprep.subr.bf16.mxu0 0
  %3313 = vmatpush1.bf16.msra.mxu0 0
  %3314 = vmatprep.subr.bf16.mxu0 %v2070
  %3315 = vmatpush1.bf16.msra.mxu0 %v2067
  %3316 = vmatprep.subr.bf16.mxu0 %v1555
  %3317 = vmatpush1.bf16.msra.mxu0 %v1554
  %3318 = vmatprep.subr.bf16.mxu0 %v1491
  %3319 = vmatpush1.bf16.msra.mxu0 %v1490
  %3320 = vmatprep.subr.bf16.mxu0 %v1427
  %3321 = vmatpush1.bf16.msra.mxu0 %v1426
  %3322 = vmatprep.subr.bf16.mxu0 %v1363
  %3323 = vmatpush1.bf16.msra.mxu0 %v1362
  %3324 = vmatprep.subr.bf16.mxu0 0
  %3325 = vmatpush2.bf16.msra.mxu0 0
  %3326 = vmatprep.subr.bf16.mxu0 0
  %3327 = vmatpush2.bf16.msra.mxu0 0
  %3328 = vmatprep.subr.bf16.mxu0 0
  %3329 = vmatpush2.bf16.msra.mxu0 0
  %3330 = vmatprep.subr.bf16.mxu0 0
  %3331 = vmatpush2.bf16.msra.mxu0 0
  %3332 = vmatprep.subr.bf16.mxu0 0
  %3333 = vmatpush2.bf16.msra.mxu0 0
  %3334 = vmatprep.subr.bf16.mxu0 0
  %3335 = vmatpush2.bf16.msra.mxu0 0
  %3336 = vmatprep.subr.bf16.mxu0 0
  %3337 = vmatpush2.bf16.msra.mxu0 0
  %3338 = vmatprep.subr.bf16.mxu0 0
  %3339 = vmatpush2.bf16.msra.mxu0 0
  %3340 = vmatprep.mubr.bf16.mxu0 0
  %3341 = vmatmul.mubr.bf16.gmra.mxu0 %v1880
  %v3342 = vpop.f32.mrf.mxu0
  %v3343 = vadd.f32 %v340, %v3342
  %v3344 = vpop.f32.mrf.mxu0
  %v3345 = vadd.f32 %v340, %v3344
  %v3346 = vpop.f32.mrf.mxu0
  %v3347 = vpop.f32.mrf.mxu0
  %3348 = vdwg.mxu0
  %3349 = vmatprep.subr.bf16.mxu0 0
  %3350 = vmatpush1.bf16.msra.mxu0 0
  %3351 = vmatprep.subr.bf16.mxu0 0
  %3352 = vmatpush1.bf16.msra.mxu0 0
  %3353 = vmatprep.subr.bf16.mxu0 0
  %3354 = vmatpush1.bf16.msra.mxu0 0
  %3355 = vmatprep.subr.bf16.mxu0 %v2076
  %3356 = vmatpush1.bf16.msra.mxu0 %v2073
  %3357 = vmatprep.subr.bf16.mxu0 %v1557
  %3358 = vmatpush1.bf16.msra.mxu0 %v1556
  %3359 = vmatprep.subr.bf16.mxu0 %v1493
  %3360 = vmatpush1.bf16.msra.mxu0 %v1492
  %3361 = vmatprep.subr.bf16.mxu0 %v1429
  %3362 = vmatpush1.bf16.msra.mxu0 %v1428
  %3363 = vmatprep.subr.bf16.mxu0 %v1365
  %3364 = vmatpush1.bf16.msra.mxu0 %v1364
  %3365 = vmatprep.subr.bf16.mxu0 0
  %3366 = vmatpush2.bf16.msra.mxu0 0
  %3367 = vmatprep.subr.bf16.mxu0 0
  %3368 = vmatpush2.bf16.msra.mxu0 0
  %3369 = vmatprep.subr.bf16.mxu0 0
  %3370 = vmatpush2.bf16.msra.mxu0 0
  %3371 = vmatprep.subr.bf16.mxu0 0
  %3372 = vmatpush2.bf16.msra.mxu0 0
  %3373 = vmatprep.subr.bf16.mxu0 0
  %3374 = vmatpush2.bf16.msra.mxu0 0
  %3375 = vmatprep.subr.bf16.mxu0 0
  %3376 = vmatpush2.bf16.msra.mxu0 0
  %3377 = vmatprep.subr.bf16.mxu0 0
  %3378 = vmatpush2.bf16.msra.mxu0 0
  %3379 = vmatprep.subr.bf16.mxu0 0
  %3380 = vmatpush2.bf16.msra.mxu0 0
  %3381 = vmatprep.mubr.bf16.mxu0 0
  %3382 = vmatmul.mubr.bf16.gmra.mxu0 %v1880
  %v3383 = vpop.f32.mrf.mxu0
  %v3384 = vadd.f32 %v340, %v3383
  %v3385 = vpop.f32.mrf.mxu0
  %v3386 = vadd.f32 %v340, %v3385
  %v3387 = vpop.f32.mrf.mxu0
  %v3388 = vpop.f32.mrf.mxu0
  %3389 = vdwg.mxu0
  %v3390 = vmax.f32 %v2113, 0.0
  %v3391 = vmax.f32 %v2115, 0.0
  %v3392 = vmax.f32 %v2154, 0.0
  %v3393 = vmax.f32 %v2156, 0.0
  %v3394 = vmax.f32 %v2195, 0.0
  %v3395 = vmax.f32 %v2197, 0.0
  %v3396 = vmax.f32 %v2236, 0.0
  %v3397 = vmax.f32 %v2238, 0.0
  %v3398 = vmax.f32 %v2277, 0.0
  %v3399 = vmax.f32 %v2279, 0.0
  %v3400 = vmax.f32 %v2318, 0.0
  %v3401 = vmax.f32 %v2320, 0.0
  %v3402 = vmax.f32 %v2359, 0.0
  %v3403 = vmax.f32 %v2361, 0.0
  %v3404 = vmax.f32 %v2400, 0.0
  %v3405 = vmax.f32 %v2402, 0.0
  %v3406 = vmax.f32 %v2441, 0.0
  %v3407 = vmax.f32 %v2443, 0.0
  %v3408 = vmax.f32 %v2482, 0.0
  %v3409 = vmax.f32 %v2484, 0.0
  %v3410 = vmax.f32 %v2523, 0.0
  %v3411 = vmax.f32 %v2525, 0.0
  %v3412 = vmax.f32 %v2564, 0.0
  %v3413 = vmax.f32 %v2566, 0.0
  %v3414 = vmax.f32 %v2605, 0.0
  %v3415 = vmax.f32 %v2607, 0.0
  %v3416 = vmax.f32 %v2646, 0.0
  %v3417 = vmax.f32 %v2648, 0.0
  %v3418 = vmax.f32 %v2687, 0.0
  %v3419 = vmax.f32 %v2689, 0.0
  %v3420 = vmax.f32 %v2728, 0.0
  %v3421 = vmax.f32 %v2730, 0.0
  %v3422 = vmax.f32 %v2769, 0.0
  %v3423 = vmax.f32 %v2771, 0.0
  %v3424 = vmax.f32 %v2810, 0.0
  %v3425 = vmax.f32 %v2812, 0.0
  %v3426 = vmax.f32 %v2851, 0.0
  %v3427 = vmax.f32 %v2853, 0.0
  %v3428 = vmax.f32 %v2892, 0.0
  %v3429 = vmax.f32 %v2894, 0.0
  %v3430 = vmax.f32 %v2933, 0.0
  %v3431 = vmax.f32 %v2935, 0.0
  %v3432 = vmax.f32 %v2974, 0.0
  %v3433 = vmax.f32 %v2976, 0.0
  %v3434 = vmax.f32 %v3015, 0.0
  %v3435 = vmax.f32 %v3017, 0.0
  %v3436 = vmax.f32 %v3056, 0.0
  %v3437 = vmax.f32 %v3058, 0.0
  %v3438 = vmax.f32 %v3097, 0.0
  %v3439 = vmax.f32 %v3099, 0.0
  %v3440 = vmax.f32 %v3138, 0.0
  %v3441 = vmax.f32 %v3140, 0.0
  %v3442 = vmax.f32 %v3179, 0.0
  %v3443 = vmax.f32 %v3181, 0.0
  %v3444 = vmax.f32 %v3220, 0.0
  %v3445 = vmax.f32 %v3222, 0.0
  %v3446 = vmax.f32 %v3261, 0.0
  %v3447 = vmax.f32 %v3263, 0.0
  %v3448 = vmax.f32 %v3302, 0.0
  %v3449 = vmax.f32 %v3304, 0.0
  %v3450 = vmax.f32 %v3343, 0.0
  %v3451 = vmax.f32 %v3345, 0.0
  %v3452 = vmax.f32 %v3384, 0.0
  %v3453 = vmax.f32 %v3386, 0.0
  %v3454 = vmax.f32 %v3390, %v3406
  %v3455 = vmax.f32 %v3391, %v3407
  %v3456 = vmax.f32 %v3392, %v3408
  %v3457 = vmax.f32 %v3393, %v3409
  %v3458 = vmax.f32 %v3394, %v3410
  %v3459 = vmax.f32 %v3395, %v3411
  %v3460 = vmax.f32 %v3396, %v3412
  %v3461 = vmax.f32 %v3397, %v3413
  %v3462 = vmax.f32 %v3398, %v3414
  %v3463 = vmax.f32 %v3399, %v3415
  %v3464 = vmax.f32 %v3400, %v3416
  %v3465 = vmax.f32 %v3401, %v3417
  %v3466 = vmax.f32 %v3402, %v3418
  %v3467 = vmax.f32 %v3403, %v3419
  %v3468 = vmax.f32 %v3404, %v3420
  %v3469 = vmax.f32 %v3405, %v3421
  %v3470 = vmax.f32 %v3422, %v3438
  %v3471 = vmax.f32 %v3423, %v3439
  %v3472 = vmax.f32 %v3424, %v3440
  %v3473 = vmax.f32 %v3425, %v3441
  %v3474 = vmax.f32 %v3426, %v3442
  %v3475 = vmax.f32 %v3427, %v3443
  %v3476 = vmax.f32 %v3428, %v3444
  %v3477 = vmax.f32 %v3429, %v3445
  %v3478 = vmax.f32 %v3430, %v3446
  %v3479 = vmax.f32 %v3431, %v3447
  %v3480 = vmax.f32 %v3432, %v3448
  %v3481 = vmax.f32 %v3433, %v3449
  %v3482 = vmax.f32 %v3434, %v3450
  %v3483 = vmax.f32 %v3435, %v3451
  %v3484 = vmax.f32 %v3436, %v3452
  %v3485 = vmax.f32 %v3437, %v3453
  %v3486 = vmax.f32 %v3454, %v3470
  %v3487 = vmax.f32 %v3455, %v3471
  %v3488 = vmax.f32 %v3456, %v3472
  %v3489 = vmax.f32 %v3457, %v3473
  %v3490 = vmax.f32 %v3458, %v3474
  %v3491 = vmax.f32 %v3459, %v3475
  %v3492 = vmax.f32 %v3460, %v3476
  %v3493 = vmax.f32 %v3461, %v3477
  %v3494 = vmax.f32 %v3462, %v3478
  %v3495 = vmax.f32 %v3463, %v3479
  %v3496 = vmax.f32 %v3464, %v3480
  %v3497 = vmax.f32 %v3465, %v3481
  %v3498 = vmax.f32 %v3466, %v3482
  %v3499 = vmax.f32 %v3467, %v3483
  %v3500 = vmax.f32 %v3468, %v3484
  %v3501 = vmax.f32 %v3469, %v3485
  %v3502 = vpack.c.bf16 %v3486, %v3486
  %v3503 = vpack.c.bf16 %v3487, %v3487
  %v3504 = vpack.c.bf16 %v3488, %v3488
  %v3505 = vpack.c.bf16 %v3489, %v3489
  %v3506 = vpack.c.bf16 %v3490, %v3490
  %v3507 = vpack.c.bf16 %v3491, %v3491
  %v3508 = vpack.c.bf16 %v3492, %v3492
  %v3509 = vpack.c.bf16 %v3493, %v3493
  %v3510 = vpack.c.bf16 %v3494, %v3494
  %v3511 = vpack.c.bf16 %v3495, %v3495
  %v3512 = vpack.c.bf16 %v3496, %v3496
  %v3513 = vpack.c.bf16 %v3497, %v3497
  %v3514 = vpack.c.bf16 %v3498, %v3498
  %v3515 = vpack.c.bf16 %v3499, %v3499
  %v3516 = vpack.c.bf16 %v3500, %v3500
  %v3517 = vpack.c.bf16 %v3501, %v3501
  %v3534 = vunpack.c.l.b16 %v3502
  %v3535 = vunpack.c.l.b16 %v3503
  %v3536 = vunpack.c.l.b16 %v3504
  %v3537 = vunpack.c.l.b16 %v3505
  %v3538 = vunpack.c.l.b16 %v3506
  %v3539 = vunpack.c.l.b16 %v3507
  %v3540 = vunpack.c.l.b16 %v3508
  %v3541 = vunpack.c.l.b16 %v3509
  %v3542 = vunpack.c.l.b16 %v3510
  %v3543 = vunpack.c.l.b16 %v3511
  %v3544 = vunpack.c.l.b16 %v3512
  %v3545 = vunpack.c.l.b16 %v3513
  %v3546 = vunpack.c.l.b16 %v3514
  %v3547 = vunpack.c.l.b16 %v3515
  %v3548 = vunpack.c.l.b16 %v3516
  %v3549 = vunpack.c.l.b16 %v3517
  %v3550 = vpack.c.b16 %v3535, %v3534
  %v3551 = vpack.c.b16 %v3537, %v3536
  %v3552 = vpack.c.b16 %v3539, %v3538
  %v3553 = vpack.c.b16 %v3541, %v3540
  %v3554 = vpack.c.b16 %v3543, %v3542
  %v3555 = vpack.c.b16 %v3545, %v3544
  %v3556 = vpack.c.b16 %v3547, %v3546
  %v3557 = vpack.c.b16 %v3549, %v3548
  %3566 = vst [vmem:[%s3] sm:$0xff] %v3550
  %3567 = vst [vmem:[%s3 + $0x8] sm:$0xff] %v3551
  %3568 = vst [vmem:[%s3 + $0x10] sm:$0xff] %v3552
  %3569 = vst [vmem:[%s3 + $0x18] sm:$0xff] %v3553
  %3570 = vst [vmem:[%s3 + $0x20] sm:$0xff] %v3554
  %3571 = vst [vmem:[%s3 + $0x28] sm:$0xff] %v3555
  %3572 = vst [vmem:[%s3 + $0x30] sm:$0xff] %v3556
  %3573 = vst [vmem:[%s3 + $0x38] sm:$0xff] %v3557
  // Predicated region
  $region14: #{net_forward.2} parent=0 // pred_check
    _
  $region15: #{net_forward.2} parent=0 // pred_check_branch
    %3575 = sbr.rel (0) target = $region17
  $region16: #{net_forward.2} parent=0 // pred_region
    _
  $region17: #{net_forward.2} parent=0 // pred_fallthru
    _
  // Predicated region
  $region18: #{net_forward.2} parent=0 // pred_check
    _
  $region19: #{net_forward.2} parent=0 // pred_check_branch
    %3577 = sbr.rel (0) target = $region21
  $region20: #{net_forward.2} parent=0 // pred_region
    _
  $region21: #{net_forward.2} parent=0 // pred_fallthru
    _

// kernel: net_forward.3
$region0: #{net_forward.3}
  #allocation0 [shape = 'u32[]', space=smem, size = 0x4, offset = 0x4, fixed_abs, tag = 'smem constant byte address 0x4 - core index']
  #allocation1 [shape = 'u32[144,128]{1,0:T(1,128)}', space=vmem, size = 0x12000, scoped, tag = 'internal scratch']
  %s0 = inlined_call_operand.vmem [shape: bf16[1,1024,150], index: 0, kind: input, shape index: {}]
  %s1 = inlined_call_operand.vmem [shape: bf16[150,16], index: 1, kind: input, shape index: {}]
  %s2 = inlined_call_operand.vmem [shape: f32[1,16], index: 2, kind: input, shape index: {}]
  %s3 = inlined_call_operand.vmem [shape: bf16[32,16,120], index: 3, kind: input, shape index: {}]
  %s4 = inlined_call_operand.vmem [shape: f32[1,120], index: 4, kind: input, shape index: {}]
  %s5 = inlined_call_operand.vmem [shape: bf16[120,84], index: 5, kind: input, shape index: {}]
  %s6 = inlined_call_operand.vmem [shape: f32[1,84], index: 6, kind: input, shape index: {}]
  %s7 = inlined_call_operand.vmem [shape: bf16[84,128], index: 7, kind: input, shape index: {}]
  %s8 = inlined_call_operand.vmem [shape: f32[1,128], index: 8, kind: input, shape index: {}]
  %s9 = inlined_call_operand.vmem [shape: f32[1,8,128], index: 9, kind: output, shape index: {}]
  %s10 = sld [smem:[#allocation0]]
  $region46: #{net_forward.3} parent=0
    _
  %s12 = ssub.s32 1, %s10
  %s13 = scalar_select 0, %s12, %s10
  // Predicated region
  $region2: #{net_forward.3} parent=0 // pred_check
    _
  $region3: #{net_forward.3} parent=0 // pred_check_branch
    %15 = sbr.rel (0) target = $region5
  $region4: #{net_forward.3} parent=0 // pred_region
    _
  $region5: #{net_forward.3} parent=0 // pred_fallthru
    _
  // Predicated region
  $region6: #{net_forward.3} parent=0 // pred_check
    _
  $region7: #{net_forward.3} parent=0 // pred_check_branch
    %17 = sbr.rel (0) target = $region9
  $region8: #{net_forward.3} parent=0 // pred_region
    _
  $region9: #{net_forward.3} parent=0 // pred_fallthru
    _
  // Predicated region
  $region10: #{net_forward.3} parent=0 // pred_check
    _
  $region11: #{net_forward.3} parent=0 // pred_check_branch
    %19 = sbr.rel (0) target = $region13
  $region12: #{net_forward.3} parent=0 // pred_region
    _
  $region13: #{net_forward.3} parent=0 // pred_fallthru
    _
  // Predicated region
  $region14: #{net_forward.3} parent=0 // pred_check
    _
  $region15: #{net_forward.3} parent=0 // pred_check_branch
    %21 = sbr.rel (0) target = $region17
  $region16: #{net_forward.3} parent=0 // pred_region
    _
  $region17: #{net_forward.3} parent=0 // pred_fallthru
    _
  // Predicated region
  $region18: #{net_forward.3} parent=0 // pred_check
    _
  $region19: #{net_forward.3} parent=0 // pred_check_branch
    %23 = sbr.rel (0) target = $region21
  $region20: #{net_forward.3} parent=0 // pred_region
    _
  $region21: #{net_forward.3} parent=0 // pred_fallthru
    _
  // Predicated region
  $region22: #{net_forward.3} parent=0 // pred_check
    _
  $region23: #{net_forward.3} parent=0 // pred_check_branch
    %25 = sbr.rel (0) target = $region25
  $region24: #{net_forward.3} parent=0 // pred_region
    _
  $region25: #{net_forward.3} parent=0 // pred_fallthru
    _
  // Predicated region
  $region26: #{net_forward.3} parent=0 // pred_check
    _
  $region27: #{net_forward.3} parent=0 // pred_check_branch
    %27 = sbr.rel (0) target = $region29
  $region28: #{net_forward.3} parent=0 // pred_region
    _
  $region29: #{net_forward.3} parent=0 // pred_fallthru
    _
  // Predicated region
  $region30: #{net_forward.3} parent=0 // pred_check
    _
  $region31: #{net_forward.3} parent=0 // pred_check_branch
    %29 = sbr.rel (0) target = $region33
  $region32: #{net_forward.3} parent=0 // pred_region
    _
  $region33: #{net_forward.3} parent=0 // pred_fallthru
    _
  // Predicated region
  $region34: #{net_forward.3} parent=0 // pred_check
    _
  $region35: #{net_forward.3} parent=0 // pred_check_branch
    %31 = sbr.rel (0) target = $region37
  $region36: #{net_forward.3} parent=0 // pred_region
    _
  $region37: #{net_forward.3} parent=0 // pred_fallthru
    _
  %v33 = vld [vmem:[%s0] sm:$0xff]
  %v34 = vld [vmem:[%s0 + $0x8] sm:$0xff]
  %v35 = vld [vmem:[%s0 + $0x10] sm:$0xff]
  %v36 = vld [vmem:[%s0 + $0x18] sm:$0xff]
  %v37 = vld [vmem:[%s0 + $0x20] sm:$0xff]
  %v38 = vld [vmem:[%s0 + $0x28] sm:$0xff]
  %v39 = vld [vmem:[%s0 + $0x30] sm:$0xff]
  %v40 = vld [vmem:[%s0 + $0x38] sm:$0xff]
  %v41 = vld [vmem:[%s0 + $0x40] sm:$0xff]
  %v42 = vld [vmem:[%s0 + $0x48] sm:$0xff]
  %v43 = vld [vmem:[%s0 + $0x50] sm:$0xff]
  %v44 = vld [vmem:[%s0 + $0x58] sm:$0xff]
  %v45 = vld [vmem:[%s0 + $0x60] sm:$0xff]
  %v46 = vld [vmem:[%s0 + $0x68] sm:$0xff]
  %v47 = vld [vmem:[%s0 + $0x70] sm:$0xff]
  %v48 = vld [vmem:[%s0 + $0x78] sm:$0xff]
  %v49 = vld [vmem:[%s0 + $0x80] sm:$0xff]
  %v50 = vld [vmem:[%s0 + $0x88] sm:$0xff]
  %v51 = vld [vmem:[%s0 + $0x90] sm:$0xff]
  %v52 = vld [vmem:[%s0 + $0x98] sm:$0xff]
  %v53 = vld [vmem:[%s0 + $0xa0] sm:$0xff]
  %v54 = vld [vmem:[%s0 + $0xa8] sm:$0xff]
  %v55 = vld [vmem:[%s0 + $0xb0] sm:$0xff]
  %v56 = vld [vmem:[%s0 + $0xb8] sm:$0xff]
  %v57 = vld [vmem:[%s0 + $0xc0] sm:$0xff]
  %v58 = vld [vmem:[%s0 + $0xc8] sm:$0xff]
  %v59 = vld [vmem:[%s0 + $0xd0] sm:$0xff]
  %v60 = vld [vmem:[%s0 + $0xd8] sm:$0xff]
  %v61 = vld [vmem:[%s0 + $0xe0] sm:$0xff]
  %v62 = vld [vmem:[%s0 + $0xe8] sm:$0xff]
  %v63 = vld [vmem:[%s0 + $0xf0] sm:$0xff]
  %v64 = vld [vmem:[%s0 + $0xf8] sm:$0xff]
  %v65 = vld [vmem:[%s0 + $0x100] sm:$0xff]
  %v66 = vld [vmem:[%s0 + $0x108] sm:$0xff]
  %v67 = vld [vmem:[%s0 + $0x110] sm:$0xff]
  %v68 = vld [vmem:[%s0 + $0x118] sm:$0xff]
  %v69 = vld [vmem:[%s0 + $0x120] sm:$0xff]
  %v70 = vld [vmem:[%s0 + $0x128] sm:$0xff]
  %v71 = vld [vmem:[%s0 + $0x130] sm:$0xff]
  %v72 = vld [vmem:[%s0 + $0x138] sm:$0xff]
  %v73 = vld [vmem:[%s0 + $0x140] sm:$0xff]
  %v74 = vld [vmem:[%s0 + $0x148] sm:$0xff]
  %v75 = vld [vmem:[%s0 + $0x150] sm:$0xff]
  %v76 = vld [vmem:[%s0 + $0x158] sm:$0xff]
  %v77 = vld [vmem:[%s0 + $0x160] sm:$0xff]
  %v78 = vld [vmem:[%s0 + $0x168] sm:$0xff]
  %v79 = vld [vmem:[%s0 + $0x170] sm:$0xff]
  %v80 = vld [vmem:[%s0 + $0x178] sm:$0xff]
  %v81 = vld [vmem:[%s0 + $0x180] sm:$0xff]
  %v82 = vld [vmem:[%s0 + $0x188] sm:$0xff]
  %v83 = vld [vmem:[%s0 + $0x190] sm:$0xff]
  %v84 = vld [vmem:[%s0 + $0x198] sm:$0xff]
  %v85 = vld [vmem:[%s0 + $0x1a0] sm:$0xff]
  %v86 = vld [vmem:[%s0 + $0x1a8] sm:$0xff]
  %v87 = vld [vmem:[%s0 + $0x1b0] sm:$0xff]
  %v88 = vld [vmem:[%s0 + $0x1b8] sm:$0xff]
  %v89 = vld [vmem:[%s0 + $0x1c0] sm:$0xff]
  %v90 = vld [vmem:[%s0 + $0x1c8] sm:$0xff]
  %v91 = vld [vmem:[%s0 + $0x1d0] sm:$0xff]
  %v92 = vld [vmem:[%s0 + $0x1d8] sm:$0xff]
  %v93 = vld [vmem:[%s0 + $0x1e0] sm:$0xff]
  %v94 = vld [vmem:[%s0 + $0x1e8] sm:$0xff]
  %v95 = vld [vmem:[%s0 + $0x1f0] sm:$0xff]
  %v96 = vld [vmem:[%s0 + $0x1f8] sm:$0xff]
  %v97 = vld [vmem:[%s0 + $0x200] sm:$0xff]
  %v98 = vld [vmem:[%s0 + $0x208] sm:$0xff]
  %v99 = vld [vmem:[%s0 + $0x210] sm:$0xff]
  %v100 = vld [vmem:[%s0 + $0x218] sm:$0xff]
  %v101 = vld [vmem:[%s0 + $0x220] sm:$0xff]
  %v102 = vld [vmem:[%s0 + $0x228] sm:$0xff]
  %v103 = vld [vmem:[%s0 + $0x230] sm:$0xff]
  %v104 = vld [vmem:[%s0 + $0x238] sm:$0xff]
  %v105 = vld [vmem:[%s0 + $0x240] sm:$0xff]
  %v106 = vld [vmem:[%s0 + $0x248] sm:$0xff]
  %v107 = vld [vmem:[%s0 + $0x250] sm:$0xff]
  %v108 = vld [vmem:[%s0 + $0x258] sm:$0xff]
  %v109 = vld [vmem:[%s0 + $0x260] sm:$0xff]
  %v110 = vld [vmem:[%s0 + $0x268] sm:$0xff]
  %v111 = vld [vmem:[%s0 + $0x270] sm:$0xff]
  %v112 = vld [vmem:[%s0 + $0x278] sm:$0xff]
  %v113 = vld [vmem:[%s0 + $0x280] sm:$0xff]
  %v114 = vld [vmem:[%s0 + $0x288] sm:$0xff]
  %v115 = vld [vmem:[%s0 + $0x290] sm:$0xff]
  %v116 = vld [vmem:[%s0 + $0x298] sm:$0xff]
  %v117 = vld [vmem:[%s0 + $0x2a0] sm:$0xff]
  %v118 = vld [vmem:[%s0 + $0x2a8] sm:$0xff]
  %v119 = vld [vmem:[%s0 + $0x2b0] sm:$0xff]
  %v120 = vld [vmem:[%s0 + $0x2b8] sm:$0xff]
  %v121 = vld [vmem:[%s0 + $0x2c0] sm:$0xff]
  %v122 = vld [vmem:[%s0 + $0x2c8] sm:$0xff]
  %v123 = vld [vmem:[%s0 + $0x2d0] sm:$0xff]
  %v124 = vld [vmem:[%s0 + $0x2d8] sm:$0xff]
  %v125 = vld [vmem:[%s0 + $0x2e0] sm:$0xff]
  %v126 = vld [vmem:[%s0 + $0x2e8] sm:$0xff]
  %v127 = vld [vmem:[%s0 + $0x2f0] sm:$0xff]
  %v128 = vld [vmem:[%s0 + $0x2f8] sm:$0xff]
  %v129 = vld [vmem:[%s0 + $0x300] sm:$0xff]
  %v130 = vld [vmem:[%s0 + $0x308] sm:$0xff]
  %v131 = vld [vmem:[%s0 + $0x310] sm:$0xff]
  %v132 = vld [vmem:[%s0 + $0x318] sm:$0xff]
  %v133 = vld [vmem:[%s0 + $0x320] sm:$0xff]
  %v134 = vld [vmem:[%s0 + $0x328] sm:$0xff]
  %v135 = vld [vmem:[%s0 + $0x330] sm:$0xff]
  %v136 = vld [vmem:[%s0 + $0x338] sm:$0xff]
  %v137 = vld [vmem:[%s0 + $0x340] sm:$0xff]
  %v138 = vld [vmem:[%s0 + $0x348] sm:$0xff]
  %v139 = vld [vmem:[%s0 + $0x350] sm:$0xff]
  %v140 = vld [vmem:[%s0 + $0x358] sm:$0xff]
  %v141 = vld [vmem:[%s0 + $0x360] sm:$0xff]
  %v142 = vld [vmem:[%s0 + $0x368] sm:$0xff]
  %v143 = vld [vmem:[%s0 + $0x370] sm:$0xff]
  %v144 = vld [vmem:[%s0 + $0x378] sm:$0xff]
  %v145 = vld [vmem:[%s0 + $0x380] sm:$0xff]
  %v146 = vld [vmem:[%s0 + $0x388] sm:$0xff]
  %v147 = vld [vmem:[%s0 + $0x390] sm:$0xff]
  %v148 = vld [vmem:[%s0 + $0x398] sm:$0xff]
  %v149 = vld [vmem:[%s0 + $0x3a0] sm:$0xff]
  %v150 = vld [vmem:[%s0 + $0x3a8] sm:$0xff]
  %v151 = vld [vmem:[%s0 + $0x3b0] sm:$0xff]
  %v152 = vld [vmem:[%s0 + $0x3b8] sm:$0xff]
  %v153 = vld [vmem:[%s0 + $0x3c0] sm:$0xff]
  %v154 = vld [vmem:[%s0 + $0x3c8] sm:$0xff]
  %v155 = vld [vmem:[%s0 + $0x3d0] sm:$0xff]
  %v156 = vld [vmem:[%s0 + $0x3d8] sm:$0xff]
  %v157 = vld [vmem:[%s0 + $0x3e0] sm:$0xff]
  %v158 = vld [vmem:[%s0 + $0x3e8] sm:$0xff]
  %v159 = vld [vmem:[%s0 + $0x3f0] sm:$0xff]
  %v160 = vld [vmem:[%s0 + $0x3f8] sm:$0xff]
  %v161 = vld [vmem:[%s1] sm:$0xf]
  %v162 = vld [vmem:[%s1 + $0x4] sm:$0xf]
  %v163 = vld [vmem:[%s1 + $0x8] sm:$0xf]
  %v164 = vld [vmem:[%s1 + $0xc] sm:$0xf]
  %v165 = vld [vmem:[%s1 + $0x10] sm:$0xf]
  %v166 = vld [vmem:[%s1 + $0x14] sm:$0xf]
  %v167 = vld [vmem:[%s1 + $0x18] sm:$0xf]
  %v168 = vld [vmem:[%s1 + $0x1c] sm:$0xf]
  %v169 = vld [vmem:[%s1 + $0x20] sm:$0xf]
  %v170 = vld [vmem:[%s1 + $0x24] sm:$0xf]
  %v171 = vld [vmem:[%s1 + $0x28] sm:$0xf]
  %v172 = vld [vmem:[%s1 + $0x2c] sm:$0xf]
  %v173 = vld [vmem:[%s1 + $0x30] sm:$0xf]
  %v174 = vld [vmem:[%s1 + $0x34] sm:$0xf]
  %v175 = vld [vmem:[%s1 + $0x38] sm:$0xf]
  %v176 = vld [vmem:[%s1 + $0x3c] sm:$0xf]
  %v177 = vld [vmem:[%s1 + $0x40] sm:$0xf]
  %v178 = vld [vmem:[%s1 + $0x44] sm:$0xf]
  %v179 = vld [vmem:[%s1 + $0x48] sm:$0x7]
  %v180 = vld [vmem:[%s2] sm:$0x1]
  %v182 = vlaneseq
  %v183 = vshrl.u32 %v182, 7
  %v184 = vsub.s32 0, %v183
  %v185 = vrot.slane %v180, %v184
  %v315 = vunpack.c.l.b16 %v33
  %v316 = vunpack.c.h.b16 %v33
  %v317 = vunpack.c.l.b16 %v34
  %v318 = vunpack.c.h.b16 %v34
  %v319 = vunpack.c.l.b16 %v35
  %v320 = vunpack.c.h.b16 %v35
  %v321 = vunpack.c.l.b16 %v36
  %v322 = vunpack.c.h.b16 %v36
  %v323 = vunpack.c.l.b16 %v37
  %v324 = vunpack.c.h.b16 %v37
  %v325 = vunpack.c.l.b16 %v38
  %v326 = vunpack.c.h.b16 %v38
  %v327 = vunpack.c.l.b16 %v39
  %v328 = vunpack.c.h.b16 %v39
  %v329 = vunpack.c.l.b16 %v40
  %v330 = vunpack.c.h.b16 %v40
  %v331 = vunpack.c.l.b16 %v41
  %v332 = vunpack.c.h.b16 %v41
  %v333 = vunpack.c.l.b16 %v42
  %v334 = vunpack.c.h.b16 %v42
  %v335 = vunpack.c.l.b16 %v43
  %v336 = vunpack.c.h.b16 %v43
  %v337 = vunpack.c.l.b16 %v44
  %v338 = vunpack.c.h.b16 %v44
  %v339 = vunpack.c.l.b16 %v45
  %v340 = vunpack.c.h.b16 %v45
  %v341 = vunpack.c.l.b16 %v46
  %v342 = vunpack.c.h.b16 %v46
  %v343 = vunpack.c.l.b16 %v47
  %v344 = vunpack.c.h.b16 %v47
  %v345 = vunpack.c.l.b16 %v48
  %v346 = vunpack.c.h.b16 %v48
  %v347 = vunpack.c.l.b16 %v49
  %v348 = vunpack.c.h.b16 %v49
  %v349 = vunpack.c.l.b16 %v50
  %v350 = vunpack.c.h.b16 %v50
  %v351 = vunpack.c.l.b16 %v51
  %v352 = vunpack.c.h.b16 %v51
  %v353 = vunpack.c.l.b16 %v52
  %v354 = vunpack.c.h.b16 %v52
  %v355 = vunpack.c.l.b16 %v53
  %v356 = vunpack.c.h.b16 %v53
  %v357 = vunpack.c.l.b16 %v54
  %v358 = vunpack.c.h.b16 %v54
  %v359 = vunpack.c.l.b16 %v55
  %v360 = vunpack.c.h.b16 %v55
  %v361 = vunpack.c.l.b16 %v56
  %v362 = vunpack.c.h.b16 %v56
  %v363 = vunpack.c.l.b16 %v57
  %v364 = vunpack.c.h.b16 %v57
  %v365 = vunpack.c.l.b16 %v58
  %v366 = vunpack.c.h.b16 %v58
  %v367 = vunpack.c.l.b16 %v59
  %v368 = vunpack.c.h.b16 %v59
  %v369 = vunpack.c.l.b16 %v60
  %v370 = vunpack.c.h.b16 %v60
  %v371 = vunpack.c.l.b16 %v61
  %v372 = vunpack.c.h.b16 %v61
  %v373 = vunpack.c.l.b16 %v62
  %v374 = vunpack.c.h.b16 %v62
  %v375 = vunpack.c.l.b16 %v63
  %v376 = vunpack.c.h.b16 %v63
  %v377 = vunpack.c.l.b16 %v64
  %v378 = vunpack.c.h.b16 %v64
  %v379 = vunpack.c.l.b16 %v65
  %v380 = vunpack.c.h.b16 %v65
  %v381 = vunpack.c.l.b16 %v66
  %v382 = vunpack.c.h.b16 %v66
  %v383 = vunpack.c.l.b16 %v67
  %v384 = vunpack.c.h.b16 %v67
  %v385 = vunpack.c.l.b16 %v68
  %v386 = vunpack.c.h.b16 %v68
  %v387 = vunpack.c.l.b16 %v69
  %v388 = vunpack.c.h.b16 %v69
  %v389 = vunpack.c.l.b16 %v70
  %v390 = vunpack.c.h.b16 %v70
  %v391 = vunpack.c.l.b16 %v71
  %v392 = vunpack.c.h.b16 %v71
  %v393 = vunpack.c.l.b16 %v72
  %v394 = vunpack.c.h.b16 %v72
  %v395 = vunpack.c.l.b16 %v73
  %v396 = vunpack.c.h.b16 %v73
  %v397 = vunpack.c.l.b16 %v74
  %v398 = vunpack.c.h.b16 %v74
  %v399 = vunpack.c.l.b16 %v75
  %v400 = vunpack.c.h.b16 %v75
  %v401 = vunpack.c.l.b16 %v76
  %v402 = vunpack.c.h.b16 %v76
  %v403 = vunpack.c.l.b16 %v77
  %v404 = vunpack.c.h.b16 %v77
  %v405 = vunpack.c.l.b16 %v78
  %v406 = vunpack.c.h.b16 %v78
  %v407 = vunpack.c.l.b16 %v79
  %v408 = vunpack.c.h.b16 %v79
  %v409 = vunpack.c.l.b16 %v80
  %v410 = vunpack.c.h.b16 %v80
  %v411 = vunpack.c.l.b16 %v81
  %v412 = vunpack.c.h.b16 %v81
  %v413 = vunpack.c.l.b16 %v82
  %v414 = vunpack.c.h.b16 %v82
  %v415 = vunpack.c.l.b16 %v83
  %v416 = vunpack.c.h.b16 %v83
  %v417 = vunpack.c.l.b16 %v84
  %v418 = vunpack.c.h.b16 %v84
  %v419 = vunpack.c.l.b16 %v85
  %v420 = vunpack.c.h.b16 %v85
  %v421 = vunpack.c.l.b16 %v86
  %v422 = vunpack.c.h.b16 %v86
  %v423 = vunpack.c.l.b16 %v87
  %v424 = vunpack.c.h.b16 %v87
  %v425 = vunpack.c.l.b16 %v88
  %v426 = vunpack.c.h.b16 %v88
  %v427 = vunpack.c.l.b16 %v89
  %v428 = vunpack.c.h.b16 %v89
  %v429 = vunpack.c.l.b16 %v90
  %v430 = vunpack.c.h.b16 %v90
  %v431 = vunpack.c.l.b16 %v91
  %v432 = vunpack.c.h.b16 %v91
  %v433 = vunpack.c.l.b16 %v92
  %v434 = vunpack.c.h.b16 %v92
  %v435 = vunpack.c.l.b16 %v93
  %v436 = vunpack.c.h.b16 %v93
  %v437 = vunpack.c.l.b16 %v94
  %v438 = vunpack.c.h.b16 %v94
  %v439 = vunpack.c.l.b16 %v95
  %v440 = vunpack.c.h.b16 %v95
  %v441 = vunpack.c.l.b16 %v96
  %v442 = vunpack.c.h.b16 %v96
  %v443 = vunpack.c.l.b16 %v97
  %v444 = vunpack.c.h.b16 %v97
  %v445 = vunpack.c.l.b16 %v98
  %v446 = vunpack.c.h.b16 %v98
  %v447 = vunpack.c.l.b16 %v99
  %v448 = vunpack.c.h.b16 %v99
  %v449 = vunpack.c.l.b16 %v100
  %v450 = vunpack.c.h.b16 %v100
  %v451 = vunpack.c.l.b16 %v101
  %v452 = vunpack.c.h.b16 %v101
  %v453 = vunpack.c.l.b16 %v102
  %v454 = vunpack.c.h.b16 %v102
  %v455 = vunpack.c.l.b16 %v103
  %v456 = vunpack.c.h.b16 %v103
  %v457 = vunpack.c.l.b16 %v104
  %v458 = vunpack.c.h.b16 %v104
  %v459 = vunpack.c.l.b16 %v105
  %v460 = vunpack.c.h.b16 %v105
  %v461 = vunpack.c.l.b16 %v106
  %v462 = vunpack.c.h.b16 %v106
  %v463 = vunpack.c.l.b16 %v107
  %v464 = vunpack.c.h.b16 %v107
  %v465 = vunpack.c.l.b16 %v108
  %v466 = vunpack.c.h.b16 %v108
  %v467 = vunpack.c.l.b16 %v109
  %v468 = vunpack.c.h.b16 %v109
  %v469 = vunpack.c.l.b16 %v110
  %v470 = vunpack.c.h.b16 %v110
  %v471 = vunpack.c.l.b16 %v111
  %v472 = vunpack.c.h.b16 %v111
  %v473 = vunpack.c.l.b16 %v112
  %v474 = vunpack.c.h.b16 %v112
  %v475 = vunpack.c.l.b16 %v113
  %v476 = vunpack.c.h.b16 %v113
  %v477 = vunpack.c.l.b16 %v114
  %v478 = vunpack.c.h.b16 %v114
  %v479 = vunpack.c.l.b16 %v115
  %v480 = vunpack.c.h.b16 %v115
  %v481 = vunpack.c.l.b16 %v116
  %v482 = vunpack.c.h.b16 %v116
  %v483 = vunpack.c.l.b16 %v117
  %v484 = vunpack.c.h.b16 %v117
  %v485 = vunpack.c.l.b16 %v118
  %v486 = vunpack.c.h.b16 %v118
  %v487 = vunpack.c.l.b16 %v119
  %v488 = vunpack.c.h.b16 %v119
  %v489 = vunpack.c.l.b16 %v120
  %v490 = vunpack.c.h.b16 %v120
  %v491 = vunpack.c.l.b16 %v121
  %v492 = vunpack.c.h.b16 %v121
  %v493 = vunpack.c.l.b16 %v122
  %v494 = vunpack.c.h.b16 %v122
  %v495 = vunpack.c.l.b16 %v123
  %v496 = vunpack.c.h.b16 %v123
  %v497 = vunpack.c.l.b16 %v124
  %v498 = vunpack.c.h.b16 %v124
  %v499 = vunpack.c.l.b16 %v125
  %v500 = vunpack.c.h.b16 %v125
  %v501 = vunpack.c.l.b16 %v126
  %v502 = vunpack.c.h.b16 %v126
  %v503 = vunpack.c.l.b16 %v127
  %v504 = vunpack.c.h.b16 %v127
  %v505 = vunpack.c.l.b16 %v128
  %v506 = vunpack.c.h.b16 %v128
  %v507 = vunpack.c.l.b16 %v129
  %v508 = vunpack.c.h.b16 %v129
  %v509 = vunpack.c.l.b16 %v130
  %v510 = vunpack.c.h.b16 %v130
  %v511 = vunpack.c.l.b16 %v131
  %v512 = vunpack.c.h.b16 %v131
  %v513 = vunpack.c.l.b16 %v132
  %v514 = vunpack.c.h.b16 %v132
  %v515 = vunpack.c.l.b16 %v133
  %v516 = vunpack.c.h.b16 %v133
  %v517 = vunpack.c.l.b16 %v134
  %v518 = vunpack.c.h.b16 %v134
  %v519 = vunpack.c.l.b16 %v135
  %v520 = vunpack.c.h.b16 %v135
  %v521 = vunpack.c.l.b16 %v136
  %v522 = vunpack.c.h.b16 %v136
  %v523 = vunpack.c.l.b16 %v137
  %v524 = vunpack.c.h.b16 %v137
  %v525 = vunpack.c.l.b16 %v138
  %v526 = vunpack.c.h.b16 %v138
  %v527 = vunpack.c.l.b16 %v139
  %v528 = vunpack.c.h.b16 %v139
  %v529 = vunpack.c.l.b16 %v140
  %v530 = vunpack.c.h.b16 %v140
  %v531 = vunpack.c.l.b16 %v141
  %v532 = vunpack.c.h.b16 %v141
  %v533 = vunpack.c.l.b16 %v142
  %v534 = vunpack.c.h.b16 %v142
  %v535 = vunpack.c.l.b16 %v143
  %v536 = vunpack.c.h.b16 %v143
  %v537 = vunpack.c.l.b16 %v144
  %v538 = vunpack.c.h.b16 %v144
  %v539 = vunpack.c.l.b16 %v145
  %v540 = vunpack.c.h.b16 %v145
  %v541 = vunpack.c.l.b16 %v146
  %v542 = vunpack.c.h.b16 %v146
  %v543 = vunpack.c.l.b16 %v147
  %v544 = vunpack.c.h.b16 %v147
  %v545 = vunpack.c.l.b16 %v148
  %v546 = vunpack.c.h.b16 %v148
  %v547 = vunpack.c.l.b16 %v149
  %v548 = vunpack.c.h.b16 %v149
  %v549 = vunpack.c.l.b16 %v150
  %v550 = vunpack.c.h.b16 %v150
  %v551 = vunpack.c.l.b16 %v151
  %v552 = vunpack.c.h.b16 %v151
  %v553 = vunpack.c.l.b16 %v152
  %v554 = vunpack.c.h.b16 %v152
  %v555 = vunpack.c.l.b16 %v153
  %v556 = vunpack.c.h.b16 %v153
  %v557 = vunpack.c.l.b16 %v154
  %v558 = vunpack.c.h.b16 %v154
  %v559 = vunpack.c.l.b16 %v155
  %v560 = vunpack.c.h.b16 %v155
  %v561 = vunpack.c.l.b16 %v156
  %v562 = vunpack.c.h.b16 %v156
  %v563 = vunpack.c.l.b16 %v157
  %v564 = vunpack.c.h.b16 %v157
  %v565 = vunpack.c.l.b16 %v158
  %v566 = vunpack.c.h.b16 %v158
  %v567 = vunpack.c.l.b16 %v159
  %v568 = vunpack.c.h.b16 %v159
  %v569 = vunpack.c.l.b16 %v160
  %v570 = vunpack.c.h.b16 %v160
  %v571 = vpack.c.b16 %v317, %v315
  %v572 = vpack.c.b16 %v318, %v316
  %v573 = vpack.c.b16 %v321, %v319
  %v574 = vpack.c.b16 %v322, %v320
  %v575 = vpack.c.b16 %v325, %v323
  %v576 = vpack.c.b16 %v326, %v324
  %v577 = vpack.c.b16 %v329, %v327
  %v578 = vpack.c.b16 %v330, %v328
  %v579 = vpack.c.b16 %v333, %v331
  %v580 = vpack.c.b16 %v334, %v332
  %v581 = vpack.c.b16 %v337, %v335
  %v582 = vpack.c.b16 %v338, %v336
  %v583 = vpack.c.b16 %v341, %v339
  %v584 = vpack.c.b16 %v342, %v340
  %v585 = vpack.c.b16 %v345, %v343
  %v586 = vpack.c.b16 %v346, %v344
  %v587 = vpack.c.b16 %v349, %v347
  %v588 = vpack.c.b16 %v350, %v348
  %v589 = vpack.c.b16 %v353, %v351
  %v590 = vpack.c.b16 %v354, %v352
  %v591 = vpack.c.b16 %v357, %v355
  %v592 = vpack.c.b16 %v358, %v356
  %v593 = vpack.c.b16 %v361, %v359
  %v594 = vpack.c.b16 %v362, %v360
  %v595 = vpack.c.b16 %v365, %v363
  %v596 = vpack.c.b16 %v366, %v364
  %v597 = vpack.c.b16 %v369, %v367
  %v598 = vpack.c.b16 %v370, %v368
  %v599 = vpack.c.b16 %v373, %v371
  %v600 = vpack.c.b16 %v374, %v372
  %v601 = vpack.c.b16 %v377, %v375
  %v602 = vpack.c.b16 %v378, %v376
  %v603 = vpack.c.b16 %v381, %v379
  %v604 = vpack.c.b16 %v382, %v380
  %v605 = vpack.c.b16 %v385, %v383
  %v606 = vpack.c.b16 %v386, %v384
  %v607 = vpack.c.b16 %v389, %v387
  %v608 = vpack.c.b16 %v390, %v388
  %v609 = vpack.c.b16 %v393, %v391
  %v610 = vpack.c.b16 %v394, %v392
  %v611 = vpack.c.b16 %v397, %v395
  %v612 = vpack.c.b16 %v398, %v396
  %v613 = vpack.c.b16 %v401, %v399
  %v614 = vpack.c.b16 %v402, %v400
  %v615 = vpack.c.b16 %v405, %v403
  %v616 = vpack.c.b16 %v406, %v404
  %v617 = vpack.c.b16 %v409, %v407
  %v618 = vpack.c.b16 %v410, %v408
  %v619 = vpack.c.b16 %v413, %v411
  %v620 = vpack.c.b16 %v414, %v412
  %v621 = vpack.c.b16 %v417, %v415
  %v622 = vpack.c.b16 %v418, %v416
  %v623 = vpack.c.b16 %v421, %v419
  %v624 = vpack.c.b16 %v422, %v420
  %v625 = vpack.c.b16 %v425, %v423
  %v626 = vpack.c.b16 %v426, %v424
  %v627 = vpack.c.b16 %v429, %v427
  %v628 = vpack.c.b16 %v430, %v428
  %v629 = vpack.c.b16 %v433, %v431
  %v630 = vpack.c.b16 %v434, %v432
  %v631 = vpack.c.b16 %v437, %v435
  %v632 = vpack.c.b16 %v438, %v436
  %v633 = vpack.c.b16 %v441, %v439
  %v634 = vpack.c.b16 %v442, %v440
  %v635 = vpack.c.b16 %v445, %v443
  %v636 = vpack.c.b16 %v446, %v444
  %v637 = vpack.c.b16 %v449, %v447
  %v638 = vpack.c.b16 %v450, %v448
  %v639 = vpack.c.b16 %v453, %v451
  %v640 = vpack.c.b16 %v454, %v452
  %v641 = vpack.c.b16 %v457, %v455
  %v642 = vpack.c.b16 %v458, %v456
  %v643 = vpack.c.b16 %v461, %v459
  %v644 = vpack.c.b16 %v462, %v460
  %v645 = vpack.c.b16 %v465, %v463
  %v646 = vpack.c.b16 %v466, %v464
  %v647 = vpack.c.b16 %v469, %v467
  %v648 = vpack.c.b16 %v470, %v468
  %v649 = vpack.c.b16 %v473, %v471
  %v650 = vpack.c.b16 %v474, %v472
  %v651 = vpack.c.b16 %v477, %v475
  %v652 = vpack.c.b16 %v478, %v476
  %v653 = vpack.c.b16 %v481, %v479
  %v654 = vpack.c.b16 %v482, %v480
  %v655 = vpack.c.b16 %v485, %v483
  %v656 = vpack.c.b16 %v486, %v484
  %v657 = vpack.c.b16 %v489, %v487
  %v658 = vpack.c.b16 %v490, %v488
  %v659 = vpack.c.b16 %v493, %v491
  %v660 = vpack.c.b16 %v494, %v492
  %v661 = vpack.c.b16 %v497, %v495
  %v662 = vpack.c.b16 %v498, %v496
  %v663 = vpack.c.b16 %v501, %v499
  %v664 = vpack.c.b16 %v502, %v500
  %v665 = vpack.c.b16 %v505, %v503
  %v666 = vpack.c.b16 %v506, %v504
  %v667 = vpack.c.b16 %v509, %v507
  %v668 = vpack.c.b16 %v510, %v508
  %v669 = vpack.c.b16 %v513, %v511
  %v670 = vpack.c.b16 %v514, %v512
  %v671 = vpack.c.b16 %v517, %v515
  %v672 = vpack.c.b16 %v518, %v516
  %v673 = vpack.c.b16 %v521, %v519
  %v674 = vpack.c.b16 %v522, %v520
  %v675 = vpack.c.b16 %v525, %v523
  %v676 = vpack.c.b16 %v526, %v524
  %v677 = vpack.c.b16 %v529, %v527
  %v678 = vpack.c.b16 %v530, %v528
  %v679 = vpack.c.b16 %v533, %v531
  %v680 = vpack.c.b16 %v534, %v532
  %v681 = vpack.c.b16 %v537, %v535
  %v682 = vpack.c.b16 %v538, %v536
  %v683 = vpack.c.b16 %v541, %v539
  %v684 = vpack.c.b16 %v542, %v540
  %v685 = vpack.c.b16 %v545, %v543
  %v686 = vpack.c.b16 %v546, %v544
  %v687 = vpack.c.b16 %v549, %v547
  %v688 = vpack.c.b16 %v550, %v548
  %v689 = vpack.c.b16 %v553, %v551
  %v690 = vpack.c.b16 %v554, %v552
  %v691 = vpack.c.b16 %v557, %v555
  %v692 = vpack.c.b16 %v558, %v556
  %v693 = vpack.c.b16 %v561, %v559
  %v694 = vpack.c.b16 %v562, %v560
  %v695 = vpack.c.b16 %v565, %v563
  %v696 = vpack.c.b16 %v566, %v564
  %v697 = vpack.c.b16 %v569, %v567
  %v698 = vpack.c.b16 %v570, %v568
  %v782 = vunpack.c.l.b16 %v161
  %v783 = vunpack.c.l.b16 %v162
  %v784 = vunpack.c.l.b16 %v163
  %v785 = vunpack.c.l.b16 %v164
  %v786 = vunpack.c.l.b16 %v165
  %v787 = vunpack.c.l.b16 %v166
  %v788 = vunpack.c.l.b16 %v167
  %v789 = vunpack.c.l.b16 %v168
  %v790 = vunpack.c.l.b16 %v169
  %v791 = vunpack.c.l.b16 %v170
  %v792 = vunpack.c.l.b16 %v171
  %v793 = vunpack.c.l.b16 %v172
  %v794 = vunpack.c.l.b16 %v173
  %v795 = vunpack.c.l.b16 %v174
  %v796 = vunpack.c.l.b16 %v175
  %v797 = vunpack.c.l.b16 %v176
  %v798 = vunpack.c.l.b16 %v177
  %v799 = vunpack.c.l.b16 %v178
  %v800 = vunpack.c.l.b16 %v179
  %v801 = vpack.c.b16 %v783, %v782
  %v802 = vpack.c.b16 %v785, %v784
  %v803 = vpack.c.b16 %v787, %v786
  %v804 = vpack.c.b16 %v789, %v788
  %v805 = vpack.c.b16 %v791, %v790
  %v806 = vpack.c.b16 %v793, %v792
  %v807 = vpack.c.b16 %v795, %v794
  %v808 = vpack.c.b16 %v797, %v796
  %v809 = vpack.c.b16 %v799, %v798
  %v810 = vpack.c.b16 %v800, %v800
  %vm820 = vcmask 179200
  %v822 = vsel %vm820, %v572, 0
  %v825 = vsel %vm820, %v574, 0
  %v828 = vsel %vm820, %v576, 0
  %v831 = vsel %vm820, %v578, 0
  %v834 = vsel %vm820, %v580, 0
  %v837 = vsel %vm820, %v582, 0
  %v840 = vsel %vm820, %v584, 0
  %v843 = vsel %vm820, %v586, 0
  %v846 = vsel %vm820, %v588, 0
  %v849 = vsel %vm820, %v590, 0
  %v852 = vsel %vm820, %v592, 0
  %v855 = vsel %vm820, %v594, 0
  %v858 = vsel %vm820, %v596, 0
  %v861 = vsel %vm820, %v598, 0
  %v864 = vsel %vm820, %v600, 0
  %v867 = vsel %vm820, %v602, 0
  %v870 = vsel %vm820, %v604, 0
  %v873 = vsel %vm820, %v606, 0
  %v876 = vsel %vm820, %v608, 0
  %v879 = vsel %vm820, %v610, 0
  %v882 = vsel %vm820, %v612, 0
  %v885 = vsel %vm820, %v614, 0
  %v888 = vsel %vm820, %v616, 0
  %v891 = vsel %vm820, %v618, 0
  %v894 = vsel %vm820, %v620, 0
  %v897 = vsel %vm820, %v622, 0
  %v900 = vsel %vm820, %v624, 0
  %v903 = vsel %vm820, %v626, 0
  %v906 = vsel %vm820, %v628, 0
  %v909 = vsel %vm820, %v630, 0
  %v912 = vsel %vm820, %v632, 0
  %v915 = vsel %vm820, %v634, 0
  %v918 = vsel %vm820, %v636, 0
  %v921 = vsel %vm820, %v638, 0
  %v924 = vsel %vm820, %v640, 0
  %v927 = vsel %vm820, %v642, 0
  %v930 = vsel %vm820, %v644, 0
  %v933 = vsel %vm820, %v646, 0
  %v936 = vsel %vm820, %v648, 0
  %v939 = vsel %vm820, %v650, 0
  %v942 = vsel %vm820, %v652, 0
  %v945 = vsel %vm820, %v654, 0
  %v948 = vsel %vm820, %v656, 0
  %v951 = vsel %vm820, %v658, 0
  %v954 = vsel %vm820, %v660, 0
  %v957 = vsel %vm820, %v662, 0
  %v960 = vsel %vm820, %v664, 0
  %v963 = vsel %vm820, %v666, 0
  %v966 = vsel %vm820, %v668, 0
  %v969 = vsel %vm820, %v670, 0
  %v972 = vsel %vm820, %v672, 0
  %v975 = vsel %vm820, %v674, 0
  %v978 = vsel %vm820, %v676, 0
  %v981 = vsel %vm820, %v678, 0
  %v984 = vsel %vm820, %v680, 0
  %v987 = vsel %vm820, %v682, 0
  %v990 = vsel %vm820, %v684, 0
  %v993 = vsel %vm820, %v686, 0
  %v996 = vsel %vm820, %v688, 0
  %v999 = vsel %vm820, %v690, 0
  %v1002 = vsel %vm820, %v692, 0
  %v1005 = vsel %vm820, %v694, 0
  %v1008 = vsel %vm820, %v696, 0
  %v1011 = vsel %vm820, %v698, 0
  %vm1013 = vcmask 1042432
  %v1015 = vsel %vm1013, %v810, 0
  %1017 = vmatprep.subr.bf16.mxu0 0
  %1018 = vmatpush1.bf16.msra.mxu0 %v808
  %1019 = vmatprep.subr.bf16.mxu0 0
  %1020 = vmatpush1.bf16.msra.mxu0 %v807
  %1021 = vmatprep.subr.bf16.mxu0 0
  %1022 = vmatpush1.bf16.msra.mxu0 %v806
  %1023 = vmatprep.subr.bf16.mxu0 0
  %1024 = vmatpush1.bf16.msra.mxu0 %v805
  %1025 = vmatprep.subr.bf16.mxu0 0
  %1026 = vmatpush1.bf16.msra.mxu0 %v804
  %1027 = vmatprep.subr.bf16.mxu0 0
  %1028 = vmatpush1.bf16.msra.mxu0 %v803
  %1029 = vmatprep.subr.bf16.mxu0 0
  %1030 = vmatpush1.bf16.msra.mxu0 %v802
  %1031 = vmatprep.subr.bf16.mxu0 0
  %1032 = vmatpush1.bf16.msra.mxu0 %v801
  %1033 = vmatprep.subr.bf16.mxu0 0
  %1034 = vmatpush2.bf16.msra.mxu0 0
  %1035 = vmatprep.subr.bf16.mxu0 0
  %1036 = vmatpush2.bf16.msra.mxu0 0
  %1037 = vmatprep.subr.bf16.mxu0 0
  %1038 = vmatpush2.bf16.msra.mxu0 0
  %1039 = vmatprep.subr.bf16.mxu0 0
  %1040 = vmatpush2.bf16.msra.mxu0 0
  %1041 = vmatprep.subr.bf16.mxu0 0
  %1042 = vmatpush2.bf16.msra.mxu0 0
  %1043 = vmatprep.subr.bf16.mxu0 0
  %1044 = vmatpush2.bf16.msra.mxu0 0
  %1045 = vmatprep.subr.bf16.mxu0 0
  %1046 = vmatpush2.bf16.msra.mxu0 %v1015
  %1047 = vmatprep.subr.bf16.mxu0 0
  %1048 = vmatpush2.bf16.msra.mxu0 %v809
  %1049 = vmatprep.mubr.bf16.mxu0 %v822
  %1050 = vmatmul.mubr.bf16.gmra.mxu0 %v571
  %v1051 = vpop.f32.mrf.mxu0
  %v1052 = vadd.f32 %v185, %v1051
  %v1053 = vpop.f32.mrf.mxu0
  %v1054 = vpop.f32.mrf.mxu0
  %v1055 = vadd.f32 %v185, %v1054
  %v1056 = vpop.f32.mrf.mxu0
  %1057 = vmatprep.mubr.bf16.mxu0 %v825
  %1058 = vmatmul.mubr.bf16.gmra.mxu0 %v573
  %v1059 = vpop.f32.mrf.mxu0
  %v1060 = vadd.f32 %v185, %v1059
  %v1061 = vpop.f32.mrf.mxu0
  %v1062 = vpop.f32.mrf.mxu0
  %v1063 = vadd.f32 %v185, %v1062
  %v1064 = vpop.f32.mrf.mxu0
  %1065 = vmatprep.mubr.bf16.mxu0 %v828
  %1066 = vmatmul.mubr.bf16.gmra.mxu0 %v575
  %v1067 = vpop.f32.mrf.mxu0
  %v1068 = vadd.f32 %v185, %v1067
  %v1069 = vpop.f32.mrf.mxu0
  %v1070 = vpop.f32.mrf.mxu0
  %v1071 = vadd.f32 %v185, %v1070
  %v1072 = vpop.f32.mrf.mxu0
  %1073 = vmatprep.mubr.bf16.mxu0 %v831
  %1074 = vmatmul.mubr.bf16.gmra.mxu0 %v577
  %v1075 = vpop.f32.mrf.mxu0
  %v1076 = vadd.f32 %v185, %v1075
  %v1077 = vpop.f32.mrf.mxu0
  %v1078 = vpop.f32.mrf.mxu0
  %v1079 = vadd.f32 %v185, %v1078
  %v1080 = vpop.f32.mrf.mxu0
  %1081 = vmatprep.mubr.bf16.mxu0 %v834
  %1082 = vmatmul.mubr.bf16.gmra.mxu0 %v579
  %v1083 = vpop.f32.mrf.mxu0
  %v1084 = vadd.f32 %v185, %v1083
  %v1085 = vpop.f32.mrf.mxu0
  %v1086 = vpop.f32.mrf.mxu0
  %v1087 = vadd.f32 %v185, %v1086
  %v1088 = vpop.f32.mrf.mxu0
  %1089 = vmatprep.mubr.bf16.mxu0 %v837
  %1090 = vmatmul.mubr.bf16.gmra.mxu0 %v581
  %v1091 = vpop.f32.mrf.mxu0
  %v1092 = vadd.f32 %v185, %v1091
  %v1093 = vpop.f32.mrf.mxu0
  %v1094 = vpop.f32.mrf.mxu0
  %v1095 = vadd.f32 %v185, %v1094
  %v1096 = vpop.f32.mrf.mxu0
  %1097 = vmatprep.mubr.bf16.mxu0 %v840
  %1098 = vmatmul.mubr.bf16.gmra.mxu0 %v583
  %v1099 = vpop.f32.mrf.mxu0
  %v1100 = vadd.f32 %v185, %v1099
  %v1101 = vpop.f32.mrf.mxu0
  %v1102 = vpop.f32.mrf.mxu0
  %v1103 = vadd.f32 %v185, %v1102
  %v1104 = vpop.f32.mrf.mxu0
  %1105 = vmatprep.mubr.bf16.mxu0 %v843
  %1106 = vmatmul.mubr.bf16.gmra.mxu0 %v585
  %v1107 = vpop.f32.mrf.mxu0
  %v1108 = vadd.f32 %v185, %v1107
  %v1109 = vpop.f32.mrf.mxu0
  %v1110 = vpop.f32.mrf.mxu0
  %v1111 = vadd.f32 %v185, %v1110
  %v1112 = vpop.f32.mrf.mxu0
  %1113 = vmatprep.mubr.bf16.mxu0 %v846
  %1114 = vmatmul.mubr.bf16.gmra.mxu0 %v587
  %v1115 = vpop.f32.mrf.mxu0
  %v1116 = vadd.f32 %v185, %v1115
  %v1117 = vpop.f32.mrf.mxu0
  %v1118 = vpop.f32.mrf.mxu0
  %v1119 = vadd.f32 %v185, %v1118
  %v1120 = vpop.f32.mrf.mxu0
  %1121 = vmatprep.mubr.bf16.mxu0 %v849
  %1122 = vmatmul.mubr.bf16.gmra.mxu0 %v589
  %v1123 = vpop.f32.mrf.mxu0
  %v1124 = vadd.f32 %v185, %v1123
  %v1125 = vpop.f32.mrf.mxu0
  %v1126 = vpop.f32.mrf.mxu0
  %v1127 = vadd.f32 %v185, %v1126
  %v1128 = vpop.f32.mrf.mxu0
  %1129 = vmatprep.mubr.bf16.mxu0 %v852
  %1130 = vmatmul.mubr.bf16.gmra.mxu0 %v591
  %v1131 = vpop.f32.mrf.mxu0
  %v1132 = vadd.f32 %v185, %v1131
  %v1133 = vpop.f32.mrf.mxu0
  %v1134 = vpop.f32.mrf.mxu0
  %v1135 = vadd.f32 %v185, %v1134
  %v1136 = vpop.f32.mrf.mxu0
  %1137 = vmatprep.mubr.bf16.mxu0 %v855
  %1138 = vmatmul.mubr.bf16.gmra.mxu0 %v593
  %v1139 = vpop.f32.mrf.mxu0
  %v1140 = vadd.f32 %v185, %v1139
  %v1141 = vpop.f32.mrf.mxu0
  %v1142 = vpop.f32.mrf.mxu0
  %v1143 = vadd.f32 %v185, %v1142
  %v1144 = vpop.f32.mrf.mxu0
  %1145 = vmatprep.mubr.bf16.mxu0 %v858
  %1146 = vmatmul.mubr.bf16.gmra.mxu0 %v595
  %v1147 = vpop.f32.mrf.mxu0
  %v1148 = vadd.f32 %v185, %v1147
  %v1149 = vpop.f32.mrf.mxu0
  %v1150 = vpop.f32.mrf.mxu0
  %v1151 = vadd.f32 %v185, %v1150
  %v1152 = vpop.f32.mrf.mxu0
  %1153 = vmatprep.mubr.bf16.mxu0 %v861
  %1154 = vmatmul.mubr.bf16.gmra.mxu0 %v597
  %v1155 = vpop.f32.mrf.mxu0
  %v1156 = vadd.f32 %v185, %v1155
  %v1157 = vpop.f32.mrf.mxu0
  %v1158 = vpop.f32.mrf.mxu0
  %v1159 = vadd.f32 %v185, %v1158
  %v1160 = vpop.f32.mrf.mxu0
  %1161 = vmatprep.mubr.bf16.mxu0 %v864
  %1162 = vmatmul.mubr.bf16.gmra.mxu0 %v599
  %v1163 = vpop.f32.mrf.mxu0
  %v1164 = vadd.f32 %v185, %v1163
  %v1165 = vpop.f32.mrf.mxu0
  %v1166 = vpop.f32.mrf.mxu0
  %v1167 = vadd.f32 %v185, %v1166
  %v1168 = vpop.f32.mrf.mxu0
  %1169 = vmatprep.mubr.bf16.mxu0 %v867
  %1170 = vmatmul.mubr.bf16.gmra.mxu0 %v601
  %v1171 = vpop.f32.mrf.mxu0
  %v1172 = vadd.f32 %v185, %v1171
  %v1173 = vpop.f32.mrf.mxu0
  %v1174 = vpop.f32.mrf.mxu0
  %v1175 = vadd.f32 %v185, %v1174
  %v1176 = vpop.f32.mrf.mxu0
  %1177 = vmatprep.mubr.bf16.mxu0 %v870
  %1178 = vmatmul.mubr.bf16.gmra.mxu0 %v603
  %v1179 = vpop.f32.mrf.mxu0
  %v1180 = vadd.f32 %v185, %v1179
  %v1181 = vpop.f32.mrf.mxu0
  %v1182 = vpop.f32.mrf.mxu0
  %v1183 = vadd.f32 %v185, %v1182
  %v1184 = vpop.f32.mrf.mxu0
  %1185 = vmatprep.mubr.bf16.mxu0 %v873
  %1186 = vmatmul.mubr.bf16.gmra.mxu0 %v605
  %v1187 = vpop.f32.mrf.mxu0
  %v1188 = vadd.f32 %v185, %v1187
  %v1189 = vpop.f32.mrf.mxu0
  %v1190 = vpop.f32.mrf.mxu0
  %v1191 = vadd.f32 %v185, %v1190
  %v1192 = vpop.f32.mrf.mxu0
  %1193 = vmatprep.mubr.bf16.mxu0 %v876
  %1194 = vmatmul.mubr.bf16.gmra.mxu0 %v607
  %v1195 = vpop.f32.mrf.mxu0
  %v1196 = vadd.f32 %v185, %v1195
  %v1197 = vpop.f32.mrf.mxu0
  %v1198 = vpop.f32.mrf.mxu0
  %v1199 = vadd.f32 %v185, %v1198
  %v1200 = vpop.f32.mrf.mxu0
  %1201 = vmatprep.mubr.bf16.mxu0 %v879
  %1202 = vmatmul.mubr.bf16.gmra.mxu0 %v609
  %v1203 = vpop.f32.mrf.mxu0
  %v1204 = vadd.f32 %v185, %v1203
  %v1205 = vpop.f32.mrf.mxu0
  %v1206 = vpop.f32.mrf.mxu0
  %v1207 = vadd.f32 %v185, %v1206
  %v1208 = vpop.f32.mrf.mxu0
  %1209 = vmatprep.mubr.bf16.mxu0 %v882
  %1210 = vmatmul.mubr.bf16.gmra.mxu0 %v611
  %v1211 = vpop.f32.mrf.mxu0
  %v1212 = vadd.f32 %v185, %v1211
  %v1213 = vpop.f32.mrf.mxu0
  %v1214 = vpop.f32.mrf.mxu0
  %v1215 = vadd.f32 %v185, %v1214
  %v1216 = vpop.f32.mrf.mxu0
  %1217 = vmatprep.mubr.bf16.mxu0 %v885
  %1218 = vmatmul.mubr.bf16.gmra.mxu0 %v613
  %v1219 = vpop.f32.mrf.mxu0
  %v1220 = vadd.f32 %v185, %v1219
  %v1221 = vpop.f32.mrf.mxu0
  %v1222 = vpop.f32.mrf.mxu0
  %v1223 = vadd.f32 %v185, %v1222
  %v1224 = vpop.f32.mrf.mxu0
  %1225 = vmatprep.mubr.bf16.mxu0 %v888
  %1226 = vmatmul.mubr.bf16.gmra.mxu0 %v615
  %v1227 = vpop.f32.mrf.mxu0
  %v1228 = vadd.f32 %v185, %v1227
  %v1229 = vpop.f32.mrf.mxu0
  %v1230 = vpop.f32.mrf.mxu0
  %v1231 = vadd.f32 %v185, %v1230
  %v1232 = vpop.f32.mrf.mxu0
  %1233 = vmatprep.mubr.bf16.mxu0 %v891
  %1234 = vmatmul.mubr.bf16.gmra.mxu0 %v617
  %v1235 = vpop.f32.mrf.mxu0
  %v1236 = vadd.f32 %v185, %v1235
  %v1237 = vpop.f32.mrf.mxu0
  %v1238 = vpop.f32.mrf.mxu0
  %v1239 = vadd.f32 %v185, %v1238
  %v1240 = vpop.f32.mrf.mxu0
  %1241 = vmatprep.mubr.bf16.mxu0 %v894
  %1242 = vmatmul.mubr.bf16.gmra.mxu0 %v619
  %v1243 = vpop.f32.mrf.mxu0
  %v1244 = vadd.f32 %v185, %v1243
  %v1245 = vpop.f32.mrf.mxu0
  %v1246 = vpop.f32.mrf.mxu0
  %v1247 = vadd.f32 %v185, %v1246
  %v1248 = vpop.f32.mrf.mxu0
  %1249 = vmatprep.mubr.bf16.mxu0 %v897
  %1250 = vmatmul.mubr.bf16.gmra.mxu0 %v621
  %v1251 = vpop.f32.mrf.mxu0
  %v1252 = vadd.f32 %v185, %v1251
  %v1253 = vpop.f32.mrf.mxu0
  %v1254 = vpop.f32.mrf.mxu0
  %v1255 = vadd.f32 %v185, %v1254
  %v1256 = vpop.f32.mrf.mxu0
  %1257 = vmatprep.mubr.bf16.mxu0 %v900
  %1258 = vmatmul.mubr.bf16.gmra.mxu0 %v623
  %v1259 = vpop.f32.mrf.mxu0
  %v1260 = vadd.f32 %v185, %v1259
  %v1261 = vpop.f32.mrf.mxu0
  %v1262 = vpop.f32.mrf.mxu0
  %v1263 = vadd.f32 %v185, %v1262
  %v1264 = vpop.f32.mrf.mxu0
  %1265 = vmatprep.mubr.bf16.mxu0 %v903
  %1266 = vmatmul.mubr.bf16.gmra.mxu0 %v625
  %v1267 = vpop.f32.mrf.mxu0
  %v1268 = vadd.f32 %v185, %v1267
  %v1269 = vpop.f32.mrf.mxu0
  %v1270 = vpop.f32.mrf.mxu0
  %v1271 = vadd.f32 %v185, %v1270
  %v1272 = vpop.f32.mrf.mxu0
  %1273 = vmatprep.mubr.bf16.mxu0 %v906
  %1274 = vmatmul.mubr.bf16.gmra.mxu0 %v627
  %v1275 = vpop.f32.mrf.mxu0
  %v1276 = vadd.f32 %v185, %v1275
  %v1277 = vpop.f32.mrf.mxu0
  %v1278 = vpop.f32.mrf.mxu0
  %v1279 = vadd.f32 %v185, %v1278
  %v1280 = vpop.f32.mrf.mxu0
  %1281 = vmatprep.mubr.bf16.mxu0 %v909
  %1282 = vmatmul.mubr.bf16.gmra.mxu0 %v629
  %v1283 = vpop.f32.mrf.mxu0
  %v1284 = vadd.f32 %v185, %v1283
  %v1285 = vpop.f32.mrf.mxu0
  %v1286 = vpop.f32.mrf.mxu0
  %v1287 = vadd.f32 %v185, %v1286
  %v1288 = vpop.f32.mrf.mxu0
  %1289 = vmatprep.mubr.bf16.mxu0 %v912
  %1290 = vmatmul.mubr.bf16.gmra.mxu0 %v631
  %v1291 = vpop.f32.mrf.mxu0
  %v1292 = vadd.f32 %v185, %v1291
  %v1293 = vpop.f32.mrf.mxu0
  %v1294 = vpop.f32.mrf.mxu0
  %v1295 = vadd.f32 %v185, %v1294
  %v1296 = vpop.f32.mrf.mxu0
  %1297 = vmatprep.mubr.bf16.mxu0 %v915
  %1298 = vmatmul.mubr.bf16.gmra.mxu0 %v633
  %v1299 = vpop.f32.mrf.mxu0
  %v1300 = vadd.f32 %v185, %v1299
  %v1301 = vpop.f32.mrf.mxu0
  %v1302 = vpop.f32.mrf.mxu0
  %v1303 = vadd.f32 %v185, %v1302
  %v1304 = vpop.f32.mrf.mxu0
  %1305 = vmatprep.mubr.bf16.mxu0 %v918
  %1306 = vmatmul.mubr.bf16.gmra.mxu0 %v635
  %v1307 = vpop.f32.mrf.mxu0
  %v1308 = vadd.f32 %v185, %v1307
  %v1309 = vpop.f32.mrf.mxu0
  %v1310 = vpop.f32.mrf.mxu0
  %v1311 = vadd.f32 %v185, %v1310
  %v1312 = vpop.f32.mrf.mxu0
  %1313 = vmatprep.mubr.bf16.mxu0 %v921
  %1314 = vmatmul.mubr.bf16.gmra.mxu0 %v637
  %v1315 = vpop.f32.mrf.mxu0
  %v1316 = vadd.f32 %v185, %v1315
  %v1317 = vpop.f32.mrf.mxu0
  %v1318 = vpop.f32.mrf.mxu0
  %v1319 = vadd.f32 %v185, %v1318
  %v1320 = vpop.f32.mrf.mxu0
  %1321 = vmatprep.mubr.bf16.mxu0 %v924
  %1322 = vmatmul.mubr.bf16.gmra.mxu0 %v639
  %v1323 = vpop.f32.mrf.mxu0
  %v1324 = vadd.f32 %v185, %v1323
  %v1325 = vpop.f32.mrf.mxu0
  %v1326 = vpop.f32.mrf.mxu0
  %v1327 = vadd.f32 %v185, %v1326
  %v1328 = vpop.f32.mrf.mxu0
  %1329 = vmatprep.mubr.bf16.mxu0 %v927
  %1330 = vmatmul.mubr.bf16.gmra.mxu0 %v641
  %v1331 = vpop.f32.mrf.mxu0
  %v1332 = vadd.f32 %v185, %v1331
  %v1333 = vpop.f32.mrf.mxu0
  %v1334 = vpop.f32.mrf.mxu0
  %v1335 = vadd.f32 %v185, %v1334
  %v1336 = vpop.f32.mrf.mxu0
  %1337 = vmatprep.mubr.bf16.mxu0 %v930
  %1338 = vmatmul.mubr.bf16.gmra.mxu0 %v643
  %v1339 = vpop.f32.mrf.mxu0
  %v1340 = vadd.f32 %v185, %v1339
  %v1341 = vpop.f32.mrf.mxu0
  %v1342 = vpop.f32.mrf.mxu0
  %v1343 = vadd.f32 %v185, %v1342
  %v1344 = vpop.f32.mrf.mxu0
  %1345 = vmatprep.mubr.bf16.mxu0 %v933
  %1346 = vmatmul.mubr.bf16.gmra.mxu0 %v645
  %v1347 = vpop.f32.mrf.mxu0
  %v1348 = vadd.f32 %v185, %v1347
  %v1349 = vpop.f32.mrf.mxu0
  %v1350 = vpop.f32.mrf.mxu0
  %v1351 = vadd.f32 %v185, %v1350
  %v1352 = vpop.f32.mrf.mxu0
  %1353 = vmatprep.mubr.bf16.mxu0 %v936
  %1354 = vmatmul.mubr.bf16.gmra.mxu0 %v647
  %v1355 = vpop.f32.mrf.mxu0
  %v1356 = vadd.f32 %v185, %v1355
  %v1357 = vpop.f32.mrf.mxu0
  %v1358 = vpop.f32.mrf.mxu0
  %v1359 = vadd.f32 %v185, %v1358
  %v1360 = vpop.f32.mrf.mxu0
  %1361 = vmatprep.mubr.bf16.mxu0 %v939
  %1362 = vmatmul.mubr.bf16.gmra.mxu0 %v649
  %v1363 = vpop.f32.mrf.mxu0
  %v1364 = vadd.f32 %v185, %v1363
  %v1365 = vpop.f32.mrf.mxu0
  %v1366 = vpop.f32.mrf.mxu0
  %v1367 = vadd.f32 %v185, %v1366
  %v1368 = vpop.f32.mrf.mxu0
  %1369 = vmatprep.mubr.bf16.mxu0 %v942
  %1370 = vmatmul.mubr.bf16.gmra.mxu0 %v651
  %v1371 = vpop.f32.mrf.mxu0
  %v1372 = vadd.f32 %v185, %v1371
  %v1373 = vpop.f32.mrf.mxu0
  %v1374 = vpop.f32.mrf.mxu0
  %v1375 = vadd.f32 %v185, %v1374
  %v1376 = vpop.f32.mrf.mxu0
  %1377 = vmatprep.mubr.bf16.mxu0 %v945
  %1378 = vmatmul.mubr.bf16.gmra.mxu0 %v653
  %v1379 = vpop.f32.mrf.mxu0
  %v1380 = vadd.f32 %v185, %v1379
  %v1381 = vpop.f32.mrf.mxu0
  %v1382 = vpop.f32.mrf.mxu0
  %v1383 = vadd.f32 %v185, %v1382
  %v1384 = vpop.f32.mrf.mxu0
  %1385 = vmatprep.mubr.bf16.mxu0 %v948
  %1386 = vmatmul.mubr.bf16.gmra.mxu0 %v655
  %v1387 = vpop.f32.mrf.mxu0
  %v1388 = vadd.f32 %v185, %v1387
  %v1389 = vpop.f32.mrf.mxu0
  %v1390 = vpop.f32.mrf.mxu0
  %v1391 = vadd.f32 %v185, %v1390
  %v1392 = vpop.f32.mrf.mxu0
  %1393 = vmatprep.mubr.bf16.mxu0 %v951
  %1394 = vmatmul.mubr.bf16.gmra.mxu0 %v657
  %v1395 = vpop.f32.mrf.mxu0
  %v1396 = vadd.f32 %v185, %v1395
  %v1397 = vpop.f32.mrf.mxu0
  %v1398 = vpop.f32.mrf.mxu0
  %v1399 = vadd.f32 %v185, %v1398
  %v1400 = vpop.f32.mrf.mxu0
  %1401 = vmatprep.mubr.bf16.mxu0 %v954
  %1402 = vmatmul.mubr.bf16.gmra.mxu0 %v659
  %v1403 = vpop.f32.mrf.mxu0
  %v1404 = vadd.f32 %v185, %v1403
  %v1405 = vpop.f32.mrf.mxu0
  %v1406 = vpop.f32.mrf.mxu0
  %v1407 = vadd.f32 %v185, %v1406
  %v1408 = vpop.f32.mrf.mxu0
  %1409 = vmatprep.mubr.bf16.mxu0 %v957
  %1410 = vmatmul.mubr.bf16.gmra.mxu0 %v661
  %v1411 = vpop.f32.mrf.mxu0
  %v1412 = vadd.f32 %v185, %v1411
  %v1413 = vpop.f32.mrf.mxu0
  %v1414 = vpop.f32.mrf.mxu0
  %v1415 = vadd.f32 %v185, %v1414
  %v1416 = vpop.f32.mrf.mxu0
  %1417 = vmatprep.mubr.bf16.mxu0 %v960
  %1418 = vmatmul.mubr.bf16.gmra.mxu0 %v663
  %v1419 = vpop.f32.mrf.mxu0
  %v1420 = vadd.f32 %v185, %v1419
  %v1421 = vpop.f32.mrf.mxu0
  %v1422 = vpop.f32.mrf.mxu0
  %v1423 = vadd.f32 %v185, %v1422
  %v1424 = vpop.f32.mrf.mxu0
  %1425 = vmatprep.mubr.bf16.mxu0 %v963
  %1426 = vmatmul.mubr.bf16.gmra.mxu0 %v665
  %v1427 = vpop.f32.mrf.mxu0
  %v1428 = vadd.f32 %v185, %v1427
  %v1429 = vpop.f32.mrf.mxu0
  %v1430 = vpop.f32.mrf.mxu0
  %v1431 = vadd.f32 %v185, %v1430
  %v1432 = vpop.f32.mrf.mxu0
  %1433 = vmatprep.mubr.bf16.mxu0 %v966
  %1434 = vmatmul.mubr.bf16.gmra.mxu0 %v667
  %v1435 = vpop.f32.mrf.mxu0
  %v1436 = vadd.f32 %v185, %v1435
  %v1437 = vpop.f32.mrf.mxu0
  %v1438 = vpop.f32.mrf.mxu0
  %v1439 = vadd.f32 %v185, %v1438
  %v1440 = vpop.f32.mrf.mxu0
  %1441 = vmatprep.mubr.bf16.mxu0 %v969
  %1442 = vmatmul.mubr.bf16.gmra.mxu0 %v669
  %v1443 = vpop.f32.mrf.mxu0
  %v1444 = vadd.f32 %v185, %v1443
  %v1445 = vpop.f32.mrf.mxu0
  %v1446 = vpop.f32.mrf.mxu0
  %v1447 = vadd.f32 %v185, %v1446
  %v1448 = vpop.f32.mrf.mxu0
  %1449 = vmatprep.mubr.bf16.mxu0 %v972
  %1450 = vmatmul.mubr.bf16.gmra.mxu0 %v671
  %v1451 = vpop.f32.mrf.mxu0
  %v1452 = vadd.f32 %v185, %v1451
  %v1453 = vpop.f32.mrf.mxu0
  %v1454 = vpop.f32.mrf.mxu0
  %v1455 = vadd.f32 %v185, %v1454
  %v1456 = vpop.f32.mrf.mxu0
  %1457 = vmatprep.mubr.bf16.mxu0 %v975
  %1458 = vmatmul.mubr.bf16.gmra.mxu0 %v673
  %v1459 = vpop.f32.mrf.mxu0
  %v1460 = vadd.f32 %v185, %v1459
  %v1461 = vpop.f32.mrf.mxu0
  %v1462 = vpop.f32.mrf.mxu0
  %v1463 = vadd.f32 %v185, %v1462
  %v1464 = vpop.f32.mrf.mxu0
  %1465 = vmatprep.mubr.bf16.mxu0 %v978
  %1466 = vmatmul.mubr.bf16.gmra.mxu0 %v675
  %v1467 = vpop.f32.mrf.mxu0
  %v1468 = vadd.f32 %v185, %v1467
  %v1469 = vpop.f32.mrf.mxu0
  %v1470 = vpop.f32.mrf.mxu0
  %v1471 = vadd.f32 %v185, %v1470
  %v1472 = vpop.f32.mrf.mxu0
  %1473 = vmatprep.mubr.bf16.mxu0 %v981
  %1474 = vmatmul.mubr.bf16.gmra.mxu0 %v677
  %v1475 = vpop.f32.mrf.mxu0
  %v1476 = vadd.f32 %v185, %v1475
  %v1477 = vpop.f32.mrf.mxu0
  %v1478 = vpop.f32.mrf.mxu0
  %v1479 = vadd.f32 %v185, %v1478
  %v1480 = vpop.f32.mrf.mxu0
  %1481 = vmatprep.mubr.bf16.mxu0 %v984
  %1482 = vmatmul.mubr.bf16.gmra.mxu0 %v679
  %v1483 = vpop.f32.mrf.mxu0
  %v1484 = vadd.f32 %v185, %v1483
  %v1485 = vpop.f32.mrf.mxu0
  %v1486 = vpop.f32.mrf.mxu0
  %v1487 = vadd.f32 %v185, %v1486
  %v1488 = vpop.f32.mrf.mxu0
  %1489 = vmatprep.mubr.bf16.mxu0 %v987
  %1490 = vmatmul.mubr.bf16.gmra.mxu0 %v681
  %v1491 = vpop.f32.mrf.mxu0
  %v1492 = vadd.f32 %v185, %v1491
  %v1493 = vpop.f32.mrf.mxu0
  %v1494 = vpop.f32.mrf.mxu0
  %v1495 = vadd.f32 %v185, %v1494
  %v1496 = vpop.f32.mrf.mxu0
  %1497 = vmatprep.mubr.bf16.mxu0 %v990
  %1498 = vmatmul.mubr.bf16.gmra.mxu0 %v683
  %v1499 = vpop.f32.mrf.mxu0
  %v1500 = vadd.f32 %v185, %v1499
  %v1501 = vpop.f32.mrf.mxu0
  %v1502 = vpop.f32.mrf.mxu0
  %v1503 = vadd.f32 %v185, %v1502
  %v1504 = vpop.f32.mrf.mxu0
  %1505 = vmatprep.mubr.bf16.mxu0 %v993
  %1506 = vmatmul.mubr.bf16.gmra.mxu0 %v685
  %v1507 = vpop.f32.mrf.mxu0
  %v1508 = vadd.f32 %v185, %v1507
  %v1509 = vpop.f32.mrf.mxu0
  %v1510 = vpop.f32.mrf.mxu0
  %v1511 = vadd.f32 %v185, %v1510
  %v1512 = vpop.f32.mrf.mxu0
  %1513 = vmatprep.mubr.bf16.mxu0 %v996
  %1514 = vmatmul.mubr.bf16.gmra.mxu0 %v687
  %v1515 = vpop.f32.mrf.mxu0
  %v1516 = vadd.f32 %v185, %v1515
  %v1517 = vpop.f32.mrf.mxu0
  %v1518 = vpop.f32.mrf.mxu0
  %v1519 = vadd.f32 %v185, %v1518
  %v1520 = vpop.f32.mrf.mxu0
  %1521 = vmatprep.mubr.bf16.mxu0 %v999
  %1522 = vmatmul.mubr.bf16.gmra.mxu0 %v689
  %v1523 = vpop.f32.mrf.mxu0
  %v1524 = vadd.f32 %v185, %v1523
  %v1525 = vpop.f32.mrf.mxu0
  %v1526 = vpop.f32.mrf.mxu0
  %v1527 = vadd.f32 %v185, %v1526
  %v1528 = vpop.f32.mrf.mxu0
  %1529 = vmatprep.mubr.bf16.mxu0 %v1002
  %1530 = vmatmul.mubr.bf16.gmra.mxu0 %v691
  %v1531 = vpop.f32.mrf.mxu0
  %v1532 = vadd.f32 %v185, %v1531
  %v1533 = vpop.f32.mrf.mxu0
  %v1534 = vpop.f32.mrf.mxu0
  %v1535 = vadd.f32 %v185, %v1534
  %v1536 = vpop.f32.mrf.mxu0
  %1537 = vmatprep.mubr.bf16.mxu0 %v1005
  %1538 = vmatmul.mubr.bf16.gmra.mxu0 %v693
  %v1539 = vpop.f32.mrf.mxu0
  %v1540 = vadd.f32 %v185, %v1539
  %v1541 = vpop.f32.mrf.mxu0
  %v1542 = vpop.f32.mrf.mxu0
  %v1543 = vadd.f32 %v185, %v1542
  %v1544 = vpop.f32.mrf.mxu0
  %1545 = vmatprep.mubr.bf16.mxu0 %v1008
  %1546 = vmatmul.mubr.bf16.gmra.mxu0 %v695
  %v1547 = vpop.f32.mrf.mxu0
  %v1548 = vadd.f32 %v185, %v1547
  %v1549 = vpop.f32.mrf.mxu0
  %v1550 = vpop.f32.mrf.mxu0
  %v1551 = vadd.f32 %v185, %v1550
  %v1552 = vpop.f32.mrf.mxu0
  %1553 = vmatprep.mubr.bf16.mxu0 %v1011
  %1554 = vmatmul.mubr.bf16.gmra.mxu0 %v697
  %v1555 = vpop.f32.mrf.mxu0
  %v1556 = vadd.f32 %v185, %v1555
  %v1557 = vpop.f32.mrf.mxu0
  %v1558 = vpop.f32.mrf.mxu0
  %v1559 = vadd.f32 %v185, %v1558
  %v1560 = vpop.f32.mrf.mxu0
  %1561 = vdwg.mxu0
  %v1562 = vmax.f32 %v1052, 0.0
  %v1563 = vmax.f32 %v1055, 0.0
  %v1564 = vmax.f32 %v1060, 0.0
  %v1565 = vmax.f32 %v1063, 0.0
  %v1566 = vmax.f32 %v1068, 0.0
  %v1567 = vmax.f32 %v1071, 0.0
  %v1568 = vmax.f32 %v1076, 0.0
  %v1569 = vmax.f32 %v1079, 0.0
  %v1570 = vmax.f32 %v1084, 0.0
  %v1571 = vmax.f32 %v1087, 0.0
  %v1572 = vmax.f32 %v1092, 0.0
  %v1573 = vmax.f32 %v1095, 0.0
  %v1574 = vmax.f32 %v1100, 0.0
  %v1575 = vmax.f32 %v1103, 0.0
  %v1576 = vmax.f32 %v1108, 0.0
  %v1577 = vmax.f32 %v1111, 0.0
  %v1578 = vmax.f32 %v1116, 0.0
  %v1579 = vmax.f32 %v1119, 0.0
  %v1580 = vmax.f32 %v1124, 0.0
  %v1581 = vmax.f32 %v1127, 0.0
  %v1582 = vmax.f32 %v1132, 0.0
  %v1583 = vmax.f32 %v1135, 0.0
  %v1584 = vmax.f32 %v1140, 0.0
  %v1585 = vmax.f32 %v1143, 0.0
  %v1586 = vmax.f32 %v1148, 0.0
  %v1587 = vmax.f32 %v1151, 0.0
  %v1588 = vmax.f32 %v1156, 0.0
  %v1589 = vmax.f32 %v1159, 0.0
  %v1590 = vmax.f32 %v1164, 0.0
  %v1591 = vmax.f32 %v1167, 0.0
  %v1592 = vmax.f32 %v1172, 0.0
  %v1593 = vmax.f32 %v1175, 0.0
  %v1594 = vmax.f32 %v1180, 0.0
  %v1595 = vmax.f32 %v1183, 0.0
  %v1596 = vmax.f32 %v1188, 0.0
  %v1597 = vmax.f32 %v1191, 0.0
  %v1598 = vmax.f32 %v1196, 0.0
  %v1599 = vmax.f32 %v1199, 0.0
  %v1600 = vmax.f32 %v1204, 0.0
  %v1601 = vmax.f32 %v1207, 0.0
  %v1602 = vmax.f32 %v1212, 0.0
  %v1603 = vmax.f32 %v1215, 0.0
  %v1604 = vmax.f32 %v1220, 0.0
  %v1605 = vmax.f32 %v1223, 0.0
  %v1606 = vmax.f32 %v1228, 0.0
  %v1607 = vmax.f32 %v1231, 0.0
  %v1608 = vmax.f32 %v1236, 0.0
  %v1609 = vmax.f32 %v1239, 0.0
  %v1610 = vmax.f32 %v1244, 0.0
  %v1611 = vmax.f32 %v1247, 0.0
  %v1612 = vmax.f32 %v1252, 0.0
  %v1613 = vmax.f32 %v1255, 0.0
  %v1614 = vmax.f32 %v1260, 0.0
  %v1615 = vmax.f32 %v1263, 0.0
  %v1616 = vmax.f32 %v1268, 0.0
  %v1617 = vmax.f32 %v1271, 0.0
  %v1618 = vmax.f32 %v1276, 0.0
  %v1619 = vmax.f32 %v1279, 0.0
  %v1620 = vmax.f32 %v1284, 0.0
  %v1621 = vmax.f32 %v1287, 0.0
  %v1622 = vmax.f32 %v1292, 0.0
  %v1623 = vmax.f32 %v1295, 0.0
  %v1624 = vmax.f32 %v1300, 0.0
  %v1625 = vmax.f32 %v1303, 0.0
  %v1626 = vmax.f32 %v1308, 0.0
  %v1627 = vmax.f32 %v1311, 0.0
  %v1628 = vmax.f32 %v1316, 0.0
  %v1629 = vmax.f32 %v1319, 0.0
  %v1630 = vmax.f32 %v1324, 0.0
  %v1631 = vmax.f32 %v1327, 0.0
  %v1632 = vmax.f32 %v1332, 0.0
  %v1633 = vmax.f32 %v1335, 0.0
  %v1634 = vmax.f32 %v1340, 0.0
  %v1635 = vmax.f32 %v1343, 0.0
  %v1636 = vmax.f32 %v1348, 0.0
  %v1637 = vmax.f32 %v1351, 0.0
  %v1638 = vmax.f32 %v1356, 0.0
  %v1639 = vmax.f32 %v1359, 0.0
  %v1640 = vmax.f32 %v1364, 0.0
  %v1641 = vmax.f32 %v1367, 0.0
  %v1642 = vmax.f32 %v1372, 0.0
  %v1643 = vmax.f32 %v1375, 0.0
  %v1644 = vmax.f32 %v1380, 0.0
  %v1645 = vmax.f32 %v1383, 0.0
  %v1646 = vmax.f32 %v1388, 0.0
  %v1647 = vmax.f32 %v1391, 0.0
  %v1648 = vmax.f32 %v1396, 0.0
  %v1649 = vmax.f32 %v1399, 0.0
  %v1650 = vmax.f32 %v1404, 0.0
  %v1651 = vmax.f32 %v1407, 0.0
  %v1652 = vmax.f32 %v1412, 0.0
  %v1653 = vmax.f32 %v1415, 0.0
  %v1654 = vmax.f32 %v1420, 0.0
  %v1655 = vmax.f32 %v1423, 0.0
  %v1656 = vmax.f32 %v1428, 0.0
  %v1657 = vmax.f32 %v1431, 0.0
  %v1658 = vmax.f32 %v1436, 0.0
  %v1659 = vmax.f32 %v1439, 0.0
  %v1660 = vmax.f32 %v1444, 0.0
  %v1661 = vmax.f32 %v1447, 0.0
  %v1662 = vmax.f32 %v1452, 0.0
  %v1663 = vmax.f32 %v1455, 0.0
  %v1664 = vmax.f32 %v1460, 0.0
  %v1665 = vmax.f32 %v1463, 0.0
  %v1666 = vmax.f32 %v1468, 0.0
  %v1667 = vmax.f32 %v1471, 0.0
  %v1668 = vmax.f32 %v1476, 0.0
  %v1669 = vmax.f32 %v1479, 0.0
  %v1670 = vmax.f32 %v1484, 0.0
  %v1671 = vmax.f32 %v1487, 0.0
  %v1672 = vmax.f32 %v1492, 0.0
  %v1673 = vmax.f32 %v1495, 0.0
  %v1674 = vmax.f32 %v1500, 0.0
  %v1675 = vmax.f32 %v1503, 0.0
  %v1676 = vmax.f32 %v1508, 0.0
  %v1677 = vmax.f32 %v1511, 0.0
  %v1678 = vmax.f32 %v1516, 0.0
  %v1679 = vmax.f32 %v1519, 0.0
  %v1680 = vmax.f32 %v1524, 0.0
  %v1681 = vmax.f32 %v1527, 0.0
  %v1682 = vmax.f32 %v1532, 0.0
  %v1683 = vmax.f32 %v1535, 0.0
  %v1684 = vmax.f32 %v1540, 0.0
  %v1685 = vmax.f32 %v1543, 0.0
  %v1686 = vmax.f32 %v1548, 0.0
  %v1687 = vmax.f32 %v1551, 0.0
  %v1688 = vmax.f32 %v1556, 0.0
  %v1689 = vmax.f32 %v1559, 0.0
  %v1690 = vmax.f32 %v1562, %v1594
  %v1691 = vmax.f32 %v1563, %v1595
  %v1692 = vmax.f32 %v1564, %v1596
  %v1693 = vmax.f32 %v1565, %v1597
  %v1694 = vmax.f32 %v1566, %v1598
  %v1695 = vmax.f32 %v1567, %v1599
  %v1696 = vmax.f32 %v1568, %v1600
  %v1697 = vmax.f32 %v1569, %v1601
  %v1698 = vmax.f32 %v1570, %v1602
  %v1699 = vmax.f32 %v1571, %v1603
  %v1700 = vmax.f32 %v1572, %v1604
  %v1701 = vmax.f32 %v1573, %v1605
  %v1702 = vmax.f32 %v1574, %v1606
  %v1703 = vmax.f32 %v1575, %v1607
  %v1704 = vmax.f32 %v1576, %v1608
  %v1705 = vmax.f32 %v1577, %v1609
  %v1706 = vmax.f32 %v1578, %v1610
  %v1707 = vmax.f32 %v1579, %v1611
  %v1708 = vmax.f32 %v1580, %v1612
  %v1709 = vmax.f32 %v1581, %v1613
  %v1710 = vmax.f32 %v1582, %v1614
  %v1711 = vmax.f32 %v1583, %v1615
  %v1712 = vmax.f32 %v1584, %v1616
  %v1713 = vmax.f32 %v1585, %v1617
  %v1714 = vmax.f32 %v1586, %v1618
  %v1715 = vmax.f32 %v1587, %v1619
  %v1716 = vmax.f32 %v1588, %v1620
  %v1717 = vmax.f32 %v1589, %v1621
  %v1718 = vmax.f32 %v1590, %v1622
  %v1719 = vmax.f32 %v1591, %v1623
  %v1720 = vmax.f32 %v1592, %v1624
  %v1721 = vmax.f32 %v1593, %v1625
  %v1722 = vmax.f32 %v1626, %v1658
  %v1723 = vmax.f32 %v1627, %v1659
  %v1724 = vmax.f32 %v1628, %v1660
  %v1725 = vmax.f32 %v1629, %v1661
  %v1726 = vmax.f32 %v1630, %v1662
  %v1727 = vmax.f32 %v1631, %v1663
  %v1728 = vmax.f32 %v1632, %v1664
  %v1729 = vmax.f32 %v1633, %v1665
  %v1730 = vmax.f32 %v1634, %v1666
  %v1731 = vmax.f32 %v1635, %v1667
  %v1732 = vmax.f32 %v1636, %v1668
  %v1733 = vmax.f32 %v1637, %v1669
  %v1734 = vmax.f32 %v1638, %v1670
  %v1735 = vmax.f32 %v1639, %v1671
  %v1736 = vmax.f32 %v1640, %v1672
  %v1737 = vmax.f32 %v1641, %v1673
  %v1738 = vmax.f32 %v1642, %v1674
  %v1739 = vmax.f32 %v1643, %v1675
  %v1740 = vmax.f32 %v1644, %v1676
  %v1741 = vmax.f32 %v1645, %v1677
  %v1742 = vmax.f32 %v1646, %v1678
  %v1743 = vmax.f32 %v1647, %v1679
  %v1744 = vmax.f32 %v1648, %v1680
  %v1745 = vmax.f32 %v1649, %v1681
  %v1746 = vmax.f32 %v1650, %v1682
  %v1747 = vmax.f32 %v1651, %v1683
  %v1748 = vmax.f32 %v1652, %v1684
  %v1749 = vmax.f32 %v1653, %v1685
  %v1750 = vmax.f32 %v1654, %v1686
  %v1751 = vmax.f32 %v1655, %v1687
  %v1752 = vmax.f32 %v1656, %v1688
  %v1753 = vmax.f32 %v1657, %v1689
  %v1754 = vmax.f32 %v1690, %v1722
  %v1755 = vmax.f32 %v1691, %v1723
  %v1756 = vmax.f32 %v1692, %v1724
  %v1757 = vmax.f32 %v1693, %v1725
  %v1758 = vmax.f32 %v1694, %v1726
  %v1759 = vmax.f32 %v1695, %v1727
  %v1760 = vmax.f32 %v1696, %v1728
  %v1761 = vmax.f32 %v1697, %v1729
  %v1762 = vmax.f32 %v1698, %v1730
  %v1763 = vmax.f32 %v1699, %v1731
  %v1764 = vmax.f32 %v1700, %v1732
  %v1765 = vmax.f32 %v1701, %v1733
  %v1766 = vmax.f32 %v1702, %v1734
  %v1767 = vmax.f32 %v1703, %v1735
  %v1768 = vmax.f32 %v1704, %v1736
  %v1769 = vmax.f32 %v1705, %v1737
  %v1770 = vmax.f32 %v1706, %v1738
  %v1771 = vmax.f32 %v1707, %v1739
  %v1772 = vmax.f32 %v1708, %v1740
  %v1773 = vmax.f32 %v1709, %v1741
  %v1774 = vmax.f32 %v1710, %v1742
  %v1775 = vmax.f32 %v1711, %v1743
  %v1776 = vmax.f32 %v1712, %v1744
  %v1777 = vmax.f32 %v1713, %v1745
  %v1778 = vmax.f32 %v1714, %v1746
  %v1779 = vmax.f32 %v1715, %v1747
  %v1780 = vmax.f32 %v1716, %v1748
  %v1781 = vmax.f32 %v1717, %v1749
  %v1782 = vmax.f32 %v1718, %v1750
  %v1783 = vmax.f32 %v1719, %v1751
  %v1784 = vmax.f32 %v1720, %v1752
  %v1785 = vmax.f32 %v1721, %v1753
  %v1786 = vpack.c.bf16 %v1754, %v1754
  %v1787 = vpack.c.bf16 %v1755, %v1755
  %v1788 = vpack.c.bf16 %v1756, %v1756
  %v1789 = vpack.c.bf16 %v1757, %v1757
  %v1790 = vpack.c.bf16 %v1758, %v1758
  %v1791 = vpack.c.bf16 %v1759, %v1759
  %v1792 = vpack.c.bf16 %v1760, %v1760
  %v1793 = vpack.c.bf16 %v1761, %v1761
  %v1794 = vpack.c.bf16 %v1762, %v1762
  %v1795 = vpack.c.bf16 %v1763, %v1763
  %v1796 = vpack.c.bf16 %v1764, %v1764
  %v1797 = vpack.c.bf16 %v1765, %v1765
  %v1798 = vpack.c.bf16 %v1766, %v1766
  %v1799 = vpack.c.bf16 %v1767, %v1767
  %v1800 = vpack.c.bf16 %v1768, %v1768
  %v1801 = vpack.c.bf16 %v1769, %v1769
  %v1802 = vpack.c.bf16 %v1770, %v1770
  %v1803 = vpack.c.bf16 %v1771, %v1771
  %v1804 = vpack.c.bf16 %v1772, %v1772
  %v1805 = vpack.c.bf16 %v1773, %v1773
  %v1806 = vpack.c.bf16 %v1774, %v1774
  %v1807 = vpack.c.bf16 %v1775, %v1775
  %v1808 = vpack.c.bf16 %v1776, %v1776
  %v1809 = vpack.c.bf16 %v1777, %v1777
  %v1810 = vpack.c.bf16 %v1778, %v1778
  %v1811 = vpack.c.bf16 %v1779, %v1779
  %v1812 = vpack.c.bf16 %v1780, %v1780
  %v1813 = vpack.c.bf16 %v1781, %v1781
  %v1814 = vpack.c.bf16 %v1782, %v1782
  %v1815 = vpack.c.bf16 %v1783, %v1783
  %v1816 = vpack.c.bf16 %v1784, %v1784
  %v1817 = vpack.c.bf16 %v1785, %v1785
  %v1818 = vld [vmem:[%s3] sm:$0xf]
  %v1819 = vld [vmem:[%s3 + $0x4] sm:$0xf]
  %v1820 = vld [vmem:[%s3 + $0x8] sm:$0xf]
  %v1821 = vld [vmem:[%s3 + $0xc] sm:$0xf]
  %v1822 = vld [vmem:[%s3 + $0x10] sm:$0xf]
  %v1823 = vld [vmem:[%s3 + $0x14] sm:$0xf]
  %v1824 = vld [vmem:[%s3 + $0x18] sm:$0xf]
  %v1825 = vld [vmem:[%s3 + $0x1c] sm:$0xf]
  %v1826 = vld [vmem:[%s3 + $0x20] sm:$0xf]
  %v1827 = vld [vmem:[%s3 + $0x24] sm:$0xf]
  %v1828 = vld [vmem:[%s3 + $0x28] sm:$0xf]
  %v1829 = vld [vmem:[%s3 + $0x2c] sm:$0xf]
  %v1830 = vld [vmem:[%s3 + $0x30] sm:$0xf]
  %v1831 = vld [vmem:[%s3 + $0x34] sm:$0xf]
  %v1832 = vld [vmem:[%s3 + $0x38] sm:$0xf]
  %v1833 = vld [vmem:[%s3 + $0x3c] sm:$0xf]
  %v1834 = vld [vmem:[%s3 + $0x40] sm:$0xf]
  %v1835 = vld [vmem:[%s3 + $0x44] sm:$0xf]
  %v1836 = vld [vmem:[%s3 + $0x48] sm:$0xf]
  %v1837 = vld [vmem:[%s3 + $0x4c] sm:$0xf]
  %v1838 = vld [vmem:[%s3 + $0x50] sm:$0xf]
  %v1839 = vld [vmem:[%s3 + $0x54] sm:$0xf]
  %v1840 = vld [vmem:[%s3 + $0x58] sm:$0xf]
  %v1841 = vld [vmem:[%s3 + $0x5c] sm:$0xf]
  %v1842 = vld [vmem:[%s3 + $0x60] sm:$0xf]
  %v1843 = vld [vmem:[%s3 + $0x64] sm:$0xf]
  %v1844 = vld [vmem:[%s3 + $0x68] sm:$0xf]
  %v1845 = vld [vmem:[%s3 + $0x6c] sm:$0xf]
  %v1846 = vld [vmem:[%s3 + $0x70] sm:$0xf]
  %v1847 = vld [vmem:[%s3 + $0x74] sm:$0xf]
  %v1848 = vld [vmem:[%s3 + $0x78] sm:$0xf]
  %v1849 = vld [vmem:[%s3 + $0x7c] sm:$0xf]
  %v1850 = vld [vmem:[%s3 + $0x80] sm:$0xf]
  %v1851 = vld [vmem:[%s3 + $0x84] sm:$0xf]
  %v1852 = vld [vmem:[%s3 + $0x88] sm:$0xf]
  %v1853 = vld [vmem:[%s3 + $0x8c] sm:$0xf]
  %v1854 = vld [vmem:[%s3 + $0x90] sm:$0xf]
  %v1855 = vld [vmem:[%s3 + $0x94] sm:$0xf]
  %v1856 = vld [vmem:[%s3 + $0x98] sm:$0xf]
  %v1857 = vld [vmem:[%s3 + $0x9c] sm:$0xf]
  %v1858 = vld [vmem:[%s3 + $0xa0] sm:$0xf]
  %v1859 = vld [vmem:[%s3 + $0xa4] sm:$0xf]
  %v1860 = vld [vmem:[%s3 + $0xa8] sm:$0xf]
  %v1861 = vld [vmem:[%s3 + $0xac] sm:$0xf]
  %v1862 = vld [vmem:[%s3 + $0xb0] sm:$0xf]
  %v1863 = vld [vmem:[%s3 + $0xb4] sm:$0xf]
  %v1864 = vld [vmem:[%s3 + $0xb8] sm:$0xf]
  %v1865 = vld [vmem:[%s3 + $0xbc] sm:$0xf]
  %v1866 = vld [vmem:[%s3 + $0xc0] sm:$0xf]
  %v1867 = vld [vmem:[%s3 + $0xc4] sm:$0xf]
  %v1868 = vld [vmem:[%s3 + $0xc8] sm:$0xf]
  %v1869 = vld [vmem:[%s3 + $0xcc] sm:$0xf]
  %v1870 = vld [vmem:[%s3 + $0xd0] sm:$0xf]
  %v1871 = vld [vmem:[%s3 + $0xd4] sm:$0xf]
  %v1872 = vld [vmem:[%s3 + $0xd8] sm:$0xf]
  %v1873 = vld [vmem:[%s3 + $0xdc] sm:$0xf]
  %v1874 = vld [vmem:[%s3 + $0xe0] sm:$0xf]
  %v1875 = vld [vmem:[%s3 + $0xe4] sm:$0xf]
  %v1876 = vld [vmem:[%s3 + $0xe8] sm:$0xf]
  %v1877 = vld [vmem:[%s3 + $0xec] sm:$0xf]
  %v1878 = vld [vmem:[%s3 + $0xf0] sm:$0xf]
  %v1879 = vld [vmem:[%s3 + $0xf4] sm:$0xf]
  %v1880 = vld [vmem:[%s3 + $0xf8] sm:$0xf]
  %v1881 = vld [vmem:[%s3 + $0xfc] sm:$0xf]
  %v1884 = vunpack.c.l.b16 %v1818
  %v1885 = vunpack.c.l.b16 %v1819
  %v1886 = vpack.c.b16 %v1885, %v1884
  %vm1888 = vcmask 130048
  %v1890 = vsel %vm1888, %v1786, 0
  %1892 = vmatprep.subr.bf16.mxu0 0
  %1893 = vmatpush1.bf16.msra.mxu0 0
  %1894 = vmatprep.subr.bf16.mxu0 0
  %1895 = vmatpush1.bf16.msra.mxu0 0
  %1896 = vmatprep.subr.bf16.mxu0 0
  %1897 = vmatpush1.bf16.msra.mxu0 0
  %1898 = vmatprep.subr.bf16.mxu0 0
  %1899 = vmatpush1.bf16.msra.mxu0 0
  %1900 = vmatprep.subr.bf16.mxu0 0
  %1901 = vmatpush1.bf16.msra.mxu0 0
  %1902 = vmatprep.subr.bf16.mxu0 0
  %1903 = vmatpush1.bf16.msra.mxu0 0
  %1904 = vmatprep.subr.bf16.mxu0 0
  %1905 = vmatpush1.bf16.msra.mxu0 0
  %1906 = vmatprep.subr.bf16.mxu0 0
  %1907 = vmatpush1.bf16.msra.mxu0 %v1886
  %1908 = vmatprep.subr.bf16.mxu0 0
  %1909 = vmatpush2.bf16.msra.mxu0 0
  %1910 = vmatprep.subr.bf16.mxu0 0
  %1911 = vmatpush2.bf16.msra.mxu0 0
  %1912 = vmatprep.subr.bf16.mxu0 0
  %1913 = vmatpush2.bf16.msra.mxu0 0
  %1914 = vmatprep.subr.bf16.mxu0 0
  %1915 = vmatpush2.bf16.msra.mxu0 0
  %1916 = vmatprep.subr.bf16.mxu0 0
  %1917 = vmatpush2.bf16.msra.mxu0 0
  %1918 = vmatprep.subr.bf16.mxu0 0
  %1919 = vmatpush2.bf16.msra.mxu0 0
  %1920 = vmatprep.subr.bf16.mxu0 0
  %1921 = vmatpush2.bf16.msra.mxu0 0
  %1922 = vmatprep.subr.bf16.mxu0 0
  %1923 = vmatpush2.bf16.msra.mxu0 0
  %1924 = vmatprep.mubr.bf16.mxu0 0
  %1925 = vmatmul.mubr.bf16.gmra.mxu0 %v1890
  %v1926 = vpop.f32.mrf.mxu0
  %v1927 = vadd.f32 0.0, %v1926
  %v1928 = vpop.f32.mrf.mxu0
  %v1929 = vpop.f32.mrf.mxu0
  %v1930 = vpop.f32.mrf.mxu0
  %1931 = vdwg.mxu0
  %v1934 = vunpack.c.l.b16 %v1820
  %v1935 = vunpack.c.l.b16 %v1821
  %v1936 = vpack.c.b16 %v1935, %v1934
  %v1939 = vsel %vm1888, %v1787, 0
  %1941 = vmatprep.subr.bf16.mxu0 0
  %1942 = vmatpush1.bf16.msra.mxu0 0
  %1943 = vmatprep.subr.bf16.mxu0 0
  %1944 = vmatpush1.bf16.msra.mxu0 0
  %1945 = vmatprep.subr.bf16.mxu0 0
  %1946 = vmatpush1.bf16.msra.mxu0 0
  %1947 = vmatprep.subr.bf16.mxu0 0
  %1948 = vmatpush1.bf16.msra.mxu0 0
  %1949 = vmatprep.subr.bf16.mxu0 0
  %1950 = vmatpush1.bf16.msra.mxu0 0
  %1951 = vmatprep.subr.bf16.mxu0 0
  %1952 = vmatpush1.bf16.msra.mxu0 0
  %1953 = vmatprep.subr.bf16.mxu0 0
  %1954 = vmatpush1.bf16.msra.mxu0 0
  %1955 = vmatprep.subr.bf16.mxu0 0
  %1956 = vmatpush1.bf16.msra.mxu0 %v1936
  %1957 = vmatprep.subr.bf16.mxu0 0
  %1958 = vmatpush2.bf16.msra.mxu0 0
  %1959 = vmatprep.subr.bf16.mxu0 0
  %1960 = vmatpush2.bf16.msra.mxu0 0
  %1961 = vmatprep.subr.bf16.mxu0 0
  %1962 = vmatpush2.bf16.msra.mxu0 0
  %1963 = vmatprep.subr.bf16.mxu0 0
  %1964 = vmatpush2.bf16.msra.mxu0 0
  %1965 = vmatprep.subr.bf16.mxu0 0
  %1966 = vmatpush2.bf16.msra.mxu0 0
  %1967 = vmatprep.subr.bf16.mxu0 0
  %1968 = vmatpush2.bf16.msra.mxu0 0
  %1969 = vmatprep.subr.bf16.mxu0 0
  %1970 = vmatpush2.bf16.msra.mxu0 0
  %1971 = vmatprep.subr.bf16.mxu0 0
  %1972 = vmatpush2.bf16.msra.mxu0 0
  %1973 = vmatprep.mubr.bf16.mxu0 0
  %1974 = vmatmul.mubr.bf16.gmra.mxu0 %v1939
  %v1975 = vpop.f32.mrf.mxu0
  %v1976 = vadd.f32 0.0, %v1975
  %v1977 = vpop.f32.mrf.mxu0
  %v1978 = vpop.f32.mrf.mxu0
  %v1979 = vpop.f32.mrf.mxu0
  %1980 = vdwg.mxu0
  %v1983 = vunpack.c.l.b16 %v1822
  %v1984 = vunpack.c.l.b16 %v1823
  %v1985 = vpack.c.b16 %v1984, %v1983
  %v1988 = vsel %vm1888, %v1788, 0
  %1990 = vmatprep.subr.bf16.mxu0 0
  %1991 = vmatpush1.bf16.msra.mxu0 0
  %1992 = vmatprep.subr.bf16.mxu0 0
  %1993 = vmatpush1.bf16.msra.mxu0 0
  %1994 = vmatprep.subr.bf16.mxu0 0
  %1995 = vmatpush1.bf16.msra.mxu0 0
  %1996 = vmatprep.subr.bf16.mxu0 0
  %1997 = vmatpush1.bf16.msra.mxu0 0
  %1998 = vmatprep.subr.bf16.mxu0 0
  %1999 = vmatpush1.bf16.msra.mxu0 0
  %2000 = vmatprep.subr.bf16.mxu0 0
  %2001 = vmatpush1.bf16.msra.mxu0 0
  %2002 = vmatprep.subr.bf16.mxu0 0
  %2003 = vmatpush1.bf16.msra.mxu0 0
  %2004 = vmatprep.subr.bf16.mxu0 0
  %2005 = vmatpush1.bf16.msra.mxu0 %v1985
  %2006 = vmatprep.subr.bf16.mxu0 0
  %2007 = vmatpush2.bf16.msra.mxu0 0
  %2008 = vmatprep.subr.bf16.mxu0 0
  %2009 = vmatpush2.bf16.msra.mxu0 0
  %2010 = vmatprep.subr.bf16.mxu0 0
  %2011 = vmatpush2.bf16.msra.mxu0 0
  %2012 = vmatprep.subr.bf16.mxu0 0
  %2013 = vmatpush2.bf16.msra.mxu0 0
  %2014 = vmatprep.subr.bf16.mxu0 0
  %2015 = vmatpush2.bf16.msra.mxu0 0
  %2016 = vmatprep.subr.bf16.mxu0 0
  %2017 = vmatpush2.bf16.msra.mxu0 0
  %2018 = vmatprep.subr.bf16.mxu0 0
  %2019 = vmatpush2.bf16.msra.mxu0 0
  %2020 = vmatprep.subr.bf16.mxu0 0
  %2021 = vmatpush2.bf16.msra.mxu0 0
  %2022 = vmatprep.mubr.bf16.mxu0 0
  %2023 = vmatmul.mubr.bf16.gmra.mxu0 %v1988
  %v2024 = vpop.f32.mrf.mxu0
  %v2025 = vadd.f32 0.0, %v2024
  %v2026 = vpop.f32.mrf.mxu0
  %v2027 = vpop.f32.mrf.mxu0
  %v2028 = vpop.f32.mrf.mxu0
  %2029 = vdwg.mxu0
  %v2032 = vunpack.c.l.b16 %v1824
  %v2033 = vunpack.c.l.b16 %v1825
  %v2034 = vpack.c.b16 %v2033, %v2032
  %v2037 = vsel %vm1888, %v1789, 0
  %2039 = vmatprep.subr.bf16.mxu0 0
  %2040 = vmatpush1.bf16.msra.mxu0 0
  %2041 = vmatprep.subr.bf16.mxu0 0
  %2042 = vmatpush1.bf16.msra.mxu0 0
  %2043 = vmatprep.subr.bf16.mxu0 0
  %2044 = vmatpush1.bf16.msra.mxu0 0
  %2045 = vmatprep.subr.bf16.mxu0 0
  %2046 = vmatpush1.bf16.msra.mxu0 0
  %2047 = vmatprep.subr.bf16.mxu0 0
  %2048 = vmatpush1.bf16.msra.mxu0 0
  %2049 = vmatprep.subr.bf16.mxu0 0
  %2050 = vmatpush1.bf16.msra.mxu0 0
  %2051 = vmatprep.subr.bf16.mxu0 0
  %2052 = vmatpush1.bf16.msra.mxu0 0
  %2053 = vmatprep.subr.bf16.mxu0 0
  %2054 = vmatpush1.bf16.msra.mxu0 %v2034
  %2055 = vmatprep.subr.bf16.mxu0 0
  %2056 = vmatpush2.bf16.msra.mxu0 0
  %2057 = vmatprep.subr.bf16.mxu0 0
  %2058 = vmatpush2.bf16.msra.mxu0 0
  %2059 = vmatprep.subr.bf16.mxu0 0
  %2060 = vmatpush2.bf16.msra.mxu0 0
  %2061 = vmatprep.subr.bf16.mxu0 0
  %2062 = vmatpush2.bf16.msra.mxu0 0
  %2063 = vmatprep.subr.bf16.mxu0 0
  %2064 = vmatpush2.bf16.msra.mxu0 0
  %2065 = vmatprep.subr.bf16.mxu0 0
  %2066 = vmatpush2.bf16.msra.mxu0 0
  %2067 = vmatprep.subr.bf16.mxu0 0
  %2068 = vmatpush2.bf16.msra.mxu0 0
  %2069 = vmatprep.subr.bf16.mxu0 0
  %2070 = vmatpush2.bf16.msra.mxu0 0
  %2071 = vmatprep.mubr.bf16.mxu0 0
  %2072 = vmatmul.mubr.bf16.gmra.mxu0 %v2037
  %v2073 = vpop.f32.mrf.mxu0
  %v2074 = vadd.f32 0.0, %v2073
  %v2075 = vpop.f32.mrf.mxu0
  %v2076 = vpop.f32.mrf.mxu0
  %v2077 = vpop.f32.mrf.mxu0
  %2078 = vdwg.mxu0
  %v2081 = vunpack.c.l.b16 %v1826
  %v2082 = vunpack.c.l.b16 %v1827
  %v2083 = vpack.c.b16 %v2082, %v2081
  %v2086 = vsel %vm1888, %v1790, 0
  %2088 = vmatprep.subr.bf16.mxu0 0
  %2089 = vmatpush1.bf16.msra.mxu0 0
  %2090 = vmatprep.subr.bf16.mxu0 0
  %2091 = vmatpush1.bf16.msra.mxu0 0
  %2092 = vmatprep.subr.bf16.mxu0 0
  %2093 = vmatpush1.bf16.msra.mxu0 0
  %2094 = vmatprep.subr.bf16.mxu0 0
  %2095 = vmatpush1.bf16.msra.mxu0 0
  %2096 = vmatprep.subr.bf16.mxu0 0
  %2097 = vmatpush1.bf16.msra.mxu0 0
  %2098 = vmatprep.subr.bf16.mxu0 0
  %2099 = vmatpush1.bf16.msra.mxu0 0
  %2100 = vmatprep.subr.bf16.mxu0 0
  %2101 = vmatpush1.bf16.msra.mxu0 0
  %2102 = vmatprep.subr.bf16.mxu0 0
  %2103 = vmatpush1.bf16.msra.mxu0 %v2083
  %2104 = vmatprep.subr.bf16.mxu0 0
  %2105 = vmatpush2.bf16.msra.mxu0 0
  %2106 = vmatprep.subr.bf16.mxu0 0
  %2107 = vmatpush2.bf16.msra.mxu0 0
  %2108 = vmatprep.subr.bf16.mxu0 0
  %2109 = vmatpush2.bf16.msra.mxu0 0
  %2110 = vmatprep.subr.bf16.mxu0 0
  %2111 = vmatpush2.bf16.msra.mxu0 0
  %2112 = vmatprep.subr.bf16.mxu0 0
  %2113 = vmatpush2.bf16.msra.mxu0 0
  %2114 = vmatprep.subr.bf16.mxu0 0
  %2115 = vmatpush2.bf16.msra.mxu0 0
  %2116 = vmatprep.subr.bf16.mxu0 0
  %2117 = vmatpush2.bf16.msra.mxu0 0
  %2118 = vmatprep.subr.bf16.mxu0 0
  %2119 = vmatpush2.bf16.msra.mxu0 0
  %2120 = vmatprep.mubr.bf16.mxu0 0
  %2121 = vmatmul.mubr.bf16.gmra.mxu0 %v2086
  %v2122 = vpop.f32.mrf.mxu0
  %v2123 = vadd.f32 0.0, %v2122
  %v2124 = vpop.f32.mrf.mxu0
  %v2125 = vpop.f32.mrf.mxu0
  %v2126 = vpop.f32.mrf.mxu0
  %2127 = vdwg.mxu0
  %v2130 = vunpack.c.l.b16 %v1828
  %v2131 = vunpack.c.l.b16 %v1829
  %v2132 = vpack.c.b16 %v2131, %v2130
  %v2135 = vsel %vm1888, %v1791, 0
  %2137 = vmatprep.subr.bf16.mxu0 0
  %2138 = vmatpush1.bf16.msra.mxu0 0
  %2139 = vmatprep.subr.bf16.mxu0 0
  %2140 = vmatpush1.bf16.msra.mxu0 0
  %2141 = vmatprep.subr.bf16.mxu0 0
  %2142 = vmatpush1.bf16.msra.mxu0 0
  %2143 = vmatprep.subr.bf16.mxu0 0
  %2144 = vmatpush1.bf16.msra.mxu0 0
  %2145 = vmatprep.subr.bf16.mxu0 0
  %2146 = vmatpush1.bf16.msra.mxu0 0
  %2147 = vmatprep.subr.bf16.mxu0 0
  %2148 = vmatpush1.bf16.msra.mxu0 0
  %2149 = vmatprep.subr.bf16.mxu0 0
  %2150 = vmatpush1.bf16.msra.mxu0 0
  %2151 = vmatprep.subr.bf16.mxu0 0
  %2152 = vmatpush1.bf16.msra.mxu0 %v2132
  %2153 = vmatprep.subr.bf16.mxu0 0
  %2154 = vmatpush2.bf16.msra.mxu0 0
  %2155 = vmatprep.subr.bf16.mxu0 0
  %2156 = vmatpush2.bf16.msra.mxu0 0
  %2157 = vmatprep.subr.bf16.mxu0 0
  %2158 = vmatpush2.bf16.msra.mxu0 0
  %2159 = vmatprep.subr.bf16.mxu0 0
  %2160 = vmatpush2.bf16.msra.mxu0 0
  %2161 = vmatprep.subr.bf16.mxu0 0
  %2162 = vmatpush2.bf16.msra.mxu0 0
  %2163 = vmatprep.subr.bf16.mxu0 0
  %2164 = vmatpush2.bf16.msra.mxu0 0
  %2165 = vmatprep.subr.bf16.mxu0 0
  %2166 = vmatpush2.bf16.msra.mxu0 0
  %2167 = vmatprep.subr.bf16.mxu0 0
  %2168 = vmatpush2.bf16.msra.mxu0 0
  %2169 = vmatprep.mubr.bf16.mxu0 0
  %2170 = vmatmul.mubr.bf16.gmra.mxu0 %v2135
  %v2171 = vpop.f32.mrf.mxu0
  %v2172 = vadd.f32 0.0, %v2171
  %v2173 = vpop.f32.mrf.mxu0
  %v2174 = vpop.f32.mrf.mxu0
  %v2175 = vpop.f32.mrf.mxu0
  %2176 = vdwg.mxu0
  %v2179 = vunpack.c.l.b16 %v1830
  %v2180 = vunpack.c.l.b16 %v1831
  %v2181 = vpack.c.b16 %v2180, %v2179
  %v2184 = vsel %vm1888, %v1792, 0
  %2186 = vmatprep.subr.bf16.mxu0 0
  %2187 = vmatpush1.bf16.msra.mxu0 0
  %2188 = vmatprep.subr.bf16.mxu0 0
  %2189 = vmatpush1.bf16.msra.mxu0 0
  %2190 = vmatprep.subr.bf16.mxu0 0
  %2191 = vmatpush1.bf16.msra.mxu0 0
  %2192 = vmatprep.subr.bf16.mxu0 0
  %2193 = vmatpush1.bf16.msra.mxu0 0
  %2194 = vmatprep.subr.bf16.mxu0 0
  %2195 = vmatpush1.bf16.msra.mxu0 0
  %2196 = vmatprep.subr.bf16.mxu0 0
  %2197 = vmatpush1.bf16.msra.mxu0 0
  %2198 = vmatprep.subr.bf16.mxu0 0
  %2199 = vmatpush1.bf16.msra.mxu0 0
  %2200 = vmatprep.subr.bf16.mxu0 0
  %2201 = vmatpush1.bf16.msra.mxu0 %v2181
  %2202 = vmatprep.subr.bf16.mxu0 0
  %2203 = vmatpush2.bf16.msra.mxu0 0
  %2204 = vmatprep.subr.bf16.mxu0 0
  %2205 = vmatpush2.bf16.msra.mxu0 0
  %2206 = vmatprep.subr.bf16.mxu0 0
  %2207 = vmatpush2.bf16.msra.mxu0 0
  %2208 = vmatprep.subr.bf16.mxu0 0
  %2209 = vmatpush2.bf16.msra.mxu0 0
  %2210 = vmatprep.subr.bf16.mxu0 0
  %2211 = vmatpush2.bf16.msra.mxu0 0
  %2212 = vmatprep.subr.bf16.mxu0 0
  %2213 = vmatpush2.bf16.msra.mxu0 0
  %2214 = vmatprep.subr.bf16.mxu0 0
  %2215 = vmatpush2.bf16.msra.mxu0 0
  %2216 = vmatprep.subr.bf16.mxu0 0
  %2217 = vmatpush2.bf16.msra.mxu0 0
  %2218 = vmatprep.mubr.bf16.mxu0 0
  %2219 = vmatmul.mubr.bf16.gmra.mxu0 %v2184
  %v2220 = vpop.f32.mrf.mxu0
  %v2221 = vadd.f32 0.0, %v2220
  %v2222 = vpop.f32.mrf.mxu0
  %v2223 = vpop.f32.mrf.mxu0
  %v2224 = vpop.f32.mrf.mxu0
  %2225 = vdwg.mxu0
  %v2228 = vunpack.c.l.b16 %v1832
  %v2229 = vunpack.c.l.b16 %v1833
  %v2230 = vpack.c.b16 %v2229, %v2228
  %v2233 = vsel %vm1888, %v1793, 0
  %2235 = vmatprep.subr.bf16.mxu0 0
  %2236 = vmatpush1.bf16.msra.mxu0 0
  %2237 = vmatprep.subr.bf16.mxu0 0
  %2238 = vmatpush1.bf16.msra.mxu0 0
  %2239 = vmatprep.subr.bf16.mxu0 0
  %2240 = vmatpush1.bf16.msra.mxu0 0
  %2241 = vmatprep.subr.bf16.mxu0 0
  %2242 = vmatpush1.bf16.msra.mxu0 0
  %2243 = vmatprep.subr.bf16.mxu0 0
  %2244 = vmatpush1.bf16.msra.mxu0 0
  %2245 = vmatprep.subr.bf16.mxu0 0
  %2246 = vmatpush1.bf16.msra.mxu0 0
  %2247 = vmatprep.subr.bf16.mxu0 0
  %2248 = vmatpush1.bf16.msra.mxu0 0
  %2249 = vmatprep.subr.bf16.mxu0 0
  %2250 = vmatpush1.bf16.msra.mxu0 %v2230
  %2251 = vmatprep.subr.bf16.mxu0 0
  %2252 = vmatpush2.bf16.msra.mxu0 0
  %2253 = vmatprep.subr.bf16.mxu0 0
  %2254 = vmatpush2.bf16.msra.mxu0 0
  %2255 = vmatprep.subr.bf16.mxu0 0
  %2256 = vmatpush2.bf16.msra.mxu0 0
  %2257 = vmatprep.subr.bf16.mxu0 0
  %2258 = vmatpush2.bf16.msra.mxu0 0
  %2259 = vmatprep.subr.bf16.mxu0 0
  %2260 = vmatpush2.bf16.msra.mxu0 0
  %2261 = vmatprep.subr.bf16.mxu0 0
  %2262 = vmatpush2.bf16.msra.mxu0 0
  %2263 = vmatprep.subr.bf16.mxu0 0
  %2264 = vmatpush2.bf16.msra.mxu0 0
  %2265 = vmatprep.subr.bf16.mxu0 0
  %2266 = vmatpush2.bf16.msra.mxu0 0
  %2267 = vmatprep.mubr.bf16.mxu0 0
  %2268 = vmatmul.mubr.bf16.gmra.mxu0 %v2233
  %v2269 = vpop.f32.mrf.mxu0
  %v2270 = vadd.f32 0.0, %v2269
  %v2271 = vpop.f32.mrf.mxu0
  %v2272 = vpop.f32.mrf.mxu0
  %v2273 = vpop.f32.mrf.mxu0
  %2274 = vdwg.mxu0
  %v2277 = vunpack.c.l.b16 %v1834
  %v2278 = vunpack.c.l.b16 %v1835
  %v2279 = vpack.c.b16 %v2278, %v2277
  %v2282 = vsel %vm1888, %v1794, 0
  %2284 = vmatprep.subr.bf16.mxu0 0
  %2285 = vmatpush1.bf16.msra.mxu0 0
  %2286 = vmatprep.subr.bf16.mxu0 0
  %2287 = vmatpush1.bf16.msra.mxu0 0
  %2288 = vmatprep.subr.bf16.mxu0 0
  %2289 = vmatpush1.bf16.msra.mxu0 0
  %2290 = vmatprep.subr.bf16.mxu0 0
  %2291 = vmatpush1.bf16.msra.mxu0 0
  %2292 = vmatprep.subr.bf16.mxu0 0
  %2293 = vmatpush1.bf16.msra.mxu0 0
  %2294 = vmatprep.subr.bf16.mxu0 0
  %2295 = vmatpush1.bf16.msra.mxu0 0
  %2296 = vmatprep.subr.bf16.mxu0 0
  %2297 = vmatpush1.bf16.msra.mxu0 0
  %2298 = vmatprep.subr.bf16.mxu0 0
  %2299 = vmatpush1.bf16.msra.mxu0 %v2279
  %2300 = vmatprep.subr.bf16.mxu0 0
  %2301 = vmatpush2.bf16.msra.mxu0 0
  %2302 = vmatprep.subr.bf16.mxu0 0
  %2303 = vmatpush2.bf16.msra.mxu0 0
  %2304 = vmatprep.subr.bf16.mxu0 0
  %2305 = vmatpush2.bf16.msra.mxu0 0
  %2306 = vmatprep.subr.bf16.mxu0 0
  %2307 = vmatpush2.bf16.msra.mxu0 0
  %2308 = vmatprep.subr.bf16.mxu0 0
  %2309 = vmatpush2.bf16.msra.mxu0 0
  %2310 = vmatprep.subr.bf16.mxu0 0
  %2311 = vmatpush2.bf16.msra.mxu0 0
  %2312 = vmatprep.subr.bf16.mxu0 0
  %2313 = vmatpush2.bf16.msra.mxu0 0
  %2314 = vmatprep.subr.bf16.mxu0 0
  %2315 = vmatpush2.bf16.msra.mxu0 0
  %2316 = vmatprep.mubr.bf16.mxu0 0
  %2317 = vmatmul.mubr.bf16.gmra.mxu0 %v2282
  %v2318 = vpop.f32.mrf.mxu0
  %v2319 = vadd.f32 0.0, %v2318
  %v2320 = vpop.f32.mrf.mxu0
  %v2321 = vpop.f32.mrf.mxu0
  %v2322 = vpop.f32.mrf.mxu0
  %2323 = vdwg.mxu0
  %v2326 = vunpack.c.l.b16 %v1836
  %v2327 = vunpack.c.l.b16 %v1837
  %v2328 = vpack.c.b16 %v2327, %v2326
  %v2331 = vsel %vm1888, %v1795, 0
  %2333 = vmatprep.subr.bf16.mxu0 0
  %2334 = vmatpush1.bf16.msra.mxu0 0
  %2335 = vmatprep.subr.bf16.mxu0 0
  %2336 = vmatpush1.bf16.msra.mxu0 0
  %2337 = vmatprep.subr.bf16.mxu0 0
  %2338 = vmatpush1.bf16.msra.mxu0 0
  %2339 = vmatprep.subr.bf16.mxu0 0
  %2340 = vmatpush1.bf16.msra.mxu0 0
  %2341 = vmatprep.subr.bf16.mxu0 0
  %2342 = vmatpush1.bf16.msra.mxu0 0
  %2343 = vmatprep.subr.bf16.mxu0 0
  %2344 = vmatpush1.bf16.msra.mxu0 0
  %2345 = vmatprep.subr.bf16.mxu0 0
  %2346 = vmatpush1.bf16.msra.mxu0 0
  %2347 = vmatprep.subr.bf16.mxu0 0
  %2348 = vmatpush1.bf16.msra.mxu0 %v2328
  %2349 = vmatprep.subr.bf16.mxu0 0
  %2350 = vmatpush2.bf16.msra.mxu0 0
  %2351 = vmatprep.subr.bf16.mxu0 0
  %2352 = vmatpush2.bf16.msra.mxu0 0
  %2353 = vmatprep.subr.bf16.mxu0 0
  %2354 = vmatpush2.bf16.msra.mxu0 0
  %2355 = vmatprep.subr.bf16.mxu0 0
  %2356 = vmatpush2.bf16.msra.mxu0 0
  %2357 = vmatprep.subr.bf16.mxu0 0
  %2358 = vmatpush2.bf16.msra.mxu0 0
  %2359 = vmatprep.subr.bf16.mxu0 0
  %2360 = vmatpush2.bf16.msra.mxu0 0
  %2361 = vmatprep.subr.bf16.mxu0 0
  %2362 = vmatpush2.bf16.msra.mxu0 0
  %2363 = vmatprep.subr.bf16.mxu0 0
  %2364 = vmatpush2.bf16.msra.mxu0 0
  %2365 = vmatprep.mubr.bf16.mxu0 0
  %2366 = vmatmul.mubr.bf16.gmra.mxu0 %v2331
  %v2367 = vpop.f32.mrf.mxu0
  %v2368 = vadd.f32 0.0, %v2367
  %v2369 = vpop.f32.mrf.mxu0
  %v2370 = vpop.f32.mrf.mxu0
  %v2371 = vpop.f32.mrf.mxu0
  %2372 = vdwg.mxu0
  %v2375 = vunpack.c.l.b16 %v1838
  %v2376 = vunpack.c.l.b16 %v1839
  %v2377 = vpack.c.b16 %v2376, %v2375
  %v2380 = vsel %vm1888, %v1796, 0
  %2382 = vmatprep.subr.bf16.mxu0 0
  %2383 = vmatpush1.bf16.msra.mxu0 0
  %2384 = vmatprep.subr.bf16.mxu0 0
  %2385 = vmatpush1.bf16.msra.mxu0 0
  %2386 = vmatprep.subr.bf16.mxu0 0
  %2387 = vmatpush1.bf16.msra.mxu0 0
  %2388 = vmatprep.subr.bf16.mxu0 0
  %2389 = vmatpush1.bf16.msra.mxu0 0
  %2390 = vmatprep.subr.bf16.mxu0 0
  %2391 = vmatpush1.bf16.msra.mxu0 0
  %2392 = vmatprep.subr.bf16.mxu0 0
  %2393 = vmatpush1.bf16.msra.mxu0 0
  %2394 = vmatprep.subr.bf16.mxu0 0
  %2395 = vmatpush1.bf16.msra.mxu0 0
  %2396 = vmatprep.subr.bf16.mxu0 0
  %2397 = vmatpush1.bf16.msra.mxu0 %v2377
  %2398 = vmatprep.subr.bf16.mxu0 0
  %2399 = vmatpush2.bf16.msra.mxu0 0
  %2400 = vmatprep.subr.bf16.mxu0 0
  %2401 = vmatpush2.bf16.msra.mxu0 0
  %2402 = vmatprep.subr.bf16.mxu0 0
  %2403 = vmatpush2.bf16.msra.mxu0 0
  %2404 = vmatprep.subr.bf16.mxu0 0
  %2405 = vmatpush2.bf16.msra.mxu0 0
  %2406 = vmatprep.subr.bf16.mxu0 0
  %2407 = vmatpush2.bf16.msra.mxu0 0
  %2408 = vmatprep.subr.bf16.mxu0 0
  %2409 = vmatpush2.bf16.msra.mxu0 0
  %2410 = vmatprep.subr.bf16.mxu0 0
  %2411 = vmatpush2.bf16.msra.mxu0 0
  %2412 = vmatprep.subr.bf16.mxu0 0
  %2413 = vmatpush2.bf16.msra.mxu0 0
  %2414 = vmatprep.mubr.bf16.mxu0 0
  %2415 = vmatmul.mubr.bf16.gmra.mxu0 %v2380
  %v2416 = vpop.f32.mrf.mxu0
  %v2417 = vadd.f32 0.0, %v2416
  %v2418 = vpop.f32.mrf.mxu0
  %v2419 = vpop.f32.mrf.mxu0
  %v2420 = vpop.f32.mrf.mxu0
  %2421 = vdwg.mxu0
  %v2424 = vunpack.c.l.b16 %v1840
  %v2425 = vunpack.c.l.b16 %v1841
  %v2426 = vpack.c.b16 %v2425, %v2424
  %v2429 = vsel %vm1888, %v1797, 0
  %2431 = vmatprep.subr.bf16.mxu0 0
  %2432 = vmatpush1.bf16.msra.mxu0 0
  %2433 = vmatprep.subr.bf16.mxu0 0
  %2434 = vmatpush1.bf16.msra.mxu0 0
  %2435 = vmatprep.subr.bf16.mxu0 0
  %2436 = vmatpush1.bf16.msra.mxu0 0
  %2437 = vmatprep.subr.bf16.mxu0 0
  %2438 = vmatpush1.bf16.msra.mxu0 0
  %2439 = vmatprep.subr.bf16.mxu0 0
  %2440 = vmatpush1.bf16.msra.mxu0 0
  %2441 = vmatprep.subr.bf16.mxu0 0
  %2442 = vmatpush1.bf16.msra.mxu0 0
  %2443 = vmatprep.subr.bf16.mxu0 0
  %2444 = vmatpush1.bf16.msra.mxu0 0
  %2445 = vmatprep.subr.bf16.mxu0 0
  %2446 = vmatpush1.bf16.msra.mxu0 %v2426
  %2447 = vmatprep.subr.bf16.mxu0 0
  %2448 = vmatpush2.bf16.msra.mxu0 0
  %2449 = vmatprep.subr.bf16.mxu0 0
  %2450 = vmatpush2.bf16.msra.mxu0 0
  %2451 = vmatprep.subr.bf16.mxu0 0
  %2452 = vmatpush2.bf16.msra.mxu0 0
  %2453 = vmatprep.subr.bf16.mxu0 0
  %2454 = vmatpush2.bf16.msra.mxu0 0
  %2455 = vmatprep.subr.bf16.mxu0 0
  %2456 = vmatpush2.bf16.msra.mxu0 0
  %2457 = vmatprep.subr.bf16.mxu0 0
  %2458 = vmatpush2.bf16.msra.mxu0 0
  %2459 = vmatprep.subr.bf16.mxu0 0
  %2460 = vmatpush2.bf16.msra.mxu0 0
  %2461 = vmatprep.subr.bf16.mxu0 0
  %2462 = vmatpush2.bf16.msra.mxu0 0
  %2463 = vmatprep.mubr.bf16.mxu0 0
  %2464 = vmatmul.mubr.bf16.gmra.mxu0 %v2429
  %v2465 = vpop.f32.mrf.mxu0
  %v2466 = vadd.f32 0.0, %v2465
  %v2467 = vpop.f32.mrf.mxu0
  %v2468 = vpop.f32.mrf.mxu0
  %v2469 = vpop.f32.mrf.mxu0
  %2470 = vdwg.mxu0
  %v2473 = vunpack.c.l.b16 %v1842
  %v2474 = vunpack.c.l.b16 %v1843
  %v2475 = vpack.c.b16 %v2474, %v2473
  %v2478 = vsel %vm1888, %v1798, 0
  %2480 = vmatprep.subr.bf16.mxu0 0
  %2481 = vmatpush1.bf16.msra.mxu0 0
  %2482 = vmatprep.subr.bf16.mxu0 0
  %2483 = vmatpush1.bf16.msra.mxu0 0
  %2484 = vmatprep.subr.bf16.mxu0 0
  %2485 = vmatpush1.bf16.msra.mxu0 0
  %2486 = vmatprep.subr.bf16.mxu0 0
  %2487 = vmatpush1.bf16.msra.mxu0 0
  %2488 = vmatprep.subr.bf16.mxu0 0
  %2489 = vmatpush1.bf16.msra.mxu0 0
  %2490 = vmatprep.subr.bf16.mxu0 0
  %2491 = vmatpush1.bf16.msra.mxu0 0
  %2492 = vmatprep.subr.bf16.mxu0 0
  %2493 = vmatpush1.bf16.msra.mxu0 0
  %2494 = vmatprep.subr.bf16.mxu0 0
  %2495 = vmatpush1.bf16.msra.mxu0 %v2475
  %2496 = vmatprep.subr.bf16.mxu0 0
  %2497 = vmatpush2.bf16.msra.mxu0 0
  %2498 = vmatprep.subr.bf16.mxu0 0
  %2499 = vmatpush2.bf16.msra.mxu0 0
  %2500 = vmatprep.subr.bf16.mxu0 0
  %2501 = vmatpush2.bf16.msra.mxu0 0
  %2502 = vmatprep.subr.bf16.mxu0 0
  %2503 = vmatpush2.bf16.msra.mxu0 0
  %2504 = vmatprep.subr.bf16.mxu0 0
  %2505 = vmatpush2.bf16.msra.mxu0 0
  %2506 = vmatprep.subr.bf16.mxu0 0
  %2507 = vmatpush2.bf16.msra.mxu0 0
  %2508 = vmatprep.subr.bf16.mxu0 0
  %2509 = vmatpush2.bf16.msra.mxu0 0
  %2510 = vmatprep.subr.bf16.mxu0 0
  %2511 = vmatpush2.bf16.msra.mxu0 0
  %2512 = vmatprep.mubr.bf16.mxu0 0
  %2513 = vmatmul.mubr.bf16.gmra.mxu0 %v2478
  %v2514 = vpop.f32.mrf.mxu0
  %v2515 = vadd.f32 0.0, %v2514
  %v2516 = vpop.f32.mrf.mxu0
  %v2517 = vpop.f32.mrf.mxu0
  %v2518 = vpop.f32.mrf.mxu0
  %2519 = vdwg.mxu0
  %v2522 = vunpack.c.l.b16 %v1844
  %v2523 = vunpack.c.l.b16 %v1845
  %v2524 = vpack.c.b16 %v2523, %v2522
  %v2527 = vsel %vm1888, %v1799, 0
  %2529 = vmatprep.subr.bf16.mxu0 0
  %2530 = vmatpush1.bf16.msra.mxu0 0
  %2531 = vmatprep.subr.bf16.mxu0 0
  %2532 = vmatpush1.bf16.msra.mxu0 0
  %2533 = vmatprep.subr.bf16.mxu0 0
  %2534 = vmatpush1.bf16.msra.mxu0 0
  %2535 = vmatprep.subr.bf16.mxu0 0
  %2536 = vmatpush1.bf16.msra.mxu0 0
  %2537 = vmatprep.subr.bf16.mxu0 0
  %2538 = vmatpush1.bf16.msra.mxu0 0
  %2539 = vmatprep.subr.bf16.mxu0 0
  %2540 = vmatpush1.bf16.msra.mxu0 0
  %2541 = vmatprep.subr.bf16.mxu0 0
  %2542 = vmatpush1.bf16.msra.mxu0 0
  %2543 = vmatprep.subr.bf16.mxu0 0
  %2544 = vmatpush1.bf16.msra.mxu0 %v2524
  %2545 = vmatprep.subr.bf16.mxu0 0
  %2546 = vmatpush2.bf16.msra.mxu0 0
  %2547 = vmatprep.subr.bf16.mxu0 0
  %2548 = vmatpush2.bf16.msra.mxu0 0
  %2549 = vmatprep.subr.bf16.mxu0 0
  %2550 = vmatpush2.bf16.msra.mxu0 0
  %2551 = vmatprep.subr.bf16.mxu0 0
  %2552 = vmatpush2.bf16.msra.mxu0 0
  %2553 = vmatprep.subr.bf16.mxu0 0
  %2554 = vmatpush2.bf16.msra.mxu0 0
  %2555 = vmatprep.subr.bf16.mxu0 0
  %2556 = vmatpush2.bf16.msra.mxu0 0
  %2557 = vmatprep.subr.bf16.mxu0 0
  %2558 = vmatpush2.bf16.msra.mxu0 0
  %2559 = vmatprep.subr.bf16.mxu0 0
  %2560 = vmatpush2.bf16.msra.mxu0 0
  %2561 = vmatprep.mubr.bf16.mxu0 0
  %2562 = vmatmul.mubr.bf16.gmra.mxu0 %v2527
  %v2563 = vpop.f32.mrf.mxu0
  %v2564 = vadd.f32 0.0, %v2563
  %v2565 = vpop.f32.mrf.mxu0
  %v2566 = vpop.f32.mrf.mxu0
  %v2567 = vpop.f32.mrf.mxu0
  %2568 = vdwg.mxu0
  %v2571 = vunpack.c.l.b16 %v1846
  %v2572 = vunpack.c.l.b16 %v1847
  %v2573 = vpack.c.b16 %v2572, %v2571
  %v2576 = vsel %vm1888, %v1800, 0
  %2578 = vmatprep.subr.bf16.mxu0 0
  %2579 = vmatpush1.bf16.msra.mxu0 0
  %2580 = vmatprep.subr.bf16.mxu0 0
  %2581 = vmatpush1.bf16.msra.mxu0 0
  %2582 = vmatprep.subr.bf16.mxu0 0
  %2583 = vmatpush1.bf16.msra.mxu0 0
  %2584 = vmatprep.subr.bf16.mxu0 0
  %2585 = vmatpush1.bf16.msra.mxu0 0
  %2586 = vmatprep.subr.bf16.mxu0 0
  %2587 = vmatpush1.bf16.msra.mxu0 0
  %2588 = vmatprep.subr.bf16.mxu0 0
  %2589 = vmatpush1.bf16.msra.mxu0 0
  %2590 = vmatprep.subr.bf16.mxu0 0
  %2591 = vmatpush1.bf16.msra.mxu0 0
  %2592 = vmatprep.subr.bf16.mxu0 0
  %2593 = vmatpush1.bf16.msra.mxu0 %v2573
  %2594 = vmatprep.subr.bf16.mxu0 0
  %2595 = vmatpush2.bf16.msra.mxu0 0
  %2596 = vmatprep.subr.bf16.mxu0 0
  %2597 = vmatpush2.bf16.msra.mxu0 0
  %2598 = vmatprep.subr.bf16.mxu0 0
  %2599 = vmatpush2.bf16.msra.mxu0 0
  %2600 = vmatprep.subr.bf16.mxu0 0
  %2601 = vmatpush2.bf16.msra.mxu0 0
  %2602 = vmatprep.subr.bf16.mxu0 0
  %2603 = vmatpush2.bf16.msra.mxu0 0
  %2604 = vmatprep.subr.bf16.mxu0 0
  %2605 = vmatpush2.bf16.msra.mxu0 0
  %2606 = vmatprep.subr.bf16.mxu0 0
  %2607 = vmatpush2.bf16.msra.mxu0 0
  %2608 = vmatprep.subr.bf16.mxu0 0
  %2609 = vmatpush2.bf16.msra.mxu0 0
  %2610 = vmatprep.mubr.bf16.mxu0 0
  %2611 = vmatmul.mubr.bf16.gmra.mxu0 %v2576
  %v2612 = vpop.f32.mrf.mxu0
  %v2613 = vadd.f32 0.0, %v2612
  %v2614 = vpop.f32.mrf.mxu0
  %v2615 = vpop.f32.mrf.mxu0
  %v2616 = vpop.f32.mrf.mxu0
  %2617 = vdwg.mxu0
  %v2620 = vunpack.c.l.b16 %v1848
  %v2621 = vunpack.c.l.b16 %v1849
  %v2622 = vpack.c.b16 %v2621, %v2620
  %v2625 = vsel %vm1888, %v1801, 0
  %2627 = vmatprep.subr.bf16.mxu0 0
  %2628 = vmatpush1.bf16.msra.mxu0 0
  %2629 = vmatprep.subr.bf16.mxu0 0
  %2630 = vmatpush1.bf16.msra.mxu0 0
  %2631 = vmatprep.subr.bf16.mxu0 0
  %2632 = vmatpush1.bf16.msra.mxu0 0
  %2633 = vmatprep.subr.bf16.mxu0 0
  %2634 = vmatpush1.bf16.msra.mxu0 0
  %2635 = vmatprep.subr.bf16.mxu0 0
  %2636 = vmatpush1.bf16.msra.mxu0 0
  %2637 = vmatprep.subr.bf16.mxu0 0
  %2638 = vmatpush1.bf16.msra.mxu0 0
  %2639 = vmatprep.subr.bf16.mxu0 0
  %2640 = vmatpush1.bf16.msra.mxu0 0
  %2641 = vmatprep.subr.bf16.mxu0 0
  %2642 = vmatpush1.bf16.msra.mxu0 %v2622
  %2643 = vmatprep.subr.bf16.mxu0 0
  %2644 = vmatpush2.bf16.msra.mxu0 0
  %2645 = vmatprep.subr.bf16.mxu0 0
  %2646 = vmatpush2.bf16.msra.mxu0 0
  %2647 = vmatprep.subr.bf16.mxu0 0
  %2648 = vmatpush2.bf16.msra.mxu0 0
  %2649 = vmatprep.subr.bf16.mxu0 0
  %2650 = vmatpush2.bf16.msra.mxu0 0
  %2651 = vmatprep.subr.bf16.mxu0 0
  %2652 = vmatpush2.bf16.msra.mxu0 0
  %2653 = vmatprep.subr.bf16.mxu0 0
  %2654 = vmatpush2.bf16.msra.mxu0 0
  %2655 = vmatprep.subr.bf16.mxu0 0
  %2656 = vmatpush2.bf16.msra.mxu0 0
  %2657 = vmatprep.subr.bf16.mxu0 0
  %2658 = vmatpush2.bf16.msra.mxu0 0
  %2659 = vmatprep.mubr.bf16.mxu0 0
  %2660 = vmatmul.mubr.bf16.gmra.mxu0 %v2625
  %v2661 = vpop.f32.mrf.mxu0
  %v2662 = vadd.f32 0.0, %v2661
  %v2663 = vpop.f32.mrf.mxu0
  %v2664 = vpop.f32.mrf.mxu0
  %v2665 = vpop.f32.mrf.mxu0
  %2666 = vdwg.mxu0
  %v2669 = vunpack.c.l.b16 %v1850
  %v2670 = vunpack.c.l.b16 %v1851
  %v2671 = vpack.c.b16 %v2670, %v2669
  %v2674 = vsel %vm1888, %v1802, 0
  %2676 = vmatprep.subr.bf16.mxu0 0
  %2677 = vmatpush1.bf16.msra.mxu0 0
  %2678 = vmatprep.subr.bf16.mxu0 0
  %2679 = vmatpush1.bf16.msra.mxu0 0
  %2680 = vmatprep.subr.bf16.mxu0 0
  %2681 = vmatpush1.bf16.msra.mxu0 0
  %2682 = vmatprep.subr.bf16.mxu0 0
  %2683 = vmatpush1.bf16.msra.mxu0 0
  %2684 = vmatprep.subr.bf16.mxu0 0
  %2685 = vmatpush1.bf16.msra.mxu0 0
  %2686 = vmatprep.subr.bf16.mxu0 0
  %2687 = vmatpush1.bf16.msra.mxu0 0
  %2688 = vmatprep.subr.bf16.mxu0 0
  %2689 = vmatpush1.bf16.msra.mxu0 0
  %2690 = vmatprep.subr.bf16.mxu0 0
  %2691 = vmatpush1.bf16.msra.mxu0 %v2671
  %2692 = vmatprep.subr.bf16.mxu0 0
  %2693 = vmatpush2.bf16.msra.mxu0 0
  %2694 = vmatprep.subr.bf16.mxu0 0
  %2695 = vmatpush2.bf16.msra.mxu0 0
  %2696 = vmatprep.subr.bf16.mxu0 0
  %2697 = vmatpush2.bf16.msra.mxu0 0
  %2698 = vmatprep.subr.bf16.mxu0 0
  %2699 = vmatpush2.bf16.msra.mxu0 0
  %2700 = vmatprep.subr.bf16.mxu0 0
  %2701 = vmatpush2.bf16.msra.mxu0 0
  %2702 = vmatprep.subr.bf16.mxu0 0
  %2703 = vmatpush2.bf16.msra.mxu0 0
  %2704 = vmatprep.subr.bf16.mxu0 0
  %2705 = vmatpush2.bf16.msra.mxu0 0
  %2706 = vmatprep.subr.bf16.mxu0 0
  %2707 = vmatpush2.bf16.msra.mxu0 0
  %2708 = vmatprep.mubr.bf16.mxu0 0
  %2709 = vmatmul.mubr.bf16.gmra.mxu0 %v2674
  %v2710 = vpop.f32.mrf.mxu0
  %v2711 = vadd.f32 0.0, %v2710
  %v2712 = vpop.f32.mrf.mxu0
  %v2713 = vpop.f32.mrf.mxu0
  %v2714 = vpop.f32.mrf.mxu0
  %2715 = vdwg.mxu0
  %v2718 = vunpack.c.l.b16 %v1852
  %v2719 = vunpack.c.l.b16 %v1853
  %v2720 = vpack.c.b16 %v2719, %v2718
  %v2723 = vsel %vm1888, %v1803, 0
  %2725 = vmatprep.subr.bf16.mxu0 0
  %2726 = vmatpush1.bf16.msra.mxu0 0
  %2727 = vmatprep.subr.bf16.mxu0 0
  %2728 = vmatpush1.bf16.msra.mxu0 0
  %2729 = vmatprep.subr.bf16.mxu0 0
  %2730 = vmatpush1.bf16.msra.mxu0 0
  %2731 = vmatprep.subr.bf16.mxu0 0
  %2732 = vmatpush1.bf16.msra.mxu0 0
  %2733 = vmatprep.subr.bf16.mxu0 0
  %2734 = vmatpush1.bf16.msra.mxu0 0
  %2735 = vmatprep.subr.bf16.mxu0 0
  %2736 = vmatpush1.bf16.msra.mxu0 0
  %2737 = vmatprep.subr.bf16.mxu0 0
  %2738 = vmatpush1.bf16.msra.mxu0 0
  %2739 = vmatprep.subr.bf16.mxu0 0
  %2740 = vmatpush1.bf16.msra.mxu0 %v2720
  %2741 = vmatprep.subr.bf16.mxu0 0
  %2742 = vmatpush2.bf16.msra.mxu0 0
  %2743 = vmatprep.subr.bf16.mxu0 0
  %2744 = vmatpush2.bf16.msra.mxu0 0
  %2745 = vmatprep.subr.bf16.mxu0 0
  %2746 = vmatpush2.bf16.msra.mxu0 0
  %2747 = vmatprep.subr.bf16.mxu0 0
  %2748 = vmatpush2.bf16.msra.mxu0 0
  %2749 = vmatprep.subr.bf16.mxu0 0
  %2750 = vmatpush2.bf16.msra.mxu0 0
  %2751 = vmatprep.subr.bf16.mxu0 0
  %2752 = vmatpush2.bf16.msra.mxu0 0
  %2753 = vmatprep.subr.bf16.mxu0 0
  %2754 = vmatpush2.bf16.msra.mxu0 0
  %2755 = vmatprep.subr.bf16.mxu0 0
  %2756 = vmatpush2.bf16.msra.mxu0 0
  %2757 = vmatprep.mubr.bf16.mxu0 0
  %2758 = vmatmul.mubr.bf16.gmra.mxu0 %v2723
  %v2759 = vpop.f32.mrf.mxu0
  %v2760 = vadd.f32 0.0, %v2759
  %v2761 = vpop.f32.mrf.mxu0
  %v2762 = vpop.f32.mrf.mxu0
  %v2763 = vpop.f32.mrf.mxu0
  %2764 = vdwg.mxu0
  %v2767 = vunpack.c.l.b16 %v1854
  %v2768 = vunpack.c.l.b16 %v1855
  %v2769 = vpack.c.b16 %v2768, %v2767
  %v2772 = vsel %vm1888, %v1804, 0
  %2774 = vmatprep.subr.bf16.mxu0 0
  %2775 = vmatpush1.bf16.msra.mxu0 0
  %2776 = vmatprep.subr.bf16.mxu0 0
  %2777 = vmatpush1.bf16.msra.mxu0 0
  %2778 = vmatprep.subr.bf16.mxu0 0
  %2779 = vmatpush1.bf16.msra.mxu0 0
  %2780 = vmatprep.subr.bf16.mxu0 0
  %2781 = vmatpush1.bf16.msra.mxu0 0
  %2782 = vmatprep.subr.bf16.mxu0 0
  %2783 = vmatpush1.bf16.msra.mxu0 0
  %2784 = vmatprep.subr.bf16.mxu0 0
  %2785 = vmatpush1.bf16.msra.mxu0 0
  %2786 = vmatprep.subr.bf16.mxu0 0
  %2787 = vmatpush1.bf16.msra.mxu0 0
  %2788 = vmatprep.subr.bf16.mxu0 0
  %2789 = vmatpush1.bf16.msra.mxu0 %v2769
  %2790 = vmatprep.subr.bf16.mxu0 0
  %2791 = vmatpush2.bf16.msra.mxu0 0
  %2792 = vmatprep.subr.bf16.mxu0 0
  %2793 = vmatpush2.bf16.msra.mxu0 0
  %2794 = vmatprep.subr.bf16.mxu0 0
  %2795 = vmatpush2.bf16.msra.mxu0 0
  %2796 = vmatprep.subr.bf16.mxu0 0
  %2797 = vmatpush2.bf16.msra.mxu0 0
  %2798 = vmatprep.subr.bf16.mxu0 0
  %2799 = vmatpush2.bf16.msra.mxu0 0
  %2800 = vmatprep.subr.bf16.mxu0 0
  %2801 = vmatpush2.bf16.msra.mxu0 0
  %2802 = vmatprep.subr.bf16.mxu0 0
  %2803 = vmatpush2.bf16.msra.mxu0 0
  %2804 = vmatprep.subr.bf16.mxu0 0
  %2805 = vmatpush2.bf16.msra.mxu0 0
  %2806 = vmatprep.mubr.bf16.mxu0 0
  %2807 = vmatmul.mubr.bf16.gmra.mxu0 %v2772
  %v2808 = vpop.f32.mrf.mxu0
  %v2809 = vadd.f32 0.0, %v2808
  %v2810 = vpop.f32.mrf.mxu0
  %v2811 = vpop.f32.mrf.mxu0
  %v2812 = vpop.f32.mrf.mxu0
  %2813 = vdwg.mxu0
  %v2816 = vunpack.c.l.b16 %v1856
  %v2817 = vunpack.c.l.b16 %v1857
  %v2818 = vpack.c.b16 %v2817, %v2816
  %v2821 = vsel %vm1888, %v1805, 0
  %2823 = vmatprep.subr.bf16.mxu0 0
  %2824 = vmatpush1.bf16.msra.mxu0 0
  %2825 = vmatprep.subr.bf16.mxu0 0
  %2826 = vmatpush1.bf16.msra.mxu0 0
  %2827 = vmatprep.subr.bf16.mxu0 0
  %2828 = vmatpush1.bf16.msra.mxu0 0
  %2829 = vmatprep.subr.bf16.mxu0 0
  %2830 = vmatpush1.bf16.msra.mxu0 0
  %2831 = vmatprep.subr.bf16.mxu0 0
  %2832 = vmatpush1.bf16.msra.mxu0 0
  %2833 = vmatprep.subr.bf16.mxu0 0
  %2834 = vmatpush1.bf16.msra.mxu0 0
  %2835 = vmatprep.subr.bf16.mxu0 0
  %2836 = vmatpush1.bf16.msra.mxu0 0
  %2837 = vmatprep.subr.bf16.mxu0 0
  %2838 = vmatpush1.bf16.msra.mxu0 %v2818
  %2839 = vmatprep.subr.bf16.mxu0 0
  %2840 = vmatpush2.bf16.msra.mxu0 0
  %2841 = vmatprep.subr.bf16.mxu0 0
  %2842 = vmatpush2.bf16.msra.mxu0 0
  %2843 = vmatprep.subr.bf16.mxu0 0
  %2844 = vmatpush2.bf16.msra.mxu0 0
  %2845 = vmatprep.subr.bf16.mxu0 0
  %2846 = vmatpush2.bf16.msra.mxu0 0
  %2847 = vmatprep.subr.bf16.mxu0 0
  %2848 = vmatpush2.bf16.msra.mxu0 0
  %2849 = vmatprep.subr.bf16.mxu0 0
  %2850 = vmatpush2.bf16.msra.mxu0 0
  %2851 = vmatprep.subr.bf16.mxu0 0
  %2852 = vmatpush2.bf16.msra.mxu0 0
  %2853 = vmatprep.subr.bf16.mxu0 0
  %2854 = vmatpush2.bf16.msra.mxu0 0
  %2855 = vmatprep.mubr.bf16.mxu0 0
  %2856 = vmatmul.mubr.bf16.gmra.mxu0 %v2821
  %v2857 = vpop.f32.mrf.mxu0
  %v2858 = vadd.f32 0.0, %v2857
  %v2859 = vpop.f32.mrf.mxu0
  %v2860 = vpop.f32.mrf.mxu0
  %v2861 = vpop.f32.mrf.mxu0
  %2862 = vdwg.mxu0
  %v2865 = vunpack.c.l.b16 %v1858
  %v2866 = vunpack.c.l.b16 %v1859
  %v2867 = vpack.c.b16 %v2866, %v2865
  %v2870 = vsel %vm1888, %v1806, 0
  %2872 = vmatprep.subr.bf16.mxu0 0
  %2873 = vmatpush1.bf16.msra.mxu0 0
  %2874 = vmatprep.subr.bf16.mxu0 0
  %2875 = vmatpush1.bf16.msra.mxu0 0
  %2876 = vmatprep.subr.bf16.mxu0 0
  %2877 = vmatpush1.bf16.msra.mxu0 0
  %2878 = vmatprep.subr.bf16.mxu0 0
  %2879 = vmatpush1.bf16.msra.mxu0 0
  %2880 = vmatprep.subr.bf16.mxu0 0
  %2881 = vmatpush1.bf16.msra.mxu0 0
  %2882 = vmatprep.subr.bf16.mxu0 0
  %2883 = vmatpush1.bf16.msra.mxu0 0
  %2884 = vmatprep.subr.bf16.mxu0 0
  %2885 = vmatpush1.bf16.msra.mxu0 0
  %2886 = vmatprep.subr.bf16.mxu0 0
  %2887 = vmatpush1.bf16.msra.mxu0 %v2867
  %2888 = vmatprep.subr.bf16.mxu0 0
  %2889 = vmatpush2.bf16.msra.mxu0 0
  %2890 = vmatprep.subr.bf16.mxu0 0
  %2891 = vmatpush2.bf16.msra.mxu0 0
  %2892 = vmatprep.subr.bf16.mxu0 0
  %2893 = vmatpush2.bf16.msra.mxu0 0
  %2894 = vmatprep.subr.bf16.mxu0 0
  %2895 = vmatpush2.bf16.msra.mxu0 0
  %2896 = vmatprep.subr.bf16.mxu0 0
  %2897 = vmatpush2.bf16.msra.mxu0 0
  %2898 = vmatprep.subr.bf16.mxu0 0
  %2899 = vmatpush2.bf16.msra.mxu0 0
  %2900 = vmatprep.subr.bf16.mxu0 0
  %2901 = vmatpush2.bf16.msra.mxu0 0
  %2902 = vmatprep.subr.bf16.mxu0 0
  %2903 = vmatpush2.bf16.msra.mxu0 0
  %2904 = vmatprep.mubr.bf16.mxu0 0
  %2905 = vmatmul.mubr.bf16.gmra.mxu0 %v2870
  %v2906 = vpop.f32.mrf.mxu0
  %v2907 = vadd.f32 0.0, %v2906
  %v2908 = vpop.f32.mrf.mxu0
  %v2909 = vpop.f32.mrf.mxu0
  %v2910 = vpop.f32.mrf.mxu0
  %2911 = vdwg.mxu0
  %v2914 = vunpack.c.l.b16 %v1860
  %v2915 = vunpack.c.l.b16 %v1861
  %v2916 = vpack.c.b16 %v2915, %v2914
  %v2919 = vsel %vm1888, %v1807, 0
  %2921 = vmatprep.subr.bf16.mxu0 0
  %2922 = vmatpush1.bf16.msra.mxu0 0
  %2923 = vmatprep.subr.bf16.mxu0 0
  %2924 = vmatpush1.bf16.msra.mxu0 0
  %2925 = vmatprep.subr.bf16.mxu0 0
  %2926 = vmatpush1.bf16.msra.mxu0 0
  %2927 = vmatprep.subr.bf16.mxu0 0
  %2928 = vmatpush1.bf16.msra.mxu0 0
  %2929 = vmatprep.subr.bf16.mxu0 0
  %2930 = vmatpush1.bf16.msra.mxu0 0
  %2931 = vmatprep.subr.bf16.mxu0 0
  %2932 = vmatpush1.bf16.msra.mxu0 0
  %2933 = vmatprep.subr.bf16.mxu0 0
  %2934 = vmatpush1.bf16.msra.mxu0 0
  %2935 = vmatprep.subr.bf16.mxu0 0
  %2936 = vmatpush1.bf16.msra.mxu0 %v2916
  %2937 = vmatprep.subr.bf16.mxu0 0
  %2938 = vmatpush2.bf16.msra.mxu0 0
  %2939 = vmatprep.subr.bf16.mxu0 0
  %2940 = vmatpush2.bf16.msra.mxu0 0
  %2941 = vmatprep.subr.bf16.mxu0 0
  %2942 = vmatpush2.bf16.msra.mxu0 0
  %2943 = vmatprep.subr.bf16.mxu0 0
  %2944 = vmatpush2.bf16.msra.mxu0 0
  %2945 = vmatprep.subr.bf16.mxu0 0
  %2946 = vmatpush2.bf16.msra.mxu0 0
  %2947 = vmatprep.subr.bf16.mxu0 0
  %2948 = vmatpush2.bf16.msra.mxu0 0
  %2949 = vmatprep.subr.bf16.mxu0 0
  %2950 = vmatpush2.bf16.msra.mxu0 0
  %2951 = vmatprep.subr.bf16.mxu0 0
  %2952 = vmatpush2.bf16.msra.mxu0 0
  %2953 = vmatprep.mubr.bf16.mxu0 0
  %2954 = vmatmul.mubr.bf16.gmra.mxu0 %v2919
  %v2955 = vpop.f32.mrf.mxu0
  %v2956 = vadd.f32 0.0, %v2955
  %v2957 = vpop.f32.mrf.mxu0
  %v2958 = vpop.f32.mrf.mxu0
  %v2959 = vpop.f32.mrf.mxu0
  %2960 = vdwg.mxu0
  %v2963 = vunpack.c.l.b16 %v1862
  %v2964 = vunpack.c.l.b16 %v1863
  %v2965 = vpack.c.b16 %v2964, %v2963
  %v2968 = vsel %vm1888, %v1808, 0
  %2970 = vmatprep.subr.bf16.mxu0 0
  %2971 = vmatpush1.bf16.msra.mxu0 0
  %2972 = vmatprep.subr.bf16.mxu0 0
  %2973 = vmatpush1.bf16.msra.mxu0 0
  %2974 = vmatprep.subr.bf16.mxu0 0
  %2975 = vmatpush1.bf16.msra.mxu0 0
  %2976 = vmatprep.subr.bf16.mxu0 0
  %2977 = vmatpush1.bf16.msra.mxu0 0
  %2978 = vmatprep.subr.bf16.mxu0 0
  %2979 = vmatpush1.bf16.msra.mxu0 0
  %2980 = vmatprep.subr.bf16.mxu0 0
  %2981 = vmatpush1.bf16.msra.mxu0 0
  %2982 = vmatprep.subr.bf16.mxu0 0
  %2983 = vmatpush1.bf16.msra.mxu0 0
  %2984 = vmatprep.subr.bf16.mxu0 0
  %2985 = vmatpush1.bf16.msra.mxu0 %v2965
  %2986 = vmatprep.subr.bf16.mxu0 0
  %2987 = vmatpush2.bf16.msra.mxu0 0
  %2988 = vmatprep.subr.bf16.mxu0 0
  %2989 = vmatpush2.bf16.msra.mxu0 0
  %2990 = vmatprep.subr.bf16.mxu0 0
  %2991 = vmatpush2.bf16.msra.mxu0 0
  %2992 = vmatprep.subr.bf16.mxu0 0
  %2993 = vmatpush2.bf16.msra.mxu0 0
  %2994 = vmatprep.subr.bf16.mxu0 0
  %2995 = vmatpush2.bf16.msra.mxu0 0
  %2996 = vmatprep.subr.bf16.mxu0 0
  %2997 = vmatpush2.bf16.msra.mxu0 0
  %2998 = vmatprep.subr.bf16.mxu0 0
  %2999 = vmatpush2.bf16.msra.mxu0 0
  %3000 = vmatprep.subr.bf16.mxu0 0
  %3001 = vmatpush2.bf16.msra.mxu0 0
  %3002 = vmatprep.mubr.bf16.mxu0 0
  %3003 = vmatmul.mubr.bf16.gmra.mxu0 %v2968
  %v3004 = vpop.f32.mrf.mxu0
  %v3005 = vadd.f32 0.0, %v3004
  %v3006 = vpop.f32.mrf.mxu0
  %v3007 = vpop.f32.mrf.mxu0
  %v3008 = vpop.f32.mrf.mxu0
  %3009 = vdwg.mxu0
  %v3012 = vunpack.c.l.b16 %v1864
  %v3013 = vunpack.c.l.b16 %v1865
  %v3014 = vpack.c.b16 %v3013, %v3012
  %v3017 = vsel %vm1888, %v1809, 0
  %3019 = vmatprep.subr.bf16.mxu0 0
  %3020 = vmatpush1.bf16.msra.mxu0 0
  %3021 = vmatprep.subr.bf16.mxu0 0
  %3022 = vmatpush1.bf16.msra.mxu0 0
  %3023 = vmatprep.subr.bf16.mxu0 0
  %3024 = vmatpush1.bf16.msra.mxu0 0
  %3025 = vmatprep.subr.bf16.mxu0 0
  %3026 = vmatpush1.bf16.msra.mxu0 0
  %3027 = vmatprep.subr.bf16.mxu0 0
  %3028 = vmatpush1.bf16.msra.mxu0 0
  %3029 = vmatprep.subr.bf16.mxu0 0
  %3030 = vmatpush1.bf16.msra.mxu0 0
  %3031 = vmatprep.subr.bf16.mxu0 0
  %3032 = vmatpush1.bf16.msra.mxu0 0
  %3033 = vmatprep.subr.bf16.mxu0 0
  %3034 = vmatpush1.bf16.msra.mxu0 %v3014
  %3035 = vmatprep.subr.bf16.mxu0 0
  %3036 = vmatpush2.bf16.msra.mxu0 0
  %3037 = vmatprep.subr.bf16.mxu0 0
  %3038 = vmatpush2.bf16.msra.mxu0 0
  %3039 = vmatprep.subr.bf16.mxu0 0
  %3040 = vmatpush2.bf16.msra.mxu0 0
  %3041 = vmatprep.subr.bf16.mxu0 0
  %3042 = vmatpush2.bf16.msra.mxu0 0
  %3043 = vmatprep.subr.bf16.mxu0 0
  %3044 = vmatpush2.bf16.msra.mxu0 0
  %3045 = vmatprep.subr.bf16.mxu0 0
  %3046 = vmatpush2.bf16.msra.mxu0 0
  %3047 = vmatprep.subr.bf16.mxu0 0
  %3048 = vmatpush2.bf16.msra.mxu0 0
  %3049 = vmatprep.subr.bf16.mxu0 0
  %3050 = vmatpush2.bf16.msra.mxu0 0
  %3051 = vmatprep.mubr.bf16.mxu0 0
  %3052 = vmatmul.mubr.bf16.gmra.mxu0 %v3017
  %v3053 = vpop.f32.mrf.mxu0
  %v3054 = vadd.f32 0.0, %v3053
  %v3055 = vpop.f32.mrf.mxu0
  %v3056 = vpop.f32.mrf.mxu0
  %v3057 = vpop.f32.mrf.mxu0
  %3058 = vdwg.mxu0
  %v3061 = vunpack.c.l.b16 %v1866
  %v3062 = vunpack.c.l.b16 %v1867
  %v3063 = vpack.c.b16 %v3062, %v3061
  %v3066 = vsel %vm1888, %v1810, 0
  %3068 = vmatprep.subr.bf16.mxu0 0
  %3069 = vmatpush1.bf16.msra.mxu0 0
  %3070 = vmatprep.subr.bf16.mxu0 0
  %3071 = vmatpush1.bf16.msra.mxu0 0
  %3072 = vmatprep.subr.bf16.mxu0 0
  %3073 = vmatpush1.bf16.msra.mxu0 0
  %3074 = vmatprep.subr.bf16.mxu0 0
  %3075 = vmatpush1.bf16.msra.mxu0 0
  %3076 = vmatprep.subr.bf16.mxu0 0
  %3077 = vmatpush1.bf16.msra.mxu0 0
  %3078 = vmatprep.subr.bf16.mxu0 0
  %3079 = vmatpush1.bf16.msra.mxu0 0
  %3080 = vmatprep.subr.bf16.mxu0 0
  %3081 = vmatpush1.bf16.msra.mxu0 0
  %3082 = vmatprep.subr.bf16.mxu0 0
  %3083 = vmatpush1.bf16.msra.mxu0 %v3063
  %3084 = vmatprep.subr.bf16.mxu0 0
  %3085 = vmatpush2.bf16.msra.mxu0 0
  %3086 = vmatprep.subr.bf16.mxu0 0
  %3087 = vmatpush2.bf16.msra.mxu0 0
  %3088 = vmatprep.subr.bf16.mxu0 0
  %3089 = vmatpush2.bf16.msra.mxu0 0
  %3090 = vmatprep.subr.bf16.mxu0 0
  %3091 = vmatpush2.bf16.msra.mxu0 0
  %3092 = vmatprep.subr.bf16.mxu0 0
  %3093 = vmatpush2.bf16.msra.mxu0 0
  %3094 = vmatprep.subr.bf16.mxu0 0
  %3095 = vmatpush2.bf16.msra.mxu0 0
  %3096 = vmatprep.subr.bf16.mxu0 0
  %3097 = vmatpush2.bf16.msra.mxu0 0
  %3098 = vmatprep.subr.bf16.mxu0 0
  %3099 = vmatpush2.bf16.msra.mxu0 0
  %3100 = vmatprep.mubr.bf16.mxu0 0
  %3101 = vmatmul.mubr.bf16.gmra.mxu0 %v3066
  %v3102 = vpop.f32.mrf.mxu0
  %v3103 = vadd.f32 0.0, %v3102
  %v3104 = vpop.f32.mrf.mxu0
  %v3105 = vpop.f32.mrf.mxu0
  %v3106 = vpop.f32.mrf.mxu0
  %3107 = vdwg.mxu0
  %v3110 = vunpack.c.l.b16 %v1868
  %v3111 = vunpack.c.l.b16 %v1869
  %v3112 = vpack.c.b16 %v3111, %v3110
  %v3115 = vsel %vm1888, %v1811, 0
  %3117 = vmatprep.subr.bf16.mxu0 0
  %3118 = vmatpush1.bf16.msra.mxu0 0
  %3119 = vmatprep.subr.bf16.mxu0 0
  %3120 = vmatpush1.bf16.msra.mxu0 0
  %3121 = vmatprep.subr.bf16.mxu0 0
  %3122 = vmatpush1.bf16.msra.mxu0 0
  %3123 = vmatprep.subr.bf16.mxu0 0
  %3124 = vmatpush1.bf16.msra.mxu0 0
  %3125 = vmatprep.subr.bf16.mxu0 0
  %3126 = vmatpush1.bf16.msra.mxu0 0
  %3127 = vmatprep.subr.bf16.mxu0 0
  %3128 = vmatpush1.bf16.msra.mxu0 0
  %3129 = vmatprep.subr.bf16.mxu0 0
  %3130 = vmatpush1.bf16.msra.mxu0 0
  %3131 = vmatprep.subr.bf16.mxu0 0
  %3132 = vmatpush1.bf16.msra.mxu0 %v3112
  %3133 = vmatprep.subr.bf16.mxu0 0
  %3134 = vmatpush2.bf16.msra.mxu0 0
  %3135 = vmatprep.subr.bf16.mxu0 0
  %3136 = vmatpush2.bf16.msra.mxu0 0
  %3137 = vmatprep.subr.bf16.mxu0 0
  %3138 = vmatpush2.bf16.msra.mxu0 0
  %3139 = vmatprep.subr.bf16.mxu0 0
  %3140 = vmatpush2.bf16.msra.mxu0 0
  %3141 = vmatprep.subr.bf16.mxu0 0
  %3142 = vmatpush2.bf16.msra.mxu0 0
  %3143 = vmatprep.subr.bf16.mxu0 0
  %3144 = vmatpush2.bf16.msra.mxu0 0
  %3145 = vmatprep.subr.bf16.mxu0 0
  %3146 = vmatpush2.bf16.msra.mxu0 0
  %3147 = vmatprep.subr.bf16.mxu0 0
  %3148 = vmatpush2.bf16.msra.mxu0 0
  %3149 = vmatprep.mubr.bf16.mxu0 0
  %3150 = vmatmul.mubr.bf16.gmra.mxu0 %v3115
  %v3151 = vpop.f32.mrf.mxu0
  %v3152 = vadd.f32 0.0, %v3151
  %v3153 = vpop.f32.mrf.mxu0
  %v3154 = vpop.f32.mrf.mxu0
  %v3155 = vpop.f32.mrf.mxu0
  %3156 = vdwg.mxu0
  %v3159 = vunpack.c.l.b16 %v1870
  %v3160 = vunpack.c.l.b16 %v1871
  %v3161 = vpack.c.b16 %v3160, %v3159
  %v3164 = vsel %vm1888, %v1812, 0
  %3166 = vmatprep.subr.bf16.mxu0 0
  %3167 = vmatpush1.bf16.msra.mxu0 0
  %3168 = vmatprep.subr.bf16.mxu0 0
  %3169 = vmatpush1.bf16.msra.mxu0 0
  %3170 = vmatprep.subr.bf16.mxu0 0
  %3171 = vmatpush1.bf16.msra.mxu0 0
  %3172 = vmatprep.subr.bf16.mxu0 0
  %3173 = vmatpush1.bf16.msra.mxu0 0
  %3174 = vmatprep.subr.bf16.mxu0 0
  %3175 = vmatpush1.bf16.msra.mxu0 0
  %3176 = vmatprep.subr.bf16.mxu0 0
  %3177 = vmatpush1.bf16.msra.mxu0 0
  %3178 = vmatprep.subr.bf16.mxu0 0
  %3179 = vmatpush1.bf16.msra.mxu0 0
  %3180 = vmatprep.subr.bf16.mxu0 0
  %3181 = vmatpush1.bf16.msra.mxu0 %v3161
  %3182 = vmatprep.subr.bf16.mxu0 0
  %3183 = vmatpush2.bf16.msra.mxu0 0
  %3184 = vmatprep.subr.bf16.mxu0 0
  %3185 = vmatpush2.bf16.msra.mxu0 0
  %3186 = vmatprep.subr.bf16.mxu0 0
  %3187 = vmatpush2.bf16.msra.mxu0 0
  %3188 = vmatprep.subr.bf16.mxu0 0
  %3189 = vmatpush2.bf16.msra.mxu0 0
  %3190 = vmatprep.subr.bf16.mxu0 0
  %3191 = vmatpush2.bf16.msra.mxu0 0
  %3192 = vmatprep.subr.bf16.mxu0 0
  %3193 = vmatpush2.bf16.msra.mxu0 0
  %3194 = vmatprep.subr.bf16.mxu0 0
  %3195 = vmatpush2.bf16.msra.mxu0 0
  %3196 = vmatprep.subr.bf16.mxu0 0
  %3197 = vmatpush2.bf16.msra.mxu0 0
  %3198 = vmatprep.mubr.bf16.mxu0 0
  %3199 = vmatmul.mubr.bf16.gmra.mxu0 %v3164
  %v3200 = vpop.f32.mrf.mxu0
  %v3201 = vadd.f32 0.0, %v3200
  %v3202 = vpop.f32.mrf.mxu0
  %v3203 = vpop.f32.mrf.mxu0
  %v3204 = vpop.f32.mrf.mxu0
  %3205 = vdwg.mxu0
  %v3208 = vunpack.c.l.b16 %v1872
  %v3209 = vunpack.c.l.b16 %v1873
  %v3210 = vpack.c.b16 %v3209, %v3208
  %v3213 = vsel %vm1888, %v1813, 0
  %3215 = vmatprep.subr.bf16.mxu0 0
  %3216 = vmatpush1.bf16.msra.mxu0 0
  %3217 = vmatprep.subr.bf16.mxu0 0
  %3218 = vmatpush1.bf16.msra.mxu0 0
  %3219 = vmatprep.subr.bf16.mxu0 0
  %3220 = vmatpush1.bf16.msra.mxu0 0
  %3221 = vmatprep.subr.bf16.mxu0 0
  %3222 = vmatpush1.bf16.msra.mxu0 0
  %3223 = vmatprep.subr.bf16.mxu0 0
  %3224 = vmatpush1.bf16.msra.mxu0 0
  %3225 = vmatprep.subr.bf16.mxu0 0
  %3226 = vmatpush1.bf16.msra.mxu0 0
  %3227 = vmatprep.subr.bf16.mxu0 0
  %3228 = vmatpush1.bf16.msra.mxu0 0
  %3229 = vmatprep.subr.bf16.mxu0 0
  %3230 = vmatpush1.bf16.msra.mxu0 %v3210
  %3231 = vmatprep.subr.bf16.mxu0 0
  %3232 = vmatpush2.bf16.msra.mxu0 0
  %3233 = vmatprep.subr.bf16.mxu0 0
  %3234 = vmatpush2.bf16.msra.mxu0 0
  %3235 = vmatprep.subr.bf16.mxu0 0
  %3236 = vmatpush2.bf16.msra.mxu0 0
  %3237 = vmatprep.subr.bf16.mxu0 0
  %3238 = vmatpush2.bf16.msra.mxu0 0
  %3239 = vmatprep.subr.bf16.mxu0 0
  %3240 = vmatpush2.bf16.msra.mxu0 0
  %3241 = vmatprep.subr.bf16.mxu0 0
  %3242 = vmatpush2.bf16.msra.mxu0 0
  %3243 = vmatprep.subr.bf16.mxu0 0
  %3244 = vmatpush2.bf16.msra.mxu0 0
  %3245 = vmatprep.subr.bf16.mxu0 0
  %3246 = vmatpush2.bf16.msra.mxu0 0
  %3247 = vmatprep.mubr.bf16.mxu0 0
  %3248 = vmatmul.mubr.bf16.gmra.mxu0 %v3213
  %v3249 = vpop.f32.mrf.mxu0
  %v3250 = vadd.f32 0.0, %v3249
  %v3251 = vpop.f32.mrf.mxu0
  %v3252 = vpop.f32.mrf.mxu0
  %v3253 = vpop.f32.mrf.mxu0
  %3254 = vdwg.mxu0
  %v3257 = vunpack.c.l.b16 %v1874
  %v3258 = vunpack.c.l.b16 %v1875
  %v3259 = vpack.c.b16 %v3258, %v3257
  %v3262 = vsel %vm1888, %v1814, 0
  %3264 = vmatprep.subr.bf16.mxu0 0
  %3265 = vmatpush1.bf16.msra.mxu0 0
  %3266 = vmatprep.subr.bf16.mxu0 0
  %3267 = vmatpush1.bf16.msra.mxu0 0
  %3268 = vmatprep.subr.bf16.mxu0 0
  %3269 = vmatpush1.bf16.msra.mxu0 0
  %3270 = vmatprep.subr.bf16.mxu0 0
  %3271 = vmatpush1.bf16.msra.mxu0 0
  %3272 = vmatprep.subr.bf16.mxu0 0
  %3273 = vmatpush1.bf16.msra.mxu0 0
  %3274 = vmatprep.subr.bf16.mxu0 0
  %3275 = vmatpush1.bf16.msra.mxu0 0
  %3276 = vmatprep.subr.bf16.mxu0 0
  %3277 = vmatpush1.bf16.msra.mxu0 0
  %3278 = vmatprep.subr.bf16.mxu0 0
  %3279 = vmatpush1.bf16.msra.mxu0 %v3259
  %3280 = vmatprep.subr.bf16.mxu0 0
  %3281 = vmatpush2.bf16.msra.mxu0 0
  %3282 = vmatprep.subr.bf16.mxu0 0
  %3283 = vmatpush2.bf16.msra.mxu0 0
  %3284 = vmatprep.subr.bf16.mxu0 0
  %3285 = vmatpush2.bf16.msra.mxu0 0
  %3286 = vmatprep.subr.bf16.mxu0 0
  %3287 = vmatpush2.bf16.msra.mxu0 0
  %3288 = vmatprep.subr.bf16.mxu0 0
  %3289 = vmatpush2.bf16.msra.mxu0 0
  %3290 = vmatprep.subr.bf16.mxu0 0
  %3291 = vmatpush2.bf16.msra.mxu0 0
  %3292 = vmatprep.subr.bf16.mxu0 0
  %3293 = vmatpush2.bf16.msra.mxu0 0
  %3294 = vmatprep.subr.bf16.mxu0 0
  %3295 = vmatpush2.bf16.msra.mxu0 0
  %3296 = vmatprep.mubr.bf16.mxu0 0
  %3297 = vmatmul.mubr.bf16.gmra.mxu0 %v3262
  %v3298 = vpop.f32.mrf.mxu0
  %v3299 = vadd.f32 0.0, %v3298
  %v3300 = vpop.f32.mrf.mxu0
  %v3301 = vpop.f32.mrf.mxu0
  %v3302 = vpop.f32.mrf.mxu0
  %3303 = vdwg.mxu0
  %v3306 = vunpack.c.l.b16 %v1876
  %v3307 = vunpack.c.l.b16 %v1877
  %v3308 = vpack.c.b16 %v3307, %v3306
  %v3311 = vsel %vm1888, %v1815, 0
  %3313 = vmatprep.subr.bf16.mxu0 0
  %3314 = vmatpush1.bf16.msra.mxu0 0
  %3315 = vmatprep.subr.bf16.mxu0 0
  %3316 = vmatpush1.bf16.msra.mxu0 0
  %3317 = vmatprep.subr.bf16.mxu0 0
  %3318 = vmatpush1.bf16.msra.mxu0 0
  %3319 = vmatprep.subr.bf16.mxu0 0
  %3320 = vmatpush1.bf16.msra.mxu0 0
  %3321 = vmatprep.subr.bf16.mxu0 0
  %3322 = vmatpush1.bf16.msra.mxu0 0
  %3323 = vmatprep.subr.bf16.mxu0 0
  %3324 = vmatpush1.bf16.msra.mxu0 0
  %3325 = vmatprep.subr.bf16.mxu0 0
  %3326 = vmatpush1.bf16.msra.mxu0 0
  %3327 = vmatprep.subr.bf16.mxu0 0
  %3328 = vmatpush1.bf16.msra.mxu0 %v3308
  %3329 = vmatprep.subr.bf16.mxu0 0
  %3330 = vmatpush2.bf16.msra.mxu0 0
  %3331 = vmatprep.subr.bf16.mxu0 0
  %3332 = vmatpush2.bf16.msra.mxu0 0
  %3333 = vmatprep.subr.bf16.mxu0 0
  %3334 = vmatpush2.bf16.msra.mxu0 0
  %3335 = vmatprep.subr.bf16.mxu0 0
  %3336 = vmatpush2.bf16.msra.mxu0 0
  %3337 = vmatprep.subr.bf16.mxu0 0
  %3338 = vmatpush2.bf16.msra.mxu0 0
  %3339 = vmatprep.subr.bf16.mxu0 0
  %3340 = vmatpush2.bf16.msra.mxu0 0
  %3341 = vmatprep.subr.bf16.mxu0 0
  %3342 = vmatpush2.bf16.msra.mxu0 0
  %3343 = vmatprep.subr.bf16.mxu0 0
  %3344 = vmatpush2.bf16.msra.mxu0 0
  %3345 = vmatprep.mubr.bf16.mxu0 0
  %3346 = vmatmul.mubr.bf16.gmra.mxu0 %v3311
  %v3347 = vpop.f32.mrf.mxu0
  %v3348 = vadd.f32 0.0, %v3347
  %v3349 = vpop.f32.mrf.mxu0
  %v3350 = vpop.f32.mrf.mxu0
  %v3351 = vpop.f32.mrf.mxu0
  %3352 = vdwg.mxu0
  %v3355 = vunpack.c.l.b16 %v1878
  %v3356 = vunpack.c.l.b16 %v1879
  %v3357 = vpack.c.b16 %v3356, %v3355
  %v3360 = vsel %vm1888, %v1816, 0
  %3362 = vmatprep.subr.bf16.mxu0 0
  %3363 = vmatpush1.bf16.msra.mxu0 0
  %3364 = vmatprep.subr.bf16.mxu0 0
  %3365 = vmatpush1.bf16.msra.mxu0 0
  %3366 = vmatprep.subr.bf16.mxu0 0
  %3367 = vmatpush1.bf16.msra.mxu0 0
  %3368 = vmatprep.subr.bf16.mxu0 0
  %3369 = vmatpush1.bf16.msra.mxu0 0
  %3370 = vmatprep.subr.bf16.mxu0 0
  %3371 = vmatpush1.bf16.msra.mxu0 0
  %3372 = vmatprep.subr.bf16.mxu0 0
  %3373 = vmatpush1.bf16.msra.mxu0 0
  %3374 = vmatprep.subr.bf16.mxu0 0
  %3375 = vmatpush1.bf16.msra.mxu0 0
  %3376 = vmatprep.subr.bf16.mxu0 0
  %3377 = vmatpush1.bf16.msra.mxu0 %v3357
  %3378 = vmatprep.subr.bf16.mxu0 0
  %3379 = vmatpush2.bf16.msra.mxu0 0
  %3380 = vmatprep.subr.bf16.mxu0 0
  %3381 = vmatpush2.bf16.msra.mxu0 0
  %3382 = vmatprep.subr.bf16.mxu0 0
  %3383 = vmatpush2.bf16.msra.mxu0 0
  %3384 = vmatprep.subr.bf16.mxu0 0
  %3385 = vmatpush2.bf16.msra.mxu0 0
  %3386 = vmatprep.subr.bf16.mxu0 0
  %3387 = vmatpush2.bf16.msra.mxu0 0
  %3388 = vmatprep.subr.bf16.mxu0 0
  %3389 = vmatpush2.bf16.msra.mxu0 0
  %3390 = vmatprep.subr.bf16.mxu0 0
  %3391 = vmatpush2.bf16.msra.mxu0 0
  %3392 = vmatprep.subr.bf16.mxu0 0
  %3393 = vmatpush2.bf16.msra.mxu0 0
  %3394 = vmatprep.mubr.bf16.mxu0 0
  %3395 = vmatmul.mubr.bf16.gmra.mxu0 %v3360
  %v3396 = vpop.f32.mrf.mxu0
  %v3397 = vadd.f32 0.0, %v3396
  %v3398 = vpop.f32.mrf.mxu0
  %v3399 = vpop.f32.mrf.mxu0
  %v3400 = vpop.f32.mrf.mxu0
  %3401 = vdwg.mxu0
  %v3404 = vunpack.c.l.b16 %v1880
  %v3405 = vunpack.c.l.b16 %v1881
  %v3406 = vpack.c.b16 %v3405, %v3404
  %v3409 = vsel %vm1888, %v1817, 0
  %3411 = vmatprep.subr.bf16.mxu0 0
  %3412 = vmatpush1.bf16.msra.mxu0 0
  %3413 = vmatprep.subr.bf16.mxu0 0
  %3414 = vmatpush1.bf16.msra.mxu0 0
  %3415 = vmatprep.subr.bf16.mxu0 0
  %3416 = vmatpush1.bf16.msra.mxu0 0
  %3417 = vmatprep.subr.bf16.mxu0 0
  %3418 = vmatpush1.bf16.msra.mxu0 0
  %3419 = vmatprep.subr.bf16.mxu0 0
  %3420 = vmatpush1.bf16.msra.mxu0 0
  %3421 = vmatprep.subr.bf16.mxu0 0
  %3422 = vmatpush1.bf16.msra.mxu0 0
  %3423 = vmatprep.subr.bf16.mxu0 0
  %3424 = vmatpush1.bf16.msra.mxu0 0
  %3425 = vmatprep.subr.bf16.mxu0 0
  %3426 = vmatpush1.bf16.msra.mxu0 %v3406
  %3427 = vmatprep.subr.bf16.mxu0 0
  %3428 = vmatpush2.bf16.msra.mxu0 0
  %3429 = vmatprep.subr.bf16.mxu0 0
  %3430 = vmatpush2.bf16.msra.mxu0 0
  %3431 = vmatprep.subr.bf16.mxu0 0
  %3432 = vmatpush2.bf16.msra.mxu0 0
  %3433 = vmatprep.subr.bf16.mxu0 0
  %3434 = vmatpush2.bf16.msra.mxu0 0
  %3435 = vmatprep.subr.bf16.mxu0 0
  %3436 = vmatpush2.bf16.msra.mxu0 0
  %3437 = vmatprep.subr.bf16.mxu0 0
  %3438 = vmatpush2.bf16.msra.mxu0 0
  %3439 = vmatprep.subr.bf16.mxu0 0
  %3440 = vmatpush2.bf16.msra.mxu0 0
  %3441 = vmatprep.subr.bf16.mxu0 0
  %3442 = vmatpush2.bf16.msra.mxu0 0
  %3443 = vmatprep.mubr.bf16.mxu0 0
  %3444 = vmatmul.mubr.bf16.gmra.mxu0 %v3409
  %v3445 = vpop.f32.mrf.mxu0
  %v3446 = vadd.f32 0.0, %v3445
  %v3447 = vpop.f32.mrf.mxu0
  %v3448 = vpop.f32.mrf.mxu0
  %v3449 = vpop.f32.mrf.mxu0
  %3450 = vdwg.mxu0
  %vm3451 = vcmask 982016
  %v3452 = vsel %vm3451, %v1927, 0.0
  %v3453 = vsel %vm3451, %v1976, 0.0
  %v3454 = vadd.f32 %v3452, %v3453
  %v3455 = vsel %vm3451, %v2025, 0.0
  %v3456 = vadd.f32 %v3454, %v3455
  %v3457 = vsel %vm3451, %v2074, 0.0
  %v3458 = vadd.f32 %v3456, %v3457
  %v3459 = vsel %vm3451, %v2123, 0.0
  %v3460 = vadd.f32 %v3458, %v3459
  %v3461 = vsel %vm3451, %v2172, 0.0
  %v3462 = vadd.f32 %v3460, %v3461
  %v3463 = vsel %vm3451, %v2221, 0.0
  %v3464 = vadd.f32 %v3462, %v3463
  %v3465 = vsel %vm3451, %v2270, 0.0
  %v3466 = vadd.f32 %v3464, %v3465
  %v3467 = vsel %vm3451, %v2319, 0.0
  %v3468 = vadd.f32 %v3466, %v3467
  %v3469 = vsel %vm3451, %v2368, 0.0
  %v3470 = vadd.f32 %v3468, %v3469
  %v3471 = vsel %vm3451, %v2417, 0.0
  %v3472 = vadd.f32 %v3470, %v3471
  %v3473 = vsel %vm3451, %v2466, 0.0
  %v3474 = vadd.f32 %v3472, %v3473
  %v3475 = vsel %vm3451, %v2515, 0.0
  %v3476 = vadd.f32 %v3474, %v3475
  %v3477 = vsel %vm3451, %v2564, 0.0
  %v3478 = vadd.f32 %v3476, %v3477
  %v3479 = vsel %vm3451, %v2613, 0.0
  %v3480 = vadd.f32 %v3478, %v3479
  %v3481 = vsel %vm3451, %v2662, 0.0
  %v3482 = vadd.f32 %v3480, %v3481
  %v3483 = vsel %vm3451, %v2711, 0.0
  %v3484 = vadd.f32 %v3482, %v3483
  %v3485 = vsel %vm3451, %v2760, 0.0
  %v3486 = vadd.f32 %v3484, %v3485
  %v3487 = vsel %vm3451, %v2809, 0.0
  %v3488 = vadd.f32 %v3486, %v3487
  %v3489 = vsel %vm3451, %v2858, 0.0
  %v3490 = vadd.f32 %v3488, %v3489
  %v3491 = vsel %vm3451, %v2907, 0.0
  %v3492 = vadd.f32 %v3490, %v3491
  %v3493 = vsel %vm3451, %v2956, 0.0
  %v3494 = vadd.f32 %v3492, %v3493
  %v3495 = vsel %vm3451, %v3005, 0.0
  %v3496 = vadd.f32 %v3494, %v3495
  %v3497 = vsel %vm3451, %v3054, 0.0
  %v3498 = vadd.f32 %v3496, %v3497
  %v3499 = vsel %vm3451, %v3103, 0.0
  %v3500 = vadd.f32 %v3498, %v3499
  %v3501 = vsel %vm3451, %v3152, 0.0
  %v3502 = vadd.f32 %v3500, %v3501
  %v3503 = vsel %vm3451, %v3201, 0.0
  %v3504 = vadd.f32 %v3502, %v3503
  %v3505 = vsel %vm3451, %v3250, 0.0
  %v3506 = vadd.f32 %v3504, %v3505
  %v3507 = vsel %vm3451, %v3299, 0.0
  %v3508 = vadd.f32 %v3506, %v3507
  %v3509 = vsel %vm3451, %v3348, 0.0
  %v3510 = vadd.f32 %v3508, %v3509
  %v3511 = vsel %vm3451, %v3397, 0.0
  %v3512 = vadd.f32 %v3510, %v3511
  %v3513 = vsel %vm3451, %v3446, 0.0
  %v3514 = vadd.f32 %v3512, %v3513
  %v3515 = vld [vmem:[%s4] sm:$0x1]
  %v3517 = vlaneseq
  %v3518 = vshrl.u32 %v3517, 7
  %v3519 = vsub.s32 0, %v3518
  %v3520 = vrot.slane %v3515, %v3519
  %v3522 = vadd.f32 %v3514, %v3520
  %v3523 = vmax.f32 %v3522, 0.0
  %v3524 = vpack.c.bf16 %v3523, %v3523
  %v3525 = vld [vmem:[%s5] sm:$0xf]
  %v3526 = vld [vmem:[%s5 + $0x4] sm:$0xf]
  %v3527 = vld [vmem:[%s5 + $0x8] sm:$0xf]
  %v3528 = vld [vmem:[%s5 + $0xc] sm:$0xf]
  %v3529 = vld [vmem:[%s5 + $0x10] sm:$0xf]
  %v3530 = vld [vmem:[%s5 + $0x14] sm:$0xf]
  %v3531 = vld [vmem:[%s5 + $0x18] sm:$0xf]
  %v3532 = vld [vmem:[%s5 + $0x1c] sm:$0xf]
  %v3533 = vld [vmem:[%s5 + $0x20] sm:$0xf]
  %v3534 = vld [vmem:[%s5 + $0x24] sm:$0xf]
  %v3535 = vld [vmem:[%s5 + $0x28] sm:$0xf]
  %v3536 = vld [vmem:[%s5 + $0x2c] sm:$0xf]
  %v3537 = vld [vmem:[%s5 + $0x30] sm:$0xf]
  %v3538 = vld [vmem:[%s5 + $0x34] sm:$0xf]
  %v3539 = vld [vmem:[%s5 + $0x38] sm:$0xf]
  %v3540 = vld [vmem:[%s6] sm:$0x1]
  %v3542 = vlaneseq
  %v3543 = vshrl.u32 %v3542, 7
  %v3544 = vsub.s32 0, %v3543
  %v3545 = vrot.slane %v3540, %v3544
  %v3562 = vunpack.c.l.b16 %v3525
  %v3563 = vunpack.c.l.b16 %v3526
  %v3564 = vunpack.c.l.b16 %v3527
  %v3565 = vunpack.c.l.b16 %v3528
  %v3566 = vunpack.c.l.b16 %v3529
  %v3567 = vunpack.c.l.b16 %v3530
  %v3568 = vunpack.c.l.b16 %v3531
  %v3569 = vunpack.c.l.b16 %v3532
  %v3570 = vunpack.c.l.b16 %v3533
  %v3571 = vunpack.c.l.b16 %v3534
  %v3572 = vunpack.c.l.b16 %v3535
  %v3573 = vunpack.c.l.b16 %v3536
  %v3574 = vunpack.c.l.b16 %v3537
  %v3575 = vunpack.c.l.b16 %v3538
  %v3576 = vunpack.c.l.b16 %v3539
  %v3577 = vpack.c.b16 %v3563, %v3562
  %v3578 = vpack.c.b16 %v3565, %v3564
  %v3579 = vpack.c.b16 %v3567, %v3566
  %v3580 = vpack.c.b16 %v3569, %v3568
  %v3581 = vpack.c.b16 %v3571, %v3570
  %v3582 = vpack.c.b16 %v3573, %v3572
  %v3583 = vpack.c.b16 %v3575, %v3574
  %v3584 = vpack.c.b16 %v3576, %v3576
  %v3593 = vsel %vm3451, %v3524, 0
  %vm3595 = vcmask 1043456
  %v3597 = vsel %vm3595, %v3584, 0
  %3599 = vmatprep.subr.bf16.mxu0 0
  %3600 = vmatpush1.bf16.msra.mxu0 %v3597
  %3601 = vmatprep.subr.bf16.mxu0 0
  %3602 = vmatpush1.bf16.msra.mxu0 %v3583
  %3603 = vmatprep.subr.bf16.mxu0 0
  %3604 = vmatpush1.bf16.msra.mxu0 %v3582
  %3605 = vmatprep.subr.bf16.mxu0 0
  %3606 = vmatpush1.bf16.msra.mxu0 %v3581
  %3607 = vmatprep.subr.bf16.mxu0 0
  %3608 = vmatpush1.bf16.msra.mxu0 %v3580
  %3609 = vmatprep.subr.bf16.mxu0 0
  %3610 = vmatpush1.bf16.msra.mxu0 %v3579
  %3611 = vmatprep.subr.bf16.mxu0 0
  %3612 = vmatpush1.bf16.msra.mxu0 %v3578
  %3613 = vmatprep.subr.bf16.mxu0 0
  %3614 = vmatpush1.bf16.msra.mxu0 %v3577
  %3615 = vmatprep.subr.bf16.mxu0 0
  %3616 = vmatpush2.bf16.msra.mxu0 0
  %3617 = vmatprep.subr.bf16.mxu0 0
  %3618 = vmatpush2.bf16.msra.mxu0 0
  %3619 = vmatprep.subr.bf16.mxu0 0
  %3620 = vmatpush2.bf16.msra.mxu0 0
  %3621 = vmatprep.subr.bf16.mxu0 0
  %3622 = vmatpush2.bf16.msra.mxu0 0
  %3623 = vmatprep.subr.bf16.mxu0 0
  %3624 = vmatpush2.bf16.msra.mxu0 0
  %3625 = vmatprep.subr.bf16.mxu0 0
  %3626 = vmatpush2.bf16.msra.mxu0 0
  %3627 = vmatprep.subr.bf16.mxu0 0
  %3628 = vmatpush2.bf16.msra.mxu0 0
  %3629 = vmatprep.subr.bf16.mxu0 0
  %3630 = vmatpush2.bf16.msra.mxu0 0
  %3631 = vmatprep.mubr.bf16.mxu0 0
  %3632 = vmatmul.mubr.bf16.gmra.mxu0 %v3593
  %v3633 = vpop.f32.mrf.mxu0
  %v3634 = vadd.f32 %v3545, %v3633
  %v3635 = vpop.f32.mrf.mxu0
  %v3636 = vpop.f32.mrf.mxu0
  %v3637 = vpop.f32.mrf.mxu0
  %3638 = vdwg.mxu0
  %v3639 = vmax.f32 %v3634, 0.0
  %v3640 = vpack.c.bf16 %v3639, %v3639
  %v3641 = vld [vmem:[%s7] sm:$0xf]
  %v3642 = vld [vmem:[%s7 + $0x4] sm:$0xf]
  %v3643 = vld [vmem:[%s7 + $0x8] sm:$0xf]
  %v3644 = vld [vmem:[%s7 + $0xc] sm:$0xf]
  %v3645 = vld [vmem:[%s7 + $0x10] sm:$0xf]
  %v3646 = vld [vmem:[%s7 + $0x14] sm:$0xf]
  %v3647 = vld [vmem:[%s7 + $0x18] sm:$0xf]
  %v3648 = vld [vmem:[%s7 + $0x1c] sm:$0xf]
  %v3649 = vld [vmem:[%s7 + $0x20] sm:$0xf]
  %v3650 = vld [vmem:[%s7 + $0x24] sm:$0xf]
  %v3651 = vld [vmem:[%s7 + $0x28] sm:$0x3]
  %v3652 = vld [vmem:[%s8] sm:$0x1]
  %v3654 = vlaneseq
  %v3655 = vshrl.u32 %v3654, 7
  %v3656 = vsub.s32 0, %v3655
  %v3657 = vrot.slane %v3652, %v3656
  %v3670 = vunpack.c.l.b16 %v3641
  %v3671 = vunpack.c.l.b16 %v3642
  %v3672 = vunpack.c.l.b16 %v3643
  %v3673 = vunpack.c.l.b16 %v3644
  %v3674 = vunpack.c.l.b16 %v3645
  %v3675 = vunpack.c.l.b16 %v3646
  %v3676 = vunpack.c.l.b16 %v3647
  %v3677 = vunpack.c.l.b16 %v3648
  %v3678 = vunpack.c.l.b16 %v3649
  %v3679 = vunpack.c.l.b16 %v3650
  %v3680 = vunpack.c.l.b16 %v3651
  %v3681 = vpack.c.b16 %v3671, %v3670
  %v3682 = vpack.c.b16 %v3673, %v3672
  %v3683 = vpack.c.b16 %v3675, %v3674
  %v3684 = vpack.c.b16 %v3677, %v3676
  %v3685 = vpack.c.b16 %v3679, %v3678
  %v3686 = vpack.c.b16 %v3680, %v3680
  %vm3692 = vcmask 687104
  %v3694 = vsel %vm3692, %v3640, 0
  %vm3696 = vcmask 1041408
  %v3698 = vsel %vm3696, %v3686, 0
  %3700 = vmatprep.subr.bf16.mxu0 0
  %3701 = vmatpush1.bf16.msra.mxu0 0
  %3702 = vmatprep.subr.bf16.mxu0 0
  %3703 = vmatpush1.bf16.msra.mxu0 0
  %3704 = vmatprep.subr.bf16.mxu0 0
  %3705 = vmatpush1.bf16.msra.mxu0 %v3698
  %3706 = vmatprep.subr.bf16.mxu0 0
  %3707 = vmatpush1.bf16.msra.mxu0 %v3685
  %3708 = vmatprep.subr.bf16.mxu0 0
  %3709 = vmatpush1.bf16.msra.mxu0 %v3684
  %3710 = vmatprep.subr.bf16.mxu0 0
  %3711 = vmatpush1.bf16.msra.mxu0 %v3683
  %3712 = vmatprep.subr.bf16.mxu0 0
  %3713 = vmatpush1.bf16.msra.mxu0 %v3682
  %3714 = vmatprep.subr.bf16.mxu0 0
  %3715 = vmatpush1.bf16.msra.mxu0 %v3681
  %3716 = vmatprep.subr.bf16.mxu0 0
  %3717 = vmatpush2.bf16.msra.mxu0 0
  %3718 = vmatprep.subr.bf16.mxu0 0
  %3719 = vmatpush2.bf16.msra.mxu0 0
  %3720 = vmatprep.subr.bf16.mxu0 0
  %3721 = vmatpush2.bf16.msra.mxu0 0
  %3722 = vmatprep.subr.bf16.mxu0 0
  %3723 = vmatpush2.bf16.msra.mxu0 0
  %3724 = vmatprep.subr.bf16.mxu0 0
  %3725 = vmatpush2.bf16.msra.mxu0 0
  %3726 = vmatprep.subr.bf16.mxu0 0
  %3727 = vmatpush2.bf16.msra.mxu0 0
  %3728 = vmatprep.subr.bf16.mxu0 0
  %3729 = vmatpush2.bf16.msra.mxu0 0
  %3730 = vmatprep.subr.bf16.mxu0 0
  %3731 = vmatpush2.bf16.msra.mxu0 0
  %3732 = vmatprep.mubr.bf16.mxu0 0
  %3733 = vmatmul.mubr.bf16.gmra.mxu0 %v3694
  %v3734 = vpop.f32.mrf.mxu0
  %v3735 = vadd.f32 %v3657, %v3734
  %v3736 = vpop.f32.mrf.mxu0
  %v3737 = vpop.f32.mrf.mxu0
  %v3738 = vpop.f32.mrf.mxu0
  %3739 = vdwg.mxu0
  %3740 = vst [vmem:[%s9] sm:$0xff] %v3735
  // Predicated region
  $region38: #{net_forward.3} parent=0 // pred_check
    _
  $region39: #{net_forward.3} parent=0 // pred_check_branch
    %3742 = sbr.rel (0) target = $region41
  $region40: #{net_forward.3} parent=0 // pred_region
    _
  $region41: #{net_forward.3} parent=0 // pred_fallthru
    _
  // Predicated region
  $region42: #{net_forward.3} parent=0 // pred_check
    _
  $region43: #{net_forward.3} parent=0 // pred_check_branch
    %3744 = sbr.rel (0) target = $region45
  $region44: #{net_forward.3} parent=0 // pred_region
    _
  $region45: #{net_forward.3} parent=0 // pred_fallthru
    _

</llo_original>
